<compile_context>
chip_gen: v7x
topology: tpu7x:2x2x1
jax: 0.10.0
libtpu: 0.0.40
codegen_flags: <defaults>
</compile_context>

<pallas_src>
import functools

import jax
import jax.numpy as jnp
from jax.experimental import pallas as pl
from jax.experimental.pallas import tpu as pltpu

_BN_EPS = 1e-5


# --------------------------- Fused forward kernel -------------------------- #
def _mlp_fused_kernel(x_ref, w_ref, b_ref, k_ref, cb_ref, m_ref, o_ref, pad_ref,
                      *, W, Lp):
    """One packed batch block: 3 x (linear -> 3x3 depthwise conv(+folded BN) -> ReLU).

    x_ref  : (1, N, Cp)      packed activations, N == H*W, Cp == Bp*C
    w_ref  : (3, Cp, Cp)     block-diagonal fc weights (stored (in, out))
    b_ref  : (3, 1, Cp)      fc biases
    k_ref  : (3, 9, Cp)      depthwise 3x3 taps with BN scale folded in
    cb_ref : (3, 1, Cp)      conv bias with BN shift folded in
    m_ref  : (2, N, Cp)      lane-dense W-edge masks ([0]: w-1 valid, [1]: w+1 valid)
    o_ref  : (1, N, Cp)      output
    pad_ref: (N + 2*Lp, Cp)  f32 scratch; rows [Lp, Lp+N) hold the stage activation,
                             the Lp pad rows on each side stay zero (H-edge padding).
    """
    N = x_ref.shape[1]
    Cp = x_ref.shape[2]

    # Zero only the pad rows; the interior is fully overwritten every stage.
    pad_ref[0:Lp, :] = jnp.zeros((Lp, Cp), jnp.float32)
    pad_ref[Lp + N:Lp + N + Lp, :] = jnp.zeros((Lp, Cp), jnp.float32)

    lmask = m_ref[0]          # 1.0 where the left  neighbour (w-1) is inside the row
    rmask = m_ref[1]          # 1.0 where the right neighbour (w+1) is inside the row

    cur = x_ref[0].astype(jnp.float32)                            # (N, Cp)
    for s in range(3):                                            # static unroll
        # ---- fc_s : one MXU matmul == Bp independent (N,C)@(C,C) GEMMs ----
        lin = jnp.dot(cur, w_ref[s],
                      preferred_element_type=jnp.float32) + b_ref[s]

        # ---- depthwise 3x3 conv on the flat (N, Cp) layout ----
        # Shifted taps are contiguous lane-dense slab reads from the zero-row-padded
        # scratch; row-wrap in the W direction is killed by the edge masks.
        pad_ref[Lp:Lp + N, :] = lin
        ks = k_ref[s]                                             # (9, Cp)
        acc0 = lin * ks[4:5, :]                                   # centre tap inits acc
        acc1 = None
        flip = True
        for dh in range(3):
            for dw in range(3):
                if dh == 1 and dw == 1:
                    continue
                off = Lp + (dh - 1) * W + (dw - 1)
                src = pad_ref[off:off + N, :]
                if dw == 0:
                    src = src * lmask
                elif dw == 2:
                    src = src * rmask
                tap = src * ks[3 * dh + dw:3 * dh + dw + 1, :]
                if flip:
                    acc1 = tap if acc1 is None else acc1 + tap
                else:
                    acc0 = acc0 + tap
                flip = not flip

        # ---- folded BatchNorm shift + ReLU ----
        cur = jnp.maximum(acc0 + acc1 + cb_ref[s], 0.0)

    o_ref[0] = cur.astype(o_ref.dtype)


@functools.partial(jax.jit, static_argnums=(2, 3))
def mlp_layer_forward(x, params, H, W):
    """x: (B, N, C) with N == H*W  ->  (B, N, C)."""
    B, N, C = x.shape
    assert N == H * W

    # ---- lane packing: put Bp batch elements side by side on the lane axis ----
    bp = max(1, 128 // C)
    while B % bp:
        bp -= 1
    G, Cp = B // bp, bp * C
    xp = x.reshape(G, bp, N, C).transpose(0, 2, 1, 3).reshape(G, N, Cp)

    # ---- fc params: block-diagonal replication so one matmul does bp GEMMs ----
    w_stack = jnp.stack([params["w1"], params["w2"], params["w3"]]).astype(jnp.float32)
    b_stack = jnp.stack([params["b1"], params["b2"], params["b3"]]).astype(jnp.float32)
    eye = jnp.eye(bp, dtype=jnp.float32)
    w_big = jnp.einsum('pq,sij->spiqj', eye, w_stack).reshape(3, Cp, Cp)
    b_big = jnp.tile(b_stack, (1, bp))[:, None, :]                        # (3,1,Cp)

    # ---- fold BatchNorm (eval mode) into the depthwise conv taps / bias ----
    k_list, cb_list = [], []
    for i in (1, 2, 3):
        p = params[f"dw{i}"]
        scale = p["gamma"] / jnp.sqrt(p["r_var"] + _BN_EPS)               # (C,)
        k_list.append((p["k"] * scale).reshape(9, C))                     # (9,C)
        cb_list.append((p["conv_bias"] - p["r_mean"]) * scale + p["beta"])
    k_big = jnp.tile(jnp.stack(k_list), (1, 1, bp))                       # (3,9,Cp)
    cb_big = jnp.tile(jnp.stack(cb_list), (1, bp))[:, None, :]            # (3,1,Cp)

    # ---- lane-dense W-edge masks for the dw=0 / dw=2 taps ----
    wcol = jnp.arange(N, dtype=jnp.int32) % W
    edge = jnp.stack([(wcol > 0), (wcol < W - 1)]).astype(jnp.float32)    # (2,N)
    m_big = jnp.broadcast_to(edge[:, :, None], (2, N, Cp))

    # Left/right zero-row padding: >= W+1 rows and 8-aligned (aligned interior store).
    Lp = -(-(W + 1) // 8) * 8

    out_p = pl.pallas_call(
        functools.partial(_mlp_fused_kernel, W=W, Lp=Lp),
        out_shape=jax.ShapeDtypeStruct((G, N, Cp), x.dtype),
        grid=(G,),
        in_specs=[
            pl.BlockSpec((1, N, Cp), lambda g: (g, 0, 0)),   # packed activations
            pl.BlockSpec((3, Cp, Cp), lambda g: (0, 0, 0)),  # block-diag fc weights
            pl.BlockSpec((3, 1, Cp), lambda g: (0, 0, 0)),   # fc biases
            pl.BlockSpec((3, 9, Cp), lambda g: (0, 0, 0)),   # folded dw taps
            pl.BlockSpec((3, 1, Cp), lambda g: (0, 0, 0)),   # folded dw bias
            pl.BlockSpec((2, N, Cp), lambda g: (0, 0, 0)),   # W-edge masks
        ],
        out_specs=pl.BlockSpec((1, N, Cp), lambda g: (g, 0, 0)),
        scratch_shapes=[pltpu.VMEM((N + 2 * Lp, Cp), jnp.float32)],
        compiler_params=pltpu.CompilerParams(
            dimension_semantics=("parallel",)),               # batch blocks across TCs
    )(xp, w_big, b_big, k_big, cb_big, m_big)

    # Unpack lanes back to (B, N, C).
    return out_p.reshape(G, N, bp, C).transpose(0, 2, 1, 3).reshape(B, N, C)


# ------------------------------- Parameters -------------------------------- #
def init_params(key, dim):
    """Deterministic synthetic parameters (mirrors the module's _init_weights,
    plus non-trivial BN running stats so the BN fold is exercised)."""
    def trunc_normal(k, shape, std=0.02):
        return std * jax.random.truncated_normal(k, -2.0, 2.0, shape, jnp.float32)

    k_lin, k_conv, k_bn = jax.random.split(key, 3)
    params = {}
    for i, k in enumerate(jax.random.split(k_lin, 3), start=1):
        params[f"w{i}"] = trunc_normal(k, (dim, dim))      # stored (in, out)
        params[f"b{i}"] = jnp.zeros((dim,), jnp.float32)

    conv_std = (2.0 / 9.0) ** 0.5                          # fan_out = 9 (grouped)
    conv_keys = jax.random.split(k_conv, 3)
    bn_keys = jax.random.split(k_bn, 3)
    for i in range(3):
        kg, kb, km, kv = jax.random.split(bn_keys[i], 4)
        params[f"dw{i+1}"] = dict(
            k=conv_std * jax.random.normal(conv_keys[i], (3, 3, dim), jnp.float32),
            conv_bias=jnp.zeros((dim,), jnp.float32),
            gamma=1.0 + 0.1 * jax.random.normal(kg, (dim,), jnp.float32),
            beta=0.05 * jax.random.normal(kb, (dim,), jnp.float32),
            r_mean=0.1 * jax.random.normal(km, (dim,), jnp.float32),
            r_var=jax.random.uniform(kv, (dim,), jnp.float32, 0.5, 1.5),
        )
    return params


# ------------------------- Pure-JAX reference (XLA) ------------------------- #
def _reference_forward(x, params, H, W):
    B, N, C = x.shape
    h = x.astype(jnp.float32)
    for i in (1, 2, 3):
        h = h.reshape(B * N, C) @ params[f"w{i}"] + params[f"b{i}"]
        p = params[f"dw{i}"]
        img = jnp.pad(h.reshape(B, H, W, C), ((0, 0), (1, 1), (1, 1), (0, 0)))
        acc = jnp.zeros((B, H, W, C), jnp.float32)
        for dh in range(3):
            for dw in range(3):
                acc = acc + img[:, dh:dh + H, dw:dw + W, :] * p["k"][dh, dw, :]
        acc = acc + p["conv_bias"]
        scale = p["gamma"] / jnp.sqrt(p["r_var"] + _BN_EPS)
        acc = (acc - p["r_mean"]) * scale + p["beta"]
        h = jnp.maximum(acc, 0.0).reshape(B, N, C)
    return h


if __name__ == "__main__":
    # Force full-f32 matmuls on both the XLA reference and the kernel's dot so the
    # comparison is not dominated by default-precision differences.
    jax.config.update("jax_default_matmul_precision", "highest")

    B, H, W, C = 8, 16, 16, 32            # Bp = 4 -> 128 lanes fully used, grid=(2,)
    N = H * W
    key = jax.random.PRNGKey(0)
    kx, kp = jax.random.split(key)
    x = jax.random.normal(kx, (B, N, C), jnp.float32)
    params = init_params(kp, C)

    out = mlp_layer_forward(x, params, H, W)
    jax.block_until_ready(out)
    assert out.shape == (B, N, C), out.shape

    ref = _reference_forward(x, params, H, W)
    ref_scale = float(jnp.max(jnp.abs(ref)))
    max_err = float(jnp.max(jnp.abs(out - ref)))
    # Scale-aware bound: tolerant of matmul-precision differences, but a structural
    # bug (wrong tap / mask / packing route) produces O(10-100%) errors and fails.
    assert max_err <= 1e-5 + 3e-2 * ref_scale, (max_err, ref_scale)

    print("KERNEL_OK")
</pallas_src>

<mosaic_0001>
module attributes {stable_mosaic.version = 11 : i64} {
  func.func @_mlp_fused_kernel(%arg0: i32, %arg1: memref<1x256x128xf32, #tpu.memory_space<vmem>>, %arg2: memref<3x128x128xf32, #tpu.memory_space<vmem>>, %arg3: memref<3x1x128xf32, #tpu.memory_space<vmem>>, %arg4: memref<3x9x128xf32, #tpu.memory_space<vmem>>, %arg5: memref<3x1x128xf32, #tpu.memory_space<vmem>>, %arg6: memref<2x256x128xf32, #tpu.memory_space<vmem>>, %arg7: memref<1x256x128xf32, #tpu.memory_space<vmem>>, %arg8: memref<304x128xf32, #tpu.memory_space<vmem>>) attributes {dimension_semantics = [#tpu.dimension_semantics<parallel>], iteration_bounds = array<i64: 2>, scalar_prefetch = 0 : i64, scratch_operands = 1 : i64, tpu.core_type = #tpu.core_type<tc>, window_params = [{transform_indices = @transform_0, window_bounds = array<i64: 1, 256, 128>}, {pipeline_mode = #tpu.pipeline_mode<synchronous>, transform_indices = @transform_1, window_bounds = array<i64: 3, 128, 128>}, {pipeline_mode = #tpu.pipeline_mode<synchronous>, transform_indices = @transform_2, window_bounds = array<i64: 3, 1, 128>}, {pipeline_mode = #tpu.pipeline_mode<synchronous>, transform_indices = @transform_3, window_bounds = array<i64: 3, 9, 128>}, {pipeline_mode = #tpu.pipeline_mode<synchronous>, transform_indices = @transform_4, window_bounds = array<i64: 3, 1, 128>}, {pipeline_mode = #tpu.pipeline_mode<synchronous>, transform_indices = @transform_5, window_bounds = array<i64: 2, 256, 128>}, {transform_indices = @transform_6, window_bounds = array<i64: 1, 256, 128>}]} {
    %cst = arith.constant 0.000000e+00 : f32
    %0 = vector.broadcast %cst : f32 to vector<24x128xf32>
    %c0 = arith.constant 0 : index
    %c0_0 = arith.constant 0 : index
    %1 = vector.load %arg8[%c0, %c0_0] : memref<304x128xf32, #tpu.memory_space<vmem>>, vector<24x128xf32>
    tpu.vector_store %arg8[%c0, %c0_0], %0 {strides = array<i32>} : memref<304x128xf32, #tpu.memory_space<vmem>>, vector<24x128xf32>,
    %cst_1 = arith.constant 0.000000e+00 : f32
    %2 = vector.broadcast %cst_1 : f32 to vector<24x128xf32>
    %c280 = arith.constant 280 : index
    %c0_2 = arith.constant 0 : index
    %3 = vector.load %arg8[%c280, %c0_2] : memref<304x128xf32, #tpu.memory_space<vmem>>, vector<24x128xf32>
    tpu.vector_store %arg8[%c280, %c0_2], %2 {strides = array<i32>} : memref<304x128xf32, #tpu.memory_space<vmem>>, vector<24x128xf32>,
    %c0_3 = arith.constant 0 : index
    %c0_4 = arith.constant 0 : index
    %c0_5 = arith.constant 0 : index
    %4 = vector.load %arg6[%c0_3, %c0_4, %c0_5] : memref<2x256x128xf32, #tpu.memory_space<vmem>>, vector<1x256x128xf32>
    %5 = vector.shape_cast %4 : vector<1x256x128xf32> to vector<256x128xf32>
    %c1 = arith.constant 1 : index
    %c0_6 = arith.constant 0 : index
    %c0_7 = arith.constant 0 : index
    %6 = vector.load %arg6[%c1, %c0_6, %c0_7] : memref<2x256x128xf32, #tpu.memory_space<vmem>>, vector<1x256x128xf32>
    %7 = vector.shape_cast %6 : vector<1x256x128xf32> to vector<256x128xf32>
    %c0_8 = arith.constant 0 : index
    %c0_9 = arith.constant 0 : index
    %c0_10 = arith.constant 0 : index
    %8 = vector.load %arg1[%c0_8, %c0_9, %c0_10] : memref<1x256x128xf32, #tpu.memory_space<vmem>>, vector<1x256x128xf32>
    %9 = vector.shape_cast %8 : vector<1x256x128xf32> to vector<256x128xf32>
    %c0_11 = arith.constant 0 : index
    %c0_12 = arith.constant 0 : index
    %c0_13 = arith.constant 0 : index
    %10 = vector.load %arg2[%c0_11, %c0_12, %c0_13] : memref<3x128x128xf32, #tpu.memory_space<vmem>>, vector<1x128x128xf32>
    %11 = vector.shape_cast %10 : vector<1x128x128xf32> to vector<128x128xf32>
    %cst_14 = arith.constant dense<0.000000e+00> : vector<256x128xf32>
    %12 = tpu.matmul %9, %11, %cst_14 {dimension_numbers = #tpu.dot_dimension_numbers<[1], [0], [0], [1], [0, 0, 1, 1], [], []>, precision = #tpu.contract_precision<fp32>} : vector<256x128xf32>, vector<128x128xf32>, vector<256x128xf32> -> vector<256x128xf32>
    %c0_15 = arith.constant 0 : index
    %c0_16 = arith.constant 0 : index
    %c0_17 = arith.constant 0 : index
    %13 = vector.load %arg3[%c0_15, %c0_16, %c0_17] : memref<3x1x128xf32, #tpu.memory_space<vmem>>, vector<1x1x128xf32>
    %14 = vector.shape_cast %13 : vector<1x1x128xf32> to vector<1x128xf32>
    %15 = vector.broadcast %14 : vector<1x128xf32> to vector<256x128xf32>
    %16 = arith.addf %12, %15 : vector<256x128xf32>
    %c24 = arith.constant 24 : index
    %c0_18 = arith.constant 0 : index
    %17 = vector.load %arg8[%c24, %c0_18] : memref<304x128xf32, #tpu.memory_space<vmem>>, vector<256x128xf32>
    tpu.vector_store %arg8[%c24, %c0_18], %16 {strides = array<i32>} : memref<304x128xf32, #tpu.memory_space<vmem>>, vector<256x128xf32>,
    %c0_19 = arith.constant 0 : index
    %c0_20 = arith.constant 0 : index
    %c0_21 = arith.constant 0 : index
    %18 = vector.load %arg4[%c0_19, %c0_20, %c0_21] : memref<3x9x128xf32, #tpu.memory_space<vmem>>, vector<1x9x128xf32>
    %19 = vector.shape_cast %18 : vector<1x9x128xf32> to vector<9x128xf32>
    %20 = vector.extract_strided_slice %19 {offsets = [4, 0], sizes = [1, 128], strides = [1, 1]} : vector<9x128xf32> to vector<1x128xf32>
    %21 = vector.broadcast %20 : vector<1x128xf32> to vector<256x128xf32>
    %22 = arith.mulf %16, %21 : vector<256x128xf32>
    %c7 = arith.constant 7 : index
    %c0_22 = arith.constant 0 : index
    %23 = vector.load %arg8[%c7, %c0_22] : memref<304x128xf32, #tpu.memory_space<vmem>>, vector<256x128xf32>
    %24 = arith.mulf %23, %5 : vector<256x128xf32>
    %25 = vector.extract_strided_slice %19 {offsets = [0, 0], sizes = [1, 128], strides = [1, 1]} : vector<9x128xf32> to vector<1x128xf32>
    %26 = vector.broadcast %25 : vector<1x128xf32> to vector<256x128xf32>
    %27 = arith.mulf %24, %26 : vector<256x128xf32>
    %c8 = arith.constant 8 : index
    %c0_23 = arith.constant 0 : index
    %28 = vector.load %arg8[%c8, %c0_23] : memref<304x128xf32, #tpu.memory_space<vmem>>, vector<256x128xf32>
    %29 = vector.extract_strided_slice %19 {offsets = [1, 0], sizes = [1, 128], strides = [1, 1]} : vector<9x128xf32> to vector<1x128xf32>
    %30 = vector.broadcast %29 : vector<1x128xf32> to vector<256x128xf32>
    %31 = arith.mulf %28, %30 : vector<256x128xf32>
    %32 = arith.addf %22, %31 : vector<256x128xf32>
    %c9 = arith.constant 9 : index
    %c0_24 = arith.constant 0 : index
    %33 = vector.load %arg8[%c9, %c0_24] : memref<304x128xf32, #tpu.memory_space<vmem>>, vector<256x128xf32>
    %34 = arith.mulf %33, %7 : vector<256x128xf32>
    %35 = vector.extract_strided_slice %19 {offsets = [2, 0], sizes = [1, 128], strides = [1, 1]} : vector<9x128xf32> to vector<1x128xf32>
    %36 = vector.broadcast %35 : vector<1x128xf32> to vector<256x128xf32>
    %37 = arith.mulf %34, %36 : vector<256x128xf32>
    %38 = arith.addf %27, %37 : vector<256x128xf32>
    %c23 = arith.constant 23 : index
    %c0_25 = arith.constant 0 : index
    %39 = vector.load %arg8[%c23, %c0_25] : memref<304x128xf32, #tpu.memory_space<vmem>>, vector<256x128xf32>
    %40 = arith.mulf %39, %5 : vector<256x128xf32>
    %41 = vector.extract_strided_slice %19 {offsets = [3, 0], sizes = [1, 128], strides = [1, 1]} : vector<9x128xf32> to vector<1x128xf32>
    %42 = vector.broadcast %41 : vector<1x128xf32> to vector<256x128xf32>
    %43 = arith.mulf %40, %42 : vector<256x128xf32>
    %44 = arith.addf %32, %43 : vector<256x128xf32>
    %c25 = arith.constant 25 : index
    %c0_26 = arith.constant 0 : index
    %45 = vector.load %arg8[%c25, %c0_26] : memref<304x128xf32, #tpu.memory_space<vmem>>, vector<256x128xf32>
    %46 = arith.mulf %45, %7 : vector<256x128xf32>
    %47 = vector.extract_strided_slice %19 {offsets = [5, 0], sizes = [1, 128], strides = [1, 1]} : vector<9x128xf32> to vector<1x128xf32>
    %48 = vector.broadcast %47 : vector<1x128xf32> to vector<256x128xf32>
    %49 = arith.mulf %46, %48 : vector<256x128xf32>
    %50 = arith.addf %38, %49 : vector<256x128xf32>
    %c39 = arith.constant 39 : index
    %c0_27 = arith.constant 0 : index
    %51 = vector.load %arg8[%c39, %c0_27] : memref<304x128xf32, #tpu.memory_space<vmem>>, vector<256x128xf32>
    %52 = arith.mulf %51, %5 : vector<256x128xf32>
    %53 = vector.extract_strided_slice %19 {offsets = [6, 0], sizes = [1, 128], strides = [1, 1]} : vector<9x128xf32> to vector<1x128xf32>
    %54 = vector.broadcast %53 : vector<1x128xf32> to vector<256x128xf32>
    %55 = arith.mulf %52, %54 : vector<256x128xf32>
    %56 = arith.addf %44, %55 : vector<256x128xf32>
    %c40 = arith.constant 40 : index
    %c0_28 = arith.constant 0 : index
    %57 = vector.load %arg8[%c40, %c0_28] : memref<304x128xf32, #tpu.memory_space<vmem>>, vector<256x128xf32>
    %58 = vector.extract_strided_slice %19 {offsets = [7, 0], sizes = [1, 128], strides = [1, 1]} : vector<9x128xf32> to vector<1x128xf32>
    %59 = vector.broadcast %58 : vector<1x128xf32> to vector<256x128xf32>
    %60 = arith.mulf %57, %59 : vector<256x128xf32>
    %61 = arith.addf %50, %60 : vector<256x128xf32>
    %c41 = arith.constant 41 : index
    %c0_29 = arith.constant 0 : index
    %62 = vector.load %arg8[%c41, %c0_29] : memref<304x128xf32, #tpu.memory_space<vmem>>, vector<256x128xf32>
    %63 = arith.mulf %62, %7 : vector<256x128xf32>
    %64 = vector.extract_strided_slice %19 {offsets = [8, 0], sizes = [1, 128], strides = [1, 1]} : vector<9x128xf32> to vector<1x128xf32>
    %65 = vector.broadcast %64 : vector<1x128xf32> to vector<256x128xf32>
    %66 = arith.mulf %63, %65 : vector<256x128xf32>
    %67 = arith.addf %56, %66 : vector<256x128xf32>
    %68 = arith.addf %67, %61 : vector<256x128xf32>
    %c0_30 = arith.constant 0 : index
    %c0_31 = arith.constant 0 : index
    %c0_32 = arith.constant 0 : index
    %69 = vector.load %arg5[%c0_30, %c0_31, %c0_32] : memref<3x1x128xf32, #tpu.memory_space<vmem>>, vector<1x1x128xf32>
    %70 = vector.shape_cast %69 : vector<1x1x128xf32> to vector<1x128xf32>
    %71 = vector.broadcast %70 : vector<1x128xf32> to vector<256x128xf32>
    %72 = arith.addf %68, %71 : vector<256x128xf32>
    %cst_33 = arith.constant 0.000000e+00 : f32
    %73 = vector.broadcast %cst_33 : f32 to vector<256x128xf32>
    %74 = arith.maximumf %72, %73 : vector<256x128xf32>
    %c1_34 = arith.constant 1 : index
    %c0_35 = arith.constant 0 : index
    %c0_36 = arith.constant 0 : index
    %75 = vector.load %arg2[%c1_34, %c0_35, %c0_36] : memref<3x128x128xf32, #tpu.memory_space<vmem>>, vector<1x128x128xf32>
    %76 = vector.shape_cast %75 : vector<1x128x128xf32> to vector<128x128xf32>
    %cst_37 = arith.constant dense<0.000000e+00> : vector<256x128xf32>
    %77 = tpu.matmul %74, %76, %cst_37 {dimension_numbers = #tpu.dot_dimension_numbers<[1], [0], [0], [1], [0, 0, 1, 1], [], []>, precision = #tpu.contract_precision<fp32>} : vector<256x128xf32>, vector<128x128xf32>, vector<256x128xf32> -> vector<256x128xf32>
    %c1_38 = arith.constant 1 : index
    %c0_39 = arith.constant 0 : index
    %c0_40 = arith.constant 0 : index
    %78 = vector.load %arg3[%c1_38, %c0_39, %c0_40] : memref<3x1x128xf32, #tpu.memory_space<vmem>>, vector<1x1x128xf32>
    %79 = vector.shape_cast %78 : vector<1x1x128xf32> to vector<1x128xf32>
    %80 = vector.broadcast %79 : vector<1x128xf32> to vector<256x128xf32>
    %81 = arith.addf %77, %80 : vector<256x128xf32>
    %c24_41 = arith.constant 24 : index
    %c0_42 = arith.constant 0 : index
    %82 = vector.load %arg8[%c24_41, %c0_42] : memref<304x128xf32, #tpu.memory_space<vmem>>, vector<256x128xf32>
    tpu.vector_store %arg8[%c24_41, %c0_42], %81 {strides = array<i32>} : memref<304x128xf32, #tpu.memory_space<vmem>>, vector<256x128xf32>,
    %c1_43 = arith.constant 1 : index
    %c0_44 = arith.constant 0 : index
    %c0_45 = arith.constant 0 : index
    %83 = vector.load %arg4[%c1_43, %c0_44, %c0_45] : memref<3x9x128xf32, #tpu.memory_space<vmem>>, vector<1x9x128xf32>
    %84 = vector.shape_cast %83 : vector<1x9x128xf32> to vector<9x128xf32>
    %85 = vector.extract_strided_slice %84 {offsets = [4, 0], sizes = [1, 128], strides = [1, 1]} : vector<9x128xf32> to vector<1x128xf32>
    %86 = vector.broadcast %85 : vector<1x128xf32> to vector<256x128xf32>
    %87 = arith.mulf %81, %86 : vector<256x128xf32>
    %c7_46 = arith.constant 7 : index
    %c0_47 = arith.constant 0 : index
    %88 = vector.load %arg8[%c7_46, %c0_47] : memref<304x128xf32, #tpu.memory_space<vmem>>, vector<256x128xf32>
    %89 = arith.mulf %88, %5 : vector<256x128xf32>
    %90 = vector.extract_strided_slice %84 {offsets = [0, 0], sizes = [1, 128], strides = [1, 1]} : vector<9x128xf32> to vector<1x128xf32>
    %91 = vector.broadcast %90 : vector<1x128xf32> to vector<256x128xf32>
    %92 = arith.mulf %89, %91 : vector<256x128xf32>
    %c8_48 = arith.constant 8 : index
    %c0_49 = arith.constant 0 : index
    %93 = vector.load %arg8[%c8_48, %c0_49] : memref<304x128xf32, #tpu.memory_space<vmem>>, vector<256x128xf32>
    %94 = vector.extract_strided_slice %84 {offsets = [1, 0], sizes = [1, 128], strides = [1, 1]} : vector<9x128xf32> to vector<1x128xf32>
    %95 = vector.broadcast %94 : vector<1x128xf32> to vector<256x128xf32>
    %96 = arith.mulf %93, %95 : vector<256x128xf32>
    %97 = arith.addf %87, %96 : vector<256x128xf32>
    %c9_50 = arith.constant 9 : index
    %c0_51 = arith.constant 0 : index
    %98 = vector.load %arg8[%c9_50, %c0_51] : memref<304x128xf32, #tpu.memory_space<vmem>>, vector<256x128xf32>
    %99 = arith.mulf %98, %7 : vector<256x128xf32>
    %100 = vector.extract_strided_slice %84 {offsets = [2, 0], sizes = [1, 128], strides = [1, 1]} : vector<9x128xf32> to vector<1x128xf32>
    %101 = vector.broadcast %100 : vector<1x128xf32> to vector<256x128xf32>
    %102 = arith.mulf %99, %101 : vector<256x128xf32>
    %103 = arith.addf %92, %102 : vector<256x128xf32>
    %c23_52 = arith.constant 23 : index
    %c0_53 = arith.constant 0 : index
    %104 = vector.load %arg8[%c23_52, %c0_53] : memref<304x128xf32, #tpu.memory_space<vmem>>, vector<256x128xf32>
    %105 = arith.mulf %104, %5 : vector<256x128xf32>
    %106 = vector.extract_strided_slice %84 {offsets = [3, 0], sizes = [1, 128], strides = [1, 1]} : vector<9x128xf32> to vector<1x128xf32>
    %107 = vector.broadcast %106 : vector<1x128xf32> to vector<256x128xf32>
    %108 = arith.mulf %105, %107 : vector<256x128xf32>
    %109 = arith.addf %97, %108 : vector<256x128xf32>
    %c25_54 = arith.constant 25 : index
    %c0_55 = arith.constant 0 : index
    %110 = vector.load %arg8[%c25_54, %c0_55] : memref<304x128xf32, #tpu.memory_space<vmem>>, vector<256x128xf32>
    %111 = arith.mulf %110, %7 : vector<256x128xf32>
    %112 = vector.extract_strided_slice %84 {offsets = [5, 0], sizes = [1, 128], strides = [1, 1]} : vector<9x128xf32> to vector<1x128xf32>
    %113 = vector.broadcast %112 : vector<1x128xf32> to vector<256x128xf32>
    %114 = arith.mulf %111, %113 : vector<256x128xf32>
    %115 = arith.addf %103, %114 : vector<256x128xf32>
    %c39_56 = arith.constant 39 : index
    %c0_57 = arith.constant 0 : index
    %116 = vector.load %arg8[%c39_56, %c0_57] : memref<304x128xf32, #tpu.memory_space<vmem>>, vector<256x128xf32>
    %117 = arith.mulf %116, %5 : vector<256x128xf32>
    %118 = vector.extract_strided_slice %84 {offsets = [6, 0], sizes = [1, 128], strides = [1, 1]} : vector<9x128xf32> to vector<1x128xf32>
    %119 = vector.broadcast %118 : vector<1x128xf32> to vector<256x128xf32>
    %120 = arith.mulf %117, %119 : vector<256x128xf32>
    %121 = arith.addf %109, %120 : vector<256x128xf32>
    %c40_58 = arith.constant 40 : index
    %c0_59 = arith.constant 0 : index
    %122 = vector.load %arg8[%c40_58, %c0_59] : memref<304x128xf32, #tpu.memory_space<vmem>>, vector<256x128xf32>
    %123 = vector.extract_strided_slice %84 {offsets = [7, 0], sizes = [1, 128], strides = [1, 1]} : vector<9x128xf32> to vector<1x128xf32>
    %124 = vector.broadcast %123 : vector<1x128xf32> to vector<256x128xf32>
    %125 = arith.mulf %122, %124 : vector<256x128xf32>
    %126 = arith.addf %115, %125 : vector<256x128xf32>
    %c41_60 = arith.constant 41 : index
    %c0_61 = arith.constant 0 : index
    %127 = vector.load %arg8[%c41_60, %c0_61] : memref<304x128xf32, #tpu.memory_space<vmem>>, vector<256x128xf32>
    %128 = arith.mulf %127, %7 : vector<256x128xf32>
    %129 = vector.extract_strided_slice %84 {offsets = [8, 0], sizes = [1, 128], strides = [1, 1]} : vector<9x128xf32> to vector<1x128xf32>
    %130 = vector.broadcast %129 : vector<1x128xf32> to vector<256x128xf32>
    %131 = arith.mulf %128, %130 : vector<256x128xf32>
    %132 = arith.addf %121, %131 : vector<256x128xf32>
    %133 = arith.addf %132, %126 : vector<256x128xf32>
    %c1_62 = arith.constant 1 : index
    %c0_63 = arith.constant 0 : index
    %c0_64 = arith.constant 0 : index
    %134 = vector.load %arg5[%c1_62, %c0_63, %c0_64] : memref<3x1x128xf32, #tpu.memory_space<vmem>>, vector<1x1x128xf32>
    %135 = vector.shape_cast %134 : vector<1x1x128xf32> to vector<1x128xf32>
    %136 = vector.broadcast %135 : vector<1x128xf32> to vector<256x128xf32>
    %137 = arith.addf %133, %136 : vector<256x128xf32>
    %cst_65 = arith.constant 0.000000e+00 : f32
    %138 = vector.broadcast %cst_65 : f32 to vector<256x128xf32>
    %139 = arith.maximumf %137, %138 : vector<256x128xf32>
    %c2 = arith.constant 2 : index
    %c0_66 = arith.constant 0 : index
    %c0_67 = arith.constant 0 : index
    %140 = vector.load %arg2[%c2, %c0_66, %c0_67] : memref<3x128x128xf32, #tpu.memory_space<vmem>>, vector<1x128x128xf32>
    %141 = vector.shape_cast %140 : vector<1x128x128xf32> to vector<128x128xf32>
    %cst_68 = arith.constant dense<0.000000e+00> : vector<256x128xf32>
    %142 = tpu.matmul %139, %141, %cst_68 {dimension_numbers = #tpu.dot_dimension_numbers<[1], [0], [0], [1], [0, 0, 1, 1], [], []>, precision = #tpu.contract_precision<fp32>} : vector<256x128xf32>, vector<128x128xf32>, vector<256x128xf32> -> vector<256x128xf32>
    %c2_69 = arith.constant 2 : index
    %c0_70 = arith.constant 0 : index
    %c0_71 = arith.constant 0 : index
    %143 = vector.load %arg3[%c2_69, %c0_70, %c0_71] : memref<3x1x128xf32, #tpu.memory_space<vmem>>, vector<1x1x128xf32>
    %144 = vector.shape_cast %143 : vector<1x1x128xf32> to vector<1x128xf32>
    %145 = vector.broadcast %144 : vector<1x128xf32> to vector<256x128xf32>
    %146 = arith.addf %142, %145 : vector<256x128xf32>
    %c24_72 = arith.constant 24 : index
    %c0_73 = arith.constant 0 : index
    %147 = vector.load %arg8[%c24_72, %c0_73] : memref<304x128xf32, #tpu.memory_space<vmem>>, vector<256x128xf32>
    tpu.vector_store %arg8[%c24_72, %c0_73], %146 {strides = array<i32>} : memref<304x128xf32, #tpu.memory_space<vmem>>, vector<256x128xf32>,
    %c2_74 = arith.constant 2 : index
    %c0_75 = arith.constant 0 : index
    %c0_76 = arith.constant 0 : index
    %148 = vector.load %arg4[%c2_74, %c0_75, %c0_76] : memref<3x9x128xf32, #tpu.memory_space<vmem>>, vector<1x9x128xf32>
    %149 = vector.shape_cast %148 : vector<1x9x128xf32> to vector<9x128xf32>
    %150 = vector.extract_strided_slice %149 {offsets = [4, 0], sizes = [1, 128], strides = [1, 1]} : vector<9x128xf32> to vector<1x128xf32>
    %151 = vector.broadcast %150 : vector<1x128xf32> to vector<256x128xf32>
    %152 = arith.mulf %146, %151 : vector<256x128xf32>
    %c7_77 = arith.constant 7 : index
    %c0_78 = arith.constant 0 : index
    %153 = vector.load %arg8[%c7_77, %c0_78] : memref<304x128xf32, #tpu.memory_space<vmem>>, vector<256x128xf32>
    %154 = arith.mulf %153, %5 : vector<256x128xf32>
    %155 = vector.extract_strided_slice %149 {offsets = [0, 0], sizes = [1, 128], strides = [1, 1]} : vector<9x128xf32> to vector<1x128xf32>
    %156 = vector.broadcast %155 : vector<1x128xf32> to vector<256x128xf32>
    %157 = arith.mulf %154, %156 : vector<256x128xf32>
    %c8_79 = arith.constant 8 : index
    %c0_80 = arith.constant 0 : index
    %158 = vector.load %arg8[%c8_79, %c0_80] : memref<304x128xf32, #tpu.memory_space<vmem>>, vector<256x128xf32>
    %159 = vector.extract_strided_slice %149 {offsets = [1, 0], sizes = [1, 128], strides = [1, 1]} : vector<9x128xf32> to vector<1x128xf32>
    %160 = vector.broadcast %159 : vector<1x128xf32> to vector<256x128xf32>
    %161 = arith.mulf %158, %160 : vector<256x128xf32>
    %162 = arith.addf %152, %161 : vector<256x128xf32>
    %c9_81 = arith.constant 9 : index
    %c0_82 = arith.constant 0 : index
    %163 = vector.load %arg8[%c9_81, %c0_82] : memref<304x128xf32, #tpu.memory_space<vmem>>, vector<256x128xf32>
    %164 = arith.mulf %163, %7 : vector<256x128xf32>
    %165 = vector.extract_strided_slice %149 {offsets = [2, 0], sizes = [1, 128], strides = [1, 1]} : vector<9x128xf32> to vector<1x128xf32>
    %166 = vector.broadcast %165 : vector<1x128xf32> to vector<256x128xf32>
    %167 = arith.mulf %164, %166 : vector<256x128xf32>
    %168 = arith.addf %157, %167 : vector<256x128xf32>
    %c23_83 = arith.constant 23 : index
    %c0_84 = arith.constant 0 : index
    %169 = vector.load %arg8[%c23_83, %c0_84] : memref<304x128xf32, #tpu.memory_space<vmem>>, vector<256x128xf32>
    %170 = arith.mulf %169, %5 : vector<256x128xf32>
    %171 = vector.extract_strided_slice %149 {offsets = [3, 0], sizes = [1, 128], strides = [1, 1]} : vector<9x128xf32> to vector<1x128xf32>
    %172 = vector.broadcast %171 : vector<1x128xf32> to vector<256x128xf32>
    %173 = arith.mulf %170, %172 : vector<256x128xf32>
    %174 = arith.addf %162, %173 : vector<256x128xf32>
    %c25_85 = arith.constant 25 : index
    %c0_86 = arith.constant 0 : index
    %175 = vector.load %arg8[%c25_85, %c0_86] : memref<304x128xf32, #tpu.memory_space<vmem>>, vector<256x128xf32>
    %176 = arith.mulf %175, %7 : vector<256x128xf32>
    %177 = vector.extract_strided_slice %149 {offsets = [5, 0], sizes = [1, 128], strides = [1, 1]} : vector<9x128xf32> to vector<1x128xf32>
    %178 = vector.broadcast %177 : vector<1x128xf32> to vector<256x128xf32>
    %179 = arith.mulf %176, %178 : vector<256x128xf32>
    %180 = arith.addf %168, %179 : vector<256x128xf32>
    %c39_87 = arith.constant 39 : index
    %c0_88 = arith.constant 0 : index
    %181 = vector.load %arg8[%c39_87, %c0_88] : memref<304x128xf32, #tpu.memory_space<vmem>>, vector<256x128xf32>
    %182 = arith.mulf %181, %5 : vector<256x128xf32>
    %183 = vector.extract_strided_slice %149 {offsets = [6, 0], sizes = [1, 128], strides = [1, 1]} : vector<9x128xf32> to vector<1x128xf32>
    %184 = vector.broadcast %183 : vector<1x128xf32> to vector<256x128xf32>
    %185 = arith.mulf %182, %184 : vector<256x128xf32>
    %186 = arith.addf %174, %185 : vector<256x128xf32>
    %c40_89 = arith.constant 40 : index
    %c0_90 = arith.constant 0 : index
    %187 = vector.load %arg8[%c40_89, %c0_90] : memref<304x128xf32, #tpu.memory_space<vmem>>, vector<256x128xf32>
    %188 = vector.extract_strided_slice %149 {offsets = [7, 0], sizes = [1, 128], strides = [1, 1]} : vector<9x128xf32> to vector<1x128xf32>
    %189 = vector.broadcast %188 : vector<1x128xf32> to vector<256x128xf32>
    %190 = arith.mulf %187, %189 : vector<256x128xf32>
    %191 = arith.addf %180, %190 : vector<256x128xf32>
    %c41_91 = arith.constant 41 : index
    %c0_92 = arith.constant 0 : index
    %192 = vector.load %arg8[%c41_91, %c0_92] : memref<304x128xf32, #tpu.memory_space<vmem>>, vector<256x128xf32>
    %193 = arith.mulf %192, %7 : vector<256x128xf32>
    %194 = vector.extract_strided_slice %149 {offsets = [8, 0], sizes = [1, 128], strides = [1, 1]} : vector<9x128xf32> to vector<1x128xf32>
    %195 = vector.broadcast %194 : vector<1x128xf32> to vector<256x128xf32>
    %196 = arith.mulf %193, %195 : vector<256x128xf32>
    %197 = arith.addf %186, %196 : vector<256x128xf32>
    %198 = arith.addf %197, %191 : vector<256x128xf32>
    %c2_93 = arith.constant 2 : index
    %c0_94 = arith.constant 0 : index
    %c0_95 = arith.constant 0 : index
    %199 = vector.load %arg5[%c2_93, %c0_94, %c0_95] : memref<3x1x128xf32, #tpu.memory_space<vmem>>, vector<1x1x128xf32>
    %200 = vector.shape_cast %199 : vector<1x1x128xf32> to vector<1x128xf32>
    %201 = vector.broadcast %200 : vector<1x128xf32> to vector<256x128xf32>
    %202 = arith.addf %198, %201 : vector<256x128xf32>
    %cst_96 = arith.constant 0.000000e+00 : f32
    %203 = vector.broadcast %cst_96 : f32 to vector<256x128xf32>
    %204 = arith.maximumf %202, %203 : vector<256x128xf32>
    %c0_97 = arith.constant 0 : index
    %c0_98 = arith.constant 0 : index
    %c0_99 = arith.constant 0 : index
    %205 = vector.load %arg7[%c0_97, %c0_98, %c0_99] : memref<1x256x128xf32, #tpu.memory_space<vmem>>, vector<1x256x128xf32>
    %206 = vector.shape_cast %205 : vector<1x256x128xf32> to vector<256x128xf32>
    %207 = vector.shape_cast %204 : vector<256x128xf32> to vector<1x256x128xf32>
    tpu.vector_store %arg7[%c0_97, %c0_98, %c0_99], %207 {strides = array<i32>} : memref<1x256x128xf32, #tpu.memory_space<vmem>>, vector<1x256x128xf32>,
    return
  }
  func.func @transform_0(%arg0: i32) -> (i32, i32, i32) {
    %c0_i32 = arith.constant 0 : i32
    %c0_i32_0 = arith.constant 0 : i32
    %c0_i32_1 = arith.constant 0 : i32
    return %arg0, %c0_i32, %c0_i32_0 : i32, i32, i32
  }
  func.func @transform_1(%arg0: i32) -> (i32, i32, i32) {
    %c0_i32 = arith.constant 0 : i32
    %c0_i32_0 = arith.constant 0 : i32
    %c0_i32_1 = arith.constant 0 : i32
    %c0_i32_2 = arith.constant 0 : i32
    return %c0_i32, %c0_i32_0, %c0_i32_1 : i32, i32, i32
  }
  func.func @transform_2(%arg0: i32) -> (i32, i32, i32) {
    %c0_i32 = arith.constant 0 : i32
    %c0_i32_0 = arith.constant 0 : i32
    %c0_i32_1 = arith.constant 0 : i32
    %c0_i32_2 = arith.constant 0 : i32
    return %c0_i32, %c0_i32_0, %c0_i32_1 : i32, i32, i32
  }
  func.func @transform_3(%arg0: i32) -> (i32, i32, i32) {
    %c0_i32 = arith.constant 0 : i32
    %c0_i32_0 = arith.constant 0 : i32
    %c0_i32_1 = arith.constant 0 : i32
    %c0_i32_2 = arith.constant 0 : i32
    return %c0_i32, %c0_i32_0, %c0_i32_1 : i32, i32, i32
  }
  func.func @transform_4(%arg0: i32) -> (i32, i32, i32) {
    %c0_i32 = arith.constant 0 : i32
    %c0_i32_0 = arith.constant 0 : i32
    %c0_i32_1 = arith.constant 0 : i32
    %c0_i32_2 = arith.constant 0 : i32
    return %c0_i32, %c0_i32_0, %c0_i32_1 : i32, i32, i32
  }
  func.func @transform_5(%arg0: i32) -> (i32, i32, i32) {
    %c0_i32 = arith.constant 0 : i32
    %c0_i32_0 = arith.constant 0 : i32
    %c0_i32_1 = arith.constant 0 : i32
    %c0_i32_2 = arith.constant 0 : i32
    return %c0_i32, %c0_i32_0, %c0_i32_1 : i32, i32, i32
  }
  func.func @transform_6(%arg0: i32) -> (i32, i32, i32) {
    %c0_i32 = arith.constant 0 : i32
    %c0_i32_0 = arith.constant 0 : i32
    %c0_i32_1 = arith.constant 0 : i32
    return %arg0, %c0_i32, %c0_i32_0 : i32, i32, i32
  }
}

</mosaic_0001>

<llo_original>
// kernel: tile.24
$region0: #{tile.24}
  %s0 = inlined_call_operand.vmem [shape: f32[3,9,4,32], index: 0, kind: input, shape index: {}]
  %s1 = inlined_call_operand.vmem [shape: f32[3,9,128], index: 1, kind: output, shape index: {}]
  $region1: #{tile.24} parent=0
    #allocation0 [shape = 'u8[36864]{0}', space=vmem, size = 0x9000, scoped, tag = 'scoped mem for output reshape']
    #allocation1 [shape = 'u8[110592]{0}', space=vmem, size = 0x1b000, scoped, tag = 'scoped mem for input reshape']
    %s3 = sshllo.u32 0, 4
    %s4 = smul.addr 4, 26
    %s5 = scalar_lea.vmem %s0, %s4
    %v6 = vld [vmem:[%s5] sm:%s3]
    %s7 = scalar_lea.vmem [#allocation1], 208
    %8 = vst [vmem:[%s7] sm:%s3] %v6
    %s9 = smul.addr 4, 25
    %s10 = scalar_lea.vmem %s0, %s9
    %v11 = vld [vmem:[%s10] sm:%s3]
    %s12 = scalar_lea.vmem [#allocation1], 200
    %13 = vst [vmem:[%s12] sm:%s3] %v11
    %s14 = smul.addr 4, 24
    %s15 = scalar_lea.vmem %s0, %s14
    %v16 = vld [vmem:[%s15] sm:%s3]
    %s17 = scalar_lea.vmem [#allocation1], 192
    %18 = vst [vmem:[%s17] sm:%s3] %v16
    %s19 = smul.addr 4, 23
    %s20 = scalar_lea.vmem %s0, %s19
    %v21 = vld [vmem:[%s20] sm:%s3]
    %s22 = scalar_lea.vmem [#allocation1], 184
    %23 = vst [vmem:[%s22] sm:%s3] %v21
    %s24 = smul.addr 4, 22
    %s25 = scalar_lea.vmem %s0, %s24
    %v26 = vld [vmem:[%s25] sm:%s3]
    %s27 = scalar_lea.vmem [#allocation1], 176
    %28 = vst [vmem:[%s27] sm:%s3] %v26
    %s29 = smul.addr 4, 21
    %s30 = scalar_lea.vmem %s0, %s29
    %v31 = vld [vmem:[%s30] sm:%s3]
    %s32 = scalar_lea.vmem [#allocation1], 168
    %33 = vst [vmem:[%s32] sm:%s3] %v31
    %s34 = smul.addr 4, 20
    %s35 = scalar_lea.vmem %s0, %s34
    %v36 = vld [vmem:[%s35] sm:%s3]
    %s37 = scalar_lea.vmem [#allocation1], 160
    %38 = vst [vmem:[%s37] sm:%s3] %v36
    %s39 = smul.addr 4, 19
    %s40 = scalar_lea.vmem %s0, %s39
    %v41 = vld [vmem:[%s40] sm:%s3]
    %s42 = scalar_lea.vmem [#allocation1], 152
    %43 = vst [vmem:[%s42] sm:%s3] %v41
    %s44 = smul.addr 4, 18
    %s45 = scalar_lea.vmem %s0, %s44
    %v46 = vld [vmem:[%s45] sm:%s3]
    %s47 = scalar_lea.vmem [#allocation1], 144
    %48 = vst [vmem:[%s47] sm:%s3] %v46
    %s49 = smul.addr 4, 17
    %s50 = scalar_lea.vmem %s0, %s49
    %v51 = vld [vmem:[%s50] sm:%s3]
    %s52 = scalar_lea.vmem [#allocation1], 136
    %53 = vst [vmem:[%s52] sm:%s3] %v51
    %s54 = smul.addr 4, 16
    %s55 = scalar_lea.vmem %s0, %s54
    %v56 = vld [vmem:[%s55] sm:%s3]
    %s57 = scalar_lea.vmem [#allocation1], 128
    %58 = vst [vmem:[%s57] sm:%s3] %v56
    %s59 = smul.addr 4, 15
    %s60 = scalar_lea.vmem %s0, %s59
    %v61 = vld [vmem:[%s60] sm:%s3]
    %s62 = scalar_lea.vmem [#allocation1], 120
    %63 = vst [vmem:[%s62] sm:%s3] %v61
    %s64 = smul.addr 4, 14
    %s65 = scalar_lea.vmem %s0, %s64
    %v66 = vld [vmem:[%s65] sm:%s3]
    %s67 = scalar_lea.vmem [#allocation1], 112
    %68 = vst [vmem:[%s67] sm:%s3] %v66
    %s69 = smul.addr 4, 13
    %s70 = scalar_lea.vmem %s0, %s69
    %v71 = vld [vmem:[%s70] sm:%s3]
    %s72 = scalar_lea.vmem [#allocation1], 104
    %73 = vst [vmem:[%s72] sm:%s3] %v71
    %s74 = smul.addr 4, 12
    %s75 = scalar_lea.vmem %s0, %s74
    %v76 = vld [vmem:[%s75] sm:%s3]
    %s77 = scalar_lea.vmem [#allocation1], 96
    %78 = vst [vmem:[%s77] sm:%s3] %v76
    %s79 = smul.addr 4, 11
    %s80 = scalar_lea.vmem %s0, %s79
    %v81 = vld [vmem:[%s80] sm:%s3]
    %s82 = scalar_lea.vmem [#allocation1], 88
    %83 = vst [vmem:[%s82] sm:%s3] %v81
    %s84 = smul.addr 4, 10
    %s85 = scalar_lea.vmem %s0, %s84
    %v86 = vld [vmem:[%s85] sm:%s3]
    %s87 = scalar_lea.vmem [#allocation1], 80
    %88 = vst [vmem:[%s87] sm:%s3] %v86
    %s89 = smul.addr 4, 9
    %s90 = scalar_lea.vmem %s0, %s89
    %v91 = vld [vmem:[%s90] sm:%s3]
    %s92 = scalar_lea.vmem [#allocation1], 72
    %93 = vst [vmem:[%s92] sm:%s3] %v91
    %s94 = smul.addr 4, 8
    %s95 = scalar_lea.vmem %s0, %s94
    %v96 = vld [vmem:[%s95] sm:%s3]
    %s97 = scalar_lea.vmem [#allocation1], 64
    %98 = vst [vmem:[%s97] sm:%s3] %v96
    %s99 = smul.addr 4, 7
    %s100 = scalar_lea.vmem %s0, %s99
    %v101 = vld [vmem:[%s100] sm:%s3]
    %s102 = scalar_lea.vmem [#allocation1], 56
    %103 = vst [vmem:[%s102] sm:%s3] %v101
    %s104 = smul.addr 4, 6
    %s105 = scalar_lea.vmem %s0, %s104
    %v106 = vld [vmem:[%s105] sm:%s3]
    %s107 = scalar_lea.vmem [#allocation1], 48
    %108 = vst [vmem:[%s107] sm:%s3] %v106
    %s109 = smul.addr 4, 5
    %s110 = scalar_lea.vmem %s0, %s109
    %v111 = vld [vmem:[%s110] sm:%s3]
    %s112 = scalar_lea.vmem [#allocation1], 40
    %113 = vst [vmem:[%s112] sm:%s3] %v111
    %s114 = smul.addr 4, 4
    %s115 = scalar_lea.vmem %s0, %s114
    %v116 = vld [vmem:[%s115] sm:%s3]
    %s117 = scalar_lea.vmem [#allocation1], 32
    %118 = vst [vmem:[%s117] sm:%s3] %v116
    %s119 = smul.addr 4, 3
    %s120 = scalar_lea.vmem %s0, %s119
    %v121 = vld [vmem:[%s120] sm:%s3]
    %s122 = scalar_lea.vmem [#allocation1], 24
    %123 = vst [vmem:[%s122] sm:%s3] %v121
    %s124 = smul.addr 4, 2
    %s125 = scalar_lea.vmem %s0, %s124
    %v126 = vld [vmem:[%s125] sm:%s3]
    %s127 = scalar_lea.vmem [#allocation1], 16
    %128 = vst [vmem:[%s127] sm:%s3] %v126
    %s129 = scalar_lea.vmem %s0, 4
    %v130 = vld [vmem:[%s129] sm:%s3]
    %s131 = scalar_lea.vmem [#allocation1], 8
    %132 = vst [vmem:[%s131] sm:%s3] %v130
    %v133 = vld [vmem:[%s0] sm:%s3]
    %134 = vst [vmem:[#allocation1] sm:%s3] %v133
    %v135 = vld [vmem:[#allocation1] ss:$8 sm:$0xf]
    %v136 = vld [vmem:[#allocation1] ss:$8 sm:$0xf0]
    %vm137 = vcmask 1047556
    %v138 = vsel %vm137, %v136, %v135
    %vm139 = vcmask 261120
    %140 = vst.msk [vmem:[#allocation0] sm:$0x7] %vm139, %v138
    %s141 = scalar_lea.vmem [#allocation0], 5
    %142 = vst.msk [vmem:[%s141] sm:$0x38] %vm139, %v138
    %s143 = scalar_lea.vmem [#allocation0], 10
    %144 = vst.msk [vmem:[%s143] sm:$0xc0] %vm139, %v138
    %s145 = scalar_lea.vmem [#allocation1], 64
    %v146 = vld [vmem:[%s145] ss:$8 sm:$0xf]
    %s147 = scalar_lea.vmem [#allocation1], 64
    %v148 = vld [vmem:[%s147] ss:$8 sm:$0xf0]
    %vm149 = vcmask 1047556
    %v150 = vsel %vm149, %v148, %v146
    %vm151 = vcmask 261120
    %s152 = scalar_lea.vmem [#allocation0], 18
    %153 = vst.msk [vmem:[%s152] ss:$6 sm:$0x3] %vm151, %v150
    %s154 = scalar_lea.vmem [#allocation0], 23
    %155 = vst.msk [vmem:[%s154] sm:$0xc] %vm151, %v150
    %s156 = scalar_lea.vmem [#allocation0], 28
    %157 = vst.msk [vmem:[%s156] sm:$0x70] %vm151, %v150
    %s158 = scalar_lea.vmem [#allocation0], 33
    %159 = vst.msk [vmem:[%s158] sm:$0x80] %vm151, %v150
    %s160 = scalar_lea.vmem [#allocation1], 128
    %v161 = vld [vmem:[%s160] ss:$8 sm:$0xf]
    %s162 = scalar_lea.vmem [#allocation1], 128
    %v163 = vld [vmem:[%s162] ss:$8 sm:$0xf0]
    %vm164 = vcmask 1047556
    %v165 = vsel %vm164, %v163, %v161
    %vm166 = vcmask 261120
    %s167 = scalar_lea.vmem [#allocation0], 41
    %168 = vst.msk [vmem:[%s167] sm:$0x3] %vm166, %v165
    %s169 = scalar_lea.vmem [#allocation0], 46
    %170 = vst.msk [vmem:[%s169] sm:$0x1c] %vm166, %v165
    %s171 = scalar_lea.vmem [#allocation0], 51
    %172 = vst.msk [vmem:[%s171] sm:$0xe0] %vm166, %v165
    %s173 = scalar_lea.vmem [#allocation1], 192
    %v174 = vld [vmem:[%s173] ss:$8 sm:$0x7]
    %vm175 = vcmask 261120
    %s176 = scalar_lea.vmem [#allocation0], 64
    %177 = vst.msk [vmem:[%s176] sm:$0x7] %vm175, %v174
    %s178 = scalar_lea.vmem [#allocation1], 3
    %v179 = vld [vmem:[%s178] ss:$8 sm:$0xf]
    %s180 = scalar_lea.vmem [#allocation1], 3
    %v181 = vld [vmem:[%s180] ss:$8 sm:$0xf0]
    %vm182 = vcmask 1047556
    %v183 = vsel %vm182, %v181, %v179
    %184 = vrot.lane.b32.xlu0 %v183, 96
    %v185 = vpop.permute.xlu0 %184
    %vm186 = vcmask 1048320
    %187 = vst.msk [vmem:[#allocation0] sm:$0x7] %vm186, %v185
    %s188 = scalar_lea.vmem [#allocation0], 5
    %189 = vst.msk [vmem:[%s188] sm:$0x38] %vm186, %v185
    %s190 = scalar_lea.vmem [#allocation0], 10
    %191 = vst.msk [vmem:[%s190] sm:$0xc0] %vm186, %v185
    %s192 = scalar_lea.vmem [#allocation1], 99
    %v193 = vld [vmem:[%s192] ss:$8 sm:$0xf]
    %s194 = scalar_lea.vmem [#allocation1], 99
    %v195 = vld [vmem:[%s194] ss:$8 sm:$0xf0]
    %vm196 = vcmask 1047556
    %v197 = vsel %vm196, %v195, %v193
    %198 = vrot.lane.b32.xlu0 %v197, 96
    %v199 = vpop.permute.xlu0 %198
    %vm200 = vcmask 1048320
    %s201 = scalar_lea.vmem [#allocation0], 32
    %202 = vst.msk [vmem:[%s201] sm:$0x7] %vm200, %v199
    %s203 = scalar_lea.vmem [#allocation0], 37
    %204 = vst.msk [vmem:[%s203] sm:$0x38] %vm200, %v199
    %s205 = scalar_lea.vmem [#allocation0], 42
    %206 = vst.msk [vmem:[%s205] sm:$0xc0] %vm200, %v199
    %s207 = scalar_lea.vmem [#allocation1], 195
    %v208 = vld [vmem:[%s207] ss:$8 sm:$0x7]
    %s209 = scalar_lea.vmem [#allocation1], 43
    %v210 = vld [vmem:[%s209] ss:$8 sm:$0x78]
    %vm211 = vcmask 1046531
    %v212 = vsel %vm211, %v210, %v208
    %s213 = scalar_lea.vmem [#allocation1], 156
    %v214 = vld [vmem:[%s213] sm:$0x80]
    %vm215 = vcmask 1047559
    %v216 = vsel %vm215, %v214, %v212
    %217 = vrot.lane.b32.xlu0 %v216, 96
    %v218 = vpop.permute.xlu0 %217
    %vm219 = vcmask 1048320
    %s220 = scalar_lea.vmem [#allocation0], 64
    %221 = vst.msk [vmem:[%s220] sm:$0x7] %vm219, %v218
    %222 = vst.msk [vmem:[#allocation0] ss:$6 sm:$0x18] %vm219, %v218
    %s223 = scalar_lea.vmem [#allocation0], 20
    %224 = vst.msk [vmem:[%s223] sm:$0x60] %vm219, %v218
    %s225 = scalar_lea.vmem [#allocation0], 43
    %226 = vst.msk [vmem:[%s225] sm:$0x80] %vm219, %v218
    %s227 = scalar_lea.vmem [#allocation1], 171
    %v228 = vld [vmem:[%s227] ss:$8 sm:$0x7]
    %229 = vrot.lane.b32.xlu0 %v228, 96
    %v230 = vpop.permute.xlu0 %229
    %vm231 = vcmask 1048320
    %s232 = scalar_lea.vmem [#allocation0], 56
    %233 = vst.msk [vmem:[%s232] sm:$0x7] %vm231, %v230
    %s234 = scalar_lea.vmem [#allocation1], 2
    %v235 = vld [vmem:[%s234] ss:$8 sm:$0xf]
    %s236 = scalar_lea.vmem [#allocation1], 2
    %v237 = vld [vmem:[%s236] ss:$8 sm:$0xf0]
    %vm238 = vcmask 1047556
    %v239 = vsel %vm238, %v237, %v235
    %240 = vrot.lane.b32.xlu0 %v239, 64
    %v241 = vpop.permute.xlu0 %240
    %vm242 = vcmask 785920
    %243 = vst.msk [vmem:[#allocation0] sm:$0x7] %vm242, %v241
    %s244 = scalar_lea.vmem [#allocation0], 5
    %245 = vst.msk [vmem:[%s244] sm:$0x38] %vm242, %v241
    %s246 = scalar_lea.vmem [#allocation0], 10
    %247 = vst.msk [vmem:[%s246] sm:$0xc0] %vm242, %v241
    %s248 = scalar_lea.vmem [#allocation1], 98
    %v249 = vld [vmem:[%s248] ss:$8 sm:$0xf]
    %s250 = scalar_lea.vmem [#allocation1], 98
    %v251 = vld [vmem:[%s250] ss:$8 sm:$0xf0]
    %vm252 = vcmask 1047556
    %v253 = vsel %vm252, %v251, %v249
    %254 = vrot.lane.b32.xlu0 %v253, 64
    %v255 = vpop.permute.xlu0 %254
    %vm256 = vcmask 785920
    %s257 = scalar_lea.vmem [#allocation0], 32
    %258 = vst.msk [vmem:[%s257] sm:$0x7] %vm256, %v255
    %s259 = scalar_lea.vmem [#allocation0], 37
    %260 = vst.msk [vmem:[%s259] sm:$0x38] %vm256, %v255
    %s261 = scalar_lea.vmem [#allocation0], 42
    %262 = vst.msk [vmem:[%s261] sm:$0xc0] %vm256, %v255
    %s263 = scalar_lea.vmem [#allocation1], 194
    %v264 = vld [vmem:[%s263] ss:$8 sm:$0x7]
    %s265 = scalar_lea.vmem [#allocation1], 42
    %v266 = vld [vmem:[%s265] ss:$8 sm:$0x78]
    %vm267 = vcmask 1046531
    %v268 = vsel %vm267, %v266, %v264
    %s269 = scalar_lea.vmem [#allocation1], 155
    %v270 = vld [vmem:[%s269] sm:$0x80]
    %vm271 = vcmask 1047559
    %v272 = vsel %vm271, %v270, %v268
    %273 = vrot.lane.b32.xlu0 %v272, 64
    %v274 = vpop.permute.xlu0 %273
    %vm275 = vcmask 785920
    %s276 = scalar_lea.vmem [#allocation0], 64
    %277 = vst.msk [vmem:[%s276] sm:$0x7] %vm275, %v274
    %278 = vst.msk [vmem:[#allocation0] ss:$6 sm:$0x18] %vm275, %v274
    %s279 = scalar_lea.vmem [#allocation0], 20
    %280 = vst.msk [vmem:[%s279] sm:$0x60] %vm275, %v274
    %s281 = scalar_lea.vmem [#allocation0], 43
    %282 = vst.msk [vmem:[%s281] sm:$0x80] %vm275, %v274
    %s283 = scalar_lea.vmem [#allocation1], 170
    %v284 = vld [vmem:[%s283] ss:$8 sm:$0x7]
    %285 = vrot.lane.b32.xlu0 %v284, 64
    %v286 = vpop.permute.xlu0 %285
    %vm287 = vcmask 785920
    %s288 = scalar_lea.vmem [#allocation0], 56
    %289 = vst.msk [vmem:[%s288] sm:$0x7] %vm287, %v286
    %s290 = scalar_lea.vmem [#allocation1], 1
    %v291 = vld [vmem:[%s290] ss:$8 sm:$0xf]
    %s292 = scalar_lea.vmem [#allocation1], 1
    %v293 = vld [vmem:[%s292] ss:$8 sm:$0xf0]
    %vm294 = vcmask 1047556
    %v295 = vsel %vm294, %v293, %v291
    %296 = vrot.lane.b32.xlu0 %v295, 32
    %v297 = vpop.permute.xlu0 %296
    %vm298 = vcmask 523520
    %299 = vst.msk [vmem:[#allocation0] sm:$0x7] %vm298, %v297
    %s300 = scalar_lea.vmem [#allocation0], 5
    %301 = vst.msk [vmem:[%s300] sm:$0x38] %vm298, %v297
    %s302 = scalar_lea.vmem [#allocation0], 10
    %303 = vst.msk [vmem:[%s302] sm:$0xc0] %vm298, %v297
    %s304 = scalar_lea.vmem [#allocation1], 97
    %v305 = vld [vmem:[%s304] ss:$8 sm:$0xf]
    %s306 = scalar_lea.vmem [#allocation1], 97
    %v307 = vld [vmem:[%s306] ss:$8 sm:$0xf0]
    %vm308 = vcmask 1047556
    %v309 = vsel %vm308, %v307, %v305
    %310 = vrot.lane.b32.xlu0 %v309, 32
    %v311 = vpop.permute.xlu0 %310
    %vm312 = vcmask 523520
    %s313 = scalar_lea.vmem [#allocation0], 32
    %314 = vst.msk [vmem:[%s313] sm:$0x7] %vm312, %v311
    %s315 = scalar_lea.vmem [#allocation0], 37
    %316 = vst.msk [vmem:[%s315] sm:$0x38] %vm312, %v311
    %s317 = scalar_lea.vmem [#allocation0], 42
    %318 = vst.msk [vmem:[%s317] sm:$0xc0] %vm312, %v311
    %s319 = scalar_lea.vmem [#allocation1], 193
    %v320 = vld [vmem:[%s319] ss:$8 sm:$0x7]
    %s321 = scalar_lea.vmem [#allocation1], 41
    %v322 = vld [vmem:[%s321] ss:$8 sm:$0x78]
    %vm323 = vcmask 1046531
    %v324 = vsel %vm323, %v322, %v320
    %s325 = scalar_lea.vmem [#allocation1], 154
    %v326 = vld [vmem:[%s325] sm:$0x80]
    %vm327 = vcmask 1047559
    %v328 = vsel %vm327, %v326, %v324
    %329 = vrot.lane.b32.xlu0 %v328, 32
    %v330 = vpop.permute.xlu0 %329
    %vm331 = vcmask 523520
    %s332 = scalar_lea.vmem [#allocation0], 64
    %333 = vst.msk [vmem:[%s332] sm:$0x7] %vm331, %v330
    %334 = vst.msk [vmem:[#allocation0] ss:$6 sm:$0x18] %vm331, %v330
    %s335 = scalar_lea.vmem [#allocation0], 20
    %336 = vst.msk [vmem:[%s335] sm:$0x60] %vm331, %v330
    %s337 = scalar_lea.vmem [#allocation0], 43
    %338 = vst.msk [vmem:[%s337] sm:$0x80] %vm331, %v330
    %s339 = scalar_lea.vmem [#allocation1], 169
    %v340 = vld [vmem:[%s339] ss:$8 sm:$0x7]
    %341 = vrot.lane.b32.xlu0 %v340, 32
    %v342 = vpop.permute.xlu0 %341
    %vm343 = vcmask 523520
    %s344 = scalar_lea.vmem [#allocation0], 56
    %345 = vst.msk [vmem:[%s344] sm:$0x7] %vm343, %v342
    %s347 = sshllo.u32 0, 4
    %v349 = vld [vmem:[#allocation0] sm:%s347]
    %s350 = sshllo.u32 0, 4
    %351 = vst [vmem:[%s1] sm:%s350] %v349
    %s352 = scalar_lea.vmem [#allocation0], 8
    %v353 = vld [vmem:[%s352] sm:%s347]
    %s354 = sshllo.u32 0, 4
    %s355 = scalar_lea.vmem %s1, 4
    %356 = vst [vmem:[%s355] sm:%s354] %v353
    %s357 = scalar_lea.vmem [#allocation0], 16
    %v358 = vld [vmem:[%s357] sm:%s347]
    %s359 = sshllo.u32 0, 4
    %s360 = smul.addr 4, 2
    %s361 = scalar_lea.vmem %s1, %s360
    %362 = vst [vmem:[%s361] sm:%s359] %v358
    %s363 = scalar_lea.vmem [#allocation0], 24
    %v364 = vld [vmem:[%s363] sm:%s347]
    %s365 = sshllo.u32 0, 4
    %s366 = smul.addr 4, 3
    %s367 = scalar_lea.vmem %s1, %s366
    %368 = vst [vmem:[%s367] sm:%s365] %v364
    %s369 = scalar_lea.vmem [#allocation0], 32
    %v370 = vld [vmem:[%s369] sm:%s347]
    %s371 = sshllo.u32 0, 4
    %s372 = smul.addr 4, 4
    %s373 = scalar_lea.vmem %s1, %s372
    %374 = vst [vmem:[%s373] sm:%s371] %v370
    %s375 = scalar_lea.vmem [#allocation0], 40
    %v376 = vld [vmem:[%s375] sm:%s347]
    %s377 = sshllo.u32 0, 4
    %s378 = smul.addr 4, 5
    %s379 = scalar_lea.vmem %s1, %s378
    %380 = vst [vmem:[%s379] sm:%s377] %v376
    %s381 = scalar_lea.vmem [#allocation0], 48
    %v382 = vld [vmem:[%s381] sm:%s347]
    %s383 = sshllo.u32 0, 4
    %s384 = smul.addr 4, 6
    %s385 = scalar_lea.vmem %s1, %s384
    %386 = vst [vmem:[%s385] sm:%s383] %v382
    %s387 = scalar_lea.vmem [#allocation0], 56
    %v388 = vld [vmem:[%s387] sm:%s347]
    %s389 = sshllo.u32 0, 4
    %s390 = smul.addr 4, 7
    %s391 = scalar_lea.vmem %s1, %s390
    %392 = vst [vmem:[%s391] sm:%s389] %v388
    %s393 = scalar_lea.vmem [#allocation0], 64
    %v394 = vld [vmem:[%s393] sm:%s347]
    %s395 = sshllo.u32 0, 4
    %s396 = smul.addr 4, 8
    %s397 = scalar_lea.vmem %s1, %s396
    %398 = vst [vmem:[%s397] sm:%s395] %v394

// kernel: mlp_layer_forward.1
$region0: #{mlp_layer_forward.1}
  #allocation0 [shape = 'u32[]', space=smem, size = 0x4, offset = 0x4, fixed_abs, tag = 'smem constant byte address 0x4 - core index']
  #allocation1 [shape = 'u32[144,128]{1,0:T(1,128)}', space=vmem, size = 0x12000, scoped, tag = 'internal scratch']
  #allocation2 [shape = 'f32[304,128]{1,0:T(8,128)}', space=vmem, size = 0x26000, scoped, tag = 'scratch operand']
  %s0 = inlined_call_operand.vmem [shape: f32[2,256,128], index: 0, kind: input, shape index: {}]
  %s1 = inlined_call_operand.vmem [shape: f32[3,128,128], index: 1, kind: input, shape index: {}]
  %s2 = inlined_call_operand.vmem [shape: f32[3,1,128], index: 2, kind: input, shape index: {}]
  %s3 = inlined_call_operand.vmem [shape: f32[3,9,128], index: 3, kind: input, shape index: {}]
  %s4 = inlined_call_operand.vmem [shape: f32[3,1,128], index: 4, kind: input, shape index: {}]
  %s5 = inlined_call_operand.vmem [shape: f32[2,256,128], index: 5, kind: input, shape index: {}]
  %s6 = inlined_call_operand.vmem [shape: f32[2,256,128], index: 6, kind: output, shape index: {}]
  %s7 = sld [smem:[#allocation0]]
  $region57: #{mlp_layer_forward.1} parent=0
    _
  %s9 = ssub.s32 1, %s7
  %s10 = scalar_select 0, %s9, %s7
  loop: start=0, step=1, limit=4
  $region2: #{mlp_layer_forward.1} parent=0 // loop_pre_header
    _
  $region3: #{mlp_layer_forward.1} parent=0 // loop_header
    %s12 = sphi 0, %s16
    %p13 = scmp.ge.s32.totalorder %s12, 4
    %s22 = sphi 0, %s24
    %s25 = sphi 0, %s22
    %s26 = sphi 0, %s25
    %s42 = sphi 0, %s26
    %s46 = sphi 0, %s46
    %s48 = sphi 0, %s46
    %s49 = sphi 0, %s48
    %s63 = sphi 0, %s49
    %s67 = sphi 0, %s67
    %s69 = sphi 0, %s67
    %s70 = sphi 0, %s69
    %s84 = sphi 0, %s70
    %s88 = sphi 0, %s88
    %s90 = sphi 0, %s88
    %s91 = sphi 0, %s90
    %s105 = sphi 0, %s91
    %s109 = sphi 0, %s109
    %s111 = sphi 0, %s109
    %s112 = sphi 0, %s111
    %s126 = sphi 0, %s112
    %s130 = sphi 0, %s130
    %s132 = sphi 0, %s130
    %s133 = sphi 0, %s132
    %s147 = sphi 0, %s133
    %s153 = sphi 0, %s155
    %s156 = sphi 0, %s153
    %s157 = sphi 0, %s156
    %s173 = sphi 0, %s157
  $region4: #{mlp_layer_forward.1} parent=0 // loop_header_branch
    %15 = sbr.rel (%p13) target = $region8
  $region5: #{mlp_layer_forward.1} parent=0 // loop_body
    %s17 = ssub.s32 %s12, 1
    %s18 = ssub.s32 %s12, 2
    %s19 = sadd.s32 %s12, 1
    %s20 = ssub.s32 %s12, %s19
    %p21 = scmp.eq.s32.totalorder %s20, 0
    %s23 = sadd.s32 %s22, 1
    %s24 = scalar_select %p21, %s22, %s23
    %p27 = pneg %p21
    %p28 = scmp.eq.s32.totalorder %s12, 1
    %p29 = por %p27, %p28
    %p30 = scmp.ne.s32.totalorder %s22, %s25
    %p31 = scmp.eq.s32.totalorder %s12, 0
    %p32 = por %p30, %p31
    %p33 = scmp.ne.s32.totalorder %s22, %s25
    %p34 = scmp.eq.s32.totalorder %s17, 1
    %p35 = por %p33, %p34
    %p36 = scmp.ne.s32.totalorder %s25, %s26
    %p37 = scmp.eq.s32.totalorder %s17, 0
    %p38 = por %p36, %p37
    %p39 = scmp.ne.s32.totalorder %s25, %s26
    %p40 = scmp.eq.s32.totalorder %s18, 1
    %p41 = por %p39, %p40
    %p43 = scmp.ne.s32.totalorder %s26, %s42
    %p44 = scmp.eq.s32.totalorder %s18, 0
    %p45 = por %p43, %p44
    %s47 = sadd.s32 %s46, 1
    %p50 = scmp.eq.s32.totalorder %s12, 1
    %p51 = scmp.ne.s32.totalorder %s46, %s48
    %p52 = scmp.eq.s32.totalorder %s12, 0
    %p53 = por %p51, %p52
    %p54 = scmp.ne.s32.totalorder %s46, %s48
    %p55 = scmp.eq.s32.totalorder %s17, 1
    %p56 = por %p54, %p55
    %p57 = scmp.ne.s32.totalorder %s48, %s49
    %p58 = scmp.eq.s32.totalorder %s17, 0
    %p59 = por %p57, %p58
    %p60 = scmp.ne.s32.totalorder %s48, %s49
    %p61 = scmp.eq.s32.totalorder %s18, 1
    %p62 = por %p60, %p61
    %p64 = scmp.ne.s32.totalorder %s49, %s63
    %p65 = scmp.eq.s32.totalorder %s18, 0
    %p66 = por %p64, %p65
    %s68 = sadd.s32 %s67, 1
    %p71 = scmp.eq.s32.totalorder %s12, 1
    %p72 = scmp.ne.s32.totalorder %s67, %s69
    %p73 = scmp.eq.s32.totalorder %s12, 0
    %p74 = por %p72, %p73
    %p75 = scmp.ne.s32.totalorder %s67, %s69
    %p76 = scmp.eq.s32.totalorder %s17, 1
    %p77 = por %p75, %p76
    %p78 = scmp.ne.s32.totalorder %s69, %s70
    %p79 = scmp.eq.s32.totalorder %s17, 0
    %p80 = por %p78, %p79
    %p81 = scmp.ne.s32.totalorder %s69, %s70
    %p82 = scmp.eq.s32.totalorder %s18, 1
    %p83 = por %p81, %p82
    %p85 = scmp.ne.s32.totalorder %s70, %s84
    %p86 = scmp.eq.s32.totalorder %s18, 0
    %p87 = por %p85, %p86
    %s89 = sadd.s32 %s88, 1
    %p92 = scmp.eq.s32.totalorder %s12, 1
    %p93 = scmp.ne.s32.totalorder %s88, %s90
    %p94 = scmp.eq.s32.totalorder %s12, 0
    %p95 = por %p93, %p94
    %p96 = scmp.ne.s32.totalorder %s88, %s90
    %p97 = scmp.eq.s32.totalorder %s17, 1
    %p98 = por %p96, %p97
    %p99 = scmp.ne.s32.totalorder %s90, %s91
    %p100 = scmp.eq.s32.totalorder %s17, 0
    %p101 = por %p99, %p100
    %p102 = scmp.ne.s32.totalorder %s90, %s91
    %p103 = scmp.eq.s32.totalorder %s18, 1
    %p104 = por %p102, %p103
    %p106 = scmp.ne.s32.totalorder %s91, %s105
    %p107 = scmp.eq.s32.totalorder %s18, 0
    %p108 = por %p106, %p107
    %s110 = sadd.s32 %s109, 1
    %p113 = scmp.eq.s32.totalorder %s12, 1
    %p114 = scmp.ne.s32.totalorder %s109, %s111
    %p115 = scmp.eq.s32.totalorder %s12, 0
    %p116 = por %p114, %p115
    %p117 = scmp.ne.s32.totalorder %s109, %s111
    %p118 = scmp.eq.s32.totalorder %s17, 1
    %p119 = por %p117, %p118
    %p120 = scmp.ne.s32.totalorder %s111, %s112
    %p121 = scmp.eq.s32.totalorder %s17, 0
    %p122 = por %p120, %p121
    %p123 = scmp.ne.s32.totalorder %s111, %s112
    %p124 = scmp.eq.s32.totalorder %s18, 1
    %p125 = por %p123, %p124
    %p127 = scmp.ne.s32.totalorder %s112, %s126
    %p128 = scmp.eq.s32.totalorder %s18, 0
    %p129 = por %p127, %p128
    %s131 = sadd.s32 %s130, 1
    %p134 = scmp.eq.s32.totalorder %s12, 1
    %p135 = scmp.ne.s32.totalorder %s130, %s132
    %p136 = scmp.eq.s32.totalorder %s12, 0
    %p137 = por %p135, %p136
    %p138 = scmp.ne.s32.totalorder %s130, %s132
    %p139 = scmp.eq.s32.totalorder %s17, 1
    %p140 = por %p138, %p139
    %p141 = scmp.ne.s32.totalorder %s132, %s133
    %p142 = scmp.eq.s32.totalorder %s17, 0
    %p143 = por %p141, %p142
    %p144 = scmp.ne.s32.totalorder %s132, %s133
    %p145 = scmp.eq.s32.totalorder %s18, 1
    %p146 = por %p144, %p145
    %p148 = scmp.ne.s32.totalorder %s133, %s147
    %p149 = scmp.eq.s32.totalorder %s18, 0
    %p150 = por %p148, %p149
    %s151 = ssub.s32 %s12, %s19
    %p152 = scmp.eq.s32.totalorder %s151, 0
    %s154 = sadd.s32 %s153, 1
    %s155 = scalar_select %p152, %s153, %s154
    %p158 = pneg %p152
    %p159 = scmp.eq.s32.totalorder %s12, 1
    %p160 = por %p158, %p159
    %p161 = scmp.ne.s32.totalorder %s153, %s156
    %p162 = scmp.eq.s32.totalorder %s12, 0
    %p163 = por %p161, %p162
    %p164 = scmp.ne.s32.totalorder %s153, %s156
    %p165 = scmp.eq.s32.totalorder %s17, 1
    %p166 = por %p164, %p165
    %p167 = scmp.ne.s32.totalorder %s156, %s157
    %p168 = scmp.eq.s32.totalorder %s17, 0
    %p169 = por %p167, %p168
    %p170 = scmp.ne.s32.totalorder %s156, %s157
    %p171 = scmp.eq.s32.totalorder %s18, 1
    %p172 = por %p170, %p171
    %p174 = scmp.ne.s32.totalorder %s157, %s173
    %p175 = scmp.eq.s32.totalorder %s18, 0
    %p176 = por %p174, %p175
    %p177 = scmp.le.s32.totalorder 1, %s12
    %p178 = scmp.lt.s32.totalorder %s12, 3
    %p179 = pnand %p177, %p178
    %p180 = pneg %p179
    // Predicated region
    $region9: #{mlp_layer_forward.1} parent=5 // pred_check
      _
    $region10: #{mlp_layer_forward.1} parent=5 // pred_check_branch
      %182 = sbr.rel (%p179) target = $region12
    $region11: #{mlp_layer_forward.1} parent=5 // pred_region
      %s183 = ssub.s32 %s12, 1
      // Predicated region
      $region13: #{mlp_layer_forward.1} parent=11 // pred_check
        %p184 = pneg %p59
      $region14: #{mlp_layer_forward.1} parent=11 // pred_check_branch
        %186 = sbr.rel (%p184) target = $region16
      $region15: #{mlp_layer_forward.1} parent=11 // pred_region
        _
      $region16: #{mlp_layer_forward.1} parent=11 // pred_fallthru
        _
      // Predicated region
      $region17: #{mlp_layer_forward.1} parent=11 // pred_check
        %p187 = pneg %p80
      $region18: #{mlp_layer_forward.1} parent=11 // pred_check_branch
        %189 = sbr.rel (%p187) target = $region20
      $region19: #{mlp_layer_forward.1} parent=11 // pred_region
        _
      $region20: #{mlp_layer_forward.1} parent=11 // pred_fallthru
        _
      // Predicated region
      $region21: #{mlp_layer_forward.1} parent=11 // pred_check
        %p190 = pneg %p101
      $region22: #{mlp_layer_forward.1} parent=11 // pred_check_branch
        %192 = sbr.rel (%p190) target = $region24
      $region23: #{mlp_layer_forward.1} parent=11 // pred_region
        _
      $region24: #{mlp_layer_forward.1} parent=11 // pred_fallthru
        _
      // Predicated region
      $region25: #{mlp_layer_forward.1} parent=11 // pred_check
        %p193 = pneg %p122
      $region26: #{mlp_layer_forward.1} parent=11 // pred_check_branch
        %195 = sbr.rel (%p193) target = $region28
      $region27: #{mlp_layer_forward.1} parent=11 // pred_region
        _
      $region28: #{mlp_layer_forward.1} parent=11 // pred_fallthru
        _
      // Predicated region
      $region29: #{mlp_layer_forward.1} parent=11 // pred_check
        %p196 = pneg %p143
      $region30: #{mlp_layer_forward.1} parent=11 // pred_check_branch
        %198 = sbr.rel (%p196) target = $region32
      $region31: #{mlp_layer_forward.1} parent=11 // pred_region
        _
      $region32: #{mlp_layer_forward.1} parent=11 // pred_fallthru
        _
    $region12: #{mlp_layer_forward.1} parent=5 // pred_fallthru
      _
    %p199 = scmp.lt.s32.totalorder %s12, 2
    // Predicated region
    $region33: #{mlp_layer_forward.1} parent=5 // pred_check
      %p200 = pneg %p199
    $region34: #{mlp_layer_forward.1} parent=5 // pred_check_branch
      %202 = sbr.rel (%p200) target = $region36
    $region35: #{mlp_layer_forward.1} parent=5 // pred_region
      // Predicated region
      $region37: #{mlp_layer_forward.1} parent=35 // pred_check
        %p203 = pneg %p32
      $region38: #{mlp_layer_forward.1} parent=35 // pred_check_branch
        %205 = sbr.rel (%p203) target = $region40
      $region39: #{mlp_layer_forward.1} parent=35 // pred_region
        %p206 = scmp.lt.s32.totalorder %s12, 1
        %s207 = scalar_select %p206, %s12, 1
        %s208 = smul.addr %s207, 32
        %s209 = smul.addr %s208, 8
        %s210 = scalar_lea.vmem %s0, %s209
      $region40: #{mlp_layer_forward.1} parent=35 // pred_fallthru
        _
    $region36: #{mlp_layer_forward.1} parent=5 // pred_fallthru
      _
    %p211 = scmp.le.s32.totalorder 1, %s12
    %p212 = scmp.lt.s32.totalorder %s12, 3
    %p213 = pnand %p211, %p212
    %p214 = pneg %p213
    // Predicated region
    $region41: #{mlp_layer_forward.1} parent=5 // pred_check
      _
    $region42: #{mlp_layer_forward.1} parent=5 // pred_check_branch
      %216 = sbr.rel (%p213) target = $region44
    $region43: #{mlp_layer_forward.1} parent=5 // pred_region
      %s217 = ssub.s32 %s12, 1
      %p218 = scmp.lt.s32.totalorder %s17, 1
      %s219 = scalar_select %p218, %s17, 1
      %s220 = smul.addr %s219, 32
      %s221 = smul.addr %s220, 8
      %s222 = scalar_lea.vmem %s0, %s221
      %p223 = pneg %p38
      %p224 = pneg %p35
      %p225 = pneg %p59
      %p226 = pneg %p56
      %p227 = pneg %p80
      %p228 = pneg %p77
      %p229 = pneg %p101
      %p230 = pneg %p98
      %p231 = pneg %p122
      %p232 = pneg %p119
      %p233 = pneg %p143
      %p234 = pneg %p140
      %p235 = pneg %p169
      %p236 = pneg %p166
      %p237 = scmp.lt.s32.totalorder %s17, 1
      %s238 = scalar_select %p237, %s17, 1
      %s239 = smul.addr %s238, 32
      %s240 = smul.addr %s239, 8
      %s241 = scalar_lea.vmem %s6, %s240
      %p242 = scmp.lt.s32.totalorder %s17, 1
      %s243 = scalar_select %p242, %s17, 1
      %s244 = smul.addr %s243, 32
      %s245 = smul.addr %s244, 8
      %s246 = scalar_lea.vmem %s0, %s245
      %p247 = scmp.lt.s32.totalorder %s17, 1
      %s248 = scalar_select %p247, %s17, 1
      %s249 = smul.addr %s248, 32
      %s250 = smul.addr %s249, 8
      %s251 = scalar_lea.vmem %s6, %s250
      %252 = vst [vmem:[#allocation2] sm:$0xff] 0.0
      %253 = vst [vmem:[#allocation2 + $0x8] sm:$0xff] 0.0
      %254 = vst [vmem:[#allocation2 + $0x10] sm:$0xff] 0.0
      %255 = vst [vmem:[#allocation2 + $0x118] sm:$0xff] 0.0
      %256 = vst [vmem:[#allocation2 + $0x120] sm:$0xff] 0.0
      %257 = vst [vmem:[#allocation2 + $0x128] sm:$0xff] 0.0
      %v258 = vld [vmem:[%s5] sm:$0xff]
      %v259 = vld [vmem:[%s5 + $0x8] sm:$0xff]
      %v260 = vld [vmem:[%s5 + $0x10] sm:$0xff]
      %v261 = vld [vmem:[%s5 + $0x18] sm:$0xff]
      %v262 = vld [vmem:[%s5 + $0x20] sm:$0xff]
      %v263 = vld [vmem:[%s5 + $0x28] sm:$0xff]
      %v264 = vld [vmem:[%s5 + $0x30] sm:$0xff]
      %v265 = vld [vmem:[%s5 + $0x38] sm:$0xff]
      %v266 = vld [vmem:[%s5 + $0x40] sm:$0xff]
      %v267 = vld [vmem:[%s5 + $0x48] sm:$0xff]
      %v268 = vld [vmem:[%s5 + $0x50] sm:$0xff]
      %v269 = vld [vmem:[%s5 + $0x58] sm:$0xff]
      %v270 = vld [vmem:[%s5 + $0x60] sm:$0xff]
      %v271 = vld [vmem:[%s5 + $0x68] sm:$0xff]
      %v272 = vld [vmem:[%s5 + $0x70] sm:$0xff]
      %v273 = vld [vmem:[%s5 + $0x78] sm:$0xff]
      %v274 = vld [vmem:[%s5 + $0x80] sm:$0xff]
      %v275 = vld [vmem:[%s5 + $0x88] sm:$0xff]
      %v276 = vld [vmem:[%s5 + $0x90] sm:$0xff]
      %v277 = vld [vmem:[%s5 + $0x98] sm:$0xff]
      %v278 = vld [vmem:[%s5 + $0xa0] sm:$0xff]
      %v279 = vld [vmem:[%s5 + $0xa8] sm:$0xff]
      %v280 = vld [vmem:[%s5 + $0xb0] sm:$0xff]
      %v281 = vld [vmem:[%s5 + $0xb8] sm:$0xff]
      %v282 = vld [vmem:[%s5 + $0xc0] sm:$0xff]
      %v283 = vld [vmem:[%s5 + $0xc8] sm:$0xff]
      %v284 = vld [vmem:[%s5 + $0xd0] sm:$0xff]
      %v285 = vld [vmem:[%s5 + $0xd8] sm:$0xff]
      %v286 = vld [vmem:[%s5 + $0xe0] sm:$0xff]
      %v287 = vld [vmem:[%s5 + $0xe8] sm:$0xff]
      %v288 = vld [vmem:[%s5 + $0xf0] sm:$0xff]
      %v289 = vld [vmem:[%s5 + $0xf8] sm:$0xff]
      %s290 = scalar_lea.vmem %s5, 256
      %v291 = vld [vmem:[%s290] sm:$0xff]
      %v292 = vld [vmem:[%s290 + $0x8] sm:$0xff]
      %v293 = vld [vmem:[%s290 + $0x10] sm:$0xff]
      %v294 = vld [vmem:[%s290 + $0x18] sm:$0xff]
      %v295 = vld [vmem:[%s290 + $0x20] sm:$0xff]
      %v296 = vld [vmem:[%s290 + $0x28] sm:$0xff]
      %v297 = vld [vmem:[%s290 + $0x30] sm:$0xff]
      %v298 = vld [vmem:[%s290 + $0x38] sm:$0xff]
      %v299 = vld [vmem:[%s290 + $0x40] sm:$0xff]
      %v300 = vld [vmem:[%s290 + $0x48] sm:$0xff]
      %v301 = vld [vmem:[%s290 + $0x50] sm:$0xff]
      %v302 = vld [vmem:[%s290 + $0x58] sm:$0xff]
      %v303 = vld [vmem:[%s290 + $0x60] sm:$0xff]
      %v304 = vld [vmem:[%s290 + $0x68] sm:$0xff]
      %v305 = vld [vmem:[%s290 + $0x70] sm:$0xff]
      %v306 = vld [vmem:[%s290 + $0x78] sm:$0xff]
      %v307 = vld [vmem:[%s290 + $0x80] sm:$0xff]
      %v308 = vld [vmem:[%s290 + $0x88] sm:$0xff]
      %v309 = vld [vmem:[%s290 + $0x90] sm:$0xff]
      %v310 = vld [vmem:[%s290 + $0x98] sm:$0xff]
      %v311 = vld [vmem:[%s290 + $0xa0] sm:$0xff]
      %v312 = vld [vmem:[%s290 + $0xa8] sm:$0xff]
      %v313 = vld [vmem:[%s290 + $0xb0] sm:$0xff]
      %v314 = vld [vmem:[%s290 + $0xb8] sm:$0xff]
      %v315 = vld [vmem:[%s290 + $0xc0] sm:$0xff]
      %v316 = vld [vmem:[%s290 + $0xc8] sm:$0xff]
      %v317 = vld [vmem:[%s290 + $0xd0] sm:$0xff]
      %v318 = vld [vmem:[%s290 + $0xd8] sm:$0xff]
      %v319 = vld [vmem:[%s290 + $0xe0] sm:$0xff]
      %v320 = vld [vmem:[%s290 + $0xe8] sm:$0xff]
      %v321 = vld [vmem:[%s290 + $0xf0] sm:$0xff]
      %v322 = vld [vmem:[%s290 + $0xf8] sm:$0xff]
      %v323 = vld [vmem:[%s246] sm:$0xff]
      %v324 = vld [vmem:[%s246 + $0x8] sm:$0xff]
      %v325 = vld [vmem:[%s246 + $0x10] sm:$0xff]
      %v326 = vld [vmem:[%s246 + $0x18] sm:$0xff]
      %v327 = vld [vmem:[%s246 + $0x20] sm:$0xff]
      %v328 = vld [vmem:[%s246 + $0x28] sm:$0xff]
      %v329 = vld [vmem:[%s246 + $0x30] sm:$0xff]
      %v330 = vld [vmem:[%s246 + $0x38] sm:$0xff]
      %v331 = vld [vmem:[%s246 + $0x40] sm:$0xff]
      %v332 = vld [vmem:[%s246 + $0x48] sm:$0xff]
      %v333 = vld [vmem:[%s246 + $0x50] sm:$0xff]
      %v334 = vld [vmem:[%s246 + $0x58] sm:$0xff]
      %v335 = vld [vmem:[%s246 + $0x60] sm:$0xff]
      %v336 = vld [vmem:[%s246 + $0x68] sm:$0xff]
      %v337 = vld [vmem:[%s246 + $0x70] sm:$0xff]
      %v338 = vld [vmem:[%s246 + $0x78] sm:$0xff]
      %v339 = vld [vmem:[%s246 + $0x80] sm:$0xff]
      %v340 = vld [vmem:[%s246 + $0x88] sm:$0xff]
      %v341 = vld [vmem:[%s246 + $0x90] sm:$0xff]
      %v342 = vld [vmem:[%s246 + $0x98] sm:$0xff]
      %v343 = vld [vmem:[%s246 + $0xa0] sm:$0xff]
      %v344 = vld [vmem:[%s246 + $0xa8] sm:$0xff]
      %v345 = vld [vmem:[%s246 + $0xb0] sm:$0xff]
      %v346 = vld [vmem:[%s246 + $0xb8] sm:$0xff]
      %v347 = vld [vmem:[%s246 + $0xc0] sm:$0xff]
      %v348 = vld [vmem:[%s246 + $0xc8] sm:$0xff]
      %v349 = vld [vmem:[%s246 + $0xd0] sm:$0xff]
      %v350 = vld [vmem:[%s246 + $0xd8] sm:$0xff]
      %v351 = vld [vmem:[%s246 + $0xe0] sm:$0xff]
      %v352 = vld [vmem:[%s246 + $0xe8] sm:$0xff]
      %v353 = vld [vmem:[%s246 + $0xf0] sm:$0xff]
      %v354 = vld [vmem:[%s246 + $0xf8] sm:$0xff]
      %v355 = vld [vmem:[%s1] sm:$0xff]
      %v356 = vld [vmem:[%s1 + $0x8] sm:$0xff]
      %v357 = vld [vmem:[%s1 + $0x10] sm:$0xff]
      %v358 = vld [vmem:[%s1 + $0x18] sm:$0xff]
      %v359 = vld [vmem:[%s1 + $0x20] sm:$0xff]
      %v360 = vld [vmem:[%s1 + $0x28] sm:$0xff]
      %v361 = vld [vmem:[%s1 + $0x30] sm:$0xff]
      %v362 = vld [vmem:[%s1 + $0x38] sm:$0xff]
      %v363 = vld [vmem:[%s1 + $0x40] sm:$0xff]
      %v364 = vld [vmem:[%s1 + $0x48] sm:$0xff]
      %v365 = vld [vmem:[%s1 + $0x50] sm:$0xff]
      %v366 = vld [vmem:[%s1 + $0x58] sm:$0xff]
      %v367 = vld [vmem:[%s1 + $0x60] sm:$0xff]
      %v368 = vld [vmem:[%s1 + $0x68] sm:$0xff]
      %v369 = vld [vmem:[%s1 + $0x70] sm:$0xff]
      %v370 = vld [vmem:[%s1 + $0x78] sm:$0xff]
      %v371 = vld [vmem:[%s2] sm:$0x1]
      %v373 = vlaneseq
      %v374 = vshrl.u32 %v373, 7
      %v375 = vsub.s32 0, %v374
      %v376 = vrot.slane %v371, %v375
      %378 = vmatprep.subr.mxu0 0.0
      %v379 = vand.u32 %v355, 4294901760
      %380 = vmatpush1.msra.mxu0 %v379
      %381 = vmatprep.subr.mxu0 0.0
      %v382 = vand.u32 %v356, 4294901760
      %383 = vmatpush1.msra.mxu0 %v382
      %384 = vmatprep.subr.mxu0 0.0
      %v385 = vand.u32 %v357, 4294901760
      %386 = vmatpush1.msra.mxu0 %v385
      %387 = vmatprep.subr.mxu0 0.0
      %v388 = vand.u32 %v358, 4294901760
      %389 = vmatpush1.msra.mxu0 %v388
      %390 = vmatprep.subr.mxu0 0.0
      %v391 = vand.u32 %v359, 4294901760
      %392 = vmatpush1.msra.mxu0 %v391
      %393 = vmatprep.subr.mxu0 0.0
      %v394 = vand.u32 %v360, 4294901760
      %395 = vmatpush1.msra.mxu0 %v394
      %396 = vmatprep.subr.mxu0 0.0
      %v397 = vand.u32 %v361, 4294901760
      %398 = vmatpush1.msra.mxu0 %v397
      %399 = vmatprep.subr.mxu0 0.0
      %v400 = vand.u32 %v362, 4294901760
      %401 = vmatpush1.msra.mxu0 %v400
      %402 = vmatprep.subr.mxu0 0.0
      %v403 = vand.u32 %v363, 4294901760
      %404 = vmatpush1.msra.mxu0 %v403
      %405 = vmatprep.subr.mxu0 0.0
      %v406 = vand.u32 %v364, 4294901760
      %407 = vmatpush1.msra.mxu0 %v406
      %408 = vmatprep.subr.mxu0 0.0
      %v409 = vand.u32 %v365, 4294901760
      %410 = vmatpush1.msra.mxu0 %v409
      %411 = vmatprep.subr.mxu0 0.0
      %v412 = vand.u32 %v366, 4294901760
      %413 = vmatpush1.msra.mxu0 %v412
      %414 = vmatprep.subr.mxu0 0.0
      %v415 = vand.u32 %v367, 4294901760
      %416 = vmatpush1.msra.mxu0 %v415
      %417 = vmatprep.subr.mxu0 0.0
      %v418 = vand.u32 %v368, 4294901760
      %419 = vmatpush1.msra.mxu0 %v418
      %420 = vmatprep.subr.mxu0 0.0
      %v421 = vand.u32 %v369, 4294901760
      %422 = vmatpush1.msra.mxu0 %v421
      %423 = vmatprep.subr.mxu0 0.0
      %v424 = vand.u32 %v370, 4294901760
      %425 = vmatpush1.msra.mxu0 %v424
      %426 = vmatprep.subr.mxu0 0.0
      %427 = vmatpush1.msra.mxu0 0.0
      %428 = vmatprep.subr.mxu0 0.0
      %429 = vmatpush1.msra.mxu0 0.0
      %430 = vmatprep.subr.mxu0 0.0
      %431 = vmatpush1.msra.mxu0 0.0
      %432 = vmatprep.subr.mxu0 0.0
      %433 = vmatpush1.msra.mxu0 0.0
      %434 = vmatprep.subr.mxu0 0.0
      %435 = vmatpush1.msra.mxu0 0.0
      %436 = vmatprep.subr.mxu0 0.0
      %437 = vmatpush1.msra.mxu0 0.0
      %438 = vmatprep.subr.mxu0 0.0
      %439 = vmatpush1.msra.mxu0 0.0
      %440 = vmatprep.subr.mxu0 0.0
      %441 = vmatpush1.msra.mxu0 0.0
      %442 = vmatprep.subr.mxu0 0.0
      %443 = vmatpush1.msra.mxu0 0.0
      %444 = vmatprep.subr.mxu0 0.0
      %445 = vmatpush1.msra.mxu0 0.0
      %446 = vmatprep.subr.mxu0 0.0
      %447 = vmatpush1.msra.mxu0 0.0
      %448 = vmatprep.subr.mxu0 0.0
      %449 = vmatpush1.msra.mxu0 0.0
      %450 = vmatprep.subr.mxu0 0.0
      %451 = vmatpush1.msra.mxu0 0.0
      %452 = vmatprep.subr.mxu0 0.0
      %453 = vmatpush1.msra.mxu0 0.0
      %454 = vmatprep.subr.mxu0 0.0
      %455 = vmatpush1.msra.mxu0 0.0
      %456 = vmatprep.subr.mxu0 0.0
      %457 = vmatpush1.msra.mxu0 0.0
      %458 = vmatprep.mubr.f32.mxu0 0.0
      %v459 = vand.u32 %v323, 4294901760
      %v460 = vsub.f32 %v323, %v459
      %v461 = vand.u32 %v460, 4294901760
      %v462 = vsub.f32 %v460, %v461
      %v463 = vand.u32 %v462, 4294901760
      %464 = vmatmul.mubr.f32.gmra.mrb[0].mxu0 %v463
      %v465 = vpop.f32.mrb[0].mxu0
      %v466 = vadd.f32 %v376, %v465
      %v467 = vpop.f32.mrb[0].mxu0
      %468 = vmatprep.mubr.f32.mxu0 0.0
      %v469 = vand.u32 %v324, 4294901760
      %v470 = vsub.f32 %v324, %v469
      %v471 = vand.u32 %v470, 4294901760
      %v472 = vsub.f32 %v470, %v471
      %v473 = vand.u32 %v472, 4294901760
      %474 = vmatmul.mubr.f32.gmra.mrb[0].mxu0 %v473
      %v475 = vpop.f32.mrb[0].mxu0
      %v476 = vadd.f32 %v376, %v475
      %v477 = vpop.f32.mrb[0].mxu0
      %478 = vmatprep.mubr.f32.mxu0 0.0
      %v479 = vand.u32 %v325, 4294901760
      %v480 = vsub.f32 %v325, %v479
      %v481 = vand.u32 %v480, 4294901760
      %v482 = vsub.f32 %v480, %v481
      %v483 = vand.u32 %v482, 4294901760
      %484 = vmatmul.mubr.f32.gmra.mrb[0].mxu0 %v483
      %v485 = vpop.f32.mrb[0].mxu0
      %v486 = vadd.f32 %v376, %v485
      %v487 = vpop.f32.mrb[0].mxu0
      %488 = vmatprep.mubr.f32.mxu0 0.0
      %v489 = vand.u32 %v326, 4294901760
      %v490 = vsub.f32 %v326, %v489
      %v491 = vand.u32 %v490, 4294901760
      %v492 = vsub.f32 %v490, %v491
      %v493 = vand.u32 %v492, 4294901760
      %494 = vmatmul.mubr.f32.gmra.mrb[0].mxu0 %v493
      %v495 = vpop.f32.mrb[0].mxu0
      %v496 = vadd.f32 %v376, %v495
      %v497 = vpop.f32.mrb[0].mxu0
      %498 = vmatprep.mubr.f32.mxu0 0.0
      %v499 = vand.u32 %v327, 4294901760
      %v500 = vsub.f32 %v327, %v499
      %v501 = vand.u32 %v500, 4294901760
      %v502 = vsub.f32 %v500, %v501
      %v503 = vand.u32 %v502, 4294901760
      %504 = vmatmul.mubr.f32.gmra.mrb[0].mxu0 %v503
      %v505 = vpop.f32.mrb[0].mxu0
      %v506 = vadd.f32 %v376, %v505
      %v507 = vpop.f32.mrb[0].mxu0
      %508 = vmatprep.mubr.f32.mxu0 0.0
      %v509 = vand.u32 %v328, 4294901760
      %v510 = vsub.f32 %v328, %v509
      %v511 = vand.u32 %v510, 4294901760
      %v512 = vsub.f32 %v510, %v511
      %v513 = vand.u32 %v512, 4294901760
      %514 = vmatmul.mubr.f32.gmra.mrb[0].mxu0 %v513
      %v515 = vpop.f32.mrb[0].mxu0
      %v516 = vadd.f32 %v376, %v515
      %v517 = vpop.f32.mrb[0].mxu0
      %518 = vmatprep.mubr.f32.mxu0 0.0
      %v519 = vand.u32 %v329, 4294901760
      %v520 = vsub.f32 %v329, %v519
      %v521 = vand.u32 %v520, 4294901760
      %v522 = vsub.f32 %v520, %v521
      %v523 = vand.u32 %v522, 4294901760
      %524 = vmatmul.mubr.f32.gmra.mrb[0].mxu0 %v523
      %v525 = vpop.f32.mrb[0].mxu0
      %v526 = vadd.f32 %v376, %v525
      %v527 = vpop.f32.mrb[0].mxu0
      %528 = vmatprep.mubr.f32.mxu0 0.0
      %v529 = vand.u32 %v330, 4294901760
      %v530 = vsub.f32 %v330, %v529
      %v531 = vand.u32 %v530, 4294901760
      %v532 = vsub.f32 %v530, %v531
      %v533 = vand.u32 %v532, 4294901760
      %534 = vmatmul.mubr.f32.gmra.mrb[0].mxu0 %v533
      %v535 = vpop.f32.mrb[0].mxu0
      %v536 = vadd.f32 %v376, %v535
      %v537 = vpop.f32.mrb[0].mxu0
      %538 = vmatprep.mubr.f32.mxu0 0.0
      %v539 = vand.u32 %v331, 4294901760
      %v540 = vsub.f32 %v331, %v539
      %v541 = vand.u32 %v540, 4294901760
      %v542 = vsub.f32 %v540, %v541
      %v543 = vand.u32 %v542, 4294901760
      %544 = vmatmul.mubr.f32.gmra.mrb[0].mxu0 %v543
      %v545 = vpop.f32.mrb[0].mxu0
      %v546 = vadd.f32 %v376, %v545
      %v547 = vpop.f32.mrb[0].mxu0
      %548 = vmatprep.mubr.f32.mxu0 0.0
      %v549 = vand.u32 %v332, 4294901760
      %v550 = vsub.f32 %v332, %v549
      %v551 = vand.u32 %v550, 4294901760
      %v552 = vsub.f32 %v550, %v551
      %v553 = vand.u32 %v552, 4294901760
      %554 = vmatmul.mubr.f32.gmra.mrb[0].mxu0 %v553
      %v555 = vpop.f32.mrb[0].mxu0
      %v556 = vadd.f32 %v376, %v555
      %v557 = vpop.f32.mrb[0].mxu0
      %558 = vmatprep.mubr.f32.mxu0 0.0
      %v559 = vand.u32 %v333, 4294901760
      %v560 = vsub.f32 %v333, %v559
      %v561 = vand.u32 %v560, 4294901760
      %v562 = vsub.f32 %v560, %v561
      %v563 = vand.u32 %v562, 4294901760
      %564 = vmatmul.mubr.f32.gmra.mrb[0].mxu0 %v563
      %v565 = vpop.f32.mrb[0].mxu0
      %v566 = vadd.f32 %v376, %v565
      %v567 = vpop.f32.mrb[0].mxu0
      %568 = vmatprep.mubr.f32.mxu0 0.0
      %v569 = vand.u32 %v334, 4294901760
      %v570 = vsub.f32 %v334, %v569
      %v571 = vand.u32 %v570, 4294901760
      %v572 = vsub.f32 %v570, %v571
      %v573 = vand.u32 %v572, 4294901760
      %574 = vmatmul.mubr.f32.gmra.mrb[0].mxu0 %v573
      %v575 = vpop.f32.mrb[0].mxu0
      %v576 = vadd.f32 %v376, %v575
      %v577 = vpop.f32.mrb[0].mxu0
      %578 = vmatprep.mubr.f32.mxu0 0.0
      %v579 = vand.u32 %v335, 4294901760
      %v580 = vsub.f32 %v335, %v579
      %v581 = vand.u32 %v580, 4294901760
      %v582 = vsub.f32 %v580, %v581
      %v583 = vand.u32 %v582, 4294901760
      %584 = vmatmul.mubr.f32.gmra.mrb[0].mxu0 %v583
      %v585 = vpop.f32.mrb[0].mxu0
      %v586 = vadd.f32 %v376, %v585
      %v587 = vpop.f32.mrb[0].mxu0
      %588 = vmatprep.mubr.f32.mxu0 0.0
      %v589 = vand.u32 %v336, 4294901760
      %v590 = vsub.f32 %v336, %v589
      %v591 = vand.u32 %v590, 4294901760
      %v592 = vsub.f32 %v590, %v591
      %v593 = vand.u32 %v592, 4294901760
      %594 = vmatmul.mubr.f32.gmra.mrb[0].mxu0 %v593
      %v595 = vpop.f32.mrb[0].mxu0
      %v596 = vadd.f32 %v376, %v595
      %v597 = vpop.f32.mrb[0].mxu0
      %598 = vmatprep.mubr.f32.mxu0 0.0
      %v599 = vand.u32 %v337, 4294901760
      %v600 = vsub.f32 %v337, %v599
      %v601 = vand.u32 %v600, 4294901760
      %v602 = vsub.f32 %v600, %v601
      %v603 = vand.u32 %v602, 4294901760
      %604 = vmatmul.mubr.f32.gmra.mrb[0].mxu0 %v603
      %v605 = vpop.f32.mrb[0].mxu0
      %v606 = vadd.f32 %v376, %v605
      %v607 = vpop.f32.mrb[0].mxu0
      %608 = vmatprep.mubr.f32.mxu0 0.0
      %v609 = vand.u32 %v338, 4294901760
      %v610 = vsub.f32 %v338, %v609
      %v611 = vand.u32 %v610, 4294901760
      %v612 = vsub.f32 %v610, %v611
      %v613 = vand.u32 %v612, 4294901760
      %614 = vmatmul.mubr.f32.gmra.mrb[0].mxu0 %v613
      %v615 = vpop.f32.mrb[0].mxu0
      %v616 = vadd.f32 %v376, %v615
      %v617 = vpop.f32.mrb[0].mxu0
      %618 = vmatprep.mubr.f32.mxu0 0.0
      %v619 = vand.u32 %v339, 4294901760
      %v620 = vsub.f32 %v339, %v619
      %v621 = vand.u32 %v620, 4294901760
      %v622 = vsub.f32 %v620, %v621
      %v623 = vand.u32 %v622, 4294901760
      %624 = vmatmul.mubr.f32.gmra.mrb[0].mxu0 %v623
      %v625 = vpop.f32.mrb[0].mxu0
      %v626 = vadd.f32 %v376, %v625
      %v627 = vpop.f32.mrb[0].mxu0
      %628 = vmatprep.mubr.f32.mxu0 0.0
      %v629 = vand.u32 %v340, 4294901760
      %v630 = vsub.f32 %v340, %v629
      %v631 = vand.u32 %v630, 4294901760
      %v632 = vsub.f32 %v630, %v631
      %v633 = vand.u32 %v632, 4294901760
      %634 = vmatmul.mubr.f32.gmra.mrb[0].mxu0 %v633
      %v635 = vpop.f32.mrb[0].mxu0
      %v636 = vadd.f32 %v376, %v635
      %v637 = vpop.f32.mrb[0].mxu0
      %638 = vmatprep.mubr.f32.mxu0 0.0
      %v639 = vand.u32 %v341, 4294901760
      %v640 = vsub.f32 %v341, %v639
      %v641 = vand.u32 %v640, 4294901760
      %v642 = vsub.f32 %v640, %v641
      %v643 = vand.u32 %v642, 4294901760
      %644 = vmatmul.mubr.f32.gmra.mrb[0].mxu0 %v643
      %v645 = vpop.f32.mrb[0].mxu0
      %v646 = vadd.f32 %v376, %v645
      %v647 = vpop.f32.mrb[0].mxu0
      %648 = vmatprep.mubr.f32.mxu0 0.0
      %v649 = vand.u32 %v342, 4294901760
      %v650 = vsub.f32 %v342, %v649
      %v651 = vand.u32 %v650, 4294901760
      %v652 = vsub.f32 %v650, %v651
      %v653 = vand.u32 %v652, 4294901760
      %654 = vmatmul.mubr.f32.gmra.mrb[0].mxu0 %v653
      %v655 = vpop.f32.mrb[0].mxu0
      %v656 = vadd.f32 %v376, %v655
      %v657 = vpop.f32.mrb[0].mxu0
      %658 = vmatprep.mubr.f32.mxu0 0.0
      %v659 = vand.u32 %v343, 4294901760
      %v660 = vsub.f32 %v343, %v659
      %v661 = vand.u32 %v660, 4294901760
      %v662 = vsub.f32 %v660, %v661
      %v663 = vand.u32 %v662, 4294901760
      %664 = vmatmul.mubr.f32.gmra.mrb[0].mxu0 %v663
      %v665 = vpop.f32.mrb[0].mxu0
      %v666 = vadd.f32 %v376, %v665
      %v667 = vpop.f32.mrb[0].mxu0
      %668 = vmatprep.mubr.f32.mxu0 0.0
      %v669 = vand.u32 %v344, 4294901760
      %v670 = vsub.f32 %v344, %v669
      %v671 = vand.u32 %v670, 4294901760
      %v672 = vsub.f32 %v670, %v671
      %v673 = vand.u32 %v672, 4294901760
      %674 = vmatmul.mubr.f32.gmra.mrb[0].mxu0 %v673
      %v675 = vpop.f32.mrb[0].mxu0
      %v676 = vadd.f32 %v376, %v675
      %v677 = vpop.f32.mrb[0].mxu0
      %678 = vmatprep.mubr.f32.mxu0 0.0
      %v679 = vand.u32 %v345, 4294901760
      %v680 = vsub.f32 %v345, %v679
      %v681 = vand.u32 %v680, 4294901760
      %v682 = vsub.f32 %v680, %v681
      %v683 = vand.u32 %v682, 4294901760
      %684 = vmatmul.mubr.f32.gmra.mrb[0].mxu0 %v683
      %v685 = vpop.f32.mrb[0].mxu0
      %v686 = vadd.f32 %v376, %v685
      %v687 = vpop.f32.mrb[0].mxu0
      %688 = vmatprep.mubr.f32.mxu0 0.0
      %v689 = vand.u32 %v346, 4294901760
      %v690 = vsub.f32 %v346, %v689
      %v691 = vand.u32 %v690, 4294901760
      %v692 = vsub.f32 %v690, %v691
      %v693 = vand.u32 %v692, 4294901760
      %694 = vmatmul.mubr.f32.gmra.mrb[0].mxu0 %v693
      %v695 = vpop.f32.mrb[0].mxu0
      %v696 = vadd.f32 %v376, %v695
      %v697 = vpop.f32.mrb[0].mxu0
      %698 = vmatprep.mubr.f32.mxu0 0.0
      %v699 = vand.u32 %v347, 4294901760
      %v700 = vsub.f32 %v347, %v699
      %v701 = vand.u32 %v700, 4294901760
      %v702 = vsub.f32 %v700, %v701
      %v703 = vand.u32 %v702, 4294901760
      %704 = vmatmul.mubr.f32.gmra.mrb[0].mxu0 %v703
      %v705 = vpop.f32.mrb[0].mxu0
      %v706 = vadd.f32 %v376, %v705
      %v707 = vpop.f32.mrb[0].mxu0
      %708 = vmatprep.mubr.f32.mxu0 0.0
      %v709 = vand.u32 %v348, 4294901760
      %v710 = vsub.f32 %v348, %v709
      %v711 = vand.u32 %v710, 4294901760
      %v712 = vsub.f32 %v710, %v711
      %v713 = vand.u32 %v712, 4294901760
      %714 = vmatmul.mubr.f32.gmra.mrb[0].mxu0 %v713
      %v715 = vpop.f32.mrb[0].mxu0
      %v716 = vadd.f32 %v376, %v715
      %v717 = vpop.f32.mrb[0].mxu0
      %718 = vmatprep.mubr.f32.mxu0 0.0
      %v719 = vand.u32 %v349, 4294901760
      %v720 = vsub.f32 %v349, %v719
      %v721 = vand.u32 %v720, 4294901760
      %v722 = vsub.f32 %v720, %v721
      %v723 = vand.u32 %v722, 4294901760
      %724 = vmatmul.mubr.f32.gmra.mrb[0].mxu0 %v723
      %v725 = vpop.f32.mrb[0].mxu0
      %v726 = vadd.f32 %v376, %v725
      %v727 = vpop.f32.mrb[0].mxu0
      %728 = vmatprep.mubr.f32.mxu0 0.0
      %v729 = vand.u32 %v350, 4294901760
      %v730 = vsub.f32 %v350, %v729
      %v731 = vand.u32 %v730, 4294901760
      %v732 = vsub.f32 %v730, %v731
      %v733 = vand.u32 %v732, 4294901760
      %734 = vmatmul.mubr.f32.gmra.mrb[0].mxu0 %v733
      %v735 = vpop.f32.mrb[0].mxu0
      %v736 = vadd.f32 %v376, %v735
      %v737 = vpop.f32.mrb[0].mxu0
      %738 = vmatprep.mubr.f32.mxu0 0.0
      %v739 = vand.u32 %v351, 4294901760
      %v740 = vsub.f32 %v351, %v739
      %v741 = vand.u32 %v740, 4294901760
      %v742 = vsub.f32 %v740, %v741
      %v743 = vand.u32 %v742, 4294901760
      %744 = vmatmul.mubr.f32.gmra.mrb[0].mxu0 %v743
      %v745 = vpop.f32.mrb[0].mxu0
      %v746 = vadd.f32 %v376, %v745
      %v747 = vpop.f32.mrb[0].mxu0
      %748 = vmatprep.mubr.f32.mxu0 0.0
      %v749 = vand.u32 %v352, 4294901760
      %v750 = vsub.f32 %v352, %v749
      %v751 = vand.u32 %v750, 4294901760
      %v752 = vsub.f32 %v750, %v751
      %v753 = vand.u32 %v752, 4294901760
      %754 = vmatmul.mubr.f32.gmra.mrb[0].mxu0 %v753
      %v755 = vpop.f32.mrb[0].mxu0
      %v756 = vadd.f32 %v376, %v755
      %v757 = vpop.f32.mrb[0].mxu0
      %758 = vmatprep.mubr.f32.mxu0 0.0
      %v759 = vand.u32 %v353, 4294901760
      %v760 = vsub.f32 %v353, %v759
      %v761 = vand.u32 %v760, 4294901760
      %v762 = vsub.f32 %v760, %v761
      %v763 = vand.u32 %v762, 4294901760
      %764 = vmatmul.mubr.f32.gmra.mrb[0].mxu0 %v763
      %v765 = vpop.f32.mrb[0].mxu0
      %v766 = vadd.f32 %v376, %v765
      %v767 = vpop.f32.mrb[0].mxu0
      %768 = vmatprep.mubr.f32.mxu0 0.0
      %v769 = vand.u32 %v354, 4294901760
      %v770 = vsub.f32 %v354, %v769
      %v771 = vand.u32 %v770, 4294901760
      %v772 = vsub.f32 %v770, %v771
      %v773 = vand.u32 %v772, 4294901760
      %774 = vmatmul.mubr.f32.gmra.mrb[0].mxu0 %v773
      %v775 = vpop.f32.mrb[0].mxu0
      %v776 = vadd.f32 %v376, %v775
      %v777 = vpop.f32.mrb[0].mxu0
      %778 = vdwg.mxu0
      %779 = vmatprep.subr.mxu0 0.0
      %v780 = vand.u32 %v355, 4294901760
      %v781 = vsub.f32 %v355, %v780
      %v782 = vand.u32 %v781, 4294901760
      %v783 = vsub.f32 %v781, %v782
      %v784 = vand.u32 %v783, 4294901760
      %785 = vmatpush1.msra.mxu0 %v784
      %786 = vmatprep.subr.mxu0 0.0
      %v787 = vand.u32 %v356, 4294901760
      %v788 = vsub.f32 %v356, %v787
      %v789 = vand.u32 %v788, 4294901760
      %v790 = vsub.f32 %v788, %v789
      %v791 = vand.u32 %v790, 4294901760
      %792 = vmatpush1.msra.mxu0 %v791
      %793 = vmatprep.subr.mxu0 0.0
      %v794 = vand.u32 %v357, 4294901760
      %v795 = vsub.f32 %v357, %v794
      %v796 = vand.u32 %v795, 4294901760
      %v797 = vsub.f32 %v795, %v796
      %v798 = vand.u32 %v797, 4294901760
      %799 = vmatpush1.msra.mxu0 %v798
      %800 = vmatprep.subr.mxu0 0.0
      %v801 = vand.u32 %v358, 4294901760
      %v802 = vsub.f32 %v358, %v801
      %v803 = vand.u32 %v802, 4294901760
      %v804 = vsub.f32 %v802, %v803
      %v805 = vand.u32 %v804, 4294901760
      %806 = vmatpush1.msra.mxu0 %v805
      %807 = vmatprep.subr.mxu0 0.0
      %v808 = vand.u32 %v359, 4294901760
      %v809 = vsub.f32 %v359, %v808
      %v810 = vand.u32 %v809, 4294901760
      %v811 = vsub.f32 %v809, %v810
      %v812 = vand.u32 %v811, 4294901760
      %813 = vmatpush1.msra.mxu0 %v812
      %814 = vmatprep.subr.mxu0 0.0
      %v815 = vand.u32 %v360, 4294901760
      %v816 = vsub.f32 %v360, %v815
      %v817 = vand.u32 %v816, 4294901760
      %v818 = vsub.f32 %v816, %v817
      %v819 = vand.u32 %v818, 4294901760
      %820 = vmatpush1.msra.mxu0 %v819
      %821 = vmatprep.subr.mxu0 0.0
      %v822 = vand.u32 %v361, 4294901760
      %v823 = vsub.f32 %v361, %v822
      %v824 = vand.u32 %v823, 4294901760
      %v825 = vsub.f32 %v823, %v824
      %v826 = vand.u32 %v825, 4294901760
      %827 = vmatpush1.msra.mxu0 %v826
      %828 = vmatprep.subr.mxu0 0.0
      %v829 = vand.u32 %v362, 4294901760
      %v830 = vsub.f32 %v362, %v829
      %v831 = vand.u32 %v830, 4294901760
      %v832 = vsub.f32 %v830, %v831
      %v833 = vand.u32 %v832, 4294901760
      %834 = vmatpush1.msra.mxu0 %v833
      %835 = vmatprep.subr.mxu0 0.0
      %v836 = vand.u32 %v363, 4294901760
      %v837 = vsub.f32 %v363, %v836
      %v838 = vand.u32 %v837, 4294901760
      %v839 = vsub.f32 %v837, %v838
      %v840 = vand.u32 %v839, 4294901760
      %841 = vmatpush1.msra.mxu0 %v840
      %842 = vmatprep.subr.mxu0 0.0
      %v843 = vand.u32 %v364, 4294901760
      %v844 = vsub.f32 %v364, %v843
      %v845 = vand.u32 %v844, 4294901760
      %v846 = vsub.f32 %v844, %v845
      %v847 = vand.u32 %v846, 4294901760
      %848 = vmatpush1.msra.mxu0 %v847
      %849 = vmatprep.subr.mxu0 0.0
      %v850 = vand.u32 %v365, 4294901760
      %v851 = vsub.f32 %v365, %v850
      %v852 = vand.u32 %v851, 4294901760
      %v853 = vsub.f32 %v851, %v852
      %v854 = vand.u32 %v853, 4294901760
      %855 = vmatpush1.msra.mxu0 %v854
      %856 = vmatprep.subr.mxu0 0.0
      %v857 = vand.u32 %v366, 4294901760
      %v858 = vsub.f32 %v366, %v857
      %v859 = vand.u32 %v858, 4294901760
      %v860 = vsub.f32 %v858, %v859
      %v861 = vand.u32 %v860, 4294901760
      %862 = vmatpush1.msra.mxu0 %v861
      %863 = vmatprep.subr.mxu0 0.0
      %v864 = vand.u32 %v367, 4294901760
      %v865 = vsub.f32 %v367, %v864
      %v866 = vand.u32 %v865, 4294901760
      %v867 = vsub.f32 %v865, %v866
      %v868 = vand.u32 %v867, 4294901760
      %869 = vmatpush1.msra.mxu0 %v868
      %870 = vmatprep.subr.mxu0 0.0
      %v871 = vand.u32 %v368, 4294901760
      %v872 = vsub.f32 %v368, %v871
      %v873 = vand.u32 %v872, 4294901760
      %v874 = vsub.f32 %v872, %v873
      %v875 = vand.u32 %v874, 4294901760
      %876 = vmatpush1.msra.mxu0 %v875
      %877 = vmatprep.subr.mxu0 0.0
      %v878 = vand.u32 %v369, 4294901760
      %v879 = vsub.f32 %v369, %v878
      %v880 = vand.u32 %v879, 4294901760
      %v881 = vsub.f32 %v879, %v880
      %v882 = vand.u32 %v881, 4294901760
      %883 = vmatpush1.msra.mxu0 %v882
      %884 = vmatprep.subr.mxu0 0.0
      %v885 = vand.u32 %v370, 4294901760
      %v886 = vsub.f32 %v370, %v885
      %v887 = vand.u32 %v886, 4294901760
      %v888 = vsub.f32 %v886, %v887
      %v889 = vand.u32 %v888, 4294901760
      %890 = vmatpush1.msra.mxu0 %v889
      %891 = vmatprep.subr.mxu0 0.0
      %892 = vmatpush1.msra.mxu0 0.0
      %893 = vmatprep.subr.mxu0 0.0
      %894 = vmatpush1.msra.mxu0 0.0
      %895 = vmatprep.subr.mxu0 0.0
      %896 = vmatpush1.msra.mxu0 0.0
      %897 = vmatprep.subr.mxu0 0.0
      %898 = vmatpush1.msra.mxu0 0.0
      %899 = vmatprep.subr.mxu0 0.0
      %900 = vmatpush1.msra.mxu0 0.0
      %901 = vmatprep.subr.mxu0 0.0
      %902 = vmatpush1.msra.mxu0 0.0
      %903 = vmatprep.subr.mxu0 0.0
      %904 = vmatpush1.msra.mxu0 0.0
      %905 = vmatprep.subr.mxu0 0.0
      %906 = vmatpush1.msra.mxu0 0.0
      %907 = vmatprep.subr.mxu0 0.0
      %908 = vmatpush1.msra.mxu0 0.0
      %909 = vmatprep.subr.mxu0 0.0
      %910 = vmatpush1.msra.mxu0 0.0
      %911 = vmatprep.subr.mxu0 0.0
      %912 = vmatpush1.msra.mxu0 0.0
      %913 = vmatprep.subr.mxu0 0.0
      %914 = vmatpush1.msra.mxu0 0.0
      %915 = vmatprep.subr.mxu0 0.0
      %916 = vmatpush1.msra.mxu0 0.0
      %917 = vmatprep.subr.mxu0 0.0
      %918 = vmatpush1.msra.mxu0 0.0
      %919 = vmatprep.subr.mxu0 0.0
      %920 = vmatpush1.msra.mxu0 0.0
      %921 = vmatprep.subr.mxu0 0.0
      %922 = vmatpush1.msra.mxu0 0.0
      %923 = vmatprep.mubr.f32.mxu0 0.0
      %v924 = vand.u32 %v323, 4294901760
      %925 = vmatmul.mubr.f32.gmra.mrb[0].mxu0 %v924
      %v926 = vpop.f32.mrb[0].mxu0
      %v927 = vadd.f32 %v466, %v926
      %v928 = vpop.f32.mrb[0].mxu0
      %929 = vmatprep.mubr.f32.mxu0 0.0
      %v930 = vand.u32 %v324, 4294901760
      %931 = vmatmul.mubr.f32.gmra.mrb[0].mxu0 %v930
      %v932 = vpop.f32.mrb[0].mxu0
      %v933 = vadd.f32 %v476, %v932
      %v934 = vpop.f32.mrb[0].mxu0
      %935 = vmatprep.mubr.f32.mxu0 0.0
      %v936 = vand.u32 %v325, 4294901760
      %937 = vmatmul.mubr.f32.gmra.mrb[0].mxu0 %v936
      %v938 = vpop.f32.mrb[0].mxu0
      %v939 = vadd.f32 %v486, %v938
      %v940 = vpop.f32.mrb[0].mxu0
      %941 = vmatprep.mubr.f32.mxu0 0.0
      %v942 = vand.u32 %v326, 4294901760
      %943 = vmatmul.mubr.f32.gmra.mrb[0].mxu0 %v942
      %v944 = vpop.f32.mrb[0].mxu0
      %v945 = vadd.f32 %v496, %v944
      %v946 = vpop.f32.mrb[0].mxu0
      %947 = vmatprep.mubr.f32.mxu0 0.0
      %v948 = vand.u32 %v327, 4294901760
      %949 = vmatmul.mubr.f32.gmra.mrb[0].mxu0 %v948
      %v950 = vpop.f32.mrb[0].mxu0
      %v951 = vadd.f32 %v506, %v950
      %v952 = vpop.f32.mrb[0].mxu0
      %953 = vmatprep.mubr.f32.mxu0 0.0
      %v954 = vand.u32 %v328, 4294901760
      %955 = vmatmul.mubr.f32.gmra.mrb[0].mxu0 %v954
      %v956 = vpop.f32.mrb[0].mxu0
      %v957 = vadd.f32 %v516, %v956
      %v958 = vpop.f32.mrb[0].mxu0
      %959 = vmatprep.mubr.f32.mxu0 0.0
      %v960 = vand.u32 %v329, 4294901760
      %961 = vmatmul.mubr.f32.gmra.mrb[0].mxu0 %v960
      %v962 = vpop.f32.mrb[0].mxu0
      %v963 = vadd.f32 %v526, %v962
      %v964 = vpop.f32.mrb[0].mxu0
      %965 = vmatprep.mubr.f32.mxu0 0.0
      %v966 = vand.u32 %v330, 4294901760
      %967 = vmatmul.mubr.f32.gmra.mrb[0].mxu0 %v966
      %v968 = vpop.f32.mrb[0].mxu0
      %v969 = vadd.f32 %v536, %v968
      %v970 = vpop.f32.mrb[0].mxu0
      %971 = vmatprep.mubr.f32.mxu0 0.0
      %v972 = vand.u32 %v331, 4294901760
      %973 = vmatmul.mubr.f32.gmra.mrb[0].mxu0 %v972
      %v974 = vpop.f32.mrb[0].mxu0
      %v975 = vadd.f32 %v546, %v974
      %v976 = vpop.f32.mrb[0].mxu0
      %977 = vmatprep.mubr.f32.mxu0 0.0
      %v978 = vand.u32 %v332, 4294901760
      %979 = vmatmul.mubr.f32.gmra.mrb[0].mxu0 %v978
      %v980 = vpop.f32.mrb[0].mxu0
      %v981 = vadd.f32 %v556, %v980
      %v982 = vpop.f32.mrb[0].mxu0
      %983 = vmatprep.mubr.f32.mxu0 0.0
      %v984 = vand.u32 %v333, 4294901760
      %985 = vmatmul.mubr.f32.gmra.mrb[0].mxu0 %v984
      %v986 = vpop.f32.mrb[0].mxu0
      %v987 = vadd.f32 %v566, %v986
      %v988 = vpop.f32.mrb[0].mxu0
      %989 = vmatprep.mubr.f32.mxu0 0.0
      %v990 = vand.u32 %v334, 4294901760
      %991 = vmatmul.mubr.f32.gmra.mrb[0].mxu0 %v990
      %v992 = vpop.f32.mrb[0].mxu0
      %v993 = vadd.f32 %v576, %v992
      %v994 = vpop.f32.mrb[0].mxu0
      %995 = vmatprep.mubr.f32.mxu0 0.0
      %v996 = vand.u32 %v335, 4294901760
      %997 = vmatmul.mubr.f32.gmra.mrb[0].mxu0 %v996
      %v998 = vpop.f32.mrb[0].mxu0
      %v999 = vadd.f32 %v586, %v998
      %v1000 = vpop.f32.mrb[0].mxu0
      %1001 = vmatprep.mubr.f32.mxu0 0.0
      %v1002 = vand.u32 %v336, 4294901760
      %1003 = vmatmul.mubr.f32.gmra.mrb[0].mxu0 %v1002
      %v1004 = vpop.f32.mrb[0].mxu0
      %v1005 = vadd.f32 %v596, %v1004
      %v1006 = vpop.f32.mrb[0].mxu0
      %1007 = vmatprep.mubr.f32.mxu0 0.0
      %v1008 = vand.u32 %v337, 4294901760
      %1009 = vmatmul.mubr.f32.gmra.mrb[0].mxu0 %v1008
      %v1010 = vpop.f32.mrb[0].mxu0
      %v1011 = vadd.f32 %v606, %v1010
      %v1012 = vpop.f32.mrb[0].mxu0
      %1013 = vmatprep.mubr.f32.mxu0 0.0
      %v1014 = vand.u32 %v338, 4294901760
      %1015 = vmatmul.mubr.f32.gmra.mrb[0].mxu0 %v1014
      %v1016 = vpop.f32.mrb[0].mxu0
      %v1017 = vadd.f32 %v616, %v1016
      %v1018 = vpop.f32.mrb[0].mxu0
      %1019 = vmatprep.mubr.f32.mxu0 0.0
      %v1020 = vand.u32 %v339, 4294901760
      %1021 = vmatmul.mubr.f32.gmra.mrb[0].mxu0 %v1020
      %v1022 = vpop.f32.mrb[0].mxu0
      %v1023 = vadd.f32 %v626, %v1022
      %v1024 = vpop.f32.mrb[0].mxu0
      %1025 = vmatprep.mubr.f32.mxu0 0.0
      %v1026 = vand.u32 %v340, 4294901760
      %1027 = vmatmul.mubr.f32.gmra.mrb[0].mxu0 %v1026
      %v1028 = vpop.f32.mrb[0].mxu0
      %v1029 = vadd.f32 %v636, %v1028
      %v1030 = vpop.f32.mrb[0].mxu0
      %1031 = vmatprep.mubr.f32.mxu0 0.0
      %v1032 = vand.u32 %v341, 4294901760
      %1033 = vmatmul.mubr.f32.gmra.mrb[0].mxu0 %v1032
      %v1034 = vpop.f32.mrb[0].mxu0
      %v1035 = vadd.f32 %v646, %v1034
      %v1036 = vpop.f32.mrb[0].mxu0
      %1037 = vmatprep.mubr.f32.mxu0 0.0
      %v1038 = vand.u32 %v342, 4294901760
      %1039 = vmatmul.mubr.f32.gmra.mrb[0].mxu0 %v1038
      %v1040 = vpop.f32.mrb[0].mxu0
      %v1041 = vadd.f32 %v656, %v1040
      %v1042 = vpop.f32.mrb[0].mxu0
      %1043 = vmatprep.mubr.f32.mxu0 0.0
      %v1044 = vand.u32 %v343, 4294901760
      %1045 = vmatmul.mubr.f32.gmra.mrb[0].mxu0 %v1044
      %v1046 = vpop.f32.mrb[0].mxu0
      %v1047 = vadd.f32 %v666, %v1046
      %v1048 = vpop.f32.mrb[0].mxu0
      %1049 = vmatprep.mubr.f32.mxu0 0.0
      %v1050 = vand.u32 %v344, 4294901760
      %1051 = vmatmul.mubr.f32.gmra.mrb[0].mxu0 %v1050
      %v1052 = vpop.f32.mrb[0].mxu0
      %v1053 = vadd.f32 %v676, %v1052
      %v1054 = vpop.f32.mrb[0].mxu0
      %1055 = vmatprep.mubr.f32.mxu0 0.0
      %v1056 = vand.u32 %v345, 4294901760
      %1057 = vmatmul.mubr.f32.gmra.mrb[0].mxu0 %v1056
      %v1058 = vpop.f32.mrb[0].mxu0
      %v1059 = vadd.f32 %v686, %v1058
      %v1060 = vpop.f32.mrb[0].mxu0
      %1061 = vmatprep.mubr.f32.mxu0 0.0
      %v1062 = vand.u32 %v346, 4294901760
      %1063 = vmatmul.mubr.f32.gmra.mrb[0].mxu0 %v1062
      %v1064 = vpop.f32.mrb[0].mxu0
      %v1065 = vadd.f32 %v696, %v1064
      %v1066 = vpop.f32.mrb[0].mxu0
      %1067 = vmatprep.mubr.f32.mxu0 0.0
      %v1068 = vand.u32 %v347, 4294901760
      %1069 = vmatmul.mubr.f32.gmra.mrb[0].mxu0 %v1068
      %v1070 = vpop.f32.mrb[0].mxu0
      %v1071 = vadd.f32 %v706, %v1070
      %v1072 = vpop.f32.mrb[0].mxu0
      %1073 = vmatprep.mubr.f32.mxu0 0.0
      %v1074 = vand.u32 %v348, 4294901760
      %1075 = vmatmul.mubr.f32.gmra.mrb[0].mxu0 %v1074
      %v1076 = vpop.f32.mrb[0].mxu0
      %v1077 = vadd.f32 %v716, %v1076
      %v1078 = vpop.f32.mrb[0].mxu0
      %1079 = vmatprep.mubr.f32.mxu0 0.0
      %v1080 = vand.u32 %v349, 4294901760
      %1081 = vmatmul.mubr.f32.gmra.mrb[0].mxu0 %v1080
      %v1082 = vpop.f32.mrb[0].mxu0
      %v1083 = vadd.f32 %v726, %v1082
      %v1084 = vpop.f32.mrb[0].mxu0
      %1085 = vmatprep.mubr.f32.mxu0 0.0
      %v1086 = vand.u32 %v350, 4294901760
      %1087 = vmatmul.mubr.f32.gmra.mrb[0].mxu0 %v1086
      %v1088 = vpop.f32.mrb[0].mxu0
      %v1089 = vadd.f32 %v736, %v1088
      %v1090 = vpop.f32.mrb[0].mxu0
      %1091 = vmatprep.mubr.f32.mxu0 0.0
      %v1092 = vand.u32 %v351, 4294901760
      %1093 = vmatmul.mubr.f32.gmra.mrb[0].mxu0 %v1092
      %v1094 = vpop.f32.mrb[0].mxu0
      %v1095 = vadd.f32 %v746, %v1094
      %v1096 = vpop.f32.mrb[0].mxu0
      %1097 = vmatprep.mubr.f32.mxu0 0.0
      %v1098 = vand.u32 %v352, 4294901760
      %1099 = vmatmul.mubr.f32.gmra.mrb[0].mxu0 %v1098
      %v1100 = vpop.f32.mrb[0].mxu0
      %v1101 = vadd.f32 %v756, %v1100
      %v1102 = vpop.f32.mrb[0].mxu0
      %1103 = vmatprep.mubr.f32.mxu0 0.0
      %v1104 = vand.u32 %v353, 4294901760
      %1105 = vmatmul.mubr.f32.gmra.mrb[0].mxu0 %v1104
      %v1106 = vpop.f32.mrb[0].mxu0
      %v1107 = vadd.f32 %v766, %v1106
      %v1108 = vpop.f32.mrb[0].mxu0
      %1109 = vmatprep.mubr.f32.mxu0 0.0
      %v1110 = vand.u32 %v354, 4294901760
      %1111 = vmatmul.mubr.f32.gmra.mrb[0].mxu0 %v1110
      %v1112 = vpop.f32.mrb[0].mxu0
      %v1113 = vadd.f32 %v776, %v1112
      %v1114 = vpop.f32.mrb[0].mxu0
      %1115 = vdwg.mxu0
      %1116 = vmatprep.subr.mxu0 0.0
      %v1117 = vand.u32 %v355, 4294901760
      %v1118 = vsub.f32 %v355, %v1117
      %1119 = vmatpush1.msra.mxu0 %v1118
      %1120 = vmatprep.subr.mxu0 0.0
      %v1121 = vand.u32 %v356, 4294901760
      %v1122 = vsub.f32 %v356, %v1121
      %1123 = vmatpush1.msra.mxu0 %v1122
      %1124 = vmatprep.subr.mxu0 0.0
      %v1125 = vand.u32 %v357, 4294901760
      %v1126 = vsub.f32 %v357, %v1125
      %1127 = vmatpush1.msra.mxu0 %v1126
      %1128 = vmatprep.subr.mxu0 0.0
      %v1129 = vand.u32 %v358, 4294901760
      %v1130 = vsub.f32 %v358, %v1129
      %1131 = vmatpush1.msra.mxu0 %v1130
      %1132 = vmatprep.subr.mxu0 0.0
      %v1133 = vand.u32 %v359, 4294901760
      %v1134 = vsub.f32 %v359, %v1133
      %1135 = vmatpush1.msra.mxu0 %v1134
      %1136 = vmatprep.subr.mxu0 0.0
      %v1137 = vand.u32 %v360, 4294901760
      %v1138 = vsub.f32 %v360, %v1137
      %1139 = vmatpush1.msra.mxu0 %v1138
      %1140 = vmatprep.subr.mxu0 0.0
      %v1141 = vand.u32 %v361, 4294901760
      %v1142 = vsub.f32 %v361, %v1141
      %1143 = vmatpush1.msra.mxu0 %v1142
      %1144 = vmatprep.subr.mxu0 0.0
      %v1145 = vand.u32 %v362, 4294901760
      %v1146 = vsub.f32 %v362, %v1145
      %1147 = vmatpush1.msra.mxu0 %v1146
      %1148 = vmatprep.subr.mxu0 0.0
      %v1149 = vand.u32 %v363, 4294901760
      %v1150 = vsub.f32 %v363, %v1149
      %1151 = vmatpush1.msra.mxu0 %v1150
      %1152 = vmatprep.subr.mxu0 0.0
      %v1153 = vand.u32 %v364, 4294901760
      %v1154 = vsub.f32 %v364, %v1153
      %1155 = vmatpush1.msra.mxu0 %v1154
      %1156 = vmatprep.subr.mxu0 0.0
      %v1157 = vand.u32 %v365, 4294901760
      %v1158 = vsub.f32 %v365, %v1157
      %1159 = vmatpush1.msra.mxu0 %v1158
      %1160 = vmatprep.subr.mxu0 0.0
      %v1161 = vand.u32 %v366, 4294901760
      %v1162 = vsub.f32 %v366, %v1161
      %1163 = vmatpush1.msra.mxu0 %v1162
      %1164 = vmatprep.subr.mxu0 0.0
      %v1165 = vand.u32 %v367, 4294901760
      %v1166 = vsub.f32 %v367, %v1165
      %1167 = vmatpush1.msra.mxu0 %v1166
      %1168 = vmatprep.subr.mxu0 0.0
      %v1169 = vand.u32 %v368, 4294901760
      %v1170 = vsub.f32 %v368, %v1169
      %1171 = vmatpush1.msra.mxu0 %v1170
      %1172 = vmatprep.subr.mxu0 0.0
      %v1173 = vand.u32 %v369, 4294901760
      %v1174 = vsub.f32 %v369, %v1173
      %1175 = vmatpush1.msra.mxu0 %v1174
      %1176 = vmatprep.subr.mxu0 0.0
      %v1177 = vand.u32 %v370, 4294901760
      %v1178 = vsub.f32 %v370, %v1177
      %1179 = vmatpush1.msra.mxu0 %v1178
      %1180 = vmatprep.subr.mxu0 0.0
      %1181 = vmatpush1.msra.mxu0 0.0
      %1182 = vmatprep.subr.mxu0 0.0
      %1183 = vmatpush1.msra.mxu0 0.0
      %1184 = vmatprep.subr.mxu0 0.0
      %1185 = vmatpush1.msra.mxu0 0.0
      %1186 = vmatprep.subr.mxu0 0.0
      %1187 = vmatpush1.msra.mxu0 0.0
      %1188 = vmatprep.subr.mxu0 0.0
      %1189 = vmatpush1.msra.mxu0 0.0
      %1190 = vmatprep.subr.mxu0 0.0
      %1191 = vmatpush1.msra.mxu0 0.0
      %1192 = vmatprep.subr.mxu0 0.0
      %1193 = vmatpush1.msra.mxu0 0.0
      %1194 = vmatprep.subr.mxu0 0.0
      %1195 = vmatpush1.msra.mxu0 0.0
      %1196 = vmatprep.subr.mxu0 0.0
      %1197 = vmatpush1.msra.mxu0 0.0
      %1198 = vmatprep.subr.mxu0 0.0
      %1199 = vmatpush1.msra.mxu0 0.0
      %1200 = vmatprep.subr.mxu0 0.0
      %1201 = vmatpush1.msra.mxu0 0.0
      %1202 = vmatprep.subr.mxu0 0.0
      %1203 = vmatpush1.msra.mxu0 0.0
      %1204 = vmatprep.subr.mxu0 0.0
      %1205 = vmatpush1.msra.mxu0 0.0
      %1206 = vmatprep.subr.mxu0 0.0
      %1207 = vmatpush1.msra.mxu0 0.0
      %1208 = vmatprep.subr.mxu0 0.0
      %1209 = vmatpush1.msra.mxu0 0.0
      %1210 = vmatprep.subr.mxu0 0.0
      %1211 = vmatpush1.msra.mxu0 0.0
      %1212 = vmatprep.mubr.f32.mxu0 0.0
      %v1213 = vand.u32 %v323, 4294901760
      %v1214 = vsub.f32 %v323, %v1213
      %1215 = vmatmul.mubr.f32.gmra.mrb[0].mxu0 %v1214
      %v1216 = vpop.f32.mrb[0].mxu0
      %v1217 = vadd.f32 %v927, %v1216
      %v1218 = vpop.f32.mrb[0].mxu0
      %1219 = vmatprep.mubr.f32.mxu0 0.0
      %v1220 = vand.u32 %v324, 4294901760
      %v1221 = vsub.f32 %v324, %v1220
      %1222 = vmatmul.mubr.f32.gmra.mrb[0].mxu0 %v1221
      %v1223 = vpop.f32.mrb[0].mxu0
      %v1224 = vadd.f32 %v933, %v1223
      %v1225 = vpop.f32.mrb[0].mxu0
      %1226 = vmatprep.mubr.f32.mxu0 0.0
      %v1227 = vand.u32 %v325, 4294901760
      %v1228 = vsub.f32 %v325, %v1227
      %1229 = vmatmul.mubr.f32.gmra.mrb[0].mxu0 %v1228
      %v1230 = vpop.f32.mrb[0].mxu0
      %v1231 = vadd.f32 %v939, %v1230
      %v1232 = vpop.f32.mrb[0].mxu0
      %1233 = vmatprep.mubr.f32.mxu0 0.0
      %v1234 = vand.u32 %v326, 4294901760
      %v1235 = vsub.f32 %v326, %v1234
      %1236 = vmatmul.mubr.f32.gmra.mrb[0].mxu0 %v1235
      %v1237 = vpop.f32.mrb[0].mxu0
      %v1238 = vadd.f32 %v945, %v1237
      %v1239 = vpop.f32.mrb[0].mxu0
      %1240 = vmatprep.mubr.f32.mxu0 0.0
      %v1241 = vand.u32 %v327, 4294901760
      %v1242 = vsub.f32 %v327, %v1241
      %1243 = vmatmul.mubr.f32.gmra.mrb[0].mxu0 %v1242
      %v1244 = vpop.f32.mrb[0].mxu0
      %v1245 = vadd.f32 %v951, %v1244
      %v1246 = vpop.f32.mrb[0].mxu0
      %1247 = vmatprep.mubr.f32.mxu0 0.0
      %v1248 = vand.u32 %v328, 4294901760
      %v1249 = vsub.f32 %v328, %v1248
      %1250 = vmatmul.mubr.f32.gmra.mrb[0].mxu0 %v1249
      %v1251 = vpop.f32.mrb[0].mxu0
      %v1252 = vadd.f32 %v957, %v1251
      %v1253 = vpop.f32.mrb[0].mxu0
      %1254 = vmatprep.mubr.f32.mxu0 0.0
      %v1255 = vand.u32 %v329, 4294901760
      %v1256 = vsub.f32 %v329, %v1255
      %1257 = vmatmul.mubr.f32.gmra.mrb[0].mxu0 %v1256
      %v1258 = vpop.f32.mrb[0].mxu0
      %v1259 = vadd.f32 %v963, %v1258
      %v1260 = vpop.f32.mrb[0].mxu0
      %1261 = vmatprep.mubr.f32.mxu0 0.0
      %v1262 = vand.u32 %v330, 4294901760
      %v1263 = vsub.f32 %v330, %v1262
      %1264 = vmatmul.mubr.f32.gmra.mrb[0].mxu0 %v1263
      %v1265 = vpop.f32.mrb[0].mxu0
      %v1266 = vadd.f32 %v969, %v1265
      %v1267 = vpop.f32.mrb[0].mxu0
      %1268 = vmatprep.mubr.f32.mxu0 0.0
      %v1269 = vand.u32 %v331, 4294901760
      %v1270 = vsub.f32 %v331, %v1269
      %1271 = vmatmul.mubr.f32.gmra.mrb[0].mxu0 %v1270
      %v1272 = vpop.f32.mrb[0].mxu0
      %v1273 = vadd.f32 %v975, %v1272
      %v1274 = vpop.f32.mrb[0].mxu0
      %1275 = vmatprep.mubr.f32.mxu0 0.0
      %v1276 = vand.u32 %v332, 4294901760
      %v1277 = vsub.f32 %v332, %v1276
      %1278 = vmatmul.mubr.f32.gmra.mrb[0].mxu0 %v1277
      %v1279 = vpop.f32.mrb[0].mxu0
      %v1280 = vadd.f32 %v981, %v1279
      %v1281 = vpop.f32.mrb[0].mxu0
      %1282 = vmatprep.mubr.f32.mxu0 0.0
      %v1283 = vand.u32 %v333, 4294901760
      %v1284 = vsub.f32 %v333, %v1283
      %1285 = vmatmul.mubr.f32.gmra.mrb[0].mxu0 %v1284
      %v1286 = vpop.f32.mrb[0].mxu0
      %v1287 = vadd.f32 %v987, %v1286
      %v1288 = vpop.f32.mrb[0].mxu0
      %1289 = vmatprep.mubr.f32.mxu0 0.0
      %v1290 = vand.u32 %v334, 4294901760
      %v1291 = vsub.f32 %v334, %v1290
      %1292 = vmatmul.mubr.f32.gmra.mrb[0].mxu0 %v1291
      %v1293 = vpop.f32.mrb[0].mxu0
      %v1294 = vadd.f32 %v993, %v1293
      %v1295 = vpop.f32.mrb[0].mxu0
      %1296 = vmatprep.mubr.f32.mxu0 0.0
      %v1297 = vand.u32 %v335, 4294901760
      %v1298 = vsub.f32 %v335, %v1297
      %1299 = vmatmul.mubr.f32.gmra.mrb[0].mxu0 %v1298
      %v1300 = vpop.f32.mrb[0].mxu0
      %v1301 = vadd.f32 %v999, %v1300
      %v1302 = vpop.f32.mrb[0].mxu0
      %1303 = vmatprep.mubr.f32.mxu0 0.0
      %v1304 = vand.u32 %v336, 4294901760
      %v1305 = vsub.f32 %v336, %v1304
      %1306 = vmatmul.mubr.f32.gmra.mrb[0].mxu0 %v1305
      %v1307 = vpop.f32.mrb[0].mxu0
      %v1308 = vadd.f32 %v1005, %v1307
      %v1309 = vpop.f32.mrb[0].mxu0
      %1310 = vmatprep.mubr.f32.mxu0 0.0
      %v1311 = vand.u32 %v337, 4294901760
      %v1312 = vsub.f32 %v337, %v1311
      %1313 = vmatmul.mubr.f32.gmra.mrb[0].mxu0 %v1312
      %v1314 = vpop.f32.mrb[0].mxu0
      %v1315 = vadd.f32 %v1011, %v1314
      %v1316 = vpop.f32.mrb[0].mxu0
      %1317 = vmatprep.mubr.f32.mxu0 0.0
      %v1318 = vand.u32 %v338, 4294901760
      %v1319 = vsub.f32 %v338, %v1318
      %1320 = vmatmul.mubr.f32.gmra.mrb[0].mxu0 %v1319
      %v1321 = vpop.f32.mrb[0].mxu0
      %v1322 = vadd.f32 %v1017, %v1321
      %v1323 = vpop.f32.mrb[0].mxu0
      %1324 = vmatprep.mubr.f32.mxu0 0.0
      %v1325 = vand.u32 %v339, 4294901760
      %v1326 = vsub.f32 %v339, %v1325
      %1327 = vmatmul.mubr.f32.gmra.mrb[0].mxu0 %v1326
      %v1328 = vpop.f32.mrb[0].mxu0
      %v1329 = vadd.f32 %v1023, %v1328
      %v1330 = vpop.f32.mrb[0].mxu0
      %1331 = vmatprep.mubr.f32.mxu0 0.0
      %v1332 = vand.u32 %v340, 4294901760
      %v1333 = vsub.f32 %v340, %v1332
      %1334 = vmatmul.mubr.f32.gmra.mrb[0].mxu0 %v1333
      %v1335 = vpop.f32.mrb[0].mxu0
      %v1336 = vadd.f32 %v1029, %v1335
      %v1337 = vpop.f32.mrb[0].mxu0
      %1338 = vmatprep.mubr.f32.mxu0 0.0
      %v1339 = vand.u32 %v341, 4294901760
      %v1340 = vsub.f32 %v341, %v1339
      %1341 = vmatmul.mubr.f32.gmra.mrb[0].mxu0 %v1340
      %v1342 = vpop.f32.mrb[0].mxu0
      %v1343 = vadd.f32 %v1035, %v1342
      %v1344 = vpop.f32.mrb[0].mxu0
      %1345 = vmatprep.mubr.f32.mxu0 0.0
      %v1346 = vand.u32 %v342, 4294901760
      %v1347 = vsub.f32 %v342, %v1346
      %1348 = vmatmul.mubr.f32.gmra.mrb[0].mxu0 %v1347
      %v1349 = vpop.f32.mrb[0].mxu0
      %v1350 = vadd.f32 %v1041, %v1349
      %v1351 = vpop.f32.mrb[0].mxu0
      %1352 = vmatprep.mubr.f32.mxu0 0.0
      %v1353 = vand.u32 %v343, 4294901760
      %v1354 = vsub.f32 %v343, %v1353
      %1355 = vmatmul.mubr.f32.gmra.mrb[0].mxu0 %v1354
      %v1356 = vpop.f32.mrb[0].mxu0
      %v1357 = vadd.f32 %v1047, %v1356
      %v1358 = vpop.f32.mrb[0].mxu0
      %1359 = vmatprep.mubr.f32.mxu0 0.0
      %v1360 = vand.u32 %v344, 4294901760
      %v1361 = vsub.f32 %v344, %v1360
      %1362 = vmatmul.mubr.f32.gmra.mrb[0].mxu0 %v1361
      %v1363 = vpop.f32.mrb[0].mxu0
      %v1364 = vadd.f32 %v1053, %v1363
      %v1365 = vpop.f32.mrb[0].mxu0
      %1366 = vmatprep.mubr.f32.mxu0 0.0
      %v1367 = vand.u32 %v345, 4294901760
      %v1368 = vsub.f32 %v345, %v1367
      %1369 = vmatmul.mubr.f32.gmra.mrb[0].mxu0 %v1368
      %v1370 = vpop.f32.mrb[0].mxu0
      %v1371 = vadd.f32 %v1059, %v1370
      %v1372 = vpop.f32.mrb[0].mxu0
      %1373 = vmatprep.mubr.f32.mxu0 0.0
      %v1374 = vand.u32 %v346, 4294901760
      %v1375 = vsub.f32 %v346, %v1374
      %1376 = vmatmul.mubr.f32.gmra.mrb[0].mxu0 %v1375
      %v1377 = vpop.f32.mrb[0].mxu0
      %v1378 = vadd.f32 %v1065, %v1377
      %v1379 = vpop.f32.mrb[0].mxu0
      %1380 = vmatprep.mubr.f32.mxu0 0.0
      %v1381 = vand.u32 %v347, 4294901760
      %v1382 = vsub.f32 %v347, %v1381
      %1383 = vmatmul.mubr.f32.gmra.mrb[0].mxu0 %v1382
      %v1384 = vpop.f32.mrb[0].mxu0
      %v1385 = vadd.f32 %v1071, %v1384
      %v1386 = vpop.f32.mrb[0].mxu0
      %1387 = vmatprep.mubr.f32.mxu0 0.0
      %v1388 = vand.u32 %v348, 4294901760
      %v1389 = vsub.f32 %v348, %v1388
      %1390 = vmatmul.mubr.f32.gmra.mrb[0].mxu0 %v1389
      %v1391 = vpop.f32.mrb[0].mxu0
      %v1392 = vadd.f32 %v1077, %v1391
      %v1393 = vpop.f32.mrb[0].mxu0
      %1394 = vmatprep.mubr.f32.mxu0 0.0
      %v1395 = vand.u32 %v349, 4294901760
      %v1396 = vsub.f32 %v349, %v1395
      %1397 = vmatmul.mubr.f32.gmra.mrb[0].mxu0 %v1396
      %v1398 = vpop.f32.mrb[0].mxu0
      %v1399 = vadd.f32 %v1083, %v1398
      %v1400 = vpop.f32.mrb[0].mxu0
      %1401 = vmatprep.mubr.f32.mxu0 0.0
      %v1402 = vand.u32 %v350, 4294901760
      %v1403 = vsub.f32 %v350, %v1402
      %1404 = vmatmul.mubr.f32.gmra.mrb[0].mxu0 %v1403
      %v1405 = vpop.f32.mrb[0].mxu0
      %v1406 = vadd.f32 %v1089, %v1405
      %v1407 = vpop.f32.mrb[0].mxu0
      %1408 = vmatprep.mubr.f32.mxu0 0.0
      %v1409 = vand.u32 %v351, 4294901760
      %v1410 = vsub.f32 %v351, %v1409
      %1411 = vmatmul.mubr.f32.gmra.mrb[0].mxu0 %v1410
      %v1412 = vpop.f32.mrb[0].mxu0
      %v1413 = vadd.f32 %v1095, %v1412
      %v1414 = vpop.f32.mrb[0].mxu0
      %1415 = vmatprep.mubr.f32.mxu0 0.0
      %v1416 = vand.u32 %v352, 4294901760
      %v1417 = vsub.f32 %v352, %v1416
      %1418 = vmatmul.mubr.f32.gmra.mrb[0].mxu0 %v1417
      %v1419 = vpop.f32.mrb[0].mxu0
      %v1420 = vadd.f32 %v1101, %v1419
      %v1421 = vpop.f32.mrb[0].mxu0
      %1422 = vmatprep.mubr.f32.mxu0 0.0
      %v1423 = vand.u32 %v353, 4294901760
      %v1424 = vsub.f32 %v353, %v1423
      %1425 = vmatmul.mubr.f32.gmra.mrb[0].mxu0 %v1424
      %v1426 = vpop.f32.mrb[0].mxu0
      %v1427 = vadd.f32 %v1107, %v1426
      %v1428 = vpop.f32.mrb[0].mxu0
      %1429 = vmatprep.mubr.f32.mxu0 0.0
      %v1430 = vand.u32 %v354, 4294901760
      %v1431 = vsub.f32 %v354, %v1430
      %1432 = vmatmul.mubr.f32.gmra.mrb[0].mxu0 %v1431
      %v1433 = vpop.f32.mrb[0].mxu0
      %v1434 = vadd.f32 %v1113, %v1433
      %v1435 = vpop.f32.mrb[0].mxu0
      %1436 = vdwg.mxu0
      %1437 = vmatprep.subr.mxu0 0.0
      %v1438 = vand.u32 %v355, 4294901760
      %1439 = vmatpush1.msra.mxu0 %v1438
      %1440 = vmatprep.subr.mxu0 0.0
      %v1441 = vand.u32 %v356, 4294901760
      %1442 = vmatpush1.msra.mxu0 %v1441
      %1443 = vmatprep.subr.mxu0 0.0
      %v1444 = vand.u32 %v357, 4294901760
      %1445 = vmatpush1.msra.mxu0 %v1444
      %1446 = vmatprep.subr.mxu0 0.0
      %v1447 = vand.u32 %v358, 4294901760
      %1448 = vmatpush1.msra.mxu0 %v1447
      %1449 = vmatprep.subr.mxu0 0.0
      %v1450 = vand.u32 %v359, 4294901760
      %1451 = vmatpush1.msra.mxu0 %v1450
      %1452 = vmatprep.subr.mxu0 0.0
      %v1453 = vand.u32 %v360, 4294901760
      %1454 = vmatpush1.msra.mxu0 %v1453
      %1455 = vmatprep.subr.mxu0 0.0
      %v1456 = vand.u32 %v361, 4294901760
      %1457 = vmatpush1.msra.mxu0 %v1456
      %1458 = vmatprep.subr.mxu0 0.0
      %v1459 = vand.u32 %v362, 4294901760
      %1460 = vmatpush1.msra.mxu0 %v1459
      %1461 = vmatprep.subr.mxu0 0.0
      %v1462 = vand.u32 %v363, 4294901760
      %1463 = vmatpush1.msra.mxu0 %v1462
      %1464 = vmatprep.subr.mxu0 0.0
      %v1465 = vand.u32 %v364, 4294901760
      %1466 = vmatpush1.msra.mxu0 %v1465
      %1467 = vmatprep.subr.mxu0 0.0
      %v1468 = vand.u32 %v365, 4294901760
      %1469 = vmatpush1.msra.mxu0 %v1468
      %1470 = vmatprep.subr.mxu0 0.0
      %v1471 = vand.u32 %v366, 4294901760
      %1472 = vmatpush1.msra.mxu0 %v1471
      %1473 = vmatprep.subr.mxu0 0.0
      %v1474 = vand.u32 %v367, 4294901760
      %1475 = vmatpush1.msra.mxu0 %v1474
      %1476 = vmatprep.subr.mxu0 0.0
      %v1477 = vand.u32 %v368, 4294901760
      %1478 = vmatpush1.msra.mxu0 %v1477
      %1479 = vmatprep.subr.mxu0 0.0
      %v1480 = vand.u32 %v369, 4294901760
      %1481 = vmatpush1.msra.mxu0 %v1480
      %1482 = vmatprep.subr.mxu0 0.0
      %v1483 = vand.u32 %v370, 4294901760
      %1484 = vmatpush1.msra.mxu0 %v1483
      %1485 = vmatprep.subr.mxu0 0.0
      %1486 = vmatpush1.msra.mxu0 0.0
      %1487 = vmatprep.subr.mxu0 0.0
      %1488 = vmatpush1.msra.mxu0 0.0
      %1489 = vmatprep.subr.mxu0 0.0
      %1490 = vmatpush1.msra.mxu0 0.0
      %1491 = vmatprep.subr.mxu0 0.0
      %1492 = vmatpush1.msra.mxu0 0.0
      %1493 = vmatprep.subr.mxu0 0.0
      %1494 = vmatpush1.msra.mxu0 0.0
      %1495 = vmatprep.subr.mxu0 0.0
      %1496 = vmatpush1.msra.mxu0 0.0
      %1497 = vmatprep.subr.mxu0 0.0
      %1498 = vmatpush1.msra.mxu0 0.0
      %1499 = vmatprep.subr.mxu0 0.0
      %1500 = vmatpush1.msra.mxu0 0.0
      %1501 = vmatprep.subr.mxu0 0.0
      %1502 = vmatpush1.msra.mxu0 0.0
      %1503 = vmatprep.subr.mxu0 0.0
      %1504 = vmatpush1.msra.mxu0 0.0
      %1505 = vmatprep.subr.mxu0 0.0
      %1506 = vmatpush1.msra.mxu0 0.0
      %1507 = vmatprep.subr.mxu0 0.0
      %1508 = vmatpush1.msra.mxu0 0.0
      %1509 = vmatprep.subr.mxu0 0.0
      %1510 = vmatpush1.msra.mxu0 0.0
      %1511 = vmatprep.subr.mxu0 0.0
      %1512 = vmatpush1.msra.mxu0 0.0
      %1513 = vmatprep.subr.mxu0 0.0
      %1514 = vmatpush1.msra.mxu0 0.0
      %1515 = vmatprep.subr.mxu0 0.0
      %1516 = vmatpush1.msra.mxu0 0.0
      %1517 = vmatprep.mubr.f32.mxu0 0.0
      %v1518 = vand.u32 %v323, 4294901760
      %v1519 = vsub.f32 %v323, %v1518
      %v1520 = vand.u32 %v1519, 4294901760
      %1521 = vmatmul.mubr.f32.gmra.mrb[0].mxu0 %v1520
      %v1522 = vpop.f32.mrb[0].mxu0
      %v1523 = vadd.f32 %v1217, %v1522
      %v1524 = vpop.f32.mrb[0].mxu0
      %1525 = vmatprep.mubr.f32.mxu0 0.0
      %v1526 = vand.u32 %v324, 4294901760
      %v1527 = vsub.f32 %v324, %v1526
      %v1528 = vand.u32 %v1527, 4294901760
      %1529 = vmatmul.mubr.f32.gmra.mrb[0].mxu0 %v1528
      %v1530 = vpop.f32.mrb[0].mxu0
      %v1531 = vadd.f32 %v1224, %v1530
      %v1532 = vpop.f32.mrb[0].mxu0
      %1533 = vmatprep.mubr.f32.mxu0 0.0
      %v1534 = vand.u32 %v325, 4294901760
      %v1535 = vsub.f32 %v325, %v1534
      %v1536 = vand.u32 %v1535, 4294901760
      %1537 = vmatmul.mubr.f32.gmra.mrb[0].mxu0 %v1536
      %v1538 = vpop.f32.mrb[0].mxu0
      %v1539 = vadd.f32 %v1231, %v1538
      %v1540 = vpop.f32.mrb[0].mxu0
      %1541 = vmatprep.mubr.f32.mxu0 0.0
      %v1542 = vand.u32 %v326, 4294901760
      %v1543 = vsub.f32 %v326, %v1542
      %v1544 = vand.u32 %v1543, 4294901760
      %1545 = vmatmul.mubr.f32.gmra.mrb[0].mxu0 %v1544
      %v1546 = vpop.f32.mrb[0].mxu0
      %v1547 = vadd.f32 %v1238, %v1546
      %v1548 = vpop.f32.mrb[0].mxu0
      %1549 = vmatprep.mubr.f32.mxu0 0.0
      %v1550 = vand.u32 %v327, 4294901760
      %v1551 = vsub.f32 %v327, %v1550
      %v1552 = vand.u32 %v1551, 4294901760
      %1553 = vmatmul.mubr.f32.gmra.mrb[0].mxu0 %v1552
      %v1554 = vpop.f32.mrb[0].mxu0
      %v1555 = vadd.f32 %v1245, %v1554
      %v1556 = vpop.f32.mrb[0].mxu0
      %1557 = vmatprep.mubr.f32.mxu0 0.0
      %v1558 = vand.u32 %v328, 4294901760
      %v1559 = vsub.f32 %v328, %v1558
      %v1560 = vand.u32 %v1559, 4294901760
      %1561 = vmatmul.mubr.f32.gmra.mrb[0].mxu0 %v1560
      %v1562 = vpop.f32.mrb[0].mxu0
      %v1563 = vadd.f32 %v1252, %v1562
      %v1564 = vpop.f32.mrb[0].mxu0
      %1565 = vmatprep.mubr.f32.mxu0 0.0
      %v1566 = vand.u32 %v329, 4294901760
      %v1567 = vsub.f32 %v329, %v1566
      %v1568 = vand.u32 %v1567, 4294901760
      %1569 = vmatmul.mubr.f32.gmra.mrb[0].mxu0 %v1568
      %v1570 = vpop.f32.mrb[0].mxu0
      %v1571 = vadd.f32 %v1259, %v1570
      %v1572 = vpop.f32.mrb[0].mxu0
      %1573 = vmatprep.mubr.f32.mxu0 0.0
      %v1574 = vand.u32 %v330, 4294901760
      %v1575 = vsub.f32 %v330, %v1574
      %v1576 = vand.u32 %v1575, 4294901760
      %1577 = vmatmul.mubr.f32.gmra.mrb[0].mxu0 %v1576
      %v1578 = vpop.f32.mrb[0].mxu0
      %v1579 = vadd.f32 %v1266, %v1578
      %v1580 = vpop.f32.mrb[0].mxu0
      %1581 = vmatprep.mubr.f32.mxu0 0.0
      %v1582 = vand.u32 %v331, 4294901760
      %v1583 = vsub.f32 %v331, %v1582
      %v1584 = vand.u32 %v1583, 4294901760
      %1585 = vmatmul.mubr.f32.gmra.mrb[0].mxu0 %v1584
      %v1586 = vpop.f32.mrb[0].mxu0
      %v1587 = vadd.f32 %v1273, %v1586
      %v1588 = vpop.f32.mrb[0].mxu0
      %1589 = vmatprep.mubr.f32.mxu0 0.0
      %v1590 = vand.u32 %v332, 4294901760
      %v1591 = vsub.f32 %v332, %v1590
      %v1592 = vand.u32 %v1591, 4294901760
      %1593 = vmatmul.mubr.f32.gmra.mrb[0].mxu0 %v1592
      %v1594 = vpop.f32.mrb[0].mxu0
      %v1595 = vadd.f32 %v1280, %v1594
      %v1596 = vpop.f32.mrb[0].mxu0
      %1597 = vmatprep.mubr.f32.mxu0 0.0
      %v1598 = vand.u32 %v333, 4294901760
      %v1599 = vsub.f32 %v333, %v1598
      %v1600 = vand.u32 %v1599, 4294901760
      %1601 = vmatmul.mubr.f32.gmra.mrb[0].mxu0 %v1600
      %v1602 = vpop.f32.mrb[0].mxu0
      %v1603 = vadd.f32 %v1287, %v1602
      %v1604 = vpop.f32.mrb[0].mxu0
      %1605 = vmatprep.mubr.f32.mxu0 0.0
      %v1606 = vand.u32 %v334, 4294901760
      %v1607 = vsub.f32 %v334, %v1606
      %v1608 = vand.u32 %v1607, 4294901760
      %1609 = vmatmul.mubr.f32.gmra.mrb[0].mxu0 %v1608
      %v1610 = vpop.f32.mrb[0].mxu0
      %v1611 = vadd.f32 %v1294, %v1610
      %v1612 = vpop.f32.mrb[0].mxu0
      %1613 = vmatprep.mubr.f32.mxu0 0.0
      %v1614 = vand.u32 %v335, 4294901760
      %v1615 = vsub.f32 %v335, %v1614
      %v1616 = vand.u32 %v1615, 4294901760
      %1617 = vmatmul.mubr.f32.gmra.mrb[0].mxu0 %v1616
      %v1618 = vpop.f32.mrb[0].mxu0
      %v1619 = vadd.f32 %v1301, %v1618
      %v1620 = vpop.f32.mrb[0].mxu0
      %1621 = vmatprep.mubr.f32.mxu0 0.0
      %v1622 = vand.u32 %v336, 4294901760
      %v1623 = vsub.f32 %v336, %v1622
      %v1624 = vand.u32 %v1623, 4294901760
      %1625 = vmatmul.mubr.f32.gmra.mrb[0].mxu0 %v1624
      %v1626 = vpop.f32.mrb[0].mxu0
      %v1627 = vadd.f32 %v1308, %v1626
      %v1628 = vpop.f32.mrb[0].mxu0
      %1629 = vmatprep.mubr.f32.mxu0 0.0
      %v1630 = vand.u32 %v337, 4294901760
      %v1631 = vsub.f32 %v337, %v1630
      %v1632 = vand.u32 %v1631, 4294901760
      %1633 = vmatmul.mubr.f32.gmra.mrb[0].mxu0 %v1632
      %v1634 = vpop.f32.mrb[0].mxu0
      %v1635 = vadd.f32 %v1315, %v1634
      %v1636 = vpop.f32.mrb[0].mxu0
      %1637 = vmatprep.mubr.f32.mxu0 0.0
      %v1638 = vand.u32 %v338, 4294901760
      %v1639 = vsub.f32 %v338, %v1638
      %v1640 = vand.u32 %v1639, 4294901760
      %1641 = vmatmul.mubr.f32.gmra.mrb[0].mxu0 %v1640
      %v1642 = vpop.f32.mrb[0].mxu0
      %v1643 = vadd.f32 %v1322, %v1642
      %v1644 = vpop.f32.mrb[0].mxu0
      %1645 = vmatprep.mubr.f32.mxu0 0.0
      %v1646 = vand.u32 %v339, 4294901760
      %v1647 = vsub.f32 %v339, %v1646
      %v1648 = vand.u32 %v1647, 4294901760
      %1649 = vmatmul.mubr.f32.gmra.mrb[0].mxu0 %v1648
      %v1650 = vpop.f32.mrb[0].mxu0
      %v1651 = vadd.f32 %v1329, %v1650
      %v1652 = vpop.f32.mrb[0].mxu0
      %1653 = vmatprep.mubr.f32.mxu0 0.0
      %v1654 = vand.u32 %v340, 4294901760
      %v1655 = vsub.f32 %v340, %v1654
      %v1656 = vand.u32 %v1655, 4294901760
      %1657 = vmatmul.mubr.f32.gmra.mrb[0].mxu0 %v1656
      %v1658 = vpop.f32.mrb[0].mxu0
      %v1659 = vadd.f32 %v1336, %v1658
      %v1660 = vpop.f32.mrb[0].mxu0
      %1661 = vmatprep.mubr.f32.mxu0 0.0
      %v1662 = vand.u32 %v341, 4294901760
      %v1663 = vsub.f32 %v341, %v1662
      %v1664 = vand.u32 %v1663, 4294901760
      %1665 = vmatmul.mubr.f32.gmra.mrb[0].mxu0 %v1664
      %v1666 = vpop.f32.mrb[0].mxu0
      %v1667 = vadd.f32 %v1343, %v1666
      %v1668 = vpop.f32.mrb[0].mxu0
      %1669 = vmatprep.mubr.f32.mxu0 0.0
      %v1670 = vand.u32 %v342, 4294901760
      %v1671 = vsub.f32 %v342, %v1670
      %v1672 = vand.u32 %v1671, 4294901760
      %1673 = vmatmul.mubr.f32.gmra.mrb[0].mxu0 %v1672
      %v1674 = vpop.f32.mrb[0].mxu0
      %v1675 = vadd.f32 %v1350, %v1674
      %v1676 = vpop.f32.mrb[0].mxu0
      %1677 = vmatprep.mubr.f32.mxu0 0.0
      %v1678 = vand.u32 %v343, 4294901760
      %v1679 = vsub.f32 %v343, %v1678
      %v1680 = vand.u32 %v1679, 4294901760
      %1681 = vmatmul.mubr.f32.gmra.mrb[0].mxu0 %v1680
      %v1682 = vpop.f32.mrb[0].mxu0
      %v1683 = vadd.f32 %v1357, %v1682
      %v1684 = vpop.f32.mrb[0].mxu0
      %1685 = vmatprep.mubr.f32.mxu0 0.0
      %v1686 = vand.u32 %v344, 4294901760
      %v1687 = vsub.f32 %v344, %v1686
      %v1688 = vand.u32 %v1687, 4294901760
      %1689 = vmatmul.mubr.f32.gmra.mrb[0].mxu0 %v1688
      %v1690 = vpop.f32.mrb[0].mxu0
      %v1691 = vadd.f32 %v1364, %v1690
      %v1692 = vpop.f32.mrb[0].mxu0
      %1693 = vmatprep.mubr.f32.mxu0 0.0
      %v1694 = vand.u32 %v345, 4294901760
      %v1695 = vsub.f32 %v345, %v1694
      %v1696 = vand.u32 %v1695, 4294901760
      %1697 = vmatmul.mubr.f32.gmra.mrb[0].mxu0 %v1696
      %v1698 = vpop.f32.mrb[0].mxu0
      %v1699 = vadd.f32 %v1371, %v1698
      %v1700 = vpop.f32.mrb[0].mxu0
      %1701 = vmatprep.mubr.f32.mxu0 0.0
      %v1702 = vand.u32 %v346, 4294901760
      %v1703 = vsub.f32 %v346, %v1702
      %v1704 = vand.u32 %v1703, 4294901760
      %1705 = vmatmul.mubr.f32.gmra.mrb[0].mxu0 %v1704
      %v1706 = vpop.f32.mrb[0].mxu0
      %v1707 = vadd.f32 %v1378, %v1706
      %v1708 = vpop.f32.mrb[0].mxu0
      %1709 = vmatprep.mubr.f32.mxu0 0.0
      %v1710 = vand.u32 %v347, 4294901760
      %v1711 = vsub.f32 %v347, %v1710
      %v1712 = vand.u32 %v1711, 4294901760
      %1713 = vmatmul.mubr.f32.gmra.mrb[0].mxu0 %v1712
      %v1714 = vpop.f32.mrb[0].mxu0
      %v1715 = vadd.f32 %v1385, %v1714
      %v1716 = vpop.f32.mrb[0].mxu0
      %1717 = vmatprep.mubr.f32.mxu0 0.0
      %v1718 = vand.u32 %v348, 4294901760
      %v1719 = vsub.f32 %v348, %v1718
      %v1720 = vand.u32 %v1719, 4294901760
      %1721 = vmatmul.mubr.f32.gmra.mrb[0].mxu0 %v1720
      %v1722 = vpop.f32.mrb[0].mxu0
      %v1723 = vadd.f32 %v1392, %v1722
      %v1724 = vpop.f32.mrb[0].mxu0
      %1725 = vmatprep.mubr.f32.mxu0 0.0
      %v1726 = vand.u32 %v349, 4294901760
      %v1727 = vsub.f32 %v349, %v1726
      %v1728 = vand.u32 %v1727, 4294901760
      %1729 = vmatmul.mubr.f32.gmra.mrb[0].mxu0 %v1728
      %v1730 = vpop.f32.mrb[0].mxu0
      %v1731 = vadd.f32 %v1399, %v1730
      %v1732 = vpop.f32.mrb[0].mxu0
      %1733 = vmatprep.mubr.f32.mxu0 0.0
      %v1734 = vand.u32 %v350, 4294901760
      %v1735 = vsub.f32 %v350, %v1734
      %v1736 = vand.u32 %v1735, 4294901760
      %1737 = vmatmul.mubr.f32.gmra.mrb[0].mxu0 %v1736
      %v1738 = vpop.f32.mrb[0].mxu0
      %v1739 = vadd.f32 %v1406, %v1738
      %v1740 = vpop.f32.mrb[0].mxu0
      %1741 = vmatprep.mubr.f32.mxu0 0.0
      %v1742 = vand.u32 %v351, 4294901760
      %v1743 = vsub.f32 %v351, %v1742
      %v1744 = vand.u32 %v1743, 4294901760
      %1745 = vmatmul.mubr.f32.gmra.mrb[0].mxu0 %v1744
      %v1746 = vpop.f32.mrb[0].mxu0
      %v1747 = vadd.f32 %v1413, %v1746
      %v1748 = vpop.f32.mrb[0].mxu0
      %1749 = vmatprep.mubr.f32.mxu0 0.0
      %v1750 = vand.u32 %v352, 4294901760
      %v1751 = vsub.f32 %v352, %v1750
      %v1752 = vand.u32 %v1751, 4294901760
      %1753 = vmatmul.mubr.f32.gmra.mrb[0].mxu0 %v1752
      %v1754 = vpop.f32.mrb[0].mxu0
      %v1755 = vadd.f32 %v1420, %v1754
      %v1756 = vpop.f32.mrb[0].mxu0
      %1757 = vmatprep.mubr.f32.mxu0 0.0
      %v1758 = vand.u32 %v353, 4294901760
      %v1759 = vsub.f32 %v353, %v1758
      %v1760 = vand.u32 %v1759, 4294901760
      %1761 = vmatmul.mubr.f32.gmra.mrb[0].mxu0 %v1760
      %v1762 = vpop.f32.mrb[0].mxu0
      %v1763 = vadd.f32 %v1427, %v1762
      %v1764 = vpop.f32.mrb[0].mxu0
      %1765 = vmatprep.mubr.f32.mxu0 0.0
      %v1766 = vand.u32 %v354, 4294901760
      %v1767 = vsub.f32 %v354, %v1766
      %v1768 = vand.u32 %v1767, 4294901760
      %1769 = vmatmul.mubr.f32.gmra.mrb[0].mxu0 %v1768
      %v1770 = vpop.f32.mrb[0].mxu0
      %v1771 = vadd.f32 %v1434, %v1770
      %v1772 = vpop.f32.mrb[0].mxu0
      %1773 = vdwg.mxu0
      %1774 = vmatprep.subr.mxu0 0.0
      %v1775 = vand.u32 %v355, 4294901760
      %v1776 = vsub.f32 %v355, %v1775
      %v1777 = vand.u32 %v1776, 4294901760
      %1778 = vmatpush1.msra.mxu0 %v1777
      %1779 = vmatprep.subr.mxu0 0.0
      %v1780 = vand.u32 %v356, 4294901760
      %v1781 = vsub.f32 %v356, %v1780
      %v1782 = vand.u32 %v1781, 4294901760
      %1783 = vmatpush1.msra.mxu0 %v1782
      %1784 = vmatprep.subr.mxu0 0.0
      %v1785 = vand.u32 %v357, 4294901760
      %v1786 = vsub.f32 %v357, %v1785
      %v1787 = vand.u32 %v1786, 4294901760
      %1788 = vmatpush1.msra.mxu0 %v1787
      %1789 = vmatprep.subr.mxu0 0.0
      %v1790 = vand.u32 %v358, 4294901760
      %v1791 = vsub.f32 %v358, %v1790
      %v1792 = vand.u32 %v1791, 4294901760
      %1793 = vmatpush1.msra.mxu0 %v1792
      %1794 = vmatprep.subr.mxu0 0.0
      %v1795 = vand.u32 %v359, 4294901760
      %v1796 = vsub.f32 %v359, %v1795
      %v1797 = vand.u32 %v1796, 4294901760
      %1798 = vmatpush1.msra.mxu0 %v1797
      %1799 = vmatprep.subr.mxu0 0.0
      %v1800 = vand.u32 %v360, 4294901760
      %v1801 = vsub.f32 %v360, %v1800
      %v1802 = vand.u32 %v1801, 4294901760
      %1803 = vmatpush1.msra.mxu0 %v1802
      %1804 = vmatprep.subr.mxu0 0.0
      %v1805 = vand.u32 %v361, 4294901760
      %v1806 = vsub.f32 %v361, %v1805
      %v1807 = vand.u32 %v1806, 4294901760
      %1808 = vmatpush1.msra.mxu0 %v1807
      %1809 = vmatprep.subr.mxu0 0.0
      %v1810 = vand.u32 %v362, 4294901760
      %v1811 = vsub.f32 %v362, %v1810
      %v1812 = vand.u32 %v1811, 4294901760
      %1813 = vmatpush1.msra.mxu0 %v1812
      %1814 = vmatprep.subr.mxu0 0.0
      %v1815 = vand.u32 %v363, 4294901760
      %v1816 = vsub.f32 %v363, %v1815
      %v1817 = vand.u32 %v1816, 4294901760
      %1818 = vmatpush1.msra.mxu0 %v1817
      %1819 = vmatprep.subr.mxu0 0.0
      %v1820 = vand.u32 %v364, 4294901760
      %v1821 = vsub.f32 %v364, %v1820
      %v1822 = vand.u32 %v1821, 4294901760
      %1823 = vmatpush1.msra.mxu0 %v1822
      %1824 = vmatprep.subr.mxu0 0.0
      %v1825 = vand.u32 %v365, 4294901760
      %v1826 = vsub.f32 %v365, %v1825
      %v1827 = vand.u32 %v1826, 4294901760
      %1828 = vmatpush1.msra.mxu0 %v1827
      %1829 = vmatprep.subr.mxu0 0.0
      %v1830 = vand.u32 %v366, 4294901760
      %v1831 = vsub.f32 %v366, %v1830
      %v1832 = vand.u32 %v1831, 4294901760
      %1833 = vmatpush1.msra.mxu0 %v1832
      %1834 = vmatprep.subr.mxu0 0.0
      %v1835 = vand.u32 %v367, 4294901760
      %v1836 = vsub.f32 %v367, %v1835
      %v1837 = vand.u32 %v1836, 4294901760
      %1838 = vmatpush1.msra.mxu0 %v1837
      %1839 = vmatprep.subr.mxu0 0.0
      %v1840 = vand.u32 %v368, 4294901760
      %v1841 = vsub.f32 %v368, %v1840
      %v1842 = vand.u32 %v1841, 4294901760
      %1843 = vmatpush1.msra.mxu0 %v1842
      %1844 = vmatprep.subr.mxu0 0.0
      %v1845 = vand.u32 %v369, 4294901760
      %v1846 = vsub.f32 %v369, %v1845
      %v1847 = vand.u32 %v1846, 4294901760
      %1848 = vmatpush1.msra.mxu0 %v1847
      %1849 = vmatprep.subr.mxu0 0.0
      %v1850 = vand.u32 %v370, 4294901760
      %v1851 = vsub.f32 %v370, %v1850
      %v1852 = vand.u32 %v1851, 4294901760
      %1853 = vmatpush1.msra.mxu0 %v1852
      %1854 = vmatprep.subr.mxu0 0.0
      %1855 = vmatpush1.msra.mxu0 0.0
      %1856 = vmatprep.subr.mxu0 0.0
      %1857 = vmatpush1.msra.mxu0 0.0
      %1858 = vmatprep.subr.mxu0 0.0
      %1859 = vmatpush1.msra.mxu0 0.0
      %1860 = vmatprep.subr.mxu0 0.0
      %1861 = vmatpush1.msra.mxu0 0.0
      %1862 = vmatprep.subr.mxu0 0.0
      %1863 = vmatpush1.msra.mxu0 0.0
      %1864 = vmatprep.subr.mxu0 0.0
      %1865 = vmatpush1.msra.mxu0 0.0
      %1866 = vmatprep.subr.mxu0 0.0
      %1867 = vmatpush1.msra.mxu0 0.0
      %1868 = vmatprep.subr.mxu0 0.0
      %1869 = vmatpush1.msra.mxu0 0.0
      %1870 = vmatprep.subr.mxu0 0.0
      %1871 = vmatpush1.msra.mxu0 0.0
      %1872 = vmatprep.subr.mxu0 0.0
      %1873 = vmatpush1.msra.mxu0 0.0
      %1874 = vmatprep.subr.mxu0 0.0
      %1875 = vmatpush1.msra.mxu0 0.0
      %1876 = vmatprep.subr.mxu0 0.0
      %1877 = vmatpush1.msra.mxu0 0.0
      %1878 = vmatprep.subr.mxu0 0.0
      %1879 = vmatpush1.msra.mxu0 0.0
      %1880 = vmatprep.subr.mxu0 0.0
      %1881 = vmatpush1.msra.mxu0 0.0
      %1882 = vmatprep.subr.mxu0 0.0
      %1883 = vmatpush1.msra.mxu0 0.0
      %1884 = vmatprep.subr.mxu0 0.0
      %1885 = vmatpush1.msra.mxu0 0.0
      %1886 = vmatprep.mubr.f32.mxu0 0.0
      %v1887 = vand.u32 %v323, 4294901760
      %1888 = vmatmul.mubr.f32.gmra.mrb[0].mxu0 %v1887
      %v1889 = vpop.f32.mrb[0].mxu0
      %v1890 = vadd.f32 %v1523, %v1889
      %v1891 = vpop.f32.mrb[0].mxu0
      %1892 = vmatprep.mubr.f32.mxu0 0.0
      %v1893 = vand.u32 %v324, 4294901760
      %1894 = vmatmul.mubr.f32.gmra.mrb[0].mxu0 %v1893
      %v1895 = vpop.f32.mrb[0].mxu0
      %v1896 = vadd.f32 %v1531, %v1895
      %v1897 = vpop.f32.mrb[0].mxu0
      %1898 = vmatprep.mubr.f32.mxu0 0.0
      %v1899 = vand.u32 %v325, 4294901760
      %1900 = vmatmul.mubr.f32.gmra.mrb[0].mxu0 %v1899
      %v1901 = vpop.f32.mrb[0].mxu0
      %v1902 = vadd.f32 %v1539, %v1901
      %v1903 = vpop.f32.mrb[0].mxu0
      %1904 = vmatprep.mubr.f32.mxu0 0.0
      %v1905 = vand.u32 %v326, 4294901760
      %1906 = vmatmul.mubr.f32.gmra.mrb[0].mxu0 %v1905
      %v1907 = vpop.f32.mrb[0].mxu0
      %v1908 = vadd.f32 %v1547, %v1907
      %v1909 = vpop.f32.mrb[0].mxu0
      %1910 = vmatprep.mubr.f32.mxu0 0.0
      %v1911 = vand.u32 %v327, 4294901760
      %1912 = vmatmul.mubr.f32.gmra.mrb[0].mxu0 %v1911
      %v1913 = vpop.f32.mrb[0].mxu0
      %v1914 = vadd.f32 %v1555, %v1913
      %v1915 = vpop.f32.mrb[0].mxu0
      %1916 = vmatprep.mubr.f32.mxu0 0.0
      %v1917 = vand.u32 %v328, 4294901760
      %1918 = vmatmul.mubr.f32.gmra.mrb[0].mxu0 %v1917
      %v1919 = vpop.f32.mrb[0].mxu0
      %v1920 = vadd.f32 %v1563, %v1919
      %v1921 = vpop.f32.mrb[0].mxu0
      %1922 = vmatprep.mubr.f32.mxu0 0.0
      %v1923 = vand.u32 %v329, 4294901760
      %1924 = vmatmul.mubr.f32.gmra.mrb[0].mxu0 %v1923
      %v1925 = vpop.f32.mrb[0].mxu0
      %v1926 = vadd.f32 %v1571, %v1925
      %v1927 = vpop.f32.mrb[0].mxu0
      %1928 = vmatprep.mubr.f32.mxu0 0.0
      %v1929 = vand.u32 %v330, 4294901760
      %1930 = vmatmul.mubr.f32.gmra.mrb[0].mxu0 %v1929
      %v1931 = vpop.f32.mrb[0].mxu0
      %v1932 = vadd.f32 %v1579, %v1931
      %v1933 = vpop.f32.mrb[0].mxu0
      %1934 = vmatprep.mubr.f32.mxu0 0.0
      %v1935 = vand.u32 %v331, 4294901760
      %1936 = vmatmul.mubr.f32.gmra.mrb[0].mxu0 %v1935
      %v1937 = vpop.f32.mrb[0].mxu0
      %v1938 = vadd.f32 %v1587, %v1937
      %v1939 = vpop.f32.mrb[0].mxu0
      %1940 = vmatprep.mubr.f32.mxu0 0.0
      %v1941 = vand.u32 %v332, 4294901760
      %1942 = vmatmul.mubr.f32.gmra.mrb[0].mxu0 %v1941
      %v1943 = vpop.f32.mrb[0].mxu0
      %v1944 = vadd.f32 %v1595, %v1943
      %v1945 = vpop.f32.mrb[0].mxu0
      %1946 = vmatprep.mubr.f32.mxu0 0.0
      %v1947 = vand.u32 %v333, 4294901760
      %1948 = vmatmul.mubr.f32.gmra.mrb[0].mxu0 %v1947
      %v1949 = vpop.f32.mrb[0].mxu0
      %v1950 = vadd.f32 %v1603, %v1949
      %v1951 = vpop.f32.mrb[0].mxu0
      %1952 = vmatprep.mubr.f32.mxu0 0.0
      %v1953 = vand.u32 %v334, 4294901760
      %1954 = vmatmul.mubr.f32.gmra.mrb[0].mxu0 %v1953
      %v1955 = vpop.f32.mrb[0].mxu0
      %v1956 = vadd.f32 %v1611, %v1955
      %v1957 = vpop.f32.mrb[0].mxu0
      %1958 = vmatprep.mubr.f32.mxu0 0.0
      %v1959 = vand.u32 %v335, 4294901760
      %1960 = vmatmul.mubr.f32.gmra.mrb[0].mxu0 %v1959
      %v1961 = vpop.f32.mrb[0].mxu0
      %v1962 = vadd.f32 %v1619, %v1961
      %v1963 = vpop.f32.mrb[0].mxu0
      %1964 = vmatprep.mubr.f32.mxu0 0.0
      %v1965 = vand.u32 %v336, 4294901760
      %1966 = vmatmul.mubr.f32.gmra.mrb[0].mxu0 %v1965
      %v1967 = vpop.f32.mrb[0].mxu0
      %v1968 = vadd.f32 %v1627, %v1967
      %v1969 = vpop.f32.mrb[0].mxu0
      %1970 = vmatprep.mubr.f32.mxu0 0.0
      %v1971 = vand.u32 %v337, 4294901760
      %1972 = vmatmul.mubr.f32.gmra.mrb[0].mxu0 %v1971
      %v1973 = vpop.f32.mrb[0].mxu0
      %v1974 = vadd.f32 %v1635, %v1973
      %v1975 = vpop.f32.mrb[0].mxu0
      %1976 = vmatprep.mubr.f32.mxu0 0.0
      %v1977 = vand.u32 %v338, 4294901760
      %1978 = vmatmul.mubr.f32.gmra.mrb[0].mxu0 %v1977
      %v1979 = vpop.f32.mrb[0].mxu0
      %v1980 = vadd.f32 %v1643, %v1979
      %v1981 = vpop.f32.mrb[0].mxu0
      %1982 = vmatprep.mubr.f32.mxu0 0.0
      %v1983 = vand.u32 %v339, 4294901760
      %1984 = vmatmul.mubr.f32.gmra.mrb[0].mxu0 %v1983
      %v1985 = vpop.f32.mrb[0].mxu0
      %v1986 = vadd.f32 %v1651, %v1985
      %v1987 = vpop.f32.mrb[0].mxu0
      %1988 = vmatprep.mubr.f32.mxu0 0.0
      %v1989 = vand.u32 %v340, 4294901760
      %1990 = vmatmul.mubr.f32.gmra.mrb[0].mxu0 %v1989
      %v1991 = vpop.f32.mrb[0].mxu0
      %v1992 = vadd.f32 %v1659, %v1991
      %v1993 = vpop.f32.mrb[0].mxu0
      %1994 = vmatprep.mubr.f32.mxu0 0.0
      %v1995 = vand.u32 %v341, 4294901760
      %1996 = vmatmul.mubr.f32.gmra.mrb[0].mxu0 %v1995
      %v1997 = vpop.f32.mrb[0].mxu0
      %v1998 = vadd.f32 %v1667, %v1997
      %v1999 = vpop.f32.mrb[0].mxu0
      %2000 = vmatprep.mubr.f32.mxu0 0.0
      %v2001 = vand.u32 %v342, 4294901760
      %2002 = vmatmul.mubr.f32.gmra.mrb[0].mxu0 %v2001
      %v2003 = vpop.f32.mrb[0].mxu0
      %v2004 = vadd.f32 %v1675, %v2003
      %v2005 = vpop.f32.mrb[0].mxu0
      %2006 = vmatprep.mubr.f32.mxu0 0.0
      %v2007 = vand.u32 %v343, 4294901760
      %2008 = vmatmul.mubr.f32.gmra.mrb[0].mxu0 %v2007
      %v2009 = vpop.f32.mrb[0].mxu0
      %v2010 = vadd.f32 %v1683, %v2009
      %v2011 = vpop.f32.mrb[0].mxu0
      %2012 = vmatprep.mubr.f32.mxu0 0.0
      %v2013 = vand.u32 %v344, 4294901760
      %2014 = vmatmul.mubr.f32.gmra.mrb[0].mxu0 %v2013
      %v2015 = vpop.f32.mrb[0].mxu0
      %v2016 = vadd.f32 %v1691, %v2015
      %v2017 = vpop.f32.mrb[0].mxu0
      %2018 = vmatprep.mubr.f32.mxu0 0.0
      %v2019 = vand.u32 %v345, 4294901760
      %2020 = vmatmul.mubr.f32.gmra.mrb[0].mxu0 %v2019
      %v2021 = vpop.f32.mrb[0].mxu0
      %v2022 = vadd.f32 %v1699, %v2021
      %v2023 = vpop.f32.mrb[0].mxu0
      %2024 = vmatprep.mubr.f32.mxu0 0.0
      %v2025 = vand.u32 %v346, 4294901760
      %2026 = vmatmul.mubr.f32.gmra.mrb[0].mxu0 %v2025
      %v2027 = vpop.f32.mrb[0].mxu0
      %v2028 = vadd.f32 %v1707, %v2027
      %v2029 = vpop.f32.mrb[0].mxu0
      %2030 = vmatprep.mubr.f32.mxu0 0.0
      %v2031 = vand.u32 %v347, 4294901760
      %2032 = vmatmul.mubr.f32.gmra.mrb[0].mxu0 %v2031
      %v2033 = vpop.f32.mrb[0].mxu0
      %v2034 = vadd.f32 %v1715, %v2033
      %v2035 = vpop.f32.mrb[0].mxu0
      %2036 = vmatprep.mubr.f32.mxu0 0.0
      %v2037 = vand.u32 %v348, 4294901760
      %2038 = vmatmul.mubr.f32.gmra.mrb[0].mxu0 %v2037
      %v2039 = vpop.f32.mrb[0].mxu0
      %v2040 = vadd.f32 %v1723, %v2039
      %v2041 = vpop.f32.mrb[0].mxu0
      %2042 = vmatprep.mubr.f32.mxu0 0.0
      %v2043 = vand.u32 %v349, 4294901760
      %2044 = vmatmul.mubr.f32.gmra.mrb[0].mxu0 %v2043
      %v2045 = vpop.f32.mrb[0].mxu0
      %v2046 = vadd.f32 %v1731, %v2045
      %v2047 = vpop.f32.mrb[0].mxu0
      %2048 = vmatprep.mubr.f32.mxu0 0.0
      %v2049 = vand.u32 %v350, 4294901760
      %2050 = vmatmul.mubr.f32.gmra.mrb[0].mxu0 %v2049
      %v2051 = vpop.f32.mrb[0].mxu0
      %v2052 = vadd.f32 %v1739, %v2051
      %v2053 = vpop.f32.mrb[0].mxu0
      %2054 = vmatprep.mubr.f32.mxu0 0.0
      %v2055 = vand.u32 %v351, 4294901760
      %2056 = vmatmul.mubr.f32.gmra.mrb[0].mxu0 %v2055
      %v2057 = vpop.f32.mrb[0].mxu0
      %v2058 = vadd.f32 %v1747, %v2057
      %v2059 = vpop.f32.mrb[0].mxu0
      %2060 = vmatprep.mubr.f32.mxu0 0.0
      %v2061 = vand.u32 %v352, 4294901760
      %2062 = vmatmul.mubr.f32.gmra.mrb[0].mxu0 %v2061
      %v2063 = vpop.f32.mrb[0].mxu0
      %v2064 = vadd.f32 %v1755, %v2063
      %v2065 = vpop.f32.mrb[0].mxu0
      %2066 = vmatprep.mubr.f32.mxu0 0.0
      %v2067 = vand.u32 %v353, 4294901760
      %2068 = vmatmul.mubr.f32.gmra.mrb[0].mxu0 %v2067
      %v2069 = vpop.f32.mrb[0].mxu0
      %v2070 = vadd.f32 %v1763, %v2069
      %v2071 = vpop.f32.mrb[0].mxu0
      %2072 = vmatprep.mubr.f32.mxu0 0.0
      %v2073 = vand.u32 %v354, 4294901760
      %2074 = vmatmul.mubr.f32.gmra.mrb[0].mxu0 %v2073
      %v2075 = vpop.f32.mrb[0].mxu0
      %v2076 = vadd.f32 %v1771, %v2075
      %v2077 = vpop.f32.mrb[0].mxu0
      %2078 = vdwg.mxu0
      %2079 = vmatprep.subr.mxu0 0.0
      %v2080 = vand.u32 %v355, 4294901760
      %2081 = vmatpush1.msra.mxu0 %v2080
      %2082 = vmatprep.subr.mxu0 0.0
      %v2083 = vand.u32 %v356, 4294901760
      %2084 = vmatpush1.msra.mxu0 %v2083
      %2085 = vmatprep.subr.mxu0 0.0
      %v2086 = vand.u32 %v357, 4294901760
      %2087 = vmatpush1.msra.mxu0 %v2086
      %2088 = vmatprep.subr.mxu0 0.0
      %v2089 = vand.u32 %v358, 4294901760
      %2090 = vmatpush1.msra.mxu0 %v2089
      %2091 = vmatprep.subr.mxu0 0.0
      %v2092 = vand.u32 %v359, 4294901760
      %2093 = vmatpush1.msra.mxu0 %v2092
      %2094 = vmatprep.subr.mxu0 0.0
      %v2095 = vand.u32 %v360, 4294901760
      %2096 = vmatpush1.msra.mxu0 %v2095
      %2097 = vmatprep.subr.mxu0 0.0
      %v2098 = vand.u32 %v361, 4294901760
      %2099 = vmatpush1.msra.mxu0 %v2098
      %2100 = vmatprep.subr.mxu0 0.0
      %v2101 = vand.u32 %v362, 4294901760
      %2102 = vmatpush1.msra.mxu0 %v2101
      %2103 = vmatprep.subr.mxu0 0.0
      %v2104 = vand.u32 %v363, 4294901760
      %2105 = vmatpush1.msra.mxu0 %v2104
      %2106 = vmatprep.subr.mxu0 0.0
      %v2107 = vand.u32 %v364, 4294901760
      %2108 = vmatpush1.msra.mxu0 %v2107
      %2109 = vmatprep.subr.mxu0 0.0
      %v2110 = vand.u32 %v365, 4294901760
      %2111 = vmatpush1.msra.mxu0 %v2110
      %2112 = vmatprep.subr.mxu0 0.0
      %v2113 = vand.u32 %v366, 4294901760
      %2114 = vmatpush1.msra.mxu0 %v2113
      %2115 = vmatprep.subr.mxu0 0.0
      %v2116 = vand.u32 %v367, 4294901760
      %2117 = vmatpush1.msra.mxu0 %v2116
      %2118 = vmatprep.subr.mxu0 0.0
      %v2119 = vand.u32 %v368, 4294901760
      %2120 = vmatpush1.msra.mxu0 %v2119
      %2121 = vmatprep.subr.mxu0 0.0
      %v2122 = vand.u32 %v369, 4294901760
      %2123 = vmatpush1.msra.mxu0 %v2122
      %2124 = vmatprep.subr.mxu0 0.0
      %v2125 = vand.u32 %v370, 4294901760
      %2126 = vmatpush1.msra.mxu0 %v2125
      %2127 = vmatprep.subr.mxu0 0.0
      %2128 = vmatpush1.msra.mxu0 0.0
      %2129 = vmatprep.subr.mxu0 0.0
      %2130 = vmatpush1.msra.mxu0 0.0
      %2131 = vmatprep.subr.mxu0 0.0
      %2132 = vmatpush1.msra.mxu0 0.0
      %2133 = vmatprep.subr.mxu0 0.0
      %2134 = vmatpush1.msra.mxu0 0.0
      %2135 = vmatprep.subr.mxu0 0.0
      %2136 = vmatpush1.msra.mxu0 0.0
      %2137 = vmatprep.subr.mxu0 0.0
      %2138 = vmatpush1.msra.mxu0 0.0
      %2139 = vmatprep.subr.mxu0 0.0
      %2140 = vmatpush1.msra.mxu0 0.0
      %2141 = vmatprep.subr.mxu0 0.0
      %2142 = vmatpush1.msra.mxu0 0.0
      %2143 = vmatprep.subr.mxu0 0.0
      %2144 = vmatpush1.msra.mxu0 0.0
      %2145 = vmatprep.subr.mxu0 0.0
      %2146 = vmatpush1.msra.mxu0 0.0
      %2147 = vmatprep.subr.mxu0 0.0
      %2148 = vmatpush1.msra.mxu0 0.0
      %2149 = vmatprep.subr.mxu0 0.0
      %2150 = vmatpush1.msra.mxu0 0.0
      %2151 = vmatprep.subr.mxu0 0.0
      %2152 = vmatpush1.msra.mxu0 0.0
      %2153 = vmatprep.subr.mxu0 0.0
      %2154 = vmatpush1.msra.mxu0 0.0
      %2155 = vmatprep.subr.mxu0 0.0
      %2156 = vmatpush1.msra.mxu0 0.0
      %2157 = vmatprep.subr.mxu0 0.0
      %2158 = vmatpush1.msra.mxu0 0.0
      %2159 = vmatprep.mubr.f32.mxu0 0.0
      %v2160 = vand.u32 %v323, 4294901760
      %2161 = vmatmul.mubr.f32.gmra.mrb[0].mxu0 %v2160
      %v2162 = vpop.f32.mrb[0].mxu0
      %v2163 = vadd.f32 %v1890, %v2162
      %v2164 = vpop.f32.mrb[0].mxu0
      %2165 = vmatprep.mubr.f32.mxu0 0.0
      %v2166 = vand.u32 %v324, 4294901760
      %2167 = vmatmul.mubr.f32.gmra.mrb[0].mxu0 %v2166
      %v2168 = vpop.f32.mrb[0].mxu0
      %v2169 = vadd.f32 %v1896, %v2168
      %v2170 = vpop.f32.mrb[0].mxu0
      %2171 = vmatprep.mubr.f32.mxu0 0.0
      %v2172 = vand.u32 %v325, 4294901760
      %2173 = vmatmul.mubr.f32.gmra.mrb[0].mxu0 %v2172
      %v2174 = vpop.f32.mrb[0].mxu0
      %v2175 = vadd.f32 %v1902, %v2174
      %v2176 = vpop.f32.mrb[0].mxu0
      %2177 = vmatprep.mubr.f32.mxu0 0.0
      %v2178 = vand.u32 %v326, 4294901760
      %2179 = vmatmul.mubr.f32.gmra.mrb[0].mxu0 %v2178
      %v2180 = vpop.f32.mrb[0].mxu0
      %v2181 = vadd.f32 %v1908, %v2180
      %v2182 = vpop.f32.mrb[0].mxu0
      %2183 = vmatprep.mubr.f32.mxu0 0.0
      %v2184 = vand.u32 %v327, 4294901760
      %2185 = vmatmul.mubr.f32.gmra.mrb[0].mxu0 %v2184
      %v2186 = vpop.f32.mrb[0].mxu0
      %v2187 = vadd.f32 %v1914, %v2186
      %v2188 = vpop.f32.mrb[0].mxu0
      %2189 = vmatprep.mubr.f32.mxu0 0.0
      %v2190 = vand.u32 %v328, 4294901760
      %2191 = vmatmul.mubr.f32.gmra.mrb[0].mxu0 %v2190
      %v2192 = vpop.f32.mrb[0].mxu0
      %v2193 = vadd.f32 %v1920, %v2192
      %v2194 = vpop.f32.mrb[0].mxu0
      %2195 = vmatprep.mubr.f32.mxu0 0.0
      %v2196 = vand.u32 %v329, 4294901760
      %2197 = vmatmul.mubr.f32.gmra.mrb[0].mxu0 %v2196
      %v2198 = vpop.f32.mrb[0].mxu0
      %v2199 = vadd.f32 %v1926, %v2198
      %v2200 = vpop.f32.mrb[0].mxu0
      %2201 = vmatprep.mubr.f32.mxu0 0.0
      %v2202 = vand.u32 %v330, 4294901760
      %2203 = vmatmul.mubr.f32.gmra.mrb[0].mxu0 %v2202
      %v2204 = vpop.f32.mrb[0].mxu0
      %v2205 = vadd.f32 %v1932, %v2204
      %v2206 = vpop.f32.mrb[0].mxu0
      %2207 = vmatprep.mubr.f32.mxu0 0.0
      %v2208 = vand.u32 %v331, 4294901760
      %2209 = vmatmul.mubr.f32.gmra.mrb[0].mxu0 %v2208
      %v2210 = vpop.f32.mrb[0].mxu0
      %v2211 = vadd.f32 %v1938, %v2210
      %v2212 = vpop.f32.mrb[0].mxu0
      %2213 = vmatprep.mubr.f32.mxu0 0.0
      %v2214 = vand.u32 %v332, 4294901760
      %2215 = vmatmul.mubr.f32.gmra.mrb[0].mxu0 %v2214
      %v2216 = vpop.f32.mrb[0].mxu0
      %v2217 = vadd.f32 %v1944, %v2216
      %v2218 = vpop.f32.mrb[0].mxu0
      %2219 = vmatprep.mubr.f32.mxu0 0.0
      %v2220 = vand.u32 %v333, 4294901760
      %2221 = vmatmul.mubr.f32.gmra.mrb[0].mxu0 %v2220
      %v2222 = vpop.f32.mrb[0].mxu0
      %v2223 = vadd.f32 %v1950, %v2222
      %v2224 = vpop.f32.mrb[0].mxu0
      %2225 = vmatprep.mubr.f32.mxu0 0.0
      %v2226 = vand.u32 %v334, 4294901760
      %2227 = vmatmul.mubr.f32.gmra.mrb[0].mxu0 %v2226
      %v2228 = vpop.f32.mrb[0].mxu0
      %v2229 = vadd.f32 %v1956, %v2228
      %v2230 = vpop.f32.mrb[0].mxu0
      %2231 = vmatprep.mubr.f32.mxu0 0.0
      %v2232 = vand.u32 %v335, 4294901760
      %2233 = vmatmul.mubr.f32.gmra.mrb[0].mxu0 %v2232
      %v2234 = vpop.f32.mrb[0].mxu0
      %v2235 = vadd.f32 %v1962, %v2234
      %v2236 = vpop.f32.mrb[0].mxu0
      %2237 = vmatprep.mubr.f32.mxu0 0.0
      %v2238 = vand.u32 %v336, 4294901760
      %2239 = vmatmul.mubr.f32.gmra.mrb[0].mxu0 %v2238
      %v2240 = vpop.f32.mrb[0].mxu0
      %v2241 = vadd.f32 %v1968, %v2240
      %v2242 = vpop.f32.mrb[0].mxu0
      %2243 = vmatprep.mubr.f32.mxu0 0.0
      %v2244 = vand.u32 %v337, 4294901760
      %2245 = vmatmul.mubr.f32.gmra.mrb[0].mxu0 %v2244
      %v2246 = vpop.f32.mrb[0].mxu0
      %v2247 = vadd.f32 %v1974, %v2246
      %v2248 = vpop.f32.mrb[0].mxu0
      %2249 = vmatprep.mubr.f32.mxu0 0.0
      %v2250 = vand.u32 %v338, 4294901760
      %2251 = vmatmul.mubr.f32.gmra.mrb[0].mxu0 %v2250
      %v2252 = vpop.f32.mrb[0].mxu0
      %v2253 = vadd.f32 %v1980, %v2252
      %v2254 = vpop.f32.mrb[0].mxu0
      %2255 = vmatprep.mubr.f32.mxu0 0.0
      %v2256 = vand.u32 %v339, 4294901760
      %2257 = vmatmul.mubr.f32.gmra.mrb[0].mxu0 %v2256
      %v2258 = vpop.f32.mrb[0].mxu0
      %v2259 = vadd.f32 %v1986, %v2258
      %v2260 = vpop.f32.mrb[0].mxu0
      %2261 = vmatprep.mubr.f32.mxu0 0.0
      %v2262 = vand.u32 %v340, 4294901760
      %2263 = vmatmul.mubr.f32.gmra.mrb[0].mxu0 %v2262
      %v2264 = vpop.f32.mrb[0].mxu0
      %v2265 = vadd.f32 %v1992, %v2264
      %v2266 = vpop.f32.mrb[0].mxu0
      %2267 = vmatprep.mubr.f32.mxu0 0.0
      %v2268 = vand.u32 %v341, 4294901760
      %2269 = vmatmul.mubr.f32.gmra.mrb[0].mxu0 %v2268
      %v2270 = vpop.f32.mrb[0].mxu0
      %v2271 = vadd.f32 %v1998, %v2270
      %v2272 = vpop.f32.mrb[0].mxu0
      %2273 = vmatprep.mubr.f32.mxu0 0.0
      %v2274 = vand.u32 %v342, 4294901760
      %2275 = vmatmul.mubr.f32.gmra.mrb[0].mxu0 %v2274
      %v2276 = vpop.f32.mrb[0].mxu0
      %v2277 = vadd.f32 %v2004, %v2276
      %v2278 = vpop.f32.mrb[0].mxu0
      %2279 = vmatprep.mubr.f32.mxu0 0.0
      %v2280 = vand.u32 %v343, 4294901760
      %2281 = vmatmul.mubr.f32.gmra.mrb[0].mxu0 %v2280
      %v2282 = vpop.f32.mrb[0].mxu0
      %v2283 = vadd.f32 %v2010, %v2282
      %v2284 = vpop.f32.mrb[0].mxu0
      %2285 = vmatprep.mubr.f32.mxu0 0.0
      %v2286 = vand.u32 %v344, 4294901760
      %2287 = vmatmul.mubr.f32.gmra.mrb[0].mxu0 %v2286
      %v2288 = vpop.f32.mrb[0].mxu0
      %v2289 = vadd.f32 %v2016, %v2288
      %v2290 = vpop.f32.mrb[0].mxu0
      %2291 = vmatprep.mubr.f32.mxu0 0.0
      %v2292 = vand.u32 %v345, 4294901760
      %2293 = vmatmul.mubr.f32.gmra.mrb[0].mxu0 %v2292
      %v2294 = vpop.f32.mrb[0].mxu0
      %v2295 = vadd.f32 %v2022, %v2294
      %v2296 = vpop.f32.mrb[0].mxu0
      %2297 = vmatprep.mubr.f32.mxu0 0.0
      %v2298 = vand.u32 %v346, 4294901760
      %2299 = vmatmul.mubr.f32.gmra.mrb[0].mxu0 %v2298
      %v2300 = vpop.f32.mrb[0].mxu0
      %v2301 = vadd.f32 %v2028, %v2300
      %v2302 = vpop.f32.mrb[0].mxu0
      %2303 = vmatprep.mubr.f32.mxu0 0.0
      %v2304 = vand.u32 %v347, 4294901760
      %2305 = vmatmul.mubr.f32.gmra.mrb[0].mxu0 %v2304
      %v2306 = vpop.f32.mrb[0].mxu0
      %v2307 = vadd.f32 %v2034, %v2306
      %v2308 = vpop.f32.mrb[0].mxu0
      %2309 = vmatprep.mubr.f32.mxu0 0.0
      %v2310 = vand.u32 %v348, 4294901760
      %2311 = vmatmul.mubr.f32.gmra.mrb[0].mxu0 %v2310
      %v2312 = vpop.f32.mrb[0].mxu0
      %v2313 = vadd.f32 %v2040, %v2312
      %v2314 = vpop.f32.mrb[0].mxu0
      %2315 = vmatprep.mubr.f32.mxu0 0.0
      %v2316 = vand.u32 %v349, 4294901760
      %2317 = vmatmul.mubr.f32.gmra.mrb[0].mxu0 %v2316
      %v2318 = vpop.f32.mrb[0].mxu0
      %v2319 = vadd.f32 %v2046, %v2318
      %v2320 = vpop.f32.mrb[0].mxu0
      %2321 = vmatprep.mubr.f32.mxu0 0.0
      %v2322 = vand.u32 %v350, 4294901760
      %2323 = vmatmul.mubr.f32.gmra.mrb[0].mxu0 %v2322
      %v2324 = vpop.f32.mrb[0].mxu0
      %v2325 = vadd.f32 %v2052, %v2324
      %v2326 = vpop.f32.mrb[0].mxu0
      %2327 = vmatprep.mubr.f32.mxu0 0.0
      %v2328 = vand.u32 %v351, 4294901760
      %2329 = vmatmul.mubr.f32.gmra.mrb[0].mxu0 %v2328
      %v2330 = vpop.f32.mrb[0].mxu0
      %v2331 = vadd.f32 %v2058, %v2330
      %v2332 = vpop.f32.mrb[0].mxu0
      %2333 = vmatprep.mubr.f32.mxu0 0.0
      %v2334 = vand.u32 %v352, 4294901760
      %2335 = vmatmul.mubr.f32.gmra.mrb[0].mxu0 %v2334
      %v2336 = vpop.f32.mrb[0].mxu0
      %v2337 = vadd.f32 %v2064, %v2336
      %v2338 = vpop.f32.mrb[0].mxu0
      %2339 = vmatprep.mubr.f32.mxu0 0.0
      %v2340 = vand.u32 %v353, 4294901760
      %2341 = vmatmul.mubr.f32.gmra.mrb[0].mxu0 %v2340
      %v2342 = vpop.f32.mrb[0].mxu0
      %v2343 = vadd.f32 %v2070, %v2342
      %v2344 = vpop.f32.mrb[0].mxu0
      %2345 = vmatprep.mubr.f32.mxu0 0.0
      %v2346 = vand.u32 %v354, 4294901760
      %2347 = vmatmul.mubr.f32.gmra.mrb[0].mxu0 %v2346
      %v2348 = vpop.f32.mrb[0].mxu0
      %v2349 = vadd.f32 %v2076, %v2348
      %v2350 = vpop.f32.mrb[0].mxu0
      %2351 = vdwg.mxu0
      %2352 = vst [vmem:[#allocation2 + $0x18] sm:$0xff] %v2163
      %2353 = vst [vmem:[#allocation2 + $0x20] sm:$0xff] %v2169
      %2354 = vst [vmem:[#allocation2 + $0x28] sm:$0xff] %v2175
      %2355 = vst [vmem:[#allocation2 + $0x30] sm:$0xff] %v2181
      %2356 = vst [vmem:[#allocation2 + $0x38] sm:$0xff] %v2187
      %2357 = vst [vmem:[#allocation2 + $0x40] sm:$0xff] %v2193
      %2358 = vst [vmem:[#allocation2 + $0x48] sm:$0xff] %v2199
      %2359 = vst [vmem:[#allocation2 + $0x50] sm:$0xff] %v2205
      %2360 = vst [vmem:[#allocation2 + $0x58] sm:$0xff] %v2211
      %2361 = vst [vmem:[#allocation2 + $0x60] sm:$0xff] %v2217
      %2362 = vst [vmem:[#allocation2 + $0x68] sm:$0xff] %v2223
      %2363 = vst [vmem:[#allocation2 + $0x70] sm:$0xff] %v2229
      %2364 = vst [vmem:[#allocation2 + $0x78] sm:$0xff] %v2235
      %2365 = vst [vmem:[#allocation2 + $0x80] sm:$0xff] %v2241
      %2366 = vst [vmem:[#allocation2 + $0x88] sm:$0xff] %v2247
      %2367 = vst [vmem:[#allocation2 + $0x90] sm:$0xff] %v2253
      %2368 = vst [vmem:[#allocation2 + $0x98] sm:$0xff] %v2259
      %2369 = vst [vmem:[#allocation2 + $0xa0] sm:$0xff] %v2265
      %2370 = vst [vmem:[#allocation2 + $0xa8] sm:$0xff] %v2271
      %2371 = vst [vmem:[#allocation2 + $0xb0] sm:$0xff] %v2277
      %2372 = vst [vmem:[#allocation2 + $0xb8] sm:$0xff] %v2283
      %2373 = vst [vmem:[#allocation2 + $0xc0] sm:$0xff] %v2289
      %2374 = vst [vmem:[#allocation2 + $0xc8] sm:$0xff] %v2295
      %2375 = vst [vmem:[#allocation2 + $0xd0] sm:$0xff] %v2301
      %2376 = vst [vmem:[#allocation2 + $0xd8] sm:$0xff] %v2307
      %2377 = vst [vmem:[#allocation2 + $0xe0] sm:$0xff] %v2313
      %2378 = vst [vmem:[#allocation2 + $0xe8] sm:$0xff] %v2319
      %2379 = vst [vmem:[#allocation2 + $0xf0] sm:$0xff] %v2325
      %2380 = vst [vmem:[#allocation2 + $0xf8] sm:$0xff] %v2331
      %2381 = vst [vmem:[#allocation2 + $0x100] sm:$0xff] %v2337
      %2382 = vst [vmem:[#allocation2 + $0x108] sm:$0xff] %v2343
      %2383 = vst [vmem:[#allocation2 + $0x110] sm:$0xff] %v2349
      %v2384 = vld [vmem:[%s3] sm:$0xff]
      %v2385 = vld [vmem:[%s3 + $0x8] sm:$0x1]
      %v2386 = vlaneseq
      %v2387 = vshrl.u32 %v2386, 7
      %v2388 = vsub.s32 4, %v2387
      %v2389 = vrot.slane %v2384, %v2388
      %v2390 = vmul.f32 %v2163, %v2389
      %v2391 = vmul.f32 %v2169, %v2389
      %v2392 = vmul.f32 %v2175, %v2389
      %v2393 = vmul.f32 %v2181, %v2389
      %v2394 = vmul.f32 %v2187, %v2389
      %v2395 = vmul.f32 %v2193, %v2389
      %v2396 = vmul.f32 %v2199, %v2389
      %v2397 = vmul.f32 %v2205, %v2389
      %v2398 = vmul.f32 %v2211, %v2389
      %v2399 = vmul.f32 %v2217, %v2389
      %v2400 = vmul.f32 %v2223, %v2389
      %v2401 = vmul.f32 %v2229, %v2389
      %v2402 = vmul.f32 %v2235, %v2389
      %v2403 = vmul.f32 %v2241, %v2389
      %v2404 = vmul.f32 %v2247, %v2389
      %v2405 = vmul.f32 %v2253, %v2389
      %v2406 = vmul.f32 %v2259, %v2389
      %v2407 = vmul.f32 %v2265, %v2389
      %v2408 = vmul.f32 %v2271, %v2389
      %v2409 = vmul.f32 %v2277, %v2389
      %v2410 = vmul.f32 %v2283, %v2389
      %v2411 = vmul.f32 %v2289, %v2389
      %v2412 = vmul.f32 %v2295, %v2389
      %v2413 = vmul.f32 %v2301, %v2389
      %v2414 = vmul.f32 %v2307, %v2389
      %v2415 = vmul.f32 %v2313, %v2389
      %v2416 = vmul.f32 %v2319, %v2389
      %v2417 = vmul.f32 %v2325, %v2389
      %v2418 = vmul.f32 %v2331, %v2389
      %v2419 = vmul.f32 %v2337, %v2389
      %v2420 = vmul.f32 %v2343, %v2389
      %v2421 = vmul.f32 %v2349, %v2389
      %v2422 = vld [vmem:[#allocation2 + $0x7] sm:$0xff]
      %v2423 = vld [vmem:[#allocation2 + $0xf] sm:$0xff]
      %v2424 = vld [vmem:[#allocation2 + $0x17] sm:$0xff]
      %v2425 = vld [vmem:[#allocation2 + $0x1f] sm:$0xff]
      %v2426 = vld [vmem:[#allocation2 + $0x27] sm:$0xff]
      %v2427 = vld [vmem:[#allocation2 + $0x2f] sm:$0xff]
      %v2428 = vld [vmem:[#allocation2 + $0x37] sm:$0xff]
      %v2429 = vld [vmem:[#allocation2 + $0x3f] sm:$0xff]
      %v2430 = vld [vmem:[#allocation2 + $0x47] sm:$0xff]
      %v2431 = vld [vmem:[#allocation2 + $0x4f] sm:$0xff]
      %v2432 = vld [vmem:[#allocation2 + $0x57] sm:$0xff]
      %v2433 = vld [vmem:[#allocation2 + $0x5f] sm:$0xff]
      %v2434 = vld [vmem:[#allocation2 + $0x67] sm:$0xff]
      %v2435 = vld [vmem:[#allocation2 + $0x6f] sm:$0xff]
      %v2436 = vld [vmem:[#allocation2 + $0x77] sm:$0xff]
      %v2437 = vld [vmem:[#allocation2 + $0x7f] sm:$0xff]
      %v2438 = vld [vmem:[#allocation2 + $0x87] sm:$0xff]
      %v2439 = vld [vmem:[#allocation2 + $0x8f] sm:$0xff]
      %v2440 = vld [vmem:[#allocation2 + $0x97] sm:$0xff]
      %v2441 = vld [vmem:[#allocation2 + $0x9f] sm:$0xff]
      %v2442 = vld [vmem:[#allocation2 + $0xa7] sm:$0xff]
      %v2443 = vld [vmem:[#allocation2 + $0xaf] sm:$0xff]
      %v2444 = vld [vmem:[#allocation2 + $0xb7] sm:$0xff]
      %v2445 = vld [vmem:[#allocation2 + $0xbf] sm:$0xff]
      %v2446 = vld [vmem:[#allocation2 + $0xc7] sm:$0xff]
      %v2447 = vld [vmem:[#allocation2 + $0xcf] sm:$0xff]
      %v2448 = vld [vmem:[#allocation2 + $0xd7] sm:$0xff]
      %v2449 = vld [vmem:[#allocation2 + $0xdf] sm:$0xff]
      %v2450 = vld [vmem:[#allocation2 + $0xe7] sm:$0xff]
      %v2451 = vld [vmem:[#allocation2 + $0xef] sm:$0xff]
      %v2452 = vld [vmem:[#allocation2 + $0xf7] sm:$0xff]
      %v2453 = vld [vmem:[#allocation2 + $0xff] sm:$0xff]
      %v2454 = vmul.f32 %v2422, %v258
      %v2455 = vmul.f32 %v2423, %v259
      %v2456 = vmul.f32 %v2424, %v260
      %v2457 = vmul.f32 %v2425, %v261
      %v2458 = vmul.f32 %v2426, %v262
      %v2459 = vmul.f32 %v2427, %v263
      %v2460 = vmul.f32 %v2428, %v264
      %v2461 = vmul.f32 %v2429, %v265
      %v2462 = vmul.f32 %v2430, %v266
      %v2463 = vmul.f32 %v2431, %v267
      %v2464 = vmul.f32 %v2432, %v268
      %v2465 = vmul.f32 %v2433, %v269
      %v2466 = vmul.f32 %v2434, %v270
      %v2467 = vmul.f32 %v2435, %v271
      %v2468 = vmul.f32 %v2436, %v272
      %v2469 = vmul.f32 %v2437, %v273
      %v2470 = vmul.f32 %v2438, %v274
      %v2471 = vmul.f32 %v2439, %v275
      %v2472 = vmul.f32 %v2440, %v276
      %v2473 = vmul.f32 %v2441, %v277
      %v2474 = vmul.f32 %v2442, %v278
      %v2475 = vmul.f32 %v2443, %v279
      %v2476 = vmul.f32 %v2444, %v280
      %v2477 = vmul.f32 %v2445, %v281
      %v2478 = vmul.f32 %v2446, %v282
      %v2479 = vmul.f32 %v2447, %v283
      %v2480 = vmul.f32 %v2448, %v284
      %v2481 = vmul.f32 %v2449, %v285
      %v2482 = vmul.f32 %v2450, %v286
      %v2483 = vmul.f32 %v2451, %v287
      %v2484 = vmul.f32 %v2452, %v288
      %v2485 = vmul.f32 %v2453, %v289
      %v2486 = vlaneseq
      %v2487 = vshrl.u32 %v2486, 7
      %v2488 = vsub.s32 0, %v2487
      %v2489 = vrot.slane %v2384, %v2488
      %v2490 = vmul.f32 %v2454, %v2489
      %v2491 = vmul.f32 %v2455, %v2489
      %v2492 = vmul.f32 %v2456, %v2489
      %v2493 = vmul.f32 %v2457, %v2489
      %v2494 = vmul.f32 %v2458, %v2489
      %v2495 = vmul.f32 %v2459, %v2489
      %v2496 = vmul.f32 %v2460, %v2489
      %v2497 = vmul.f32 %v2461, %v2489
      %v2498 = vmul.f32 %v2462, %v2489
      %v2499 = vmul.f32 %v2463, %v2489
      %v2500 = vmul.f32 %v2464, %v2489
      %v2501 = vmul.f32 %v2465, %v2489
      %v2502 = vmul.f32 %v2466, %v2489
      %v2503 = vmul.f32 %v2467, %v2489
      %v2504 = vmul.f32 %v2468, %v2489
      %v2505 = vmul.f32 %v2469, %v2489
      %v2506 = vmul.f32 %v2470, %v2489
      %v2507 = vmul.f32 %v2471, %v2489
      %v2508 = vmul.f32 %v2472, %v2489
      %v2509 = vmul.f32 %v2473, %v2489
      %v2510 = vmul.f32 %v2474, %v2489
      %v2511 = vmul.f32 %v2475, %v2489
      %v2512 = vmul.f32 %v2476, %v2489
      %v2513 = vmul.f32 %v2477, %v2489
      %v2514 = vmul.f32 %v2478, %v2489
      %v2515 = vmul.f32 %v2479, %v2489
      %v2516 = vmul.f32 %v2480, %v2489
      %v2517 = vmul.f32 %v2481, %v2489
      %v2518 = vmul.f32 %v2482, %v2489
      %v2519 = vmul.f32 %v2483, %v2489
      %v2520 = vmul.f32 %v2484, %v2489
      %v2521 = vmul.f32 %v2485, %v2489
      %v2522 = vld [vmem:[#allocation2 + $0x8] sm:$0xff]
      %v2523 = vld [vmem:[#allocation2 + $0x10] sm:$0xff]
      %v2524 = vld [vmem:[#allocation2 + $0x18] sm:$0xff]
      %v2525 = vld [vmem:[#allocation2 + $0x20] sm:$0xff]
      %v2526 = vld [vmem:[#allocation2 + $0x28] sm:$0xff]
      %v2527 = vld [vmem:[#allocation2 + $0x30] sm:$0xff]
      %v2528 = vld [vmem:[#allocation2 + $0x38] sm:$0xff]
      %v2529 = vld [vmem:[#allocation2 + $0x40] sm:$0xff]
      %v2530 = vld [vmem:[#allocation2 + $0x48] sm:$0xff]
      %v2531 = vld [vmem:[#allocation2 + $0x50] sm:$0xff]
      %v2532 = vld [vmem:[#allocation2 + $0x58] sm:$0xff]
      %v2533 = vld [vmem:[#allocation2 + $0x60] sm:$0xff]
      %v2534 = vld [vmem:[#allocation2 + $0x68] sm:$0xff]
      %v2535 = vld [vmem:[#allocation2 + $0x70] sm:$0xff]
      %v2536 = vld [vmem:[#allocation2 + $0x78] sm:$0xff]
      %v2537 = vld [vmem:[#allocation2 + $0x80] sm:$0xff]
      %v2538 = vld [vmem:[#allocation2 + $0x88] sm:$0xff]
      %v2539 = vld [vmem:[#allocation2 + $0x90] sm:$0xff]
      %v2540 = vld [vmem:[#allocation2 + $0x98] sm:$0xff]
      %v2541 = vld [vmem:[#allocation2 + $0xa0] sm:$0xff]
      %v2542 = vld [vmem:[#allocation2 + $0xa8] sm:$0xff]
      %v2543 = vld [vmem:[#allocation2 + $0xb0] sm:$0xff]
      %v2544 = vld [vmem:[#allocation2 + $0xb8] sm:$0xff]
      %v2545 = vld [vmem:[#allocation2 + $0xc0] sm:$0xff]
      %v2546 = vld [vmem:[#allocation2 + $0xc8] sm:$0xff]
      %v2547 = vld [vmem:[#allocation2 + $0xd0] sm:$0xff]
      %v2548 = vld [vmem:[#allocation2 + $0xd8] sm:$0xff]
      %v2549 = vld [vmem:[#allocation2 + $0xe0] sm:$0xff]
      %v2550 = vld [vmem:[#allocation2 + $0xe8] sm:$0xff]
      %v2551 = vld [vmem:[#allocation2 + $0xf0] sm:$0xff]
      %v2552 = vld [vmem:[#allocation2 + $0xf8] sm:$0xff]
      %v2553 = vld [vmem:[#allocation2 + $0x100] sm:$0xff]
      %v2554 = vlaneseq
      %v2555 = vshrl.u32 %v2554, 7
      %v2556 = vsub.s32 1, %v2555
      %v2557 = vrot.slane %v2384, %v2556
      %v2558 = vmul.f32 %v2522, %v2557
      %v2559 = vmul.f32 %v2523, %v2557
      %v2560 = vmul.f32 %v2524, %v2557
      %v2561 = vmul.f32 %v2525, %v2557
      %v2562 = vmul.f32 %v2526, %v2557
      %v2563 = vmul.f32 %v2527, %v2557
      %v2564 = vmul.f32 %v2528, %v2557
      %v2565 = vmul.f32 %v2529, %v2557
      %v2566 = vmul.f32 %v2530, %v2557
      %v2567 = vmul.f32 %v2531, %v2557
      %v2568 = vmul.f32 %v2532, %v2557
      %v2569 = vmul.f32 %v2533, %v2557
      %v2570 = vmul.f32 %v2534, %v2557
      %v2571 = vmul.f32 %v2535, %v2557
      %v2572 = vmul.f32 %v2536, %v2557
      %v2573 = vmul.f32 %v2537, %v2557
      %v2574 = vmul.f32 %v2538, %v2557
      %v2575 = vmul.f32 %v2539, %v2557
      %v2576 = vmul.f32 %v2540, %v2557
      %v2577 = vmul.f32 %v2541, %v2557
      %v2578 = vmul.f32 %v2542, %v2557
      %v2579 = vmul.f32 %v2543, %v2557
      %v2580 = vmul.f32 %v2544, %v2557
      %v2581 = vmul.f32 %v2545, %v2557
      %v2582 = vmul.f32 %v2546, %v2557
      %v2583 = vmul.f32 %v2547, %v2557
      %v2584 = vmul.f32 %v2548, %v2557
      %v2585 = vmul.f32 %v2549, %v2557
      %v2586 = vmul.f32 %v2550, %v2557
      %v2587 = vmul.f32 %v2551, %v2557
      %v2588 = vmul.f32 %v2552, %v2557
      %v2589 = vmul.f32 %v2553, %v2557
      %v2590 = vadd.f32 %v2390, %v2558
      %v2591 = vadd.f32 %v2391, %v2559
      %v2592 = vadd.f32 %v2392, %v2560
      %v2593 = vadd.f32 %v2393, %v2561
      %v2594 = vadd.f32 %v2394, %v2562
      %v2595 = vadd.f32 %v2395, %v2563
      %v2596 = vadd.f32 %v2396, %v2564
      %v2597 = vadd.f32 %v2397, %v2565
      %v2598 = vadd.f32 %v2398, %v2566
      %v2599 = vadd.f32 %v2399, %v2567
      %v2600 = vadd.f32 %v2400, %v2568
      %v2601 = vadd.f32 %v2401, %v2569
      %v2602 = vadd.f32 %v2402, %v2570
      %v2603 = vadd.f32 %v2403, %v2571
      %v2604 = vadd.f32 %v2404, %v2572
      %v2605 = vadd.f32 %v2405, %v2573
      %v2606 = vadd.f32 %v2406, %v2574
      %v2607 = vadd.f32 %v2407, %v2575
      %v2608 = vadd.f32 %v2408, %v2576
      %v2609 = vadd.f32 %v2409, %v2577
      %v2610 = vadd.f32 %v2410, %v2578
      %v2611 = vadd.f32 %v2411, %v2579
      %v2612 = vadd.f32 %v2412, %v2580
      %v2613 = vadd.f32 %v2413, %v2581
      %v2614 = vadd.f32 %v2414, %v2582
      %v2615 = vadd.f32 %v2415, %v2583
      %v2616 = vadd.f32 %v2416, %v2584
      %v2617 = vadd.f32 %v2417, %v2585
      %v2618 = vadd.f32 %v2418, %v2586
      %v2619 = vadd.f32 %v2419, %v2587
      %v2620 = vadd.f32 %v2420, %v2588
      %v2621 = vadd.f32 %v2421, %v2589
      %v2622 = vld [vmem:[#allocation2 + $0x9] sm:$0xff]
      %v2623 = vld [vmem:[#allocation2 + $0x11] sm:$0xff]
      %v2624 = vld [vmem:[#allocation2 + $0x19] sm:$0xff]
      %v2625 = vld [vmem:[#allocation2 + $0x21] sm:$0xff]
      %v2626 = vld [vmem:[#allocation2 + $0x29] sm:$0xff]
      %v2627 = vld [vmem:[#allocation2 + $0x31] sm:$0xff]
      %v2628 = vld [vmem:[#allocation2 + $0x39] sm:$0xff]
      %v2629 = vld [vmem:[#allocation2 + $0x41] sm:$0xff]
      %v2630 = vld [vmem:[#allocation2 + $0x49] sm:$0xff]
      %v2631 = vld [vmem:[#allocation2 + $0x51] sm:$0xff]
      %v2632 = vld [vmem:[#allocation2 + $0x59] sm:$0xff]
      %v2633 = vld [vmem:[#allocation2 + $0x61] sm:$0xff]
      %v2634 = vld [vmem:[#allocation2 + $0x69] sm:$0xff]
      %v2635 = vld [vmem:[#allocation2 + $0x71] sm:$0xff]
      %v2636 = vld [vmem:[#allocation2 + $0x79] sm:$0xff]
      %v2637 = vld [vmem:[#allocation2 + $0x81] sm:$0xff]
      %v2638 = vld [vmem:[#allocation2 + $0x89] sm:$0xff]
      %v2639 = vld [vmem:[#allocation2 + $0x91] sm:$0xff]
      %v2640 = vld [vmem:[#allocation2 + $0x99] sm:$0xff]
      %v2641 = vld [vmem:[#allocation2 + $0xa1] sm:$0xff]
      %v2642 = vld [vmem:[#allocation2 + $0xa9] sm:$0xff]
      %v2643 = vld [vmem:[#allocation2 + $0xb1] sm:$0xff]
      %v2644 = vld [vmem:[#allocation2 + $0xb9] sm:$0xff]
      %v2645 = vld [vmem:[#allocation2 + $0xc1] sm:$0xff]
      %v2646 = vld [vmem:[#allocation2 + $0xc9] sm:$0xff]
      %v2647 = vld [vmem:[#allocation2 + $0xd1] sm:$0xff]
      %v2648 = vld [vmem:[#allocation2 + $0xd9] sm:$0xff]
      %v2649 = vld [vmem:[#allocation2 + $0xe1] sm:$0xff]
      %v2650 = vld [vmem:[#allocation2 + $0xe9] sm:$0xff]
      %v2651 = vld [vmem:[#allocation2 + $0xf1] sm:$0xff]
      %v2652 = vld [vmem:[#allocation2 + $0xf9] sm:$0xff]
      %v2653 = vld [vmem:[#allocation2 + $0x101] sm:$0xff]
      %v2654 = vmul.f32 %v2622, %v291
      %v2655 = vmul.f32 %v2623, %v292
      %v2656 = vmul.f32 %v2624, %v293
      %v2657 = vmul.f32 %v2625, %v294
      %v2658 = vmul.f32 %v2626, %v295
      %v2659 = vmul.f32 %v2627, %v296
      %v2660 = vmul.f32 %v2628, %v297
      %v2661 = vmul.f32 %v2629, %v298
      %v2662 = vmul.f32 %v2630, %v299
      %v2663 = vmul.f32 %v2631, %v300
      %v2664 = vmul.f32 %v2632, %v301
      %v2665 = vmul.f32 %v2633, %v302
      %v2666 = vmul.f32 %v2634, %v303
      %v2667 = vmul.f32 %v2635, %v304
      %v2668 = vmul.f32 %v2636, %v305
      %v2669 = vmul.f32 %v2637, %v306
      %v2670 = vmul.f32 %v2638, %v307
      %v2671 = vmul.f32 %v2639, %v308
      %v2672 = vmul.f32 %v2640, %v309
      %v2673 = vmul.f32 %v2641, %v310
      %v2674 = vmul.f32 %v2642, %v311
      %v2675 = vmul.f32 %v2643, %v312
      %v2676 = vmul.f32 %v2644, %v313
      %v2677 = vmul.f32 %v2645, %v314
      %v2678 = vmul.f32 %v2646, %v315
      %v2679 = vmul.f32 %v2647, %v316
      %v2680 = vmul.f32 %v2648, %v317
      %v2681 = vmul.f32 %v2649, %v318
      %v2682 = vmul.f32 %v2650, %v319
      %v2683 = vmul.f32 %v2651, %v320
      %v2684 = vmul.f32 %v2652, %v321
      %v2685 = vmul.f32 %v2653, %v322
      %v2686 = vlaneseq
      %v2687 = vshrl.u32 %v2686, 7
      %v2688 = vsub.s32 2, %v2687
      %v2689 = vrot.slane %v2384, %v2688
      %v2690 = vmul.f32 %v2654, %v2689
      %v2691 = vmul.f32 %v2655, %v2689
      %v2692 = vmul.f32 %v2656, %v2689
      %v2693 = vmul.f32 %v2657, %v2689
      %v2694 = vmul.f32 %v2658, %v2689
      %v2695 = vmul.f32 %v2659, %v2689
      %v2696 = vmul.f32 %v2660, %v2689
      %v2697 = vmul.f32 %v2661, %v2689
      %v2698 = vmul.f32 %v2662, %v2689
      %v2699 = vmul.f32 %v2663, %v2689
      %v2700 = vmul.f32 %v2664, %v2689
      %v2701 = vmul.f32 %v2665, %v2689
      %v2702 = vmul.f32 %v2666, %v2689
      %v2703 = vmul.f32 %v2667, %v2689
      %v2704 = vmul.f32 %v2668, %v2689
      %v2705 = vmul.f32 %v2669, %v2689
      %v2706 = vmul.f32 %v2670, %v2689
      %v2707 = vmul.f32 %v2671, %v2689
      %v2708 = vmul.f32 %v2672, %v2689
      %v2709 = vmul.f32 %v2673, %v2689
      %v2710 = vmul.f32 %v2674, %v2689
      %v2711 = vmul.f32 %v2675, %v2689
      %v2712 = vmul.f32 %v2676, %v2689
      %v2713 = vmul.f32 %v2677, %v2689
      %v2714 = vmul.f32 %v2678, %v2689
      %v2715 = vmul.f32 %v2679, %v2689
      %v2716 = vmul.f32 %v2680, %v2689
      %v2717 = vmul.f32 %v2681, %v2689
      %v2718 = vmul.f32 %v2682, %v2689
      %v2719 = vmul.f32 %v2683, %v2689
      %v2720 = vmul.f32 %v2684, %v2689
      %v2721 = vmul.f32 %v2685, %v2689
      %v2722 = vadd.f32 %v2490, %v2690
      %v2723 = vadd.f32 %v2491, %v2691
      %v2724 = vadd.f32 %v2492, %v2692
      %v2725 = vadd.f32 %v2493, %v2693
      %v2726 = vadd.f32 %v2494, %v2694
      %v2727 = vadd.f32 %v2495, %v2695
      %v2728 = vadd.f32 %v2496, %v2696
      %v2729 = vadd.f32 %v2497, %v2697
      %v2730 = vadd.f32 %v2498, %v2698
      %v2731 = vadd.f32 %v2499, %v2699
      %v2732 = vadd.f32 %v2500, %v2700
      %v2733 = vadd.f32 %v2501, %v2701
      %v2734 = vadd.f32 %v2502, %v2702
      %v2735 = vadd.f32 %v2503, %v2703
      %v2736 = vadd.f32 %v2504, %v2704
      %v2737 = vadd.f32 %v2505, %v2705
      %v2738 = vadd.f32 %v2506, %v2706
      %v2739 = vadd.f32 %v2507, %v2707
      %v2740 = vadd.f32 %v2508, %v2708
      %v2741 = vadd.f32 %v2509, %v2709
      %v2742 = vadd.f32 %v2510, %v2710
      %v2743 = vadd.f32 %v2511, %v2711
      %v2744 = vadd.f32 %v2512, %v2712
      %v2745 = vadd.f32 %v2513, %v2713
      %v2746 = vadd.f32 %v2514, %v2714
      %v2747 = vadd.f32 %v2515, %v2715
      %v2748 = vadd.f32 %v2516, %v2716
      %v2749 = vadd.f32 %v2517, %v2717
      %v2750 = vadd.f32 %v2518, %v2718
      %v2751 = vadd.f32 %v2519, %v2719
      %v2752 = vadd.f32 %v2520, %v2720
      %v2753 = vadd.f32 %v2521, %v2721
      %v2754 = vld [vmem:[#allocation2 + $0x107] sm:$0xff]
      %v2755 = vld [vmem:[#allocation2 + $0x10f] sm:$0xff]
      %v2756 = vmul.f32 %v2424, %v258
      %v2757 = vmul.f32 %v2425, %v259
      %v2758 = vmul.f32 %v2426, %v260
      %v2759 = vmul.f32 %v2427, %v261
      %v2760 = vmul.f32 %v2428, %v262
      %v2761 = vmul.f32 %v2429, %v263
      %v2762 = vmul.f32 %v2430, %v264
      %v2763 = vmul.f32 %v2431, %v265
      %v2764 = vmul.f32 %v2432, %v266
      %v2765 = vmul.f32 %v2433, %v267
      %v2766 = vmul.f32 %v2434, %v268
      %v2767 = vmul.f32 %v2435, %v269
      %v2768 = vmul.f32 %v2436, %v270
      %v2769 = vmul.f32 %v2437, %v271
      %v2770 = vmul.f32 %v2438, %v272
      %v2771 = vmul.f32 %v2439, %v273
      %v2772 = vmul.f32 %v2440, %v274
      %v2773 = vmul.f32 %v2441, %v275
      %v2774 = vmul.f32 %v2442, %v276
      %v2775 = vmul.f32 %v2443, %v277
      %v2776 = vmul.f32 %v2444, %v278
      %v2777 = vmul.f32 %v2445, %v279
      %v2778 = vmul.f32 %v2446, %v280
      %v2779 = vmul.f32 %v2447, %v281
      %v2780 = vmul.f32 %v2448, %v282
      %v2781 = vmul.f32 %v2449, %v283
      %v2782 = vmul.f32 %v2450, %v284
      %v2783 = vmul.f32 %v2451, %v285
      %v2784 = vmul.f32 %v2452, %v286
      %v2785 = vmul.f32 %v2453, %v287
      %v2786 = vmul.f32 %v2754, %v288
      %v2787 = vmul.f32 %v2755, %v289
      %v2788 = vlaneseq
      %v2789 = vshrl.u32 %v2788, 7
      %v2790 = vsub.s32 3, %v2789
      %v2791 = vrot.slane %v2384, %v2790
      %v2792 = vmul.f32 %v2756, %v2791
      %v2793 = vmul.f32 %v2757, %v2791
      %v2794 = vmul.f32 %v2758, %v2791
      %v2795 = vmul.f32 %v2759, %v2791
      %v2796 = vmul.f32 %v2760, %v2791
      %v2797 = vmul.f32 %v2761, %v2791
      %v2798 = vmul.f32 %v2762, %v2791
      %v2799 = vmul.f32 %v2763, %v2791
      %v2800 = vmul.f32 %v2764, %v2791
      %v2801 = vmul.f32 %v2765, %v2791
      %v2802 = vmul.f32 %v2766, %v2791
      %v2803 = vmul.f32 %v2767, %v2791
      %v2804 = vmul.f32 %v2768, %v2791
      %v2805 = vmul.f32 %v2769, %v2791
      %v2806 = vmul.f32 %v2770, %v2791
      %v2807 = vmul.f32 %v2771, %v2791
      %v2808 = vmul.f32 %v2772, %v2791
      %v2809 = vmul.f32 %v2773, %v2791
      %v2810 = vmul.f32 %v2774, %v2791
      %v2811 = vmul.f32 %v2775, %v2791
      %v2812 = vmul.f32 %v2776, %v2791
      %v2813 = vmul.f32 %v2777, %v2791
      %v2814 = vmul.f32 %v2778, %v2791
      %v2815 = vmul.f32 %v2779, %v2791
      %v2816 = vmul.f32 %v2780, %v2791
      %v2817 = vmul.f32 %v2781, %v2791
      %v2818 = vmul.f32 %v2782, %v2791
      %v2819 = vmul.f32 %v2783, %v2791
      %v2820 = vmul.f32 %v2784, %v2791
      %v2821 = vmul.f32 %v2785, %v2791
      %v2822 = vmul.f32 %v2786, %v2791
      %v2823 = vmul.f32 %v2787, %v2791
      %v2824 = vadd.f32 %v2590, %v2792
      %v2825 = vadd.f32 %v2591, %v2793
      %v2826 = vadd.f32 %v2592, %v2794
      %v2827 = vadd.f32 %v2593, %v2795
      %v2828 = vadd.f32 %v2594, %v2796
      %v2829 = vadd.f32 %v2595, %v2797
      %v2830 = vadd.f32 %v2596, %v2798
      %v2831 = vadd.f32 %v2597, %v2799
      %v2832 = vadd.f32 %v2598, %v2800
      %v2833 = vadd.f32 %v2599, %v2801
      %v2834 = vadd.f32 %v2600, %v2802
      %v2835 = vadd.f32 %v2601, %v2803
      %v2836 = vadd.f32 %v2602, %v2804
      %v2837 = vadd.f32 %v2603, %v2805
      %v2838 = vadd.f32 %v2604, %v2806
      %v2839 = vadd.f32 %v2605, %v2807
      %v2840 = vadd.f32 %v2606, %v2808
      %v2841 = vadd.f32 %v2607, %v2809
      %v2842 = vadd.f32 %v2608, %v2810
      %v2843 = vadd.f32 %v2609, %v2811
      %v2844 = vadd.f32 %v2610, %v2812
      %v2845 = vadd.f32 %v2611, %v2813
      %v2846 = vadd.f32 %v2612, %v2814
      %v2847 = vadd.f32 %v2613, %v2815
      %v2848 = vadd.f32 %v2614, %v2816
      %v2849 = vadd.f32 %v2615, %v2817
      %v2850 = vadd.f32 %v2616, %v2818
      %v2851 = vadd.f32 %v2617, %v2819
      %v2852 = vadd.f32 %v2618, %v2820
      %v2853 = vadd.f32 %v2619, %v2821
      %v2854 = vadd.f32 %v2620, %v2822
      %v2855 = vadd.f32 %v2621, %v2823
      %v2856 = vld [vmem:[#allocation2 + $0x109] sm:$0xff]
      %v2857 = vld [vmem:[#allocation2 + $0x111] sm:$0xff]
      %v2858 = vmul.f32 %v2624, %v291
      %v2859 = vmul.f32 %v2625, %v292
      %v2860 = vmul.f32 %v2626, %v293
      %v2861 = vmul.f32 %v2627, %v294
      %v2862 = vmul.f32 %v2628, %v295
      %v2863 = vmul.f32 %v2629, %v296
      %v2864 = vmul.f32 %v2630, %v297
      %v2865 = vmul.f32 %v2631, %v298
      %v2866 = vmul.f32 %v2632, %v299
      %v2867 = vmul.f32 %v2633, %v300
      %v2868 = vmul.f32 %v2634, %v301
      %v2869 = vmul.f32 %v2635, %v302
      %v2870 = vmul.f32 %v2636, %v303
      %v2871 = vmul.f32 %v2637, %v304
      %v2872 = vmul.f32 %v2638, %v305
      %v2873 = vmul.f32 %v2639, %v306
      %v2874 = vmul.f32 %v2640, %v307
      %v2875 = vmul.f32 %v2641, %v308
      %v2876 = vmul.f32 %v2642, %v309
      %v2877 = vmul.f32 %v2643, %v310
      %v2878 = vmul.f32 %v2644, %v311
      %v2879 = vmul.f32 %v2645, %v312
      %v2880 = vmul.f32 %v2646, %v313
      %v2881 = vmul.f32 %v2647, %v314
      %v2882 = vmul.f32 %v2648, %v315
      %v2883 = vmul.f32 %v2649, %v316
      %v2884 = vmul.f32 %v2650, %v317
      %v2885 = vmul.f32 %v2651, %v318
      %v2886 = vmul.f32 %v2652, %v319
      %v2887 = vmul.f32 %v2653, %v320
      %v2888 = vmul.f32 %v2856, %v321
      %v2889 = vmul.f32 %v2857, %v322
      %v2890 = vlaneseq
      %v2891 = vshrl.u32 %v2890, 7
      %v2892 = vsub.s32 5, %v2891
      %v2893 = vrot.slane %v2384, %v2892
      %v2894 = vmul.f32 %v2858, %v2893
      %v2895 = vmul.f32 %v2859, %v2893
      %v2896 = vmul.f32 %v2860, %v2893
      %v2897 = vmul.f32 %v2861, %v2893
      %v2898 = vmul.f32 %v2862, %v2893
      %v2899 = vmul.f32 %v2863, %v2893
      %v2900 = vmul.f32 %v2864, %v2893
      %v2901 = vmul.f32 %v2865, %v2893
      %v2902 = vmul.f32 %v2866, %v2893
      %v2903 = vmul.f32 %v2867, %v2893
      %v2904 = vmul.f32 %v2868, %v2893
      %v2905 = vmul.f32 %v2869, %v2893
      %v2906 = vmul.f32 %v2870, %v2893
      %v2907 = vmul.f32 %v2871, %v2893
      %v2908 = vmul.f32 %v2872, %v2893
      %v2909 = vmul.f32 %v2873, %v2893
      %v2910 = vmul.f32 %v2874, %v2893
      %v2911 = vmul.f32 %v2875, %v2893
      %v2912 = vmul.f32 %v2876, %v2893
      %v2913 = vmul.f32 %v2877, %v2893
      %v2914 = vmul.f32 %v2878, %v2893
      %v2915 = vmul.f32 %v2879, %v2893
      %v2916 = vmul.f32 %v2880, %v2893
      %v2917 = vmul.f32 %v2881, %v2893
      %v2918 = vmul.f32 %v2882, %v2893
      %v2919 = vmul.f32 %v2883, %v2893
      %v2920 = vmul.f32 %v2884, %v2893
      %v2921 = vmul.f32 %v2885, %v2893
      %v2922 = vmul.f32 %v2886, %v2893
      %v2923 = vmul.f32 %v2887, %v2893
      %v2924 = vmul.f32 %v2888, %v2893
      %v2925 = vmul.f32 %v2889, %v2893
      %v2926 = vadd.f32 %v2722, %v2894
      %v2927 = vadd.f32 %v2723, %v2895
      %v2928 = vadd.f32 %v2724, %v2896
      %v2929 = vadd.f32 %v2725, %v2897
      %v2930 = vadd.f32 %v2726, %v2898
      %v2931 = vadd.f32 %v2727, %v2899
      %v2932 = vadd.f32 %v2728, %v2900
      %v2933 = vadd.f32 %v2729, %v2901
      %v2934 = vadd.f32 %v2730, %v2902
      %v2935 = vadd.f32 %v2731, %v2903
      %v2936 = vadd.f32 %v2732, %v2904
      %v2937 = vadd.f32 %v2733, %v2905
      %v2938 = vadd.f32 %v2734, %v2906
      %v2939 = vadd.f32 %v2735, %v2907
      %v2940 = vadd.f32 %v2736, %v2908
      %v2941 = vadd.f32 %v2737, %v2909
      %v2942 = vadd.f32 %v2738, %v2910
      %v2943 = vadd.f32 %v2739, %v2911
      %v2944 = vadd.f32 %v2740, %v2912
      %v2945 = vadd.f32 %v2741, %v2913
      %v2946 = vadd.f32 %v2742, %v2914
      %v2947 = vadd.f32 %v2743, %v2915
      %v2948 = vadd.f32 %v2744, %v2916
      %v2949 = vadd.f32 %v2745, %v2917
      %v2950 = vadd.f32 %v2746, %v2918
      %v2951 = vadd.f32 %v2747, %v2919
      %v2952 = vadd.f32 %v2748, %v2920
      %v2953 = vadd.f32 %v2749, %v2921
      %v2954 = vadd.f32 %v2750, %v2922
      %v2955 = vadd.f32 %v2751, %v2923
      %v2956 = vadd.f32 %v2752, %v2924
      %v2957 = vadd.f32 %v2753, %v2925
      %v2958 = vld [vmem:[#allocation2 + $0x117] sm:$0xff]
      %v2959 = vld [vmem:[#allocation2 + $0x11f] sm:$0xff]
      %v2960 = vmul.f32 %v2426, %v258
      %v2961 = vmul.f32 %v2427, %v259
      %v2962 = vmul.f32 %v2428, %v260
      %v2963 = vmul.f32 %v2429, %v261
      %v2964 = vmul.f32 %v2430, %v262
      %v2965 = vmul.f32 %v2431, %v263
      %v2966 = vmul.f32 %v2432, %v264
      %v2967 = vmul.f32 %v2433, %v265
      %v2968 = vmul.f32 %v2434, %v266
      %v2969 = vmul.f32 %v2435, %v267
      %v2970 = vmul.f32 %v2436, %v268
      %v2971 = vmul.f32 %v2437, %v269
      %v2972 = vmul.f32 %v2438, %v270
      %v2973 = vmul.f32 %v2439, %v271
      %v2974 = vmul.f32 %v2440, %v272
      %v2975 = vmul.f32 %v2441, %v273
      %v2976 = vmul.f32 %v2442, %v274
      %v2977 = vmul.f32 %v2443, %v275
      %v2978 = vmul.f32 %v2444, %v276
      %v2979 = vmul.f32 %v2445, %v277
      %v2980 = vmul.f32 %v2446, %v278
      %v2981 = vmul.f32 %v2447, %v279
      %v2982 = vmul.f32 %v2448, %v280
      %v2983 = vmul.f32 %v2449, %v281
      %v2984 = vmul.f32 %v2450, %v282
      %v2985 = vmul.f32 %v2451, %v283
      %v2986 = vmul.f32 %v2452, %v284
      %v2987 = vmul.f32 %v2453, %v285
      %v2988 = vmul.f32 %v2754, %v286
      %v2989 = vmul.f32 %v2755, %v287
      %v2990 = vmul.f32 %v2958, %v288
      %v2991 = vmul.f32 %v2959, %v289
      %v2992 = vlaneseq
      %v2993 = vshrl.u32 %v2992, 7
      %v2994 = vsub.s32 6, %v2993
      %v2995 = vrot.slane %v2384, %v2994
      %v2996 = vmul.f32 %v2960, %v2995
      %v2997 = vmul.f32 %v2961, %v2995
      %v2998 = vmul.f32 %v2962, %v2995
      %v2999 = vmul.f32 %v2963, %v2995
      %v3000 = vmul.f32 %v2964, %v2995
      %v3001 = vmul.f32 %v2965, %v2995
      %v3002 = vmul.f32 %v2966, %v2995
      %v3003 = vmul.f32 %v2967, %v2995
      %v3004 = vmul.f32 %v2968, %v2995
      %v3005 = vmul.f32 %v2969, %v2995
      %v3006 = vmul.f32 %v2970, %v2995
      %v3007 = vmul.f32 %v2971, %v2995
      %v3008 = vmul.f32 %v2972, %v2995
      %v3009 = vmul.f32 %v2973, %v2995
      %v3010 = vmul.f32 %v2974, %v2995
      %v3011 = vmul.f32 %v2975, %v2995
      %v3012 = vmul.f32 %v2976, %v2995
      %v3013 = vmul.f32 %v2977, %v2995
      %v3014 = vmul.f32 %v2978, %v2995
      %v3015 = vmul.f32 %v2979, %v2995
      %v3016 = vmul.f32 %v2980, %v2995
      %v3017 = vmul.f32 %v2981, %v2995
      %v3018 = vmul.f32 %v2982, %v2995
      %v3019 = vmul.f32 %v2983, %v2995
      %v3020 = vmul.f32 %v2984, %v2995
      %v3021 = vmul.f32 %v2985, %v2995
      %v3022 = vmul.f32 %v2986, %v2995
      %v3023 = vmul.f32 %v2987, %v2995
      %v3024 = vmul.f32 %v2988, %v2995
      %v3025 = vmul.f32 %v2989, %v2995
      %v3026 = vmul.f32 %v2990, %v2995
      %v3027 = vmul.f32 %v2991, %v2995
      %v3028 = vadd.f32 %v2824, %v2996
      %v3029 = vadd.f32 %v2825, %v2997
      %v3030 = vadd.f32 %v2826, %v2998
      %v3031 = vadd.f32 %v2827, %v2999
      %v3032 = vadd.f32 %v2828, %v3000
      %v3033 = vadd.f32 %v2829, %v3001
      %v3034 = vadd.f32 %v2830, %v3002
      %v3035 = vadd.f32 %v2831, %v3003
      %v3036 = vadd.f32 %v2832, %v3004
      %v3037 = vadd.f32 %v2833, %v3005
      %v3038 = vadd.f32 %v2834, %v3006
      %v3039 = vadd.f32 %v2835, %v3007
      %v3040 = vadd.f32 %v2836, %v3008
      %v3041 = vadd.f32 %v2837, %v3009
      %v3042 = vadd.f32 %v2838, %v3010
      %v3043 = vadd.f32 %v2839, %v3011
      %v3044 = vadd.f32 %v2840, %v3012
      %v3045 = vadd.f32 %v2841, %v3013
      %v3046 = vadd.f32 %v2842, %v3014
      %v3047 = vadd.f32 %v2843, %v3015
      %v3048 = vadd.f32 %v2844, %v3016
      %v3049 = vadd.f32 %v2845, %v3017
      %v3050 = vadd.f32 %v2846, %v3018
      %v3051 = vadd.f32 %v2847, %v3019
      %v3052 = vadd.f32 %v2848, %v3020
      %v3053 = vadd.f32 %v2849, %v3021
      %v3054 = vadd.f32 %v2850, %v3022
      %v3055 = vadd.f32 %v2851, %v3023
      %v3056 = vadd.f32 %v2852, %v3024
      %v3057 = vadd.f32 %v2853, %v3025
      %v3058 = vadd.f32 %v2854, %v3026
      %v3059 = vadd.f32 %v2855, %v3027
      %v3060 = vld [vmem:[#allocation2 + $0x108] sm:$0xff]
      %v3061 = vld [vmem:[#allocation2 + $0x110] sm:$0xff]
      %v3062 = vld [vmem:[#allocation2 + $0x118] sm:$0xff]
      %v3063 = vld [vmem:[#allocation2 + $0x120] sm:$0xff]
      %v3064 = vlaneseq
      %v3065 = vshrl.u32 %v3064, 7
      %v3066 = vsub.s32 7, %v3065
      %v3067 = vrot.slane %v2384, %v3066
      %v3068 = vmul.f32 %v2526, %v3067
      %v3069 = vmul.f32 %v2527, %v3067
      %v3070 = vmul.f32 %v2528, %v3067
      %v3071 = vmul.f32 %v2529, %v3067
      %v3072 = vmul.f32 %v2530, %v3067
      %v3073 = vmul.f32 %v2531, %v3067
      %v3074 = vmul.f32 %v2532, %v3067
      %v3075 = vmul.f32 %v2533, %v3067
      %v3076 = vmul.f32 %v2534, %v3067
      %v3077 = vmul.f32 %v2535, %v3067
      %v3078 = vmul.f32 %v2536, %v3067
      %v3079 = vmul.f32 %v2537, %v3067
      %v3080 = vmul.f32 %v2538, %v3067
      %v3081 = vmul.f32 %v2539, %v3067
      %v3082 = vmul.f32 %v2540, %v3067
      %v3083 = vmul.f32 %v2541, %v3067
      %v3084 = vmul.f32 %v2542, %v3067
      %v3085 = vmul.f32 %v2543, %v3067
      %v3086 = vmul.f32 %v2544, %v3067
      %v3087 = vmul.f32 %v2545, %v3067
      %v3088 = vmul.f32 %v2546, %v3067
      %v3089 = vmul.f32 %v2547, %v3067
      %v3090 = vmul.f32 %v2548, %v3067
      %v3091 = vmul.f32 %v2549, %v3067
      %v3092 = vmul.f32 %v2550, %v3067
      %v3093 = vmul.f32 %v2551, %v3067
      %v3094 = vmul.f32 %v2552, %v3067
      %v3095 = vmul.f32 %v2553, %v3067
      %v3096 = vmul.f32 %v3060, %v3067
      %v3097 = vmul.f32 %v3061, %v3067
      %v3098 = vmul.f32 %v3062, %v3067
      %v3099 = vmul.f32 %v3063, %v3067
      %v3100 = vadd.f32 %v2926, %v3068
      %v3101 = vadd.f32 %v2927, %v3069
      %v3102 = vadd.f32 %v2928, %v3070
      %v3103 = vadd.f32 %v2929, %v3071
      %v3104 = vadd.f32 %v2930, %v3072
      %v3105 = vadd.f32 %v2931, %v3073
      %v3106 = vadd.f32 %v2932, %v3074
      %v3107 = vadd.f32 %v2933, %v3075
      %v3108 = vadd.f32 %v2934, %v3076
      %v3109 = vadd.f32 %v2935, %v3077
      %v3110 = vadd.f32 %v2936, %v3078
      %v3111 = vadd.f32 %v2937, %v3079
      %v3112 = vadd.f32 %v2938, %v3080
      %v3113 = vadd.f32 %v2939, %v3081
      %v3114 = vadd.f32 %v2940, %v3082
      %v3115 = vadd.f32 %v2941, %v3083
      %v3116 = vadd.f32 %v2942, %v3084
      %v3117 = vadd.f32 %v2943, %v3085
      %v3118 = vadd.f32 %v2944, %v3086
      %v3119 = vadd.f32 %v2945, %v3087
      %v3120 = vadd.f32 %v2946, %v3088
      %v3121 = vadd.f32 %v2947, %v3089
      %v3122 = vadd.f32 %v2948, %v3090
      %v3123 = vadd.f32 %v2949, %v3091
      %v3124 = vadd.f32 %v2950, %v3092
      %v3125 = vadd.f32 %v2951, %v3093
      %v3126 = vadd.f32 %v2952, %v3094
      %v3127 = vadd.f32 %v2953, %v3095
      %v3128 = vadd.f32 %v2954, %v3096
      %v3129 = vadd.f32 %v2955, %v3097
      %v3130 = vadd.f32 %v2956, %v3098
      %v3131 = vadd.f32 %v2957, %v3099
      %v3132 = vld [vmem:[#allocation2 + $0x119] sm:$0xff]
      %v3133 = vld [vmem:[#allocation2 + $0x121] sm:$0xff]
      %v3134 = vmul.f32 %v2626, %v291
      %v3135 = vmul.f32 %v2627, %v292
      %v3136 = vmul.f32 %v2628, %v293
      %v3137 = vmul.f32 %v2629, %v294
      %v3138 = vmul.f32 %v2630, %v295
      %v3139 = vmul.f32 %v2631, %v296
      %v3140 = vmul.f32 %v2632, %v297
      %v3141 = vmul.f32 %v2633, %v298
      %v3142 = vmul.f32 %v2634, %v299
      %v3143 = vmul.f32 %v2635, %v300
      %v3144 = vmul.f32 %v2636, %v301
      %v3145 = vmul.f32 %v2637, %v302
      %v3146 = vmul.f32 %v2638, %v303
      %v3147 = vmul.f32 %v2639, %v304
      %v3148 = vmul.f32 %v2640, %v305
      %v3149 = vmul.f32 %v2641, %v306
      %v3150 = vmul.f32 %v2642, %v307
      %v3151 = vmul.f32 %v2643, %v308
      %v3152 = vmul.f32 %v2644, %v309
      %v3153 = vmul.f32 %v2645, %v310
      %v3154 = vmul.f32 %v2646, %v311
      %v3155 = vmul.f32 %v2647, %v312
      %v3156 = vmul.f32 %v2648, %v313
      %v3157 = vmul.f32 %v2649, %v314
      %v3158 = vmul.f32 %v2650, %v315
      %v3159 = vmul.f32 %v2651, %v316
      %v3160 = vmul.f32 %v2652, %v317
      %v3161 = vmul.f32 %v2653, %v318
      %v3162 = vmul.f32 %v2856, %v319
      %v3163 = vmul.f32 %v2857, %v320
      %v3164 = vmul.f32 %v3132, %v321
      %v3165 = vmul.f32 %v3133, %v322
      %v3166 = vlaneseq
      %v3167 = vshrl.u32 %v3166, 7
      %v3168 = vsub.s32 0, %v3167
      %v3169 = vrot.slane %v2385, %v3168
      %v3170 = vmul.f32 %v3134, %v3169
      %v3171 = vmul.f32 %v3135, %v3169
      %v3172 = vmul.f32 %v3136, %v3169
      %v3173 = vmul.f32 %v3137, %v3169
      %v3174 = vmul.f32 %v3138, %v3169
      %v3175 = vmul.f32 %v3139, %v3169
      %v3176 = vmul.f32 %v3140, %v3169
      %v3177 = vmul.f32 %v3141, %v3169
      %v3178 = vmul.f32 %v3142, %v3169
      %v3179 = vmul.f32 %v3143, %v3169
      %v3180 = vmul.f32 %v3144, %v3169
      %v3181 = vmul.f32 %v3145, %v3169
      %v3182 = vmul.f32 %v3146, %v3169
      %v3183 = vmul.f32 %v3147, %v3169
      %v3184 = vmul.f32 %v3148, %v3169
      %v3185 = vmul.f32 %v3149, %v3169
      %v3186 = vmul.f32 %v3150, %v3169
      %v3187 = vmul.f32 %v3151, %v3169
      %v3188 = vmul.f32 %v3152, %v3169
      %v3189 = vmul.f32 %v3153, %v3169
      %v3190 = vmul.f32 %v3154, %v3169
      %v3191 = vmul.f32 %v3155, %v3169
      %v3192 = vmul.f32 %v3156, %v3169
      %v3193 = vmul.f32 %v3157, %v3169
      %v3194 = vmul.f32 %v3158, %v3169
      %v3195 = vmul.f32 %v3159, %v3169
      %v3196 = vmul.f32 %v3160, %v3169
      %v3197 = vmul.f32 %v3161, %v3169
      %v3198 = vmul.f32 %v3162, %v3169
      %v3199 = vmul.f32 %v3163, %v3169
      %v3200 = vmul.f32 %v3164, %v3169
      %v3201 = vmul.f32 %v3165, %v3169
      %v3202 = vadd.f32 %v3028, %v3170
      %v3203 = vadd.f32 %v3029, %v3171
      %v3204 = vadd.f32 %v3030, %v3172
      %v3205 = vadd.f32 %v3031, %v3173
      %v3206 = vadd.f32 %v3032, %v3174
      %v3207 = vadd.f32 %v3033, %v3175
      %v3208 = vadd.f32 %v3034, %v3176
      %v3209 = vadd.f32 %v3035, %v3177
      %v3210 = vadd.f32 %v3036, %v3178
      %v3211 = vadd.f32 %v3037, %v3179
      %v3212 = vadd.f32 %v3038, %v3180
      %v3213 = vadd.f32 %v3039, %v3181
      %v3214 = vadd.f32 %v3040, %v3182
      %v3215 = vadd.f32 %v3041, %v3183
      %v3216 = vadd.f32 %v3042, %v3184
      %v3217 = vadd.f32 %v3043, %v3185
      %v3218 = vadd.f32 %v3044, %v3186
      %v3219 = vadd.f32 %v3045, %v3187
      %v3220 = vadd.f32 %v3046, %v3188
      %v3221 = vadd.f32 %v3047, %v3189
      %v3222 = vadd.f32 %v3048, %v3190
      %v3223 = vadd.f32 %v3049, %v3191
      %v3224 = vadd.f32 %v3050, %v3192
      %v3225 = vadd.f32 %v3051, %v3193
      %v3226 = vadd.f32 %v3052, %v3194
      %v3227 = vadd.f32 %v3053, %v3195
      %v3228 = vadd.f32 %v3054, %v3196
      %v3229 = vadd.f32 %v3055, %v3197
      %v3230 = vadd.f32 %v3056, %v3198
      %v3231 = vadd.f32 %v3057, %v3199
      %v3232 = vadd.f32 %v3058, %v3200
      %v3233 = vadd.f32 %v3059, %v3201
      %v3234 = vadd.f32 %v3202, %v3100
      %v3235 = vadd.f32 %v3203, %v3101
      %v3236 = vadd.f32 %v3204, %v3102
      %v3237 = vadd.f32 %v3205, %v3103
      %v3238 = vadd.f32 %v3206, %v3104
      %v3239 = vadd.f32 %v3207, %v3105
      %v3240 = vadd.f32 %v3208, %v3106
      %v3241 = vadd.f32 %v3209, %v3107
      %v3242 = vadd.f32 %v3210, %v3108
      %v3243 = vadd.f32 %v3211, %v3109
      %v3244 = vadd.f32 %v3212, %v3110
      %v3245 = vadd.f32 %v3213, %v3111
      %v3246 = vadd.f32 %v3214, %v3112
      %v3247 = vadd.f32 %v3215, %v3113
      %v3248 = vadd.f32 %v3216, %v3114
      %v3249 = vadd.f32 %v3217, %v3115
      %v3250 = vadd.f32 %v3218, %v3116
      %v3251 = vadd.f32 %v3219, %v3117
      %v3252 = vadd.f32 %v3220, %v3118
      %v3253 = vadd.f32 %v3221, %v3119
      %v3254 = vadd.f32 %v3222, %v3120
      %v3255 = vadd.f32 %v3223, %v3121
      %v3256 = vadd.f32 %v3224, %v3122
      %v3257 = vadd.f32 %v3225, %v3123
      %v3258 = vadd.f32 %v3226, %v3124
      %v3259 = vadd.f32 %v3227, %v3125
      %v3260 = vadd.f32 %v3228, %v3126
      %v3261 = vadd.f32 %v3229, %v3127
      %v3262 = vadd.f32 %v3230, %v3128
      %v3263 = vadd.f32 %v3231, %v3129
      %v3264 = vadd.f32 %v3232, %v3130
      %v3265 = vadd.f32 %v3233, %v3131
      %v3266 = vld [vmem:[%s4] sm:$0x1]
      %v3268 = vlaneseq
      %v3269 = vshrl.u32 %v3268, 7
      %v3270 = vsub.s32 0, %v3269
      %v3271 = vrot.slane %v3266, %v3270
      %v3273 = vadd.f32 %v3234, %v3271
      %v3274 = vadd.f32 %v3235, %v3271
      %v3275 = vadd.f32 %v3236, %v3271
      %v3276 = vadd.f32 %v3237, %v3271
      %v3277 = vadd.f32 %v3238, %v3271
      %v3278 = vadd.f32 %v3239, %v3271
      %v3279 = vadd.f32 %v3240, %v3271
      %v3280 = vadd.f32 %v3241, %v3271
      %v3281 = vadd.f32 %v3242, %v3271
      %v3282 = vadd.f32 %v3243, %v3271
      %v3283 = vadd.f32 %v3244, %v3271
      %v3284 = vadd.f32 %v3245, %v3271
      %v3285 = vadd.f32 %v3246, %v3271
      %v3286 = vadd.f32 %v3247, %v3271
      %v3287 = vadd.f32 %v3248, %v3271
      %v3288 = vadd.f32 %v3249, %v3271
      %v3289 = vadd.f32 %v3250, %v3271
      %v3290 = vadd.f32 %v3251, %v3271
      %v3291 = vadd.f32 %v3252, %v3271
      %v3292 = vadd.f32 %v3253, %v3271
      %v3293 = vadd.f32 %v3254, %v3271
      %v3294 = vadd.f32 %v3255, %v3271
      %v3295 = vadd.f32 %v3256, %v3271
      %v3296 = vadd.f32 %v3257, %v3271
      %v3297 = vadd.f32 %v3258, %v3271
      %v3298 = vadd.f32 %v3259, %v3271
      %v3299 = vadd.f32 %v3260, %v3271
      %v3300 = vadd.f32 %v3261, %v3271
      %v3301 = vadd.f32 %v3262, %v3271
      %v3302 = vadd.f32 %v3263, %v3271
      %v3303 = vadd.f32 %v3264, %v3271
      %v3304 = vadd.f32 %v3265, %v3271
      %v3305 = vmax.f32 %v3273, 0.0
      %v3306 = vmax.f32 %v3274, 0.0
      %v3307 = vmax.f32 %v3275, 0.0
      %v3308 = vmax.f32 %v3276, 0.0
      %v3309 = vmax.f32 %v3277, 0.0
      %v3310 = vmax.f32 %v3278, 0.0
      %v3311 = vmax.f32 %v3279, 0.0
      %v3312 = vmax.f32 %v3280, 0.0
      %v3313 = vmax.f32 %v3281, 0.0
      %v3314 = vmax.f32 %v3282, 0.0
      %v3315 = vmax.f32 %v3283, 0.0
      %v3316 = vmax.f32 %v3284, 0.0
      %v3317 = vmax.f32 %v3285, 0.0
      %v3318 = vmax.f32 %v3286, 0.0
      %v3319 = vmax.f32 %v3287, 0.0
      %v3320 = vmax.f32 %v3288, 0.0
      %v3321 = vmax.f32 %v3289, 0.0
      %v3322 = vmax.f32 %v3290, 0.0
      %v3323 = vmax.f32 %v3291, 0.0
      %v3324 = vmax.f32 %v3292, 0.0
      %v3325 = vmax.f32 %v3293, 0.0
      %v3326 = vmax.f32 %v3294, 0.0
      %v3327 = vmax.f32 %v3295, 0.0
      %v3328 = vmax.f32 %v3296, 0.0
      %v3329 = vmax.f32 %v3297, 0.0
      %v3330 = vmax.f32 %v3298, 0.0
      %v3331 = vmax.f32 %v3299, 0.0
      %v3332 = vmax.f32 %v3300, 0.0
      %v3333 = vmax.f32 %v3301, 0.0
      %v3334 = vmax.f32 %v3302, 0.0
      %v3335 = vmax.f32 %v3303, 0.0
      %v3336 = vmax.f32 %v3304, 0.0
      %s3337 = scalar_lea.vmem %s1, 128
      %v3338 = vld [vmem:[%s3337] sm:$0xff]
      %v3339 = vld [vmem:[%s3337 + $0x8] sm:$0xff]
      %v3340 = vld [vmem:[%s3337 + $0x10] sm:$0xff]
      %v3341 = vld [vmem:[%s3337 + $0x18] sm:$0xff]
      %v3342 = vld [vmem:[%s3337 + $0x20] sm:$0xff]
      %v3343 = vld [vmem:[%s3337 + $0x28] sm:$0xff]
      %v3344 = vld [vmem:[%s3337 + $0x30] sm:$0xff]
      %v3345 = vld [vmem:[%s3337 + $0x38] sm:$0xff]
      %v3346 = vld [vmem:[%s3337 + $0x40] sm:$0xff]
      %v3347 = vld [vmem:[%s3337 + $0x48] sm:$0xff]
      %v3348 = vld [vmem:[%s3337 + $0x50] sm:$0xff]
      %v3349 = vld [vmem:[%s3337 + $0x58] sm:$0xff]
      %v3350 = vld [vmem:[%s3337 + $0x60] sm:$0xff]
      %v3351 = vld [vmem:[%s3337 + $0x68] sm:$0xff]
      %v3352 = vld [vmem:[%s3337 + $0x70] sm:$0xff]
      %v3353 = vld [vmem:[%s3337 + $0x78] sm:$0xff]
      %s3354 = scalar_lea.vmem %s2, 1
      %v3355 = vld [vmem:[%s3354] sm:$0x1]
      %v3357 = vlaneseq
      %v3358 = vshrl.u32 %v3357, 7
      %v3359 = vsub.s32 0, %v3358
      %v3360 = vrot.slane %v3355, %v3359
      %3362 = vmatprep.subr.mxu0 0.0
      %v3363 = vand.u32 %v3338, 4294901760
      %3364 = vmatpush1.msra.mxu0 %v3363
      %3365 = vmatprep.subr.mxu0 0.0
      %v3366 = vand.u32 %v3339, 4294901760
      %3367 = vmatpush1.msra.mxu0 %v3366
      %3368 = vmatprep.subr.mxu0 0.0
      %v3369 = vand.u32 %v3340, 4294901760
      %3370 = vmatpush1.msra.mxu0 %v3369
      %3371 = vmatprep.subr.mxu0 0.0
      %v3372 = vand.u32 %v3341, 4294901760
      %3373 = vmatpush1.msra.mxu0 %v3372
      %3374 = vmatprep.subr.mxu0 0.0
      %v3375 = vand.u32 %v3342, 4294901760
      %3376 = vmatpush1.msra.mxu0 %v3375
      %3377 = vmatprep.subr.mxu0 0.0
      %v3378 = vand.u32 %v3343, 4294901760
      %3379 = vmatpush1.msra.mxu0 %v3378
      %3380 = vmatprep.subr.mxu0 0.0
      %v3381 = vand.u32 %v3344, 4294901760
      %3382 = vmatpush1.msra.mxu0 %v3381
      %3383 = vmatprep.subr.mxu0 0.0
      %v3384 = vand.u32 %v3345, 4294901760
      %3385 = vmatpush1.msra.mxu0 %v3384
      %3386 = vmatprep.subr.mxu0 0.0
      %v3387 = vand.u32 %v3346, 4294901760
      %3388 = vmatpush1.msra.mxu0 %v3387
      %3389 = vmatprep.subr.mxu0 0.0
      %v3390 = vand.u32 %v3347, 4294901760
      %3391 = vmatpush1.msra.mxu0 %v3390
      %3392 = vmatprep.subr.mxu0 0.0
      %v3393 = vand.u32 %v3348, 4294901760
      %3394 = vmatpush1.msra.mxu0 %v3393
      %3395 = vmatprep.subr.mxu0 0.0
      %v3396 = vand.u32 %v3349, 4294901760
      %3397 = vmatpush1.msra.mxu0 %v3396
      %3398 = vmatprep.subr.mxu0 0.0
      %v3399 = vand.u32 %v3350, 4294901760
      %3400 = vmatpush1.msra.mxu0 %v3399
      %3401 = vmatprep.subr.mxu0 0.0
      %v3402 = vand.u32 %v3351, 4294901760
      %3403 = vmatpush1.msra.mxu0 %v3402
      %3404 = vmatprep.subr.mxu0 0.0
      %v3405 = vand.u32 %v3352, 4294901760
      %3406 = vmatpush1.msra.mxu0 %v3405
      %3407 = vmatprep.subr.mxu0 0.0
      %v3408 = vand.u32 %v3353, 4294901760
      %3409 = vmatpush1.msra.mxu0 %v3408
      %3410 = vmatprep.subr.mxu0 0.0
      %3411 = vmatpush1.msra.mxu0 0.0
      %3412 = vmatprep.subr.mxu0 0.0
      %3413 = vmatpush1.msra.mxu0 0.0
      %3414 = vmatprep.subr.mxu0 0.0
      %3415 = vmatpush1.msra.mxu0 0.0
      %3416 = vmatprep.subr.mxu0 0.0
      %3417 = vmatpush1.msra.mxu0 0.0
      %3418 = vmatprep.subr.mxu0 0.0
      %3419 = vmatpush1.msra.mxu0 0.0
      %3420 = vmatprep.subr.mxu0 0.0
      %3421 = vmatpush1.msra.mxu0 0.0
      %3422 = vmatprep.subr.mxu0 0.0
      %3423 = vmatpush1.msra.mxu0 0.0
      %3424 = vmatprep.subr.mxu0 0.0
      %3425 = vmatpush1.msra.mxu0 0.0
      %3426 = vmatprep.subr.mxu0 0.0
      %3427 = vmatpush1.msra.mxu0 0.0
      %3428 = vmatprep.subr.mxu0 0.0
      %3429 = vmatpush1.msra.mxu0 0.0
      %3430 = vmatprep.subr.mxu0 0.0
      %3431 = vmatpush1.msra.mxu0 0.0
      %3432 = vmatprep.subr.mxu0 0.0
      %3433 = vmatpush1.msra.mxu0 0.0
      %3434 = vmatprep.subr.mxu0 0.0
      %3435 = vmatpush1.msra.mxu0 0.0
      %3436 = vmatprep.subr.mxu0 0.0
      %3437 = vmatpush1.msra.mxu0 0.0
      %3438 = vmatprep.subr.mxu0 0.0
      %3439 = vmatpush1.msra.mxu0 0.0
      %3440 = vmatprep.subr.mxu0 0.0
      %3441 = vmatpush1.msra.mxu0 0.0
      %3442 = vmatprep.mubr.f32.mxu0 0.0
      %v3443 = vand.u32 %v3305, 4294901760
      %v3444 = vsub.f32 %v3305, %v3443
      %v3445 = vand.u32 %v3444, 4294901760
      %v3446 = vsub.f32 %v3444, %v3445
      %v3447 = vand.u32 %v3446, 4294901760
      %3448 = vmatmul.mubr.f32.gmra.mrb[0].mxu0 %v3447
      %v3449 = vpop.f32.mrb[0].mxu0
      %v3450 = vadd.f32 %v3360, %v3449
      %v3451 = vpop.f32.mrb[0].mxu0
      %3452 = vmatprep.mubr.f32.mxu0 0.0
      %v3453 = vand.u32 %v3306, 4294901760
      %v3454 = vsub.f32 %v3306, %v3453
      %v3455 = vand.u32 %v3454, 4294901760
      %v3456 = vsub.f32 %v3454, %v3455
      %v3457 = vand.u32 %v3456, 4294901760
      %3458 = vmatmul.mubr.f32.gmra.mrb[0].mxu0 %v3457
      %v3459 = vpop.f32.mrb[0].mxu0
      %v3460 = vadd.f32 %v3360, %v3459
      %v3461 = vpop.f32.mrb[0].mxu0
      %3462 = vmatprep.mubr.f32.mxu0 0.0
      %v3463 = vand.u32 %v3307, 4294901760
      %v3464 = vsub.f32 %v3307, %v3463
      %v3465 = vand.u32 %v3464, 4294901760
      %v3466 = vsub.f32 %v3464, %v3465
      %v3467 = vand.u32 %v3466, 4294901760
      %3468 = vmatmul.mubr.f32.gmra.mrb[0].mxu0 %v3467
      %v3469 = vpop.f32.mrb[0].mxu0
      %v3470 = vadd.f32 %v3360, %v3469
      %v3471 = vpop.f32.mrb[0].mxu0
      %3472 = vmatprep.mubr.f32.mxu0 0.0
      %v3473 = vand.u32 %v3308, 4294901760
      %v3474 = vsub.f32 %v3308, %v3473
      %v3475 = vand.u32 %v3474, 4294901760
      %v3476 = vsub.f32 %v3474, %v3475
      %v3477 = vand.u32 %v3476, 4294901760
      %3478 = vmatmul.mubr.f32.gmra.mrb[0].mxu0 %v3477
      %v3479 = vpop.f32.mrb[0].mxu0
      %v3480 = vadd.f32 %v3360, %v3479
      %v3481 = vpop.f32.mrb[0].mxu0
      %3482 = vmatprep.mubr.f32.mxu0 0.0
      %v3483 = vand.u32 %v3309, 4294901760
      %v3484 = vsub.f32 %v3309, %v3483
      %v3485 = vand.u32 %v3484, 4294901760
      %v3486 = vsub.f32 %v3484, %v3485
      %v3487 = vand.u32 %v3486, 4294901760
      %3488 = vmatmul.mubr.f32.gmra.mrb[0].mxu0 %v3487
      %v3489 = vpop.f32.mrb[0].mxu0
      %v3490 = vadd.f32 %v3360, %v3489
      %v3491 = vpop.f32.mrb[0].mxu0
      %3492 = vmatprep.mubr.f32.mxu0 0.0
      %v3493 = vand.u32 %v3310, 4294901760
      %v3494 = vsub.f32 %v3310, %v3493
      %v3495 = vand.u32 %v3494, 4294901760
      %v3496 = vsub.f32 %v3494, %v3495
      %v3497 = vand.u32 %v3496, 4294901760
      %3498 = vmatmul.mubr.f32.gmra.mrb[0].mxu0 %v3497
      %v3499 = vpop.f32.mrb[0].mxu0
      %v3500 = vadd.f32 %v3360, %v3499
      %v3501 = vpop.f32.mrb[0].mxu0
      %3502 = vmatprep.mubr.f32.mxu0 0.0
      %v3503 = vand.u32 %v3311, 4294901760
      %v3504 = vsub.f32 %v3311, %v3503
      %v3505 = vand.u32 %v3504, 4294901760
      %v3506 = vsub.f32 %v3504, %v3505
      %v3507 = vand.u32 %v3506, 4294901760
      %3508 = vmatmul.mubr.f32.gmra.mrb[0].mxu0 %v3507
      %v3509 = vpop.f32.mrb[0].mxu0
      %v3510 = vadd.f32 %v3360, %v3509
      %v3511 = vpop.f32.mrb[0].mxu0
      %3512 = vmatprep.mubr.f32.mxu0 0.0
      %v3513 = vand.u32 %v3312, 4294901760
      %v3514 = vsub.f32 %v3312, %v3513
      %v3515 = vand.u32 %v3514, 4294901760
      %v3516 = vsub.f32 %v3514, %v3515
      %v3517 = vand.u32 %v3516, 4294901760
      %3518 = vmatmul.mubr.f32.gmra.mrb[0].mxu0 %v3517
      %v3519 = vpop.f32.mrb[0].mxu0
      %v3520 = vadd.f32 %v3360, %v3519
      %v3521 = vpop.f32.mrb[0].mxu0
      %3522 = vmatprep.mubr.f32.mxu0 0.0
      %v3523 = vand.u32 %v3313, 4294901760
      %v3524 = vsub.f32 %v3313, %v3523
      %v3525 = vand.u32 %v3524, 4294901760
      %v3526 = vsub.f32 %v3524, %v3525
      %v3527 = vand.u32 %v3526, 4294901760
      %3528 = vmatmul.mubr.f32.gmra.mrb[0].mxu0 %v3527
      %v3529 = vpop.f32.mrb[0].mxu0
      %v3530 = vadd.f32 %v3360, %v3529
      %v3531 = vpop.f32.mrb[0].mxu0
      %3532 = vmatprep.mubr.f32.mxu0 0.0
      %v3533 = vand.u32 %v3314, 4294901760
      %v3534 = vsub.f32 %v3314, %v3533
      %v3535 = vand.u32 %v3534, 4294901760
      %v3536 = vsub.f32 %v3534, %v3535
      %v3537 = vand.u32 %v3536, 4294901760
      %3538 = vmatmul.mubr.f32.gmra.mrb[0].mxu0 %v3537
      %v3539 = vpop.f32.mrb[0].mxu0
      %v3540 = vadd.f32 %v3360, %v3539
      %v3541 = vpop.f32.mrb[0].mxu0
      %3542 = vmatprep.mubr.f32.mxu0 0.0
      %v3543 = vand.u32 %v3315, 4294901760
      %v3544 = vsub.f32 %v3315, %v3543
      %v3545 = vand.u32 %v3544, 4294901760
      %v3546 = vsub.f32 %v3544, %v3545
      %v3547 = vand.u32 %v3546, 4294901760
      %3548 = vmatmul.mubr.f32.gmra.mrb[0].mxu0 %v3547
      %v3549 = vpop.f32.mrb[0].mxu0
      %v3550 = vadd.f32 %v3360, %v3549
      %v3551 = vpop.f32.mrb[0].mxu0
      %3552 = vmatprep.mubr.f32.mxu0 0.0
      %v3553 = vand.u32 %v3316, 4294901760
      %v3554 = vsub.f32 %v3316, %v3553
      %v3555 = vand.u32 %v3554, 4294901760
      %v3556 = vsub.f32 %v3554, %v3555
      %v3557 = vand.u32 %v3556, 4294901760
      %3558 = vmatmul.mubr.f32.gmra.mrb[0].mxu0 %v3557
      %v3559 = vpop.f32.mrb[0].mxu0
      %v3560 = vadd.f32 %v3360, %v3559
      %v3561 = vpop.f32.mrb[0].mxu0
      %3562 = vmatprep.mubr.f32.mxu0 0.0
      %v3563 = vand.u32 %v3317, 4294901760
      %v3564 = vsub.f32 %v3317, %v3563
      %v3565 = vand.u32 %v3564, 4294901760
      %v3566 = vsub.f32 %v3564, %v3565
      %v3567 = vand.u32 %v3566, 4294901760
      %3568 = vmatmul.mubr.f32.gmra.mrb[0].mxu0 %v3567
      %v3569 = vpop.f32.mrb[0].mxu0
      %v3570 = vadd.f32 %v3360, %v3569
      %v3571 = vpop.f32.mrb[0].mxu0
      %3572 = vmatprep.mubr.f32.mxu0 0.0
      %v3573 = vand.u32 %v3318, 4294901760
      %v3574 = vsub.f32 %v3318, %v3573
      %v3575 = vand.u32 %v3574, 4294901760
      %v3576 = vsub.f32 %v3574, %v3575
      %v3577 = vand.u32 %v3576, 4294901760
      %3578 = vmatmul.mubr.f32.gmra.mrb[0].mxu0 %v3577
      %v3579 = vpop.f32.mrb[0].mxu0
      %v3580 = vadd.f32 %v3360, %v3579
      %v3581 = vpop.f32.mrb[0].mxu0
      %3582 = vmatprep.mubr.f32.mxu0 0.0
      %v3583 = vand.u32 %v3319, 4294901760
      %v3584 = vsub.f32 %v3319, %v3583
      %v3585 = vand.u32 %v3584, 4294901760
      %v3586 = vsub.f32 %v3584, %v3585
      %v3587 = vand.u32 %v3586, 4294901760
      %3588 = vmatmul.mubr.f32.gmra.mrb[0].mxu0 %v3587
      %v3589 = vpop.f32.mrb[0].mxu0
      %v3590 = vadd.f32 %v3360, %v3589
      %v3591 = vpop.f32.mrb[0].mxu0
      %3592 = vmatprep.mubr.f32.mxu0 0.0
      %v3593 = vand.u32 %v3320, 4294901760
      %v3594 = vsub.f32 %v3320, %v3593
      %v3595 = vand.u32 %v3594, 4294901760
      %v3596 = vsub.f32 %v3594, %v3595
      %v3597 = vand.u32 %v3596, 4294901760
      %3598 = vmatmul.mubr.f32.gmra.mrb[0].mxu0 %v3597
      %v3599 = vpop.f32.mrb[0].mxu0
      %v3600 = vadd.f32 %v3360, %v3599
      %v3601 = vpop.f32.mrb[0].mxu0
      %3602 = vmatprep.mubr.f32.mxu0 0.0
      %v3603 = vand.u32 %v3321, 4294901760
      %v3604 = vsub.f32 %v3321, %v3603
      %v3605 = vand.u32 %v3604, 4294901760
      %v3606 = vsub.f32 %v3604, %v3605
      %v3607 = vand.u32 %v3606, 4294901760
      %3608 = vmatmul.mubr.f32.gmra.mrb[0].mxu0 %v3607
      %v3609 = vpop.f32.mrb[0].mxu0
      %v3610 = vadd.f32 %v3360, %v3609
      %v3611 = vpop.f32.mrb[0].mxu0
      %3612 = vmatprep.mubr.f32.mxu0 0.0
      %v3613 = vand.u32 %v3322, 4294901760
      %v3614 = vsub.f32 %v3322, %v3613
      %v3615 = vand.u32 %v3614, 4294901760
      %v3616 = vsub.f32 %v3614, %v3615
      %v3617 = vand.u32 %v3616, 4294901760
      %3618 = vmatmul.mubr.f32.gmra.mrb[0].mxu0 %v3617
      %v3619 = vpop.f32.mrb[0].mxu0
      %v3620 = vadd.f32 %v3360, %v3619
      %v3621 = vpop.f32.mrb[0].mxu0
      %3622 = vmatprep.mubr.f32.mxu0 0.0
      %v3623 = vand.u32 %v3323, 4294901760
      %v3624 = vsub.f32 %v3323, %v3623
      %v3625 = vand.u32 %v3624, 4294901760
      %v3626 = vsub.f32 %v3624, %v3625
      %v3627 = vand.u32 %v3626, 4294901760
      %3628 = vmatmul.mubr.f32.gmra.mrb[0].mxu0 %v3627
      %v3629 = vpop.f32.mrb[0].mxu0
      %v3630 = vadd.f32 %v3360, %v3629
      %v3631 = vpop.f32.mrb[0].mxu0
      %3632 = vmatprep.mubr.f32.mxu0 0.0
      %v3633 = vand.u32 %v3324, 4294901760
      %v3634 = vsub.f32 %v3324, %v3633
      %v3635 = vand.u32 %v3634, 4294901760
      %v3636 = vsub.f32 %v3634, %v3635
      %v3637 = vand.u32 %v3636, 4294901760
      %3638 = vmatmul.mubr.f32.gmra.mrb[0].mxu0 %v3637
      %v3639 = vpop.f32.mrb[0].mxu0
      %v3640 = vadd.f32 %v3360, %v3639
      %v3641 = vpop.f32.mrb[0].mxu0
      %3642 = vmatprep.mubr.f32.mxu0 0.0
      %v3643 = vand.u32 %v3325, 4294901760
      %v3644 = vsub.f32 %v3325, %v3643
      %v3645 = vand.u32 %v3644, 4294901760
      %v3646 = vsub.f32 %v3644, %v3645
      %v3647 = vand.u32 %v3646, 4294901760
      %3648 = vmatmul.mubr.f32.gmra.mrb[0].mxu0 %v3647
      %v3649 = vpop.f32.mrb[0].mxu0
      %v3650 = vadd.f32 %v3360, %v3649
      %v3651 = vpop.f32.mrb[0].mxu0
      %3652 = vmatprep.mubr.f32.mxu0 0.0
      %v3653 = vand.u32 %v3326, 4294901760
      %v3654 = vsub.f32 %v3326, %v3653
      %v3655 = vand.u32 %v3654, 4294901760
      %v3656 = vsub.f32 %v3654, %v3655
      %v3657 = vand.u32 %v3656, 4294901760
      %3658 = vmatmul.mubr.f32.gmra.mrb[0].mxu0 %v3657
      %v3659 = vpop.f32.mrb[0].mxu0
      %v3660 = vadd.f32 %v3360, %v3659
      %v3661 = vpop.f32.mrb[0].mxu0
      %3662 = vmatprep.mubr.f32.mxu0 0.0
      %v3663 = vand.u32 %v3327, 4294901760
      %v3664 = vsub.f32 %v3327, %v3663
      %v3665 = vand.u32 %v3664, 4294901760
      %v3666 = vsub.f32 %v3664, %v3665
      %v3667 = vand.u32 %v3666, 4294901760
      %3668 = vmatmul.mubr.f32.gmra.mrb[0].mxu0 %v3667
      %v3669 = vpop.f32.mrb[0].mxu0
      %v3670 = vadd.f32 %v3360, %v3669
      %v3671 = vpop.f32.mrb[0].mxu0
      %3672 = vmatprep.mubr.f32.mxu0 0.0
      %v3673 = vand.u32 %v3328, 4294901760
      %v3674 = vsub.f32 %v3328, %v3673
      %v3675 = vand.u32 %v3674, 4294901760
      %v3676 = vsub.f32 %v3674, %v3675
      %v3677 = vand.u32 %v3676, 4294901760
      %3678 = vmatmul.mubr.f32.gmra.mrb[0].mxu0 %v3677
      %v3679 = vpop.f32.mrb[0].mxu0
      %v3680 = vadd.f32 %v3360, %v3679
      %v3681 = vpop.f32.mrb[0].mxu0
      %3682 = vmatprep.mubr.f32.mxu0 0.0
      %v3683 = vand.u32 %v3329, 4294901760
      %v3684 = vsub.f32 %v3329, %v3683
      %v3685 = vand.u32 %v3684, 4294901760
      %v3686 = vsub.f32 %v3684, %v3685
      %v3687 = vand.u32 %v3686, 4294901760
      %3688 = vmatmul.mubr.f32.gmra.mrb[0].mxu0 %v3687
      %v3689 = vpop.f32.mrb[0].mxu0
      %v3690 = vadd.f32 %v3360, %v3689
      %v3691 = vpop.f32.mrb[0].mxu0
      %3692 = vmatprep.mubr.f32.mxu0 0.0
      %v3693 = vand.u32 %v3330, 4294901760
      %v3694 = vsub.f32 %v3330, %v3693
      %v3695 = vand.u32 %v3694, 4294901760
      %v3696 = vsub.f32 %v3694, %v3695
      %v3697 = vand.u32 %v3696, 4294901760
      %3698 = vmatmul.mubr.f32.gmra.mrb[0].mxu0 %v3697
      %v3699 = vpop.f32.mrb[0].mxu0
      %v3700 = vadd.f32 %v3360, %v3699
      %v3701 = vpop.f32.mrb[0].mxu0
      %3702 = vmatprep.mubr.f32.mxu0 0.0
      %v3703 = vand.u32 %v3331, 4294901760
      %v3704 = vsub.f32 %v3331, %v3703
      %v3705 = vand.u32 %v3704, 4294901760
      %v3706 = vsub.f32 %v3704, %v3705
      %v3707 = vand.u32 %v3706, 4294901760
      %3708 = vmatmul.mubr.f32.gmra.mrb[0].mxu0 %v3707
      %v3709 = vpop.f32.mrb[0].mxu0
      %v3710 = vadd.f32 %v3360, %v3709
      %v3711 = vpop.f32.mrb[0].mxu0
      %3712 = vmatprep.mubr.f32.mxu0 0.0
      %v3713 = vand.u32 %v3332, 4294901760
      %v3714 = vsub.f32 %v3332, %v3713
      %v3715 = vand.u32 %v3714, 4294901760
      %v3716 = vsub.f32 %v3714, %v3715
      %v3717 = vand.u32 %v3716, 4294901760
      %3718 = vmatmul.mubr.f32.gmra.mrb[0].mxu0 %v3717
      %v3719 = vpop.f32.mrb[0].mxu0
      %v3720 = vadd.f32 %v3360, %v3719
      %v3721 = vpop.f32.mrb[0].mxu0
      %3722 = vmatprep.mubr.f32.mxu0 0.0
      %v3723 = vand.u32 %v3333, 4294901760
      %v3724 = vsub.f32 %v3333, %v3723
      %v3725 = vand.u32 %v3724, 4294901760
      %v3726 = vsub.f32 %v3724, %v3725
      %v3727 = vand.u32 %v3726, 4294901760
      %3728 = vmatmul.mubr.f32.gmra.mrb[0].mxu0 %v3727
      %v3729 = vpop.f32.mrb[0].mxu0
      %v3730 = vadd.f32 %v3360, %v3729
      %v3731 = vpop.f32.mrb[0].mxu0
      %3732 = vmatprep.mubr.f32.mxu0 0.0
      %v3733 = vand.u32 %v3334, 4294901760
      %v3734 = vsub.f32 %v3334, %v3733
      %v3735 = vand.u32 %v3734, 4294901760
      %v3736 = vsub.f32 %v3734, %v3735
      %v3737 = vand.u32 %v3736, 4294901760
      %3738 = vmatmul.mubr.f32.gmra.mrb[0].mxu0 %v3737
      %v3739 = vpop.f32.mrb[0].mxu0
      %v3740 = vadd.f32 %v3360, %v3739
      %v3741 = vpop.f32.mrb[0].mxu0
      %3742 = vmatprep.mubr.f32.mxu0 0.0
      %v3743 = vand.u32 %v3335, 4294901760
      %v3744 = vsub.f32 %v3335, %v3743
      %v3745 = vand.u32 %v3744, 4294901760
      %v3746 = vsub.f32 %v3744, %v3745
      %v3747 = vand.u32 %v3746, 4294901760
      %3748 = vmatmul.mubr.f32.gmra.mrb[0].mxu0 %v3747
      %v3749 = vpop.f32.mrb[0].mxu0
      %v3750 = vadd.f32 %v3360, %v3749
      %v3751 = vpop.f32.mrb[0].mxu0
      %3752 = vmatprep.mubr.f32.mxu0 0.0
      %v3753 = vand.u32 %v3336, 4294901760
      %v3754 = vsub.f32 %v3336, %v3753
      %v3755 = vand.u32 %v3754, 4294901760
      %v3756 = vsub.f32 %v3754, %v3755
      %v3757 = vand.u32 %v3756, 4294901760
      %3758 = vmatmul.mubr.f32.gmra.mrb[0].mxu0 %v3757
      %v3759 = vpop.f32.mrb[0].mxu0
      %v3760 = vadd.f32 %v3360, %v3759
      %v3761 = vpop.f32.mrb[0].mxu0
      %3762 = vdwg.mxu0
      %3763 = vmatprep.subr.mxu0 0.0
      %v3764 = vand.u32 %v3338, 4294901760
      %v3765 = vsub.f32 %v3338, %v3764
      %v3766 = vand.u32 %v3765, 4294901760
      %v3767 = vsub.f32 %v3765, %v3766
      %v3768 = vand.u32 %v3767, 4294901760
      %3769 = vmatpush1.msra.mxu0 %v3768
      %3770 = vmatprep.subr.mxu0 0.0
      %v3771 = vand.u32 %v3339, 4294901760
      %v3772 = vsub.f32 %v3339, %v3771
      %v3773 = vand.u32 %v3772, 4294901760
      %v3774 = vsub.f32 %v3772, %v3773
      %v3775 = vand.u32 %v3774, 4294901760
      %3776 = vmatpush1.msra.mxu0 %v3775
      %3777 = vmatprep.subr.mxu0 0.0
      %v3778 = vand.u32 %v3340, 4294901760
      %v3779 = vsub.f32 %v3340, %v3778
      %v3780 = vand.u32 %v3779, 4294901760
      %v3781 = vsub.f32 %v3779, %v3780
      %v3782 = vand.u32 %v3781, 4294901760
      %3783 = vmatpush1.msra.mxu0 %v3782
      %3784 = vmatprep.subr.mxu0 0.0
      %v3785 = vand.u32 %v3341, 4294901760
      %v3786 = vsub.f32 %v3341, %v3785
      %v3787 = vand.u32 %v3786, 4294901760
      %v3788 = vsub.f32 %v3786, %v3787
      %v3789 = vand.u32 %v3788, 4294901760
      %3790 = vmatpush1.msra.mxu0 %v3789
      %3791 = vmatprep.subr.mxu0 0.0
      %v3792 = vand.u32 %v3342, 4294901760
      %v3793 = vsub.f32 %v3342, %v3792
      %v3794 = vand.u32 %v3793, 4294901760
      %v3795 = vsub.f32 %v3793, %v3794
      %v3796 = vand.u32 %v3795, 4294901760
      %3797 = vmatpush1.msra.mxu0 %v3796
      %3798 = vmatprep.subr.mxu0 0.0
      %v3799 = vand.u32 %v3343, 4294901760
      %v3800 = vsub.f32 %v3343, %v3799
      %v3801 = vand.u32 %v3800, 4294901760
      %v3802 = vsub.f32 %v3800, %v3801
      %v3803 = vand.u32 %v3802, 4294901760
      %3804 = vmatpush1.msra.mxu0 %v3803
      %3805 = vmatprep.subr.mxu0 0.0
      %v3806 = vand.u32 %v3344, 4294901760
      %v3807 = vsub.f32 %v3344, %v3806
      %v3808 = vand.u32 %v3807, 4294901760
      %v3809 = vsub.f32 %v3807, %v3808
      %v3810 = vand.u32 %v3809, 4294901760
      %3811 = vmatpush1.msra.mxu0 %v3810
      %3812 = vmatprep.subr.mxu0 0.0
      %v3813 = vand.u32 %v3345, 4294901760
      %v3814 = vsub.f32 %v3345, %v3813
      %v3815 = vand.u32 %v3814, 4294901760
      %v3816 = vsub.f32 %v3814, %v3815
      %v3817 = vand.u32 %v3816, 4294901760
      %3818 = vmatpush1.msra.mxu0 %v3817
      %3819 = vmatprep.subr.mxu0 0.0
      %v3820 = vand.u32 %v3346, 4294901760
      %v3821 = vsub.f32 %v3346, %v3820
      %v3822 = vand.u32 %v3821, 4294901760
      %v3823 = vsub.f32 %v3821, %v3822
      %v3824 = vand.u32 %v3823, 4294901760
      %3825 = vmatpush1.msra.mxu0 %v3824
      %3826 = vmatprep.subr.mxu0 0.0
      %v3827 = vand.u32 %v3347, 4294901760
      %v3828 = vsub.f32 %v3347, %v3827
      %v3829 = vand.u32 %v3828, 4294901760
      %v3830 = vsub.f32 %v3828, %v3829
      %v3831 = vand.u32 %v3830, 4294901760
      %3832 = vmatpush1.msra.mxu0 %v3831
      %3833 = vmatprep.subr.mxu0 0.0
      %v3834 = vand.u32 %v3348, 4294901760
      %v3835 = vsub.f32 %v3348, %v3834
      %v3836 = vand.u32 %v3835, 4294901760
      %v3837 = vsub.f32 %v3835, %v3836
      %v3838 = vand.u32 %v3837, 4294901760
      %3839 = vmatpush1.msra.mxu0 %v3838
      %3840 = vmatprep.subr.mxu0 0.0
      %v3841 = vand.u32 %v3349, 4294901760
      %v3842 = vsub.f32 %v3349, %v3841
      %v3843 = vand.u32 %v3842, 4294901760
      %v3844 = vsub.f32 %v3842, %v3843
      %v3845 = vand.u32 %v3844, 4294901760
      %3846 = vmatpush1.msra.mxu0 %v3845
      %3847 = vmatprep.subr.mxu0 0.0
      %v3848 = vand.u32 %v3350, 4294901760
      %v3849 = vsub.f32 %v3350, %v3848
      %v3850 = vand.u32 %v3849, 4294901760
      %v3851 = vsub.f32 %v3849, %v3850
      %v3852 = vand.u32 %v3851, 4294901760
      %3853 = vmatpush1.msra.mxu0 %v3852
      %3854 = vmatprep.subr.mxu0 0.0
      %v3855 = vand.u32 %v3351, 4294901760
      %v3856 = vsub.f32 %v3351, %v3855
      %v3857 = vand.u32 %v3856, 4294901760
      %v3858 = vsub.f32 %v3856, %v3857
      %v3859 = vand.u32 %v3858, 4294901760
      %3860 = vmatpush1.msra.mxu0 %v3859
      %3861 = vmatprep.subr.mxu0 0.0
      %v3862 = vand.u32 %v3352, 4294901760
      %v3863 = vsub.f32 %v3352, %v3862
      %v3864 = vand.u32 %v3863, 4294901760
      %v3865 = vsub.f32 %v3863, %v3864
      %v3866 = vand.u32 %v3865, 4294901760
      %3867 = vmatpush1.msra.mxu0 %v3866
      %3868 = vmatprep.subr.mxu0 0.0
      %v3869 = vand.u32 %v3353, 4294901760
      %v3870 = vsub.f32 %v3353, %v3869
      %v3871 = vand.u32 %v3870, 4294901760
      %v3872 = vsub.f32 %v3870, %v3871
      %v3873 = vand.u32 %v3872, 4294901760
      %3874 = vmatpush1.msra.mxu0 %v3873
      %3875 = vmatprep.subr.mxu0 0.0
      %3876 = vmatpush1.msra.mxu0 0.0
      %3877 = vmatprep.subr.mxu0 0.0
      %3878 = vmatpush1.msra.mxu0 0.0
      %3879 = vmatprep.subr.mxu0 0.0
      %3880 = vmatpush1.msra.mxu0 0.0
      %3881 = vmatprep.subr.mxu0 0.0
      %3882 = vmatpush1.msra.mxu0 0.0
      %3883 = vmatprep.subr.mxu0 0.0
      %3884 = vmatpush1.msra.mxu0 0.0
      %3885 = vmatprep.subr.mxu0 0.0
      %3886 = vmatpush1.msra.mxu0 0.0
      %3887 = vmatprep.subr.mxu0 0.0
      %3888 = vmatpush1.msra.mxu0 0.0
      %3889 = vmatprep.subr.mxu0 0.0
      %3890 = vmatpush1.msra.mxu0 0.0
      %3891 = vmatprep.subr.mxu0 0.0
      %3892 = vmatpush1.msra.mxu0 0.0
      %3893 = vmatprep.subr.mxu0 0.0
      %3894 = vmatpush1.msra.mxu0 0.0
      %3895 = vmatprep.subr.mxu0 0.0
      %3896 = vmatpush1.msra.mxu0 0.0
      %3897 = vmatprep.subr.mxu0 0.0
      %3898 = vmatpush1.msra.mxu0 0.0
      %3899 = vmatprep.subr.mxu0 0.0
      %3900 = vmatpush1.msra.mxu0 0.0
      %3901 = vmatprep.subr.mxu0 0.0
      %3902 = vmatpush1.msra.mxu0 0.0
      %3903 = vmatprep.subr.mxu0 0.0
      %3904 = vmatpush1.msra.mxu0 0.0
      %3905 = vmatprep.subr.mxu0 0.0
      %3906 = vmatpush1.msra.mxu0 0.0
      %3907 = vmatprep.mubr.f32.mxu0 0.0
      %v3908 = vand.u32 %v3305, 4294901760
      %3909 = vmatmul.mubr.f32.gmra.mrb[0].mxu0 %v3908
      %v3910 = vpop.f32.mrb[0].mxu0
      %v3911 = vadd.f32 %v3450, %v3910
      %v3912 = vpop.f32.mrb[0].mxu0
      %3913 = vmatprep.mubr.f32.mxu0 0.0
      %v3914 = vand.u32 %v3306, 4294901760
      %3915 = vmatmul.mubr.f32.gmra.mrb[0].mxu0 %v3914
      %v3916 = vpop.f32.mrb[0].mxu0
      %v3917 = vadd.f32 %v3460, %v3916
      %v3918 = vpop.f32.mrb[0].mxu0
      %3919 = vmatprep.mubr.f32.mxu0 0.0
      %v3920 = vand.u32 %v3307, 4294901760
      %3921 = vmatmul.mubr.f32.gmra.mrb[0].mxu0 %v3920
      %v3922 = vpop.f32.mrb[0].mxu0
      %v3923 = vadd.f32 %v3470, %v3922
      %v3924 = vpop.f32.mrb[0].mxu0
      %3925 = vmatprep.mubr.f32.mxu0 0.0
      %v3926 = vand.u32 %v3308, 4294901760
      %3927 = vmatmul.mubr.f32.gmra.mrb[0].mxu0 %v3926
      %v3928 = vpop.f32.mrb[0].mxu0
      %v3929 = vadd.f32 %v3480, %v3928
      %v3930 = vpop.f32.mrb[0].mxu0
      %3931 = vmatprep.mubr.f32.mxu0 0.0
      %v3932 = vand.u32 %v3309, 4294901760
      %3933 = vmatmul.mubr.f32.gmra.mrb[0].mxu0 %v3932
      %v3934 = vpop.f32.mrb[0].mxu0
      %v3935 = vadd.f32 %v3490, %v3934
      %v3936 = vpop.f32.mrb[0].mxu0
      %3937 = vmatprep.mubr.f32.mxu0 0.0
      %v3938 = vand.u32 %v3310, 4294901760
      %3939 = vmatmul.mubr.f32.gmra.mrb[0].mxu0 %v3938
      %v3940 = vpop.f32.mrb[0].mxu0
      %v3941 = vadd.f32 %v3500, %v3940
      %v3942 = vpop.f32.mrb[0].mxu0
      %3943 = vmatprep.mubr.f32.mxu0 0.0
      %v3944 = vand.u32 %v3311, 4294901760
      %3945 = vmatmul.mubr.f32.gmra.mrb[0].mxu0 %v3944
      %v3946 = vpop.f32.mrb[0].mxu0
      %v3947 = vadd.f32 %v3510, %v3946
      %v3948 = vpop.f32.mrb[0].mxu0
      %3949 = vmatprep.mubr.f32.mxu0 0.0
      %v3950 = vand.u32 %v3312, 4294901760
      %3951 = vmatmul.mubr.f32.gmra.mrb[0].mxu0 %v3950
      %v3952 = vpop.f32.mrb[0].mxu0
      %v3953 = vadd.f32 %v3520, %v3952
      %v3954 = vpop.f32.mrb[0].mxu0
      %3955 = vmatprep.mubr.f32.mxu0 0.0
      %v3956 = vand.u32 %v3313, 4294901760
      %3957 = vmatmul.mubr.f32.gmra.mrb[0].mxu0 %v3956
      %v3958 = vpop.f32.mrb[0].mxu0
      %v3959 = vadd.f32 %v3530, %v3958
      %v3960 = vpop.f32.mrb[0].mxu0
      %3961 = vmatprep.mubr.f32.mxu0 0.0
      %v3962 = vand.u32 %v3314, 4294901760
      %3963 = vmatmul.mubr.f32.gmra.mrb[0].mxu0 %v3962
      %v3964 = vpop.f32.mrb[0].mxu0
      %v3965 = vadd.f32 %v3540, %v3964
      %v3966 = vpop.f32.mrb[0].mxu0
      %3967 = vmatprep.mubr.f32.mxu0 0.0
      %v3968 = vand.u32 %v3315, 4294901760
      %3969 = vmatmul.mubr.f32.gmra.mrb[0].mxu0 %v3968
      %v3970 = vpop.f32.mrb[0].mxu0
      %v3971 = vadd.f32 %v3550, %v3970
      %v3972 = vpop.f32.mrb[0].mxu0
      %3973 = vmatprep.mubr.f32.mxu0 0.0
      %v3974 = vand.u32 %v3316, 4294901760
      %3975 = vmatmul.mubr.f32.gmra.mrb[0].mxu0 %v3974
      %v3976 = vpop.f32.mrb[0].mxu0
      %v3977 = vadd.f32 %v3560, %v3976
      %v3978 = vpop.f32.mrb[0].mxu0
      %3979 = vmatprep.mubr.f32.mxu0 0.0
      %v3980 = vand.u32 %v3317, 4294901760
      %3981 = vmatmul.mubr.f32.gmra.mrb[0].mxu0 %v3980
      %v3982 = vpop.f32.mrb[0].mxu0
      %v3983 = vadd.f32 %v3570, %v3982
      %v3984 = vpop.f32.mrb[0].mxu0
      %3985 = vmatprep.mubr.f32.mxu0 0.0
      %v3986 = vand.u32 %v3318, 4294901760
      %3987 = vmatmul.mubr.f32.gmra.mrb[0].mxu0 %v3986
      %v3988 = vpop.f32.mrb[0].mxu0
      %v3989 = vadd.f32 %v3580, %v3988
      %v3990 = vpop.f32.mrb[0].mxu0
      %3991 = vmatprep.mubr.f32.mxu0 0.0
      %v3992 = vand.u32 %v3319, 4294901760
      %3993 = vmatmul.mubr.f32.gmra.mrb[0].mxu0 %v3992
      %v3994 = vpop.f32.mrb[0].mxu0
      %v3995 = vadd.f32 %v3590, %v3994
      %v3996 = vpop.f32.mrb[0].mxu0
      %3997 = vmatprep.mubr.f32.mxu0 0.0
      %v3998 = vand.u32 %v3320, 4294901760
      %3999 = vmatmul.mubr.f32.gmra.mrb[0].mxu0 %v3998
      %v4000 = vpop.f32.mrb[0].mxu0
      %v4001 = vadd.f32 %v3600, %v4000
      %v4002 = vpop.f32.mrb[0].mxu0
      %4003 = vmatprep.mubr.f32.mxu0 0.0
      %v4004 = vand.u32 %v3321, 4294901760
      %4005 = vmatmul.mubr.f32.gmra.mrb[0].mxu0 %v4004
      %v4006 = vpop.f32.mrb[0].mxu0
      %v4007 = vadd.f32 %v3610, %v4006
      %v4008 = vpop.f32.mrb[0].mxu0
      %4009 = vmatprep.mubr.f32.mxu0 0.0
      %v4010 = vand.u32 %v3322, 4294901760
      %4011 = vmatmul.mubr.f32.gmra.mrb[0].mxu0 %v4010
      %v4012 = vpop.f32.mrb[0].mxu0
      %v4013 = vadd.f32 %v3620, %v4012
      %v4014 = vpop.f32.mrb[0].mxu0
      %4015 = vmatprep.mubr.f32.mxu0 0.0
      %v4016 = vand.u32 %v3323, 4294901760
      %4017 = vmatmul.mubr.f32.gmra.mrb[0].mxu0 %v4016
      %v4018 = vpop.f32.mrb[0].mxu0
      %v4019 = vadd.f32 %v3630, %v4018
      %v4020 = vpop.f32.mrb[0].mxu0
      %4021 = vmatprep.mubr.f32.mxu0 0.0
      %v4022 = vand.u32 %v3324, 4294901760
      %4023 = vmatmul.mubr.f32.gmra.mrb[0].mxu0 %v4022
      %v4024 = vpop.f32.mrb[0].mxu0
      %v4025 = vadd.f32 %v3640, %v4024
      %v4026 = vpop.f32.mrb[0].mxu0
      %4027 = vmatprep.mubr.f32.mxu0 0.0
      %v4028 = vand.u32 %v3325, 4294901760
      %4029 = vmatmul.mubr.f32.gmra.mrb[0].mxu0 %v4028
      %v4030 = vpop.f32.mrb[0].mxu0
      %v4031 = vadd.f32 %v3650, %v4030
      %v4032 = vpop.f32.mrb[0].mxu0
      %4033 = vmatprep.mubr.f32.mxu0 0.0
      %v4034 = vand.u32 %v3326, 4294901760
      %4035 = vmatmul.mubr.f32.gmra.mrb[0].mxu0 %v4034
      %v4036 = vpop.f32.mrb[0].mxu0
      %v4037 = vadd.f32 %v3660, %v4036
      %v4038 = vpop.f32.mrb[0].mxu0
      %4039 = vmatprep.mubr.f32.mxu0 0.0
      %v4040 = vand.u32 %v3327, 4294901760
      %4041 = vmatmul.mubr.f32.gmra.mrb[0].mxu0 %v4040
      %v4042 = vpop.f32.mrb[0].mxu0
      %v4043 = vadd.f32 %v3670, %v4042
      %v4044 = vpop.f32.mrb[0].mxu0
      %4045 = vmatprep.mubr.f32.mxu0 0.0
      %v4046 = vand.u32 %v3328, 4294901760
      %4047 = vmatmul.mubr.f32.gmra.mrb[0].mxu0 %v4046
      %v4048 = vpop.f32.mrb[0].mxu0
      %v4049 = vadd.f32 %v3680, %v4048
      %v4050 = vpop.f32.mrb[0].mxu0
      %4051 = vmatprep.mubr.f32.mxu0 0.0
      %v4052 = vand.u32 %v3329, 4294901760
      %4053 = vmatmul.mubr.f32.gmra.mrb[0].mxu0 %v4052
      %v4054 = vpop.f32.mrb[0].mxu0
      %v4055 = vadd.f32 %v3690, %v4054
      %v4056 = vpop.f32.mrb[0].mxu0
      %4057 = vmatprep.mubr.f32.mxu0 0.0
      %v4058 = vand.u32 %v3330, 4294901760
      %4059 = vmatmul.mubr.f32.gmra.mrb[0].mxu0 %v4058
      %v4060 = vpop.f32.mrb[0].mxu0
      %v4061 = vadd.f32 %v3700, %v4060
      %v4062 = vpop.f32.mrb[0].mxu0
      %4063 = vmatprep.mubr.f32.mxu0 0.0
      %v4064 = vand.u32 %v3331, 4294901760
      %4065 = vmatmul.mubr.f32.gmra.mrb[0].mxu0 %v4064
      %v4066 = vpop.f32.mrb[0].mxu0
      %v4067 = vadd.f32 %v3710, %v4066
      %v4068 = vpop.f32.mrb[0].mxu0
      %4069 = vmatprep.mubr.f32.mxu0 0.0
      %v4070 = vand.u32 %v3332, 4294901760
      %4071 = vmatmul.mubr.f32.gmra.mrb[0].mxu0 %v4070
      %v4072 = vpop.f32.mrb[0].mxu0
      %v4073 = vadd.f32 %v3720, %v4072
      %v4074 = vpop.f32.mrb[0].mxu0
      %4075 = vmatprep.mubr.f32.mxu0 0.0
      %v4076 = vand.u32 %v3333, 4294901760
      %4077 = vmatmul.mubr.f32.gmra.mrb[0].mxu0 %v4076
      %v4078 = vpop.f32.mrb[0].mxu0
      %v4079 = vadd.f32 %v3730, %v4078
      %v4080 = vpop.f32.mrb[0].mxu0
      %4081 = vmatprep.mubr.f32.mxu0 0.0
      %v4082 = vand.u32 %v3334, 4294901760
      %4083 = vmatmul.mubr.f32.gmra.mrb[0].mxu0 %v4082
      %v4084 = vpop.f32.mrb[0].mxu0
      %v4085 = vadd.f32 %v3740, %v4084
      %v4086 = vpop.f32.mrb[0].mxu0
      %4087 = vmatprep.mubr.f32.mxu0 0.0
      %v4088 = vand.u32 %v3335, 4294901760
      %4089 = vmatmul.mubr.f32.gmra.mrb[0].mxu0 %v4088
      %v4090 = vpop.f32.mrb[0].mxu0
      %v4091 = vadd.f32 %v3750, %v4090
      %v4092 = vpop.f32.mrb[0].mxu0
      %4093 = vmatprep.mubr.f32.mxu0 0.0
      %v4094 = vand.u32 %v3336, 4294901760
      %4095 = vmatmul.mubr.f32.gmra.mrb[0].mxu0 %v4094
      %v4096 = vpop.f32.mrb[0].mxu0
      %v4097 = vadd.f32 %v3760, %v4096
      %v4098 = vpop.f32.mrb[0].mxu0
      %4099 = vdwg.mxu0
      %4100 = vmatprep.subr.mxu0 0.0
      %v4101 = vand.u32 %v3338, 4294901760
      %v4102 = vsub.f32 %v3338, %v4101
      %4103 = vmatpush1.msra.mxu0 %v4102
      %4104 = vmatprep.subr.mxu0 0.0
      %v4105 = vand.u32 %v3339, 4294901760
      %v4106 = vsub.f32 %v3339, %v4105
      %4107 = vmatpush1.msra.mxu0 %v4106
      %4108 = vmatprep.subr.mxu0 0.0
      %v4109 = vand.u32 %v3340, 4294901760
      %v4110 = vsub.f32 %v3340, %v4109
      %4111 = vmatpush1.msra.mxu0 %v4110
      %4112 = vmatprep.subr.mxu0 0.0
      %v4113 = vand.u32 %v3341, 4294901760
      %v4114 = vsub.f32 %v3341, %v4113
      %4115 = vmatpush1.msra.mxu0 %v4114
      %4116 = vmatprep.subr.mxu0 0.0
      %v4117 = vand.u32 %v3342, 4294901760
      %v4118 = vsub.f32 %v3342, %v4117
      %4119 = vmatpush1.msra.mxu0 %v4118
      %4120 = vmatprep.subr.mxu0 0.0
      %v4121 = vand.u32 %v3343, 4294901760
      %v4122 = vsub.f32 %v3343, %v4121
      %4123 = vmatpush1.msra.mxu0 %v4122
      %4124 = vmatprep.subr.mxu0 0.0
      %v4125 = vand.u32 %v3344, 4294901760
      %v4126 = vsub.f32 %v3344, %v4125
      %4127 = vmatpush1.msra.mxu0 %v4126
      %4128 = vmatprep.subr.mxu0 0.0
      %v4129 = vand.u32 %v3345, 4294901760
      %v4130 = vsub.f32 %v3345, %v4129
      %4131 = vmatpush1.msra.mxu0 %v4130
      %4132 = vmatprep.subr.mxu0 0.0
      %v4133 = vand.u32 %v3346, 4294901760
      %v4134 = vsub.f32 %v3346, %v4133
      %4135 = vmatpush1.msra.mxu0 %v4134
      %4136 = vmatprep.subr.mxu0 0.0
      %v4137 = vand.u32 %v3347, 4294901760
      %v4138 = vsub.f32 %v3347, %v4137
      %4139 = vmatpush1.msra.mxu0 %v4138
      %4140 = vmatprep.subr.mxu0 0.0
      %v4141 = vand.u32 %v3348, 4294901760
      %v4142 = vsub.f32 %v3348, %v4141
      %4143 = vmatpush1.msra.mxu0 %v4142
      %4144 = vmatprep.subr.mxu0 0.0
      %v4145 = vand.u32 %v3349, 4294901760
      %v4146 = vsub.f32 %v3349, %v4145
      %4147 = vmatpush1.msra.mxu0 %v4146
      %4148 = vmatprep.subr.mxu0 0.0
      %v4149 = vand.u32 %v3350, 4294901760
      %v4150 = vsub.f32 %v3350, %v4149
      %4151 = vmatpush1.msra.mxu0 %v4150
      %4152 = vmatprep.subr.mxu0 0.0
      %v4153 = vand.u32 %v3351, 4294901760
      %v4154 = vsub.f32 %v3351, %v4153
      %4155 = vmatpush1.msra.mxu0 %v4154
      %4156 = vmatprep.subr.mxu0 0.0
      %v4157 = vand.u32 %v3352, 4294901760
      %v4158 = vsub.f32 %v3352, %v4157
      %4159 = vmatpush1.msra.mxu0 %v4158
      %4160 = vmatprep.subr.mxu0 0.0
      %v4161 = vand.u32 %v3353, 4294901760
      %v4162 = vsub.f32 %v3353, %v4161
      %4163 = vmatpush1.msra.mxu0 %v4162
      %4164 = vmatprep.subr.mxu0 0.0
      %4165 = vmatpush1.msra.mxu0 0.0
      %4166 = vmatprep.subr.mxu0 0.0
      %4167 = vmatpush1.msra.mxu0 0.0
      %4168 = vmatprep.subr.mxu0 0.0
      %4169 = vmatpush1.msra.mxu0 0.0
      %4170 = vmatprep.subr.mxu0 0.0
      %4171 = vmatpush1.msra.mxu0 0.0
      %4172 = vmatprep.subr.mxu0 0.0
      %4173 = vmatpush1.msra.mxu0 0.0
      %4174 = vmatprep.subr.mxu0 0.0
      %4175 = vmatpush1.msra.mxu0 0.0
      %4176 = vmatprep.subr.mxu0 0.0
      %4177 = vmatpush1.msra.mxu0 0.0
      %4178 = vmatprep.subr.mxu0 0.0
      %4179 = vmatpush1.msra.mxu0 0.0
      %4180 = vmatprep.subr.mxu0 0.0
      %4181 = vmatpush1.msra.mxu0 0.0
      %4182 = vmatprep.subr.mxu0 0.0
      %4183 = vmatpush1.msra.mxu0 0.0
      %4184 = vmatprep.subr.mxu0 0.0
      %4185 = vmatpush1.msra.mxu0 0.0
      %4186 = vmatprep.subr.mxu0 0.0
      %4187 = vmatpush1.msra.mxu0 0.0
      %4188 = vmatprep.subr.mxu0 0.0
      %4189 = vmatpush1.msra.mxu0 0.0
      %4190 = vmatprep.subr.mxu0 0.0
      %4191 = vmatpush1.msra.mxu0 0.0
      %4192 = vmatprep.subr.mxu0 0.0
      %4193 = vmatpush1.msra.mxu0 0.0
      %4194 = vmatprep.subr.mxu0 0.0
      %4195 = vmatpush1.msra.mxu0 0.0
      %4196 = vmatprep.mubr.f32.mxu0 0.0
      %v4197 = vand.u32 %v3305, 4294901760
      %v4198 = vsub.f32 %v3305, %v4197
      %4199 = vmatmul.mubr.f32.gmra.mrb[0].mxu0 %v4198
      %v4200 = vpop.f32.mrb[0].mxu0
      %v4201 = vadd.f32 %v3911, %v4200
      %v4202 = vpop.f32.mrb[0].mxu0
      %4203 = vmatprep.mubr.f32.mxu0 0.0
      %v4204 = vand.u32 %v3306, 4294901760
      %v4205 = vsub.f32 %v3306, %v4204
      %4206 = vmatmul.mubr.f32.gmra.mrb[0].mxu0 %v4205
      %v4207 = vpop.f32.mrb[0].mxu0
      %v4208 = vadd.f32 %v3917, %v4207
      %v4209 = vpop.f32.mrb[0].mxu0
      %4210 = vmatprep.mubr.f32.mxu0 0.0
      %v4211 = vand.u32 %v3307, 4294901760
      %v4212 = vsub.f32 %v3307, %v4211
      %4213 = vmatmul.mubr.f32.gmra.mrb[0].mxu0 %v4212
      %v4214 = vpop.f32.mrb[0].mxu0
      %v4215 = vadd.f32 %v3923, %v4214
      %v4216 = vpop.f32.mrb[0].mxu0
      %4217 = vmatprep.mubr.f32.mxu0 0.0
      %v4218 = vand.u32 %v3308, 4294901760
      %v4219 = vsub.f32 %v3308, %v4218
      %4220 = vmatmul.mubr.f32.gmra.mrb[0].mxu0 %v4219
      %v4221 = vpop.f32.mrb[0].mxu0
      %v4222 = vadd.f32 %v3929, %v4221
      %v4223 = vpop.f32.mrb[0].mxu0
      %4224 = vmatprep.mubr.f32.mxu0 0.0
      %v4225 = vand.u32 %v3309, 4294901760
      %v4226 = vsub.f32 %v3309, %v4225
      %4227 = vmatmul.mubr.f32.gmra.mrb[0].mxu0 %v4226
      %v4228 = vpop.f32.mrb[0].mxu0
      %v4229 = vadd.f32 %v3935, %v4228
      %v4230 = vpop.f32.mrb[0].mxu0
      %4231 = vmatprep.mubr.f32.mxu0 0.0
      %v4232 = vand.u32 %v3310, 4294901760
      %v4233 = vsub.f32 %v3310, %v4232
      %4234 = vmatmul.mubr.f32.gmra.mrb[0].mxu0 %v4233
      %v4235 = vpop.f32.mrb[0].mxu0
      %v4236 = vadd.f32 %v3941, %v4235
      %v4237 = vpop.f32.mrb[0].mxu0
      %4238 = vmatprep.mubr.f32.mxu0 0.0
      %v4239 = vand.u32 %v3311, 4294901760
      %v4240 = vsub.f32 %v3311, %v4239
      %4241 = vmatmul.mubr.f32.gmra.mrb[0].mxu0 %v4240
      %v4242 = vpop.f32.mrb[0].mxu0
      %v4243 = vadd.f32 %v3947, %v4242
      %v4244 = vpop.f32.mrb[0].mxu0
      %4245 = vmatprep.mubr.f32.mxu0 0.0
      %v4246 = vand.u32 %v3312, 4294901760
      %v4247 = vsub.f32 %v3312, %v4246
      %4248 = vmatmul.mubr.f32.gmra.mrb[0].mxu0 %v4247
      %v4249 = vpop.f32.mrb[0].mxu0
      %v4250 = vadd.f32 %v3953, %v4249
      %v4251 = vpop.f32.mrb[0].mxu0
      %4252 = vmatprep.mubr.f32.mxu0 0.0
      %v4253 = vand.u32 %v3313, 4294901760
      %v4254 = vsub.f32 %v3313, %v4253
      %4255 = vmatmul.mubr.f32.gmra.mrb[0].mxu0 %v4254
      %v4256 = vpop.f32.mrb[0].mxu0
      %v4257 = vadd.f32 %v3959, %v4256
      %v4258 = vpop.f32.mrb[0].mxu0
      %4259 = vmatprep.mubr.f32.mxu0 0.0
      %v4260 = vand.u32 %v3314, 4294901760
      %v4261 = vsub.f32 %v3314, %v4260
      %4262 = vmatmul.mubr.f32.gmra.mrb[0].mxu0 %v4261
      %v4263 = vpop.f32.mrb[0].mxu0
      %v4264 = vadd.f32 %v3965, %v4263
      %v4265 = vpop.f32.mrb[0].mxu0
      %4266 = vmatprep.mubr.f32.mxu0 0.0
      %v4267 = vand.u32 %v3315, 4294901760
      %v4268 = vsub.f32 %v3315, %v4267
      %4269 = vmatmul.mubr.f32.gmra.mrb[0].mxu0 %v4268
      %v4270 = vpop.f32.mrb[0].mxu0
      %v4271 = vadd.f32 %v3971, %v4270
      %v4272 = vpop.f32.mrb[0].mxu0
      %4273 = vmatprep.mubr.f32.mxu0 0.0
      %v4274 = vand.u32 %v3316, 4294901760
      %v4275 = vsub.f32 %v3316, %v4274
      %4276 = vmatmul.mubr.f32.gmra.mrb[0].mxu0 %v4275
      %v4277 = vpop.f32.mrb[0].mxu0
      %v4278 = vadd.f32 %v3977, %v4277
      %v4279 = vpop.f32.mrb[0].mxu0
      %4280 = vmatprep.mubr.f32.mxu0 0.0
      %v4281 = vand.u32 %v3317, 4294901760
      %v4282 = vsub.f32 %v3317, %v4281
      %4283 = vmatmul.mubr.f32.gmra.mrb[0].mxu0 %v4282
      %v4284 = vpop.f32.mrb[0].mxu0
      %v4285 = vadd.f32 %v3983, %v4284
      %v4286 = vpop.f32.mrb[0].mxu0
      %4287 = vmatprep.mubr.f32.mxu0 0.0
      %v4288 = vand.u32 %v3318, 4294901760
      %v4289 = vsub.f32 %v3318, %v4288
      %4290 = vmatmul.mubr.f32.gmra.mrb[0].mxu0 %v4289
      %v4291 = vpop.f32.mrb[0].mxu0
      %v4292 = vadd.f32 %v3989, %v4291
      %v4293 = vpop.f32.mrb[0].mxu0
      %4294 = vmatprep.mubr.f32.mxu0 0.0
      %v4295 = vand.u32 %v3319, 4294901760
      %v4296 = vsub.f32 %v3319, %v4295
      %4297 = vmatmul.mubr.f32.gmra.mrb[0].mxu0 %v4296
      %v4298 = vpop.f32.mrb[0].mxu0
      %v4299 = vadd.f32 %v3995, %v4298
      %v4300 = vpop.f32.mrb[0].mxu0
      %4301 = vmatprep.mubr.f32.mxu0 0.0
      %v4302 = vand.u32 %v3320, 4294901760
      %v4303 = vsub.f32 %v3320, %v4302
      %4304 = vmatmul.mubr.f32.gmra.mrb[0].mxu0 %v4303
      %v4305 = vpop.f32.mrb[0].mxu0
      %v4306 = vadd.f32 %v4001, %v4305
      %v4307 = vpop.f32.mrb[0].mxu0
      %4308 = vmatprep.mubr.f32.mxu0 0.0
      %v4309 = vand.u32 %v3321, 4294901760
      %v4310 = vsub.f32 %v3321, %v4309
      %4311 = vmatmul.mubr.f32.gmra.mrb[0].mxu0 %v4310
      %v4312 = vpop.f32.mrb[0].mxu0
      %v4313 = vadd.f32 %v4007, %v4312
      %v4314 = vpop.f32.mrb[0].mxu0
      %4315 = vmatprep.mubr.f32.mxu0 0.0
      %v4316 = vand.u32 %v3322, 4294901760
      %v4317 = vsub.f32 %v3322, %v4316
      %4318 = vmatmul.mubr.f32.gmra.mrb[0].mxu0 %v4317
      %v4319 = vpop.f32.mrb[0].mxu0
      %v4320 = vadd.f32 %v4013, %v4319
      %v4321 = vpop.f32.mrb[0].mxu0
      %4322 = vmatprep.mubr.f32.mxu0 0.0
      %v4323 = vand.u32 %v3323, 4294901760
      %v4324 = vsub.f32 %v3323, %v4323
      %4325 = vmatmul.mubr.f32.gmra.mrb[0].mxu0 %v4324
      %v4326 = vpop.f32.mrb[0].mxu0
      %v4327 = vadd.f32 %v4019, %v4326
      %v4328 = vpop.f32.mrb[0].mxu0
      %4329 = vmatprep.mubr.f32.mxu0 0.0
      %v4330 = vand.u32 %v3324, 4294901760
      %v4331 = vsub.f32 %v3324, %v4330
      %4332 = vmatmul.mubr.f32.gmra.mrb[0].mxu0 %v4331
      %v4333 = vpop.f32.mrb[0].mxu0
      %v4334 = vadd.f32 %v4025, %v4333
      %v4335 = vpop.f32.mrb[0].mxu0
      %4336 = vmatprep.mubr.f32.mxu0 0.0
      %v4337 = vand.u32 %v3325, 4294901760
      %v4338 = vsub.f32 %v3325, %v4337
      %4339 = vmatmul.mubr.f32.gmra.mrb[0].mxu0 %v4338
      %v4340 = vpop.f32.mrb[0].mxu0
      %v4341 = vadd.f32 %v4031, %v4340
      %v4342 = vpop.f32.mrb[0].mxu0
      %4343 = vmatprep.mubr.f32.mxu0 0.0
      %v4344 = vand.u32 %v3326, 4294901760
      %v4345 = vsub.f32 %v3326, %v4344
      %4346 = vmatmul.mubr.f32.gmra.mrb[0].mxu0 %v4345
      %v4347 = vpop.f32.mrb[0].mxu0
      %v4348 = vadd.f32 %v4037, %v4347
      %v4349 = vpop.f32.mrb[0].mxu0
      %4350 = vmatprep.mubr.f32.mxu0 0.0
      %v4351 = vand.u32 %v3327, 4294901760
      %v4352 = vsub.f32 %v3327, %v4351
      %4353 = vmatmul.mubr.f32.gmra.mrb[0].mxu0 %v4352
      %v4354 = vpop.f32.mrb[0].mxu0
      %v4355 = vadd.f32 %v4043, %v4354
      %v4356 = vpop.f32.mrb[0].mxu0
      %4357 = vmatprep.mubr.f32.mxu0 0.0
      %v4358 = vand.u32 %v3328, 4294901760
      %v4359 = vsub.f32 %v3328, %v4358
      %4360 = vmatmul.mubr.f32.gmra.mrb[0].mxu0 %v4359
      %v4361 = vpop.f32.mrb[0].mxu0
      %v4362 = vadd.f32 %v4049, %v4361
      %v4363 = vpop.f32.mrb[0].mxu0
      %4364 = vmatprep.mubr.f32.mxu0 0.0
      %v4365 = vand.u32 %v3329, 4294901760
      %v4366 = vsub.f32 %v3329, %v4365
      %4367 = vmatmul.mubr.f32.gmra.mrb[0].mxu0 %v4366
      %v4368 = vpop.f32.mrb[0].mxu0
      %v4369 = vadd.f32 %v4055, %v4368
      %v4370 = vpop.f32.mrb[0].mxu0
      %4371 = vmatprep.mubr.f32.mxu0 0.0
      %v4372 = vand.u32 %v3330, 4294901760
      %v4373 = vsub.f32 %v3330, %v4372
      %4374 = vmatmul.mubr.f32.gmra.mrb[0].mxu0 %v4373
      %v4375 = vpop.f32.mrb[0].mxu0
      %v4376 = vadd.f32 %v4061, %v4375
      %v4377 = vpop.f32.mrb[0].mxu0
      %4378 = vmatprep.mubr.f32.mxu0 0.0
      %v4379 = vand.u32 %v3331, 4294901760
      %v4380 = vsub.f32 %v3331, %v4379
      %4381 = vmatmul.mubr.f32.gmra.mrb[0].mxu0 %v4380
      %v4382 = vpop.f32.mrb[0].mxu0
      %v4383 = vadd.f32 %v4067, %v4382
      %v4384 = vpop.f32.mrb[0].mxu0
      %4385 = vmatprep.mubr.f32.mxu0 0.0
      %v4386 = vand.u32 %v3332, 4294901760
      %v4387 = vsub.f32 %v3332, %v4386
      %4388 = vmatmul.mubr.f32.gmra.mrb[0].mxu0 %v4387
      %v4389 = vpop.f32.mrb[0].mxu0
      %v4390 = vadd.f32 %v4073, %v4389
      %v4391 = vpop.f32.mrb[0].mxu0
      %4392 = vmatprep.mubr.f32.mxu0 0.0
      %v4393 = vand.u32 %v3333, 4294901760
      %v4394 = vsub.f32 %v3333, %v4393
      %4395 = vmatmul.mubr.f32.gmra.mrb[0].mxu0 %v4394
      %v4396 = vpop.f32.mrb[0].mxu0
      %v4397 = vadd.f32 %v4079, %v4396
      %v4398 = vpop.f32.mrb[0].mxu0
      %4399 = vmatprep.mubr.f32.mxu0 0.0
      %v4400 = vand.u32 %v3334, 4294901760
      %v4401 = vsub.f32 %v3334, %v4400
      %4402 = vmatmul.mubr.f32.gmra.mrb[0].mxu0 %v4401
      %v4403 = vpop.f32.mrb[0].mxu0
      %v4404 = vadd.f32 %v4085, %v4403
      %v4405 = vpop.f32.mrb[0].mxu0
      %4406 = vmatprep.mubr.f32.mxu0 0.0
      %v4407 = vand.u32 %v3335, 4294901760
      %v4408 = vsub.f32 %v3335, %v4407
      %4409 = vmatmul.mubr.f32.gmra.mrb[0].mxu0 %v4408
      %v4410 = vpop.f32.mrb[0].mxu0
      %v4411 = vadd.f32 %v4091, %v4410
      %v4412 = vpop.f32.mrb[0].mxu0
      %4413 = vmatprep.mubr.f32.mxu0 0.0
      %v4414 = vand.u32 %v3336, 4294901760
      %v4415 = vsub.f32 %v3336, %v4414
      %4416 = vmatmul.mubr.f32.gmra.mrb[0].mxu0 %v4415
      %v4417 = vpop.f32.mrb[0].mxu0
      %v4418 = vadd.f32 %v4097, %v4417
      %v4419 = vpop.f32.mrb[0].mxu0
      %4420 = vdwg.mxu0
      %4421 = vmatprep.subr.mxu0 0.0
      %v4422 = vand.u32 %v3338, 4294901760
      %4423 = vmatpush1.msra.mxu0 %v4422
      %4424 = vmatprep.subr.mxu0 0.0
      %v4425 = vand.u32 %v3339, 4294901760
      %4426 = vmatpush1.msra.mxu0 %v4425
      %4427 = vmatprep.subr.mxu0 0.0
      %v4428 = vand.u32 %v3340, 4294901760
      %4429 = vmatpush1.msra.mxu0 %v4428
      %4430 = vmatprep.subr.mxu0 0.0
      %v4431 = vand.u32 %v3341, 4294901760
      %4432 = vmatpush1.msra.mxu0 %v4431
      %4433 = vmatprep.subr.mxu0 0.0
      %v4434 = vand.u32 %v3342, 4294901760
      %4435 = vmatpush1.msra.mxu0 %v4434
      %4436 = vmatprep.subr.mxu0 0.0
      %v4437 = vand.u32 %v3343, 4294901760
      %4438 = vmatpush1.msra.mxu0 %v4437
      %4439 = vmatprep.subr.mxu0 0.0
      %v4440 = vand.u32 %v3344, 4294901760
      %4441 = vmatpush1.msra.mxu0 %v4440
      %4442 = vmatprep.subr.mxu0 0.0
      %v4443 = vand.u32 %v3345, 4294901760
      %4444 = vmatpush1.msra.mxu0 %v4443
      %4445 = vmatprep.subr.mxu0 0.0
      %v4446 = vand.u32 %v3346, 4294901760
      %4447 = vmatpush1.msra.mxu0 %v4446
      %4448 = vmatprep.subr.mxu0 0.0
      %v4449 = vand.u32 %v3347, 4294901760
      %4450 = vmatpush1.msra.mxu0 %v4449
      %4451 = vmatprep.subr.mxu0 0.0
      %v4452 = vand.u32 %v3348, 4294901760
      %4453 = vmatpush1.msra.mxu0 %v4452
      %4454 = vmatprep.subr.mxu0 0.0
      %v4455 = vand.u32 %v3349, 4294901760
      %4456 = vmatpush1.msra.mxu0 %v4455
      %4457 = vmatprep.subr.mxu0 0.0
      %v4458 = vand.u32 %v3350, 4294901760
      %4459 = vmatpush1.msra.mxu0 %v4458
      %4460 = vmatprep.subr.mxu0 0.0
      %v4461 = vand.u32 %v3351, 4294901760
      %4462 = vmatpush1.msra.mxu0 %v4461
      %4463 = vmatprep.subr.mxu0 0.0
      %v4464 = vand.u32 %v3352, 4294901760
      %4465 = vmatpush1.msra.mxu0 %v4464
      %4466 = vmatprep.subr.mxu0 0.0
      %v4467 = vand.u32 %v3353, 4294901760
      %4468 = vmatpush1.msra.mxu0 %v4467
      %4469 = vmatprep.subr.mxu0 0.0
      %4470 = vmatpush1.msra.mxu0 0.0
      %4471 = vmatprep.subr.mxu0 0.0
      %4472 = vmatpush1.msra.mxu0 0.0
      %4473 = vmatprep.subr.mxu0 0.0
      %4474 = vmatpush1.msra.mxu0 0.0
      %4475 = vmatprep.subr.mxu0 0.0
      %4476 = vmatpush1.msra.mxu0 0.0
      %4477 = vmatprep.subr.mxu0 0.0
      %4478 = vmatpush1.msra.mxu0 0.0
      %4479 = vmatprep.subr.mxu0 0.0
      %4480 = vmatpush1.msra.mxu0 0.0
      %4481 = vmatprep.subr.mxu0 0.0
      %4482 = vmatpush1.msra.mxu0 0.0
      %4483 = vmatprep.subr.mxu0 0.0
      %4484 = vmatpush1.msra.mxu0 0.0
      %4485 = vmatprep.subr.mxu0 0.0
      %4486 = vmatpush1.msra.mxu0 0.0
      %4487 = vmatprep.subr.mxu0 0.0
      %4488 = vmatpush1.msra.mxu0 0.0
      %4489 = vmatprep.subr.mxu0 0.0
      %4490 = vmatpush1.msra.mxu0 0.0
      %4491 = vmatprep.subr.mxu0 0.0
      %4492 = vmatpush1.msra.mxu0 0.0
      %4493 = vmatprep.subr.mxu0 0.0
      %4494 = vmatpush1.msra.mxu0 0.0
      %4495 = vmatprep.subr.mxu0 0.0
      %4496 = vmatpush1.msra.mxu0 0.0
      %4497 = vmatprep.subr.mxu0 0.0
      %4498 = vmatpush1.msra.mxu0 0.0
      %4499 = vmatprep.subr.mxu0 0.0
      %4500 = vmatpush1.msra.mxu0 0.0
      %4501 = vmatprep.mubr.f32.mxu0 0.0
      %v4502 = vand.u32 %v3305, 4294901760
      %v4503 = vsub.f32 %v3305, %v4502
      %v4504 = vand.u32 %v4503, 4294901760
      %4505 = vmatmul.mubr.f32.gmra.mrb[0].mxu0 %v4504
      %v4506 = vpop.f32.mrb[0].mxu0
      %v4507 = vadd.f32 %v4201, %v4506
      %v4508 = vpop.f32.mrb[0].mxu0
      %4509 = vmatprep.mubr.f32.mxu0 0.0
      %v4510 = vand.u32 %v3306, 4294901760
      %v4511 = vsub.f32 %v3306, %v4510
      %v4512 = vand.u32 %v4511, 4294901760
      %4513 = vmatmul.mubr.f32.gmra.mrb[0].mxu0 %v4512
      %v4514 = vpop.f32.mrb[0].mxu0
      %v4515 = vadd.f32 %v4208, %v4514
      %v4516 = vpop.f32.mrb[0].mxu0
      %4517 = vmatprep.mubr.f32.mxu0 0.0
      %v4518 = vand.u32 %v3307, 4294901760
      %v4519 = vsub.f32 %v3307, %v4518
      %v4520 = vand.u32 %v4519, 4294901760
      %4521 = vmatmul.mubr.f32.gmra.mrb[0].mxu0 %v4520
      %v4522 = vpop.f32.mrb[0].mxu0
      %v4523 = vadd.f32 %v4215, %v4522
      %v4524 = vpop.f32.mrb[0].mxu0
      %4525 = vmatprep.mubr.f32.mxu0 0.0
      %v4526 = vand.u32 %v3308, 4294901760
      %v4527 = vsub.f32 %v3308, %v4526
      %v4528 = vand.u32 %v4527, 4294901760
      %4529 = vmatmul.mubr.f32.gmra.mrb[0].mxu0 %v4528
      %v4530 = vpop.f32.mrb[0].mxu0
      %v4531 = vadd.f32 %v4222, %v4530
      %v4532 = vpop.f32.mrb[0].mxu0
      %4533 = vmatprep.mubr.f32.mxu0 0.0
      %v4534 = vand.u32 %v3309, 4294901760
      %v4535 = vsub.f32 %v3309, %v4534
      %v4536 = vand.u32 %v4535, 4294901760
      %4537 = vmatmul.mubr.f32.gmra.mrb[0].mxu0 %v4536
      %v4538 = vpop.f32.mrb[0].mxu0
      %v4539 = vadd.f32 %v4229, %v4538
      %v4540 = vpop.f32.mrb[0].mxu0
      %4541 = vmatprep.mubr.f32.mxu0 0.0
      %v4542 = vand.u32 %v3310, 4294901760
      %v4543 = vsub.f32 %v3310, %v4542
      %v4544 = vand.u32 %v4543, 4294901760
      %4545 = vmatmul.mubr.f32.gmra.mrb[0].mxu0 %v4544
      %v4546 = vpop.f32.mrb[0].mxu0
      %v4547 = vadd.f32 %v4236, %v4546
      %v4548 = vpop.f32.mrb[0].mxu0
      %4549 = vmatprep.mubr.f32.mxu0 0.0
      %v4550 = vand.u32 %v3311, 4294901760
      %v4551 = vsub.f32 %v3311, %v4550
      %v4552 = vand.u32 %v4551, 4294901760
      %4553 = vmatmul.mubr.f32.gmra.mrb[0].mxu0 %v4552
      %v4554 = vpop.f32.mrb[0].mxu0
      %v4555 = vadd.f32 %v4243, %v4554
      %v4556 = vpop.f32.mrb[0].mxu0
      %4557 = vmatprep.mubr.f32.mxu0 0.0
      %v4558 = vand.u32 %v3312, 4294901760
      %v4559 = vsub.f32 %v3312, %v4558
      %v4560 = vand.u32 %v4559, 4294901760
      %4561 = vmatmul.mubr.f32.gmra.mrb[0].mxu0 %v4560
      %v4562 = vpop.f32.mrb[0].mxu0
      %v4563 = vadd.f32 %v4250, %v4562
      %v4564 = vpop.f32.mrb[0].mxu0
      %4565 = vmatprep.mubr.f32.mxu0 0.0
      %v4566 = vand.u32 %v3313, 4294901760
      %v4567 = vsub.f32 %v3313, %v4566
      %v4568 = vand.u32 %v4567, 4294901760
      %4569 = vmatmul.mubr.f32.gmra.mrb[0].mxu0 %v4568
      %v4570 = vpop.f32.mrb[0].mxu0
      %v4571 = vadd.f32 %v4257, %v4570
      %v4572 = vpop.f32.mrb[0].mxu0
      %4573 = vmatprep.mubr.f32.mxu0 0.0
      %v4574 = vand.u32 %v3314, 4294901760
      %v4575 = vsub.f32 %v3314, %v4574
      %v4576 = vand.u32 %v4575, 4294901760
      %4577 = vmatmul.mubr.f32.gmra.mrb[0].mxu0 %v4576
      %v4578 = vpop.f32.mrb[0].mxu0
      %v4579 = vadd.f32 %v4264, %v4578
      %v4580 = vpop.f32.mrb[0].mxu0
      %4581 = vmatprep.mubr.f32.mxu0 0.0
      %v4582 = vand.u32 %v3315, 4294901760
      %v4583 = vsub.f32 %v3315, %v4582
      %v4584 = vand.u32 %v4583, 4294901760
      %4585 = vmatmul.mubr.f32.gmra.mrb[0].mxu0 %v4584
      %v4586 = vpop.f32.mrb[0].mxu0
      %v4587 = vadd.f32 %v4271, %v4586
      %v4588 = vpop.f32.mrb[0].mxu0
      %4589 = vmatprep.mubr.f32.mxu0 0.0
      %v4590 = vand.u32 %v3316, 4294901760
      %v4591 = vsub.f32 %v3316, %v4590
      %v4592 = vand.u32 %v4591, 4294901760
      %4593 = vmatmul.mubr.f32.gmra.mrb[0].mxu0 %v4592
      %v4594 = vpop.f32.mrb[0].mxu0
      %v4595 = vadd.f32 %v4278, %v4594
      %v4596 = vpop.f32.mrb[0].mxu0
      %4597 = vmatprep.mubr.f32.mxu0 0.0
      %v4598 = vand.u32 %v3317, 4294901760
      %v4599 = vsub.f32 %v3317, %v4598
      %v4600 = vand.u32 %v4599, 4294901760
      %4601 = vmatmul.mubr.f32.gmra.mrb[0].mxu0 %v4600
      %v4602 = vpop.f32.mrb[0].mxu0
      %v4603 = vadd.f32 %v4285, %v4602
      %v4604 = vpop.f32.mrb[0].mxu0
      %4605 = vmatprep.mubr.f32.mxu0 0.0
      %v4606 = vand.u32 %v3318, 4294901760
      %v4607 = vsub.f32 %v3318, %v4606
      %v4608 = vand.u32 %v4607, 4294901760
      %4609 = vmatmul.mubr.f32.gmra.mrb[0].mxu0 %v4608
      %v4610 = vpop.f32.mrb[0].mxu0
      %v4611 = vadd.f32 %v4292, %v4610
      %v4612 = vpop.f32.mrb[0].mxu0
      %4613 = vmatprep.mubr.f32.mxu0 0.0
      %v4614 = vand.u32 %v3319, 4294901760
      %v4615 = vsub.f32 %v3319, %v4614
      %v4616 = vand.u32 %v4615, 4294901760
      %4617 = vmatmul.mubr.f32.gmra.mrb[0].mxu0 %v4616
      %v4618 = vpop.f32.mrb[0].mxu0
      %v4619 = vadd.f32 %v4299, %v4618
      %v4620 = vpop.f32.mrb[0].mxu0
      %4621 = vmatprep.mubr.f32.mxu0 0.0
      %v4622 = vand.u32 %v3320, 4294901760
      %v4623 = vsub.f32 %v3320, %v4622
      %v4624 = vand.u32 %v4623, 4294901760
      %4625 = vmatmul.mubr.f32.gmra.mrb[0].mxu0 %v4624
      %v4626 = vpop.f32.mrb[0].mxu0
      %v4627 = vadd.f32 %v4306, %v4626
      %v4628 = vpop.f32.mrb[0].mxu0
      %4629 = vmatprep.mubr.f32.mxu0 0.0
      %v4630 = vand.u32 %v3321, 4294901760
      %v4631 = vsub.f32 %v3321, %v4630
      %v4632 = vand.u32 %v4631, 4294901760
      %4633 = vmatmul.mubr.f32.gmra.mrb[0].mxu0 %v4632
      %v4634 = vpop.f32.mrb[0].mxu0
      %v4635 = vadd.f32 %v4313, %v4634
      %v4636 = vpop.f32.mrb[0].mxu0
      %4637 = vmatprep.mubr.f32.mxu0 0.0
      %v4638 = vand.u32 %v3322, 4294901760
      %v4639 = vsub.f32 %v3322, %v4638
      %v4640 = vand.u32 %v4639, 4294901760
      %4641 = vmatmul.mubr.f32.gmra.mrb[0].mxu0 %v4640
      %v4642 = vpop.f32.mrb[0].mxu0
      %v4643 = vadd.f32 %v4320, %v4642
      %v4644 = vpop.f32.mrb[0].mxu0
      %4645 = vmatprep.mubr.f32.mxu0 0.0
      %v4646 = vand.u32 %v3323, 4294901760
      %v4647 = vsub.f32 %v3323, %v4646
      %v4648 = vand.u32 %v4647, 4294901760
      %4649 = vmatmul.mubr.f32.gmra.mrb[0].mxu0 %v4648
      %v4650 = vpop.f32.mrb[0].mxu0
      %v4651 = vadd.f32 %v4327, %v4650
      %v4652 = vpop.f32.mrb[0].mxu0
      %4653 = vmatprep.mubr.f32.mxu0 0.0
      %v4654 = vand.u32 %v3324, 4294901760
      %v4655 = vsub.f32 %v3324, %v4654
      %v4656 = vand.u32 %v4655, 4294901760
      %4657 = vmatmul.mubr.f32.gmra.mrb[0].mxu0 %v4656
      %v4658 = vpop.f32.mrb[0].mxu0
      %v4659 = vadd.f32 %v4334, %v4658
      %v4660 = vpop.f32.mrb[0].mxu0
      %4661 = vmatprep.mubr.f32.mxu0 0.0
      %v4662 = vand.u32 %v3325, 4294901760
      %v4663 = vsub.f32 %v3325, %v4662
      %v4664 = vand.u32 %v4663, 4294901760
      %4665 = vmatmul.mubr.f32.gmra.mrb[0].mxu0 %v4664
      %v4666 = vpop.f32.mrb[0].mxu0
      %v4667 = vadd.f32 %v4341, %v4666
      %v4668 = vpop.f32.mrb[0].mxu0
      %4669 = vmatprep.mubr.f32.mxu0 0.0
      %v4670 = vand.u32 %v3326, 4294901760
      %v4671 = vsub.f32 %v3326, %v4670
      %v4672 = vand.u32 %v4671, 4294901760
      %4673 = vmatmul.mubr.f32.gmra.mrb[0].mxu0 %v4672
      %v4674 = vpop.f32.mrb[0].mxu0
      %v4675 = vadd.f32 %v4348, %v4674
      %v4676 = vpop.f32.mrb[0].mxu0
      %4677 = vmatprep.mubr.f32.mxu0 0.0
      %v4678 = vand.u32 %v3327, 4294901760
      %v4679 = vsub.f32 %v3327, %v4678
      %v4680 = vand.u32 %v4679, 4294901760
      %4681 = vmatmul.mubr.f32.gmra.mrb[0].mxu0 %v4680
      %v4682 = vpop.f32.mrb[0].mxu0
      %v4683 = vadd.f32 %v4355, %v4682
      %v4684 = vpop.f32.mrb[0].mxu0
      %4685 = vmatprep.mubr.f32.mxu0 0.0
      %v4686 = vand.u32 %v3328, 4294901760
      %v4687 = vsub.f32 %v3328, %v4686
      %v4688 = vand.u32 %v4687, 4294901760
      %4689 = vmatmul.mubr.f32.gmra.mrb[0].mxu0 %v4688
      %v4690 = vpop.f32.mrb[0].mxu0
      %v4691 = vadd.f32 %v4362, %v4690
      %v4692 = vpop.f32.mrb[0].mxu0
      %4693 = vmatprep.mubr.f32.mxu0 0.0
      %v4694 = vand.u32 %v3329, 4294901760
      %v4695 = vsub.f32 %v3329, %v4694
      %v4696 = vand.u32 %v4695, 4294901760
      %4697 = vmatmul.mubr.f32.gmra.mrb[0].mxu0 %v4696
      %v4698 = vpop.f32.mrb[0].mxu0
      %v4699 = vadd.f32 %v4369, %v4698
      %v4700 = vpop.f32.mrb[0].mxu0
      %4701 = vmatprep.mubr.f32.mxu0 0.0
      %v4702 = vand.u32 %v3330, 4294901760
      %v4703 = vsub.f32 %v3330, %v4702
      %v4704 = vand.u32 %v4703, 4294901760
      %4705 = vmatmul.mubr.f32.gmra.mrb[0].mxu0 %v4704
      %v4706 = vpop.f32.mrb[0].mxu0
      %v4707 = vadd.f32 %v4376, %v4706
      %v4708 = vpop.f32.mrb[0].mxu0
      %4709 = vmatprep.mubr.f32.mxu0 0.0
      %v4710 = vand.u32 %v3331, 4294901760
      %v4711 = vsub.f32 %v3331, %v4710
      %v4712 = vand.u32 %v4711, 4294901760
      %4713 = vmatmul.mubr.f32.gmra.mrb[0].mxu0 %v4712
      %v4714 = vpop.f32.mrb[0].mxu0
      %v4715 = vadd.f32 %v4383, %v4714
      %v4716 = vpop.f32.mrb[0].mxu0
      %4717 = vmatprep.mubr.f32.mxu0 0.0
      %v4718 = vand.u32 %v3332, 4294901760
      %v4719 = vsub.f32 %v3332, %v4718
      %v4720 = vand.u32 %v4719, 4294901760
      %4721 = vmatmul.mubr.f32.gmra.mrb[0].mxu0 %v4720
      %v4722 = vpop.f32.mrb[0].mxu0
      %v4723 = vadd.f32 %v4390, %v4722
      %v4724 = vpop.f32.mrb[0].mxu0
      %4725 = vmatprep.mubr.f32.mxu0 0.0
      %v4726 = vand.u32 %v3333, 4294901760
      %v4727 = vsub.f32 %v3333, %v4726
      %v4728 = vand.u32 %v4727, 4294901760
      %4729 = vmatmul.mubr.f32.gmra.mrb[0].mxu0 %v4728
      %v4730 = vpop.f32.mrb[0].mxu0
      %v4731 = vadd.f32 %v4397, %v4730
      %v4732 = vpop.f32.mrb[0].mxu0
      %4733 = vmatprep.mubr.f32.mxu0 0.0
      %v4734 = vand.u32 %v3334, 4294901760
      %v4735 = vsub.f32 %v3334, %v4734
      %v4736 = vand.u32 %v4735, 4294901760
      %4737 = vmatmul.mubr.f32.gmra.mrb[0].mxu0 %v4736
      %v4738 = vpop.f32.mrb[0].mxu0
      %v4739 = vadd.f32 %v4404, %v4738
      %v4740 = vpop.f32.mrb[0].mxu0
      %4741 = vmatprep.mubr.f32.mxu0 0.0
      %v4742 = vand.u32 %v3335, 4294901760
      %v4743 = vsub.f32 %v3335, %v4742
      %v4744 = vand.u32 %v4743, 4294901760
      %4745 = vmatmul.mubr.f32.gmra.mrb[0].mxu0 %v4744
      %v4746 = vpop.f32.mrb[0].mxu0
      %v4747 = vadd.f32 %v4411, %v4746
      %v4748 = vpop.f32.mrb[0].mxu0
      %4749 = vmatprep.mubr.f32.mxu0 0.0
      %v4750 = vand.u32 %v3336, 4294901760
      %v4751 = vsub.f32 %v3336, %v4750
      %v4752 = vand.u32 %v4751, 4294901760
      %4753 = vmatmul.mubr.f32.gmra.mrb[0].mxu0 %v4752
      %v4754 = vpop.f32.mrb[0].mxu0
      %v4755 = vadd.f32 %v4418, %v4754
      %v4756 = vpop.f32.mrb[0].mxu0
      %4757 = vdwg.mxu0
      %4758 = vmatprep.subr.mxu0 0.0
      %v4759 = vand.u32 %v3338, 4294901760
      %v4760 = vsub.f32 %v3338, %v4759
      %v4761 = vand.u32 %v4760, 4294901760
      %4762 = vmatpush1.msra.mxu0 %v4761
      %4763 = vmatprep.subr.mxu0 0.0
      %v4764 = vand.u32 %v3339, 4294901760
      %v4765 = vsub.f32 %v3339, %v4764
      %v4766 = vand.u32 %v4765, 4294901760
      %4767 = vmatpush1.msra.mxu0 %v4766
      %4768 = vmatprep.subr.mxu0 0.0
      %v4769 = vand.u32 %v3340, 4294901760
      %v4770 = vsub.f32 %v3340, %v4769
      %v4771 = vand.u32 %v4770, 4294901760
      %4772 = vmatpush1.msra.mxu0 %v4771
      %4773 = vmatprep.subr.mxu0 0.0
      %v4774 = vand.u32 %v3341, 4294901760
      %v4775 = vsub.f32 %v3341, %v4774
      %v4776 = vand.u32 %v4775, 4294901760
      %4777 = vmatpush1.msra.mxu0 %v4776
      %4778 = vmatprep.subr.mxu0 0.0
      %v4779 = vand.u32 %v3342, 4294901760
      %v4780 = vsub.f32 %v3342, %v4779
      %v4781 = vand.u32 %v4780, 4294901760
      %4782 = vmatpush1.msra.mxu0 %v4781
      %4783 = vmatprep.subr.mxu0 0.0
      %v4784 = vand.u32 %v3343, 4294901760
      %v4785 = vsub.f32 %v3343, %v4784
      %v4786 = vand.u32 %v4785, 4294901760
      %4787 = vmatpush1.msra.mxu0 %v4786
      %4788 = vmatprep.subr.mxu0 0.0
      %v4789 = vand.u32 %v3344, 4294901760
      %v4790 = vsub.f32 %v3344, %v4789
      %v4791 = vand.u32 %v4790, 4294901760
      %4792 = vmatpush1.msra.mxu0 %v4791
      %4793 = vmatprep.subr.mxu0 0.0
      %v4794 = vand.u32 %v3345, 4294901760
      %v4795 = vsub.f32 %v3345, %v4794
      %v4796 = vand.u32 %v4795, 4294901760
      %4797 = vmatpush1.msra.mxu0 %v4796
      %4798 = vmatprep.subr.mxu0 0.0
      %v4799 = vand.u32 %v3346, 4294901760
      %v4800 = vsub.f32 %v3346, %v4799
      %v4801 = vand.u32 %v4800, 4294901760
      %4802 = vmatpush1.msra.mxu0 %v4801
      %4803 = vmatprep.subr.mxu0 0.0
      %v4804 = vand.u32 %v3347, 4294901760
      %v4805 = vsub.f32 %v3347, %v4804
      %v4806 = vand.u32 %v4805, 4294901760
      %4807 = vmatpush1.msra.mxu0 %v4806
      %4808 = vmatprep.subr.mxu0 0.0
      %v4809 = vand.u32 %v3348, 4294901760
      %v4810 = vsub.f32 %v3348, %v4809
      %v4811 = vand.u32 %v4810, 4294901760
      %4812 = vmatpush1.msra.mxu0 %v4811
      %4813 = vmatprep.subr.mxu0 0.0
      %v4814 = vand.u32 %v3349, 4294901760
      %v4815 = vsub.f32 %v3349, %v4814
      %v4816 = vand.u32 %v4815, 4294901760
      %4817 = vmatpush1.msra.mxu0 %v4816
      %4818 = vmatprep.subr.mxu0 0.0
      %v4819 = vand.u32 %v3350, 4294901760
      %v4820 = vsub.f32 %v3350, %v4819
      %v4821 = vand.u32 %v4820, 4294901760
      %4822 = vmatpush1.msra.mxu0 %v4821
      %4823 = vmatprep.subr.mxu0 0.0
      %v4824 = vand.u32 %v3351, 4294901760
      %v4825 = vsub.f32 %v3351, %v4824
      %v4826 = vand.u32 %v4825, 4294901760
      %4827 = vmatpush1.msra.mxu0 %v4826
      %4828 = vmatprep.subr.mxu0 0.0
      %v4829 = vand.u32 %v3352, 4294901760
      %v4830 = vsub.f32 %v3352, %v4829
      %v4831 = vand.u32 %v4830, 4294901760
      %4832 = vmatpush1.msra.mxu0 %v4831
      %4833 = vmatprep.subr.mxu0 0.0
      %v4834 = vand.u32 %v3353, 4294901760
      %v4835 = vsub.f32 %v3353, %v4834
      %v4836 = vand.u32 %v4835, 4294901760
      %4837 = vmatpush1.msra.mxu0 %v4836
      %4838 = vmatprep.subr.mxu0 0.0
      %4839 = vmatpush1.msra.mxu0 0.0
      %4840 = vmatprep.subr.mxu0 0.0
      %4841 = vmatpush1.msra.mxu0 0.0
      %4842 = vmatprep.subr.mxu0 0.0
      %4843 = vmatpush1.msra.mxu0 0.0
      %4844 = vmatprep.subr.mxu0 0.0
      %4845 = vmatpush1.msra.mxu0 0.0
      %4846 = vmatprep.subr.mxu0 0.0
      %4847 = vmatpush1.msra.mxu0 0.0
      %4848 = vmatprep.subr.mxu0 0.0
      %4849 = vmatpush1.msra.mxu0 0.0
      %4850 = vmatprep.subr.mxu0 0.0
      %4851 = vmatpush1.msra.mxu0 0.0
      %4852 = vmatprep.subr.mxu0 0.0
      %4853 = vmatpush1.msra.mxu0 0.0
      %4854 = vmatprep.subr.mxu0 0.0
      %4855 = vmatpush1.msra.mxu0 0.0
      %4856 = vmatprep.subr.mxu0 0.0
      %4857 = vmatpush1.msra.mxu0 0.0
      %4858 = vmatprep.subr.mxu0 0.0
      %4859 = vmatpush1.msra.mxu0 0.0
      %4860 = vmatprep.subr.mxu0 0.0
      %4861 = vmatpush1.msra.mxu0 0.0
      %4862 = vmatprep.subr.mxu0 0.0
      %4863 = vmatpush1.msra.mxu0 0.0
      %4864 = vmatprep.subr.mxu0 0.0
      %4865 = vmatpush1.msra.mxu0 0.0
      %4866 = vmatprep.subr.mxu0 0.0
      %4867 = vmatpush1.msra.mxu0 0.0
      %4868 = vmatprep.subr.mxu0 0.0
      %4869 = vmatpush1.msra.mxu0 0.0
      %4870 = vmatprep.mubr.f32.mxu0 0.0
      %v4871 = vand.u32 %v3305, 4294901760
      %4872 = vmatmul.mubr.f32.gmra.mrb[0].mxu0 %v4871
      %v4873 = vpop.f32.mrb[0].mxu0
      %v4874 = vadd.f32 %v4507, %v4873
      %v4875 = vpop.f32.mrb[0].mxu0
      %4876 = vmatprep.mubr.f32.mxu0 0.0
      %v4877 = vand.u32 %v3306, 4294901760
      %4878 = vmatmul.mubr.f32.gmra.mrb[0].mxu0 %v4877
      %v4879 = vpop.f32.mrb[0].mxu0
      %v4880 = vadd.f32 %v4515, %v4879
      %v4881 = vpop.f32.mrb[0].mxu0
      %4882 = vmatprep.mubr.f32.mxu0 0.0
      %v4883 = vand.u32 %v3307, 4294901760
      %4884 = vmatmul.mubr.f32.gmra.mrb[0].mxu0 %v4883
      %v4885 = vpop.f32.mrb[0].mxu0
      %v4886 = vadd.f32 %v4523, %v4885
      %v4887 = vpop.f32.mrb[0].mxu0
      %4888 = vmatprep.mubr.f32.mxu0 0.0
      %v4889 = vand.u32 %v3308, 4294901760
      %4890 = vmatmul.mubr.f32.gmra.mrb[0].mxu0 %v4889
      %v4891 = vpop.f32.mrb[0].mxu0
      %v4892 = vadd.f32 %v4531, %v4891
      %v4893 = vpop.f32.mrb[0].mxu0
      %4894 = vmatprep.mubr.f32.mxu0 0.0
      %v4895 = vand.u32 %v3309, 4294901760
      %4896 = vmatmul.mubr.f32.gmra.mrb[0].mxu0 %v4895
      %v4897 = vpop.f32.mrb[0].mxu0
      %v4898 = vadd.f32 %v4539, %v4897
      %v4899 = vpop.f32.mrb[0].mxu0
      %4900 = vmatprep.mubr.f32.mxu0 0.0
      %v4901 = vand.u32 %v3310, 4294901760
      %4902 = vmatmul.mubr.f32.gmra.mrb[0].mxu0 %v4901
      %v4903 = vpop.f32.mrb[0].mxu0
      %v4904 = vadd.f32 %v4547, %v4903
      %v4905 = vpop.f32.mrb[0].mxu0
      %4906 = vmatprep.mubr.f32.mxu0 0.0
      %v4907 = vand.u32 %v3311, 4294901760
      %4908 = vmatmul.mubr.f32.gmra.mrb[0].mxu0 %v4907
      %v4909 = vpop.f32.mrb[0].mxu0
      %v4910 = vadd.f32 %v4555, %v4909
      %v4911 = vpop.f32.mrb[0].mxu0
      %4912 = vmatprep.mubr.f32.mxu0 0.0
      %v4913 = vand.u32 %v3312, 4294901760
      %4914 = vmatmul.mubr.f32.gmra.mrb[0].mxu0 %v4913
      %v4915 = vpop.f32.mrb[0].mxu0
      %v4916 = vadd.f32 %v4563, %v4915
      %v4917 = vpop.f32.mrb[0].mxu0
      %4918 = vmatprep.mubr.f32.mxu0 0.0
      %v4919 = vand.u32 %v3313, 4294901760
      %4920 = vmatmul.mubr.f32.gmra.mrb[0].mxu0 %v4919
      %v4921 = vpop.f32.mrb[0].mxu0
      %v4922 = vadd.f32 %v4571, %v4921
      %v4923 = vpop.f32.mrb[0].mxu0
      %4924 = vmatprep.mubr.f32.mxu0 0.0
      %v4925 = vand.u32 %v3314, 4294901760
      %4926 = vmatmul.mubr.f32.gmra.mrb[0].mxu0 %v4925
      %v4927 = vpop.f32.mrb[0].mxu0
      %v4928 = vadd.f32 %v4579, %v4927
      %v4929 = vpop.f32.mrb[0].mxu0
      %4930 = vmatprep.mubr.f32.mxu0 0.0
      %v4931 = vand.u32 %v3315, 4294901760
      %4932 = vmatmul.mubr.f32.gmra.mrb[0].mxu0 %v4931
      %v4933 = vpop.f32.mrb[0].mxu0
      %v4934 = vadd.f32 %v4587, %v4933
      %v4935 = vpop.f32.mrb[0].mxu0
      %4936 = vmatprep.mubr.f32.mxu0 0.0
      %v4937 = vand.u32 %v3316, 4294901760
      %4938 = vmatmul.mubr.f32.gmra.mrb[0].mxu0 %v4937
      %v4939 = vpop.f32.mrb[0].mxu0
      %v4940 = vadd.f32 %v4595, %v4939
      %v4941 = vpop.f32.mrb[0].mxu0
      %4942 = vmatprep.mubr.f32.mxu0 0.0
      %v4943 = vand.u32 %v3317, 4294901760
      %4944 = vmatmul.mubr.f32.gmra.mrb[0].mxu0 %v4943
      %v4945 = vpop.f32.mrb[0].mxu0
      %v4946 = vadd.f32 %v4603, %v4945
      %v4947 = vpop.f32.mrb[0].mxu0
      %4948 = vmatprep.mubr.f32.mxu0 0.0
      %v4949 = vand.u32 %v3318, 4294901760
      %4950 = vmatmul.mubr.f32.gmra.mrb[0].mxu0 %v4949
      %v4951 = vpop.f32.mrb[0].mxu0
      %v4952 = vadd.f32 %v4611, %v4951
      %v4953 = vpop.f32.mrb[0].mxu0
      %4954 = vmatprep.mubr.f32.mxu0 0.0
      %v4955 = vand.u32 %v3319, 4294901760
      %4956 = vmatmul.mubr.f32.gmra.mrb[0].mxu0 %v4955
      %v4957 = vpop.f32.mrb[0].mxu0
      %v4958 = vadd.f32 %v4619, %v4957
      %v4959 = vpop.f32.mrb[0].mxu0
      %4960 = vmatprep.mubr.f32.mxu0 0.0
      %v4961 = vand.u32 %v3320, 4294901760
      %4962 = vmatmul.mubr.f32.gmra.mrb[0].mxu0 %v4961
      %v4963 = vpop.f32.mrb[0].mxu0
      %v4964 = vadd.f32 %v4627, %v4963
      %v4965 = vpop.f32.mrb[0].mxu0
      %4966 = vmatprep.mubr.f32.mxu0 0.0
      %v4967 = vand.u32 %v3321, 4294901760
      %4968 = vmatmul.mubr.f32.gmra.mrb[0].mxu0 %v4967
      %v4969 = vpop.f32.mrb[0].mxu0
      %v4970 = vadd.f32 %v4635, %v4969
      %v4971 = vpop.f32.mrb[0].mxu0
      %4972 = vmatprep.mubr.f32.mxu0 0.0
      %v4973 = vand.u32 %v3322, 4294901760
      %4974 = vmatmul.mubr.f32.gmra.mrb[0].mxu0 %v4973
      %v4975 = vpop.f32.mrb[0].mxu0
      %v4976 = vadd.f32 %v4643, %v4975
      %v4977 = vpop.f32.mrb[0].mxu0
      %4978 = vmatprep.mubr.f32.mxu0 0.0
      %v4979 = vand.u32 %v3323, 4294901760
      %4980 = vmatmul.mubr.f32.gmra.mrb[0].mxu0 %v4979
      %v4981 = vpop.f32.mrb[0].mxu0
      %v4982 = vadd.f32 %v4651, %v4981
      %v4983 = vpop.f32.mrb[0].mxu0
      %4984 = vmatprep.mubr.f32.mxu0 0.0
      %v4985 = vand.u32 %v3324, 4294901760
      %4986 = vmatmul.mubr.f32.gmra.mrb[0].mxu0 %v4985
      %v4987 = vpop.f32.mrb[0].mxu0
      %v4988 = vadd.f32 %v4659, %v4987
      %v4989 = vpop.f32.mrb[0].mxu0
      %4990 = vmatprep.mubr.f32.mxu0 0.0
      %v4991 = vand.u32 %v3325, 4294901760
      %4992 = vmatmul.mubr.f32.gmra.mrb[0].mxu0 %v4991
      %v4993 = vpop.f32.mrb[0].mxu0
      %v4994 = vadd.f32 %v4667, %v4993
      %v4995 = vpop.f32.mrb[0].mxu0
      %4996 = vmatprep.mubr.f32.mxu0 0.0
      %v4997 = vand.u32 %v3326, 4294901760
      %4998 = vmatmul.mubr.f32.gmra.mrb[0].mxu0 %v4997
      %v4999 = vpop.f32.mrb[0].mxu0
      %v5000 = vadd.f32 %v4675, %v4999
      %v5001 = vpop.f32.mrb[0].mxu0
      %5002 = vmatprep.mubr.f32.mxu0 0.0
      %v5003 = vand.u32 %v3327, 4294901760
      %5004 = vmatmul.mubr.f32.gmra.mrb[0].mxu0 %v5003
      %v5005 = vpop.f32.mrb[0].mxu0
      %v5006 = vadd.f32 %v4683, %v5005
      %v5007 = vpop.f32.mrb[0].mxu0
      %5008 = vmatprep.mubr.f32.mxu0 0.0
      %v5009 = vand.u32 %v3328, 4294901760
      %5010 = vmatmul.mubr.f32.gmra.mrb[0].mxu0 %v5009
      %v5011 = vpop.f32.mrb[0].mxu0
      %v5012 = vadd.f32 %v4691, %v5011
      %v5013 = vpop.f32.mrb[0].mxu0
      %5014 = vmatprep.mubr.f32.mxu0 0.0
      %v5015 = vand.u32 %v3329, 4294901760
      %5016 = vmatmul.mubr.f32.gmra.mrb[0].mxu0 %v5015
      %v5017 = vpop.f32.mrb[0].mxu0
      %v5018 = vadd.f32 %v4699, %v5017
      %v5019 = vpop.f32.mrb[0].mxu0
      %5020 = vmatprep.mubr.f32.mxu0 0.0
      %v5021 = vand.u32 %v3330, 4294901760
      %5022 = vmatmul.mubr.f32.gmra.mrb[0].mxu0 %v5021
      %v5023 = vpop.f32.mrb[0].mxu0
      %v5024 = vadd.f32 %v4707, %v5023
      %v5025 = vpop.f32.mrb[0].mxu0
      %5026 = vmatprep.mubr.f32.mxu0 0.0
      %v5027 = vand.u32 %v3331, 4294901760
      %5028 = vmatmul.mubr.f32.gmra.mrb[0].mxu0 %v5027
      %v5029 = vpop.f32.mrb[0].mxu0
      %v5030 = vadd.f32 %v4715, %v5029
      %v5031 = vpop.f32.mrb[0].mxu0
      %5032 = vmatprep.mubr.f32.mxu0 0.0
      %v5033 = vand.u32 %v3332, 4294901760
      %5034 = vmatmul.mubr.f32.gmra.mrb[0].mxu0 %v5033
      %v5035 = vpop.f32.mrb[0].mxu0
      %v5036 = vadd.f32 %v4723, %v5035
      %v5037 = vpop.f32.mrb[0].mxu0
      %5038 = vmatprep.mubr.f32.mxu0 0.0
      %v5039 = vand.u32 %v3333, 4294901760
      %5040 = vmatmul.mubr.f32.gmra.mrb[0].mxu0 %v5039
      %v5041 = vpop.f32.mrb[0].mxu0
      %v5042 = vadd.f32 %v4731, %v5041
      %v5043 = vpop.f32.mrb[0].mxu0
      %5044 = vmatprep.mubr.f32.mxu0 0.0
      %v5045 = vand.u32 %v3334, 4294901760
      %5046 = vmatmul.mubr.f32.gmra.mrb[0].mxu0 %v5045
      %v5047 = vpop.f32.mrb[0].mxu0
      %v5048 = vadd.f32 %v4739, %v5047
      %v5049 = vpop.f32.mrb[0].mxu0
      %5050 = vmatprep.mubr.f32.mxu0 0.0
      %v5051 = vand.u32 %v3335, 4294901760
      %5052 = vmatmul.mubr.f32.gmra.mrb[0].mxu0 %v5051
      %v5053 = vpop.f32.mrb[0].mxu0
      %v5054 = vadd.f32 %v4747, %v5053
      %v5055 = vpop.f32.mrb[0].mxu0
      %5056 = vmatprep.mubr.f32.mxu0 0.0
      %v5057 = vand.u32 %v3336, 4294901760
      %5058 = vmatmul.mubr.f32.gmra.mrb[0].mxu0 %v5057
      %v5059 = vpop.f32.mrb[0].mxu0
      %v5060 = vadd.f32 %v4755, %v5059
      %v5061 = vpop.f32.mrb[0].mxu0
      %5062 = vdwg.mxu0
      %5063 = vmatprep.subr.mxu0 0.0
      %v5064 = vand.u32 %v3338, 4294901760
      %5065 = vmatpush1.msra.mxu0 %v5064
      %5066 = vmatprep.subr.mxu0 0.0
      %v5067 = vand.u32 %v3339, 4294901760
      %5068 = vmatpush1.msra.mxu0 %v5067
      %5069 = vmatprep.subr.mxu0 0.0
      %v5070 = vand.u32 %v3340, 4294901760
      %5071 = vmatpush1.msra.mxu0 %v5070
      %5072 = vmatprep.subr.mxu0 0.0
      %v5073 = vand.u32 %v3341, 4294901760
      %5074 = vmatpush1.msra.mxu0 %v5073
      %5075 = vmatprep.subr.mxu0 0.0
      %v5076 = vand.u32 %v3342, 4294901760
      %5077 = vmatpush1.msra.mxu0 %v5076
      %5078 = vmatprep.subr.mxu0 0.0
      %v5079 = vand.u32 %v3343, 4294901760
      %5080 = vmatpush1.msra.mxu0 %v5079
      %5081 = vmatprep.subr.mxu0 0.0
      %v5082 = vand.u32 %v3344, 4294901760
      %5083 = vmatpush1.msra.mxu0 %v5082
      %5084 = vmatprep.subr.mxu0 0.0
      %v5085 = vand.u32 %v3345, 4294901760
      %5086 = vmatpush1.msra.mxu0 %v5085
      %5087 = vmatprep.subr.mxu0 0.0
      %v5088 = vand.u32 %v3346, 4294901760
      %5089 = vmatpush1.msra.mxu0 %v5088
      %5090 = vmatprep.subr.mxu0 0.0
      %v5091 = vand.u32 %v3347, 4294901760
      %5092 = vmatpush1.msra.mxu0 %v5091
      %5093 = vmatprep.subr.mxu0 0.0
      %v5094 = vand.u32 %v3348, 4294901760
      %5095 = vmatpush1.msra.mxu0 %v5094
      %5096 = vmatprep.subr.mxu0 0.0
      %v5097 = vand.u32 %v3349, 4294901760
      %5098 = vmatpush1.msra.mxu0 %v5097
      %5099 = vmatprep.subr.mxu0 0.0
      %v5100 = vand.u32 %v3350, 4294901760
      %5101 = vmatpush1.msra.mxu0 %v5100
      %5102 = vmatprep.subr.mxu0 0.0
      %v5103 = vand.u32 %v3351, 4294901760
      %5104 = vmatpush1.msra.mxu0 %v5103
      %5105 = vmatprep.subr.mxu0 0.0
      %v5106 = vand.u32 %v3352, 4294901760
      %5107 = vmatpush1.msra.mxu0 %v5106
      %5108 = vmatprep.subr.mxu0 0.0
      %v5109 = vand.u32 %v3353, 4294901760
      %5110 = vmatpush1.msra.mxu0 %v5109
      %5111 = vmatprep.subr.mxu0 0.0
      %5112 = vmatpush1.msra.mxu0 0.0
      %5113 = vmatprep.subr.mxu0 0.0
      %5114 = vmatpush1.msra.mxu0 0.0
      %5115 = vmatprep.subr.mxu0 0.0
      %5116 = vmatpush1.msra.mxu0 0.0
      %5117 = vmatprep.subr.mxu0 0.0
      %5118 = vmatpush1.msra.mxu0 0.0
      %5119 = vmatprep.subr.mxu0 0.0
      %5120 = vmatpush1.msra.mxu0 0.0
      %5121 = vmatprep.subr.mxu0 0.0
      %5122 = vmatpush1.msra.mxu0 0.0
      %5123 = vmatprep.subr.mxu0 0.0
      %5124 = vmatpush1.msra.mxu0 0.0
      %5125 = vmatprep.subr.mxu0 0.0
      %5126 = vmatpush1.msra.mxu0 0.0
      %5127 = vmatprep.subr.mxu0 0.0
      %5128 = vmatpush1.msra.mxu0 0.0
      %5129 = vmatprep.subr.mxu0 0.0
      %5130 = vmatpush1.msra.mxu0 0.0
      %5131 = vmatprep.subr.mxu0 0.0
      %5132 = vmatpush1.msra.mxu0 0.0
      %5133 = vmatprep.subr.mxu0 0.0
      %5134 = vmatpush1.msra.mxu0 0.0
      %5135 = vmatprep.subr.mxu0 0.0
      %5136 = vmatpush1.msra.mxu0 0.0
      %5137 = vmatprep.subr.mxu0 0.0
      %5138 = vmatpush1.msra.mxu0 0.0
      %5139 = vmatprep.subr.mxu0 0.0
      %5140 = vmatpush1.msra.mxu0 0.0
      %5141 = vmatprep.subr.mxu0 0.0
      %5142 = vmatpush1.msra.mxu0 0.0
      %5143 = vmatprep.mubr.f32.mxu0 0.0
      %v5144 = vand.u32 %v3305, 4294901760
      %5145 = vmatmul.mubr.f32.gmra.mrb[0].mxu0 %v5144
      %v5146 = vpop.f32.mrb[0].mxu0
      %v5147 = vadd.f32 %v4874, %v5146
      %v5148 = vpop.f32.mrb[0].mxu0
      %5149 = vmatprep.mubr.f32.mxu0 0.0
      %v5150 = vand.u32 %v3306, 4294901760
      %5151 = vmatmul.mubr.f32.gmra.mrb[0].mxu0 %v5150
      %v5152 = vpop.f32.mrb[0].mxu0
      %v5153 = vadd.f32 %v4880, %v5152
      %v5154 = vpop.f32.mrb[0].mxu0
      %5155 = vmatprep.mubr.f32.mxu0 0.0
      %v5156 = vand.u32 %v3307, 4294901760
      %5157 = vmatmul.mubr.f32.gmra.mrb[0].mxu0 %v5156
      %v5158 = vpop.f32.mrb[0].mxu0
      %v5159 = vadd.f32 %v4886, %v5158
      %v5160 = vpop.f32.mrb[0].mxu0
      %5161 = vmatprep.mubr.f32.mxu0 0.0
      %v5162 = vand.u32 %v3308, 4294901760
      %5163 = vmatmul.mubr.f32.gmra.mrb[0].mxu0 %v5162
      %v5164 = vpop.f32.mrb[0].mxu0
      %v5165 = vadd.f32 %v4892, %v5164
      %v5166 = vpop.f32.mrb[0].mxu0
      %5167 = vmatprep.mubr.f32.mxu0 0.0
      %v5168 = vand.u32 %v3309, 4294901760
      %5169 = vmatmul.mubr.f32.gmra.mrb[0].mxu0 %v5168
      %v5170 = vpop.f32.mrb[0].mxu0
      %v5171 = vadd.f32 %v4898, %v5170
      %v5172 = vpop.f32.mrb[0].mxu0
      %5173 = vmatprep.mubr.f32.mxu0 0.0
      %v5174 = vand.u32 %v3310, 4294901760
      %5175 = vmatmul.mubr.f32.gmra.mrb[0].mxu0 %v5174
      %v5176 = vpop.f32.mrb[0].mxu0
      %v5177 = vadd.f32 %v4904, %v5176
      %v5178 = vpop.f32.mrb[0].mxu0
      %5179 = vmatprep.mubr.f32.mxu0 0.0
      %v5180 = vand.u32 %v3311, 4294901760
      %5181 = vmatmul.mubr.f32.gmra.mrb[0].mxu0 %v5180
      %v5182 = vpop.f32.mrb[0].mxu0
      %v5183 = vadd.f32 %v4910, %v5182
      %v5184 = vpop.f32.mrb[0].mxu0
      %5185 = vmatprep.mubr.f32.mxu0 0.0
      %v5186 = vand.u32 %v3312, 4294901760
      %5187 = vmatmul.mubr.f32.gmra.mrb[0].mxu0 %v5186
      %v5188 = vpop.f32.mrb[0].mxu0
      %v5189 = vadd.f32 %v4916, %v5188
      %v5190 = vpop.f32.mrb[0].mxu0
      %5191 = vmatprep.mubr.f32.mxu0 0.0
      %v5192 = vand.u32 %v3313, 4294901760
      %5193 = vmatmul.mubr.f32.gmra.mrb[0].mxu0 %v5192
      %v5194 = vpop.f32.mrb[0].mxu0
      %v5195 = vadd.f32 %v4922, %v5194
      %v5196 = vpop.f32.mrb[0].mxu0
      %5197 = vmatprep.mubr.f32.mxu0 0.0
      %v5198 = vand.u32 %v3314, 4294901760
      %5199 = vmatmul.mubr.f32.gmra.mrb[0].mxu0 %v5198
      %v5200 = vpop.f32.mrb[0].mxu0
      %v5201 = vadd.f32 %v4928, %v5200
      %v5202 = vpop.f32.mrb[0].mxu0
      %5203 = vmatprep.mubr.f32.mxu0 0.0
      %v5204 = vand.u32 %v3315, 4294901760
      %5205 = vmatmul.mubr.f32.gmra.mrb[0].mxu0 %v5204
      %v5206 = vpop.f32.mrb[0].mxu0
      %v5207 = vadd.f32 %v4934, %v5206
      %v5208 = vpop.f32.mrb[0].mxu0
      %5209 = vmatprep.mubr.f32.mxu0 0.0
      %v5210 = vand.u32 %v3316, 4294901760
      %5211 = vmatmul.mubr.f32.gmra.mrb[0].mxu0 %v5210
      %v5212 = vpop.f32.mrb[0].mxu0
      %v5213 = vadd.f32 %v4940, %v5212
      %v5214 = vpop.f32.mrb[0].mxu0
      %5215 = vmatprep.mubr.f32.mxu0 0.0
      %v5216 = vand.u32 %v3317, 4294901760
      %5217 = vmatmul.mubr.f32.gmra.mrb[0].mxu0 %v5216
      %v5218 = vpop.f32.mrb[0].mxu0
      %v5219 = vadd.f32 %v4946, %v5218
      %v5220 = vpop.f32.mrb[0].mxu0
      %5221 = vmatprep.mubr.f32.mxu0 0.0
      %v5222 = vand.u32 %v3318, 4294901760
      %5223 = vmatmul.mubr.f32.gmra.mrb[0].mxu0 %v5222
      %v5224 = vpop.f32.mrb[0].mxu0
      %v5225 = vadd.f32 %v4952, %v5224
      %v5226 = vpop.f32.mrb[0].mxu0
      %5227 = vmatprep.mubr.f32.mxu0 0.0
      %v5228 = vand.u32 %v3319, 4294901760
      %5229 = vmatmul.mubr.f32.gmra.mrb[0].mxu0 %v5228
      %v5230 = vpop.f32.mrb[0].mxu0
      %v5231 = vadd.f32 %v4958, %v5230
      %v5232 = vpop.f32.mrb[0].mxu0
      %5233 = vmatprep.mubr.f32.mxu0 0.0
      %v5234 = vand.u32 %v3320, 4294901760
      %5235 = vmatmul.mubr.f32.gmra.mrb[0].mxu0 %v5234
      %v5236 = vpop.f32.mrb[0].mxu0
      %v5237 = vadd.f32 %v4964, %v5236
      %v5238 = vpop.f32.mrb[0].mxu0
      %5239 = vmatprep.mubr.f32.mxu0 0.0
      %v5240 = vand.u32 %v3321, 4294901760
      %5241 = vmatmul.mubr.f32.gmra.mrb[0].mxu0 %v5240
      %v5242 = vpop.f32.mrb[0].mxu0
      %v5243 = vadd.f32 %v4970, %v5242
      %v5244 = vpop.f32.mrb[0].mxu0
      %5245 = vmatprep.mubr.f32.mxu0 0.0
      %v5246 = vand.u32 %v3322, 4294901760
      %5247 = vmatmul.mubr.f32.gmra.mrb[0].mxu0 %v5246
      %v5248 = vpop.f32.mrb[0].mxu0
      %v5249 = vadd.f32 %v4976, %v5248
      %v5250 = vpop.f32.mrb[0].mxu0
      %5251 = vmatprep.mubr.f32.mxu0 0.0
      %v5252 = vand.u32 %v3323, 4294901760
      %5253 = vmatmul.mubr.f32.gmra.mrb[0].mxu0 %v5252
      %v5254 = vpop.f32.mrb[0].mxu0
      %v5255 = vadd.f32 %v4982, %v5254
      %v5256 = vpop.f32.mrb[0].mxu0
      %5257 = vmatprep.mubr.f32.mxu0 0.0
      %v5258 = vand.u32 %v3324, 4294901760
      %5259 = vmatmul.mubr.f32.gmra.mrb[0].mxu0 %v5258
      %v5260 = vpop.f32.mrb[0].mxu0
      %v5261 = vadd.f32 %v4988, %v5260
      %v5262 = vpop.f32.mrb[0].mxu0
      %5263 = vmatprep.mubr.f32.mxu0 0.0
      %v5264 = vand.u32 %v3325, 4294901760
      %5265 = vmatmul.mubr.f32.gmra.mrb[0].mxu0 %v5264
      %v5266 = vpop.f32.mrb[0].mxu0
      %v5267 = vadd.f32 %v4994, %v5266
      %v5268 = vpop.f32.mrb[0].mxu0
      %5269 = vmatprep.mubr.f32.mxu0 0.0
      %v5270 = vand.u32 %v3326, 4294901760
      %5271 = vmatmul.mubr.f32.gmra.mrb[0].mxu0 %v5270
      %v5272 = vpop.f32.mrb[0].mxu0
      %v5273 = vadd.f32 %v5000, %v5272
      %v5274 = vpop.f32.mrb[0].mxu0
      %5275 = vmatprep.mubr.f32.mxu0 0.0
      %v5276 = vand.u32 %v3327, 4294901760
      %5277 = vmatmul.mubr.f32.gmra.mrb[0].mxu0 %v5276
      %v5278 = vpop.f32.mrb[0].mxu0
      %v5279 = vadd.f32 %v5006, %v5278
      %v5280 = vpop.f32.mrb[0].mxu0
      %5281 = vmatprep.mubr.f32.mxu0 0.0
      %v5282 = vand.u32 %v3328, 4294901760
      %5283 = vmatmul.mubr.f32.gmra.mrb[0].mxu0 %v5282
      %v5284 = vpop.f32.mrb[0].mxu0
      %v5285 = vadd.f32 %v5012, %v5284
      %v5286 = vpop.f32.mrb[0].mxu0
      %5287 = vmatprep.mubr.f32.mxu0 0.0
      %v5288 = vand.u32 %v3329, 4294901760
      %5289 = vmatmul.mubr.f32.gmra.mrb[0].mxu0 %v5288
      %v5290 = vpop.f32.mrb[0].mxu0
      %v5291 = vadd.f32 %v5018, %v5290
      %v5292 = vpop.f32.mrb[0].mxu0
      %5293 = vmatprep.mubr.f32.mxu0 0.0
      %v5294 = vand.u32 %v3330, 4294901760
      %5295 = vmatmul.mubr.f32.gmra.mrb[0].mxu0 %v5294
      %v5296 = vpop.f32.mrb[0].mxu0
      %v5297 = vadd.f32 %v5024, %v5296
      %v5298 = vpop.f32.mrb[0].mxu0
      %5299 = vmatprep.mubr.f32.mxu0 0.0
      %v5300 = vand.u32 %v3331, 4294901760
      %5301 = vmatmul.mubr.f32.gmra.mrb[0].mxu0 %v5300
      %v5302 = vpop.f32.mrb[0].mxu0
      %v5303 = vadd.f32 %v5030, %v5302
      %v5304 = vpop.f32.mrb[0].mxu0
      %5305 = vmatprep.mubr.f32.mxu0 0.0
      %v5306 = vand.u32 %v3332, 4294901760
      %5307 = vmatmul.mubr.f32.gmra.mrb[0].mxu0 %v5306
      %v5308 = vpop.f32.mrb[0].mxu0
      %v5309 = vadd.f32 %v5036, %v5308
      %v5310 = vpop.f32.mrb[0].mxu0
      %5311 = vmatprep.mubr.f32.mxu0 0.0
      %v5312 = vand.u32 %v3333, 4294901760
      %5313 = vmatmul.mubr.f32.gmra.mrb[0].mxu0 %v5312
      %v5314 = vpop.f32.mrb[0].mxu0
      %v5315 = vadd.f32 %v5042, %v5314
      %v5316 = vpop.f32.mrb[0].mxu0
      %5317 = vmatprep.mubr.f32.mxu0 0.0
      %v5318 = vand.u32 %v3334, 4294901760
      %5319 = vmatmul.mubr.f32.gmra.mrb[0].mxu0 %v5318
      %v5320 = vpop.f32.mrb[0].mxu0
      %v5321 = vadd.f32 %v5048, %v5320
      %v5322 = vpop.f32.mrb[0].mxu0
      %5323 = vmatprep.mubr.f32.mxu0 0.0
      %v5324 = vand.u32 %v3335, 4294901760
      %5325 = vmatmul.mubr.f32.gmra.mrb[0].mxu0 %v5324
      %v5326 = vpop.f32.mrb[0].mxu0
      %v5327 = vadd.f32 %v5054, %v5326
      %v5328 = vpop.f32.mrb[0].mxu0
      %5329 = vmatprep.mubr.f32.mxu0 0.0
      %v5330 = vand.u32 %v3336, 4294901760
      %5331 = vmatmul.mubr.f32.gmra.mrb[0].mxu0 %v5330
      %v5332 = vpop.f32.mrb[0].mxu0
      %v5333 = vadd.f32 %v5060, %v5332
      %v5334 = vpop.f32.mrb[0].mxu0
      %5335 = vdwg.mxu0
      %5336 = vst [vmem:[#allocation2 + $0x18] sm:$0xff] %v5147
      %5337 = vst [vmem:[#allocation2 + $0x20] sm:$0xff] %v5153
      %5338 = vst [vmem:[#allocation2 + $0x28] sm:$0xff] %v5159
      %5339 = vst [vmem:[#allocation2 + $0x30] sm:$0xff] %v5165
      %5340 = vst [vmem:[#allocation2 + $0x38] sm:$0xff] %v5171
      %5341 = vst [vmem:[#allocation2 + $0x40] sm:$0xff] %v5177
      %5342 = vst [vmem:[#allocation2 + $0x48] sm:$0xff] %v5183
      %5343 = vst [vmem:[#allocation2 + $0x50] sm:$0xff] %v5189
      %5344 = vst [vmem:[#allocation2 + $0x58] sm:$0xff] %v5195
      %5345 = vst [vmem:[#allocation2 + $0x60] sm:$0xff] %v5201
      %5346 = vst [vmem:[#allocation2 + $0x68] sm:$0xff] %v5207
      %5347 = vst [vmem:[#allocation2 + $0x70] sm:$0xff] %v5213
      %5348 = vst [vmem:[#allocation2 + $0x78] sm:$0xff] %v5219
      %5349 = vst [vmem:[#allocation2 + $0x80] sm:$0xff] %v5225
      %5350 = vst [vmem:[#allocation2 + $0x88] sm:$0xff] %v5231
      %5351 = vst [vmem:[#allocation2 + $0x90] sm:$0xff] %v5237
      %5352 = vst [vmem:[#allocation2 + $0x98] sm:$0xff] %v5243
      %5353 = vst [vmem:[#allocation2 + $0xa0] sm:$0xff] %v5249
      %5354 = vst [vmem:[#allocation2 + $0xa8] sm:$0xff] %v5255
      %5355 = vst [vmem:[#allocation2 + $0xb0] sm:$0xff] %v5261
      %5356 = vst [vmem:[#allocation2 + $0xb8] sm:$0xff] %v5267
      %5357 = vst [vmem:[#allocation2 + $0xc0] sm:$0xff] %v5273
      %5358 = vst [vmem:[#allocation2 + $0xc8] sm:$0xff] %v5279
      %5359 = vst [vmem:[#allocation2 + $0xd0] sm:$0xff] %v5285
      %5360 = vst [vmem:[#allocation2 + $0xd8] sm:$0xff] %v5291
      %5361 = vst [vmem:[#allocation2 + $0xe0] sm:$0xff] %v5297
      %5362 = vst [vmem:[#allocation2 + $0xe8] sm:$0xff] %v5303
      %5363 = vst [vmem:[#allocation2 + $0xf0] sm:$0xff] %v5309
      %5364 = vst [vmem:[#allocation2 + $0xf8] sm:$0xff] %v5315
      %5365 = vst [vmem:[#allocation2 + $0x100] sm:$0xff] %v5321
      %5366 = vst [vmem:[#allocation2 + $0x108] sm:$0xff] %v5327
      %5367 = vst [vmem:[#allocation2 + $0x110] sm:$0xff] %v5333
      %s5368 = scalar_lea.vmem %s3, 16
      %v5369 = vld [vmem:[%s5368] sm:$0xff]
      %v5370 = vld [vmem:[%s5368 + $0x8] sm:$0x1]
      %v5371 = vlaneseq
      %v5372 = vshrl.u32 %v5371, 7
      %v5373 = vsub.s32 4, %v5372
      %v5374 = vrot.slane %v5369, %v5373
      %v5375 = vmul.f32 %v5147, %v5374
      %v5376 = vmul.f32 %v5153, %v5374
      %v5377 = vmul.f32 %v5159, %v5374
      %v5378 = vmul.f32 %v5165, %v5374
      %v5379 = vmul.f32 %v5171, %v5374
      %v5380 = vmul.f32 %v5177, %v5374
      %v5381 = vmul.f32 %v5183, %v5374
      %v5382 = vmul.f32 %v5189, %v5374
      %v5383 = vmul.f32 %v5195, %v5374
      %v5384 = vmul.f32 %v5201, %v5374
      %v5385 = vmul.f32 %v5207, %v5374
      %v5386 = vmul.f32 %v5213, %v5374
      %v5387 = vmul.f32 %v5219, %v5374
      %v5388 = vmul.f32 %v5225, %v5374
      %v5389 = vmul.f32 %v5231, %v5374
      %v5390 = vmul.f32 %v5237, %v5374
      %v5391 = vmul.f32 %v5243, %v5374
      %v5392 = vmul.f32 %v5249, %v5374
      %v5393 = vmul.f32 %v5255, %v5374
      %v5394 = vmul.f32 %v5261, %v5374
      %v5395 = vmul.f32 %v5267, %v5374
      %v5396 = vmul.f32 %v5273, %v5374
      %v5397 = vmul.f32 %v5279, %v5374
      %v5398 = vmul.f32 %v5285, %v5374
      %v5399 = vmul.f32 %v5291, %v5374
      %v5400 = vmul.f32 %v5297, %v5374
      %v5401 = vmul.f32 %v5303, %v5374
      %v5402 = vmul.f32 %v5309, %v5374
      %v5403 = vmul.f32 %v5315, %v5374
      %v5404 = vmul.f32 %v5321, %v5374
      %v5405 = vmul.f32 %v5327, %v5374
      %v5406 = vmul.f32 %v5333, %v5374
      %v5407 = vld [vmem:[#allocation2 + $0x7] sm:$0xff]
      %v5408 = vld [vmem:[#allocation2 + $0xf] sm:$0xff]
      %v5409 = vld [vmem:[#allocation2 + $0x17] sm:$0xff]
      %v5410 = vld [vmem:[#allocation2 + $0x1f] sm:$0xff]
      %v5411 = vld [vmem:[#allocation2 + $0x27] sm:$0xff]
      %v5412 = vld [vmem:[#allocation2 + $0x2f] sm:$0xff]
      %v5413 = vld [vmem:[#allocation2 + $0x37] sm:$0xff]
      %v5414 = vld [vmem:[#allocation2 + $0x3f] sm:$0xff]
      %v5415 = vld [vmem:[#allocation2 + $0x47] sm:$0xff]
      %v5416 = vld [vmem:[#allocation2 + $0x4f] sm:$0xff]
      %v5417 = vld [vmem:[#allocation2 + $0x57] sm:$0xff]
      %v5418 = vld [vmem:[#allocation2 + $0x5f] sm:$0xff]
      %v5419 = vld [vmem:[#allocation2 + $0x67] sm:$0xff]
      %v5420 = vld [vmem:[#allocation2 + $0x6f] sm:$0xff]
      %v5421 = vld [vmem:[#allocation2 + $0x77] sm:$0xff]
      %v5422 = vld [vmem:[#allocation2 + $0x7f] sm:$0xff]
      %v5423 = vld [vmem:[#allocation2 + $0x87] sm:$0xff]
      %v5424 = vld [vmem:[#allocation2 + $0x8f] sm:$0xff]
      %v5425 = vld [vmem:[#allocation2 + $0x97] sm:$0xff]
      %v5426 = vld [vmem:[#allocation2 + $0x9f] sm:$0xff]
      %v5427 = vld [vmem:[#allocation2 + $0xa7] sm:$0xff]
      %v5428 = vld [vmem:[#allocation2 + $0xaf] sm:$0xff]
      %v5429 = vld [vmem:[#allocation2 + $0xb7] sm:$0xff]
      %v5430 = vld [vmem:[#allocation2 + $0xbf] sm:$0xff]
      %v5431 = vld [vmem:[#allocation2 + $0xc7] sm:$0xff]
      %v5432 = vld [vmem:[#allocation2 + $0xcf] sm:$0xff]
      %v5433 = vld [vmem:[#allocation2 + $0xd7] sm:$0xff]
      %v5434 = vld [vmem:[#allocation2 + $0xdf] sm:$0xff]
      %v5435 = vld [vmem:[#allocation2 + $0xe7] sm:$0xff]
      %v5436 = vld [vmem:[#allocation2 + $0xef] sm:$0xff]
      %v5437 = vld [vmem:[#allocation2 + $0xf7] sm:$0xff]
      %v5438 = vld [vmem:[#allocation2 + $0xff] sm:$0xff]
      %v5439 = vmul.f32 %v5407, %v258
      %v5440 = vmul.f32 %v5408, %v259
      %v5441 = vmul.f32 %v5409, %v260
      %v5442 = vmul.f32 %v5410, %v261
      %v5443 = vmul.f32 %v5411, %v262
      %v5444 = vmul.f32 %v5412, %v263
      %v5445 = vmul.f32 %v5413, %v264
      %v5446 = vmul.f32 %v5414, %v265
      %v5447 = vmul.f32 %v5415, %v266
      %v5448 = vmul.f32 %v5416, %v267
      %v5449 = vmul.f32 %v5417, %v268
      %v5450 = vmul.f32 %v5418, %v269
      %v5451 = vmul.f32 %v5419, %v270
      %v5452 = vmul.f32 %v5420, %v271
      %v5453 = vmul.f32 %v5421, %v272
      %v5454 = vmul.f32 %v5422, %v273
      %v5455 = vmul.f32 %v5423, %v274
      %v5456 = vmul.f32 %v5424, %v275
      %v5457 = vmul.f32 %v5425, %v276
      %v5458 = vmul.f32 %v5426, %v277
      %v5459 = vmul.f32 %v5427, %v278
      %v5460 = vmul.f32 %v5428, %v279
      %v5461 = vmul.f32 %v5429, %v280
      %v5462 = vmul.f32 %v5430, %v281
      %v5463 = vmul.f32 %v5431, %v282
      %v5464 = vmul.f32 %v5432, %v283
      %v5465 = vmul.f32 %v5433, %v284
      %v5466 = vmul.f32 %v5434, %v285
      %v5467 = vmul.f32 %v5435, %v286
      %v5468 = vmul.f32 %v5436, %v287
      %v5469 = vmul.f32 %v5437, %v288
      %v5470 = vmul.f32 %v5438, %v289
      %v5471 = vlaneseq
      %v5472 = vshrl.u32 %v5471, 7
      %v5473 = vsub.s32 0, %v5472
      %v5474 = vrot.slane %v5369, %v5473
      %v5475 = vmul.f32 %v5439, %v5474
      %v5476 = vmul.f32 %v5440, %v5474
      %v5477 = vmul.f32 %v5441, %v5474
      %v5478 = vmul.f32 %v5442, %v5474
      %v5479 = vmul.f32 %v5443, %v5474
      %v5480 = vmul.f32 %v5444, %v5474
      %v5481 = vmul.f32 %v5445, %v5474
      %v5482 = vmul.f32 %v5446, %v5474
      %v5483 = vmul.f32 %v5447, %v5474
      %v5484 = vmul.f32 %v5448, %v5474
      %v5485 = vmul.f32 %v5449, %v5474
      %v5486 = vmul.f32 %v5450, %v5474
      %v5487 = vmul.f32 %v5451, %v5474
      %v5488 = vmul.f32 %v5452, %v5474
      %v5489 = vmul.f32 %v5453, %v5474
      %v5490 = vmul.f32 %v5454, %v5474
      %v5491 = vmul.f32 %v5455, %v5474
      %v5492 = vmul.f32 %v5456, %v5474
      %v5493 = vmul.f32 %v5457, %v5474
      %v5494 = vmul.f32 %v5458, %v5474
      %v5495 = vmul.f32 %v5459, %v5474
      %v5496 = vmul.f32 %v5460, %v5474
      %v5497 = vmul.f32 %v5461, %v5474
      %v5498 = vmul.f32 %v5462, %v5474
      %v5499 = vmul.f32 %v5463, %v5474
      %v5500 = vmul.f32 %v5464, %v5474
      %v5501 = vmul.f32 %v5465, %v5474
      %v5502 = vmul.f32 %v5466, %v5474
      %v5503 = vmul.f32 %v5467, %v5474
      %v5504 = vmul.f32 %v5468, %v5474
      %v5505 = vmul.f32 %v5469, %v5474
      %v5506 = vmul.f32 %v5470, %v5474
      %v5507 = vld [vmem:[#allocation2 + $0x8] sm:$0xff]
      %v5508 = vld [vmem:[#allocation2 + $0x10] sm:$0xff]
      %v5509 = vld [vmem:[#allocation2 + $0x18] sm:$0xff]
      %v5510 = vld [vmem:[#allocation2 + $0x20] sm:$0xff]
      %v5511 = vld [vmem:[#allocation2 + $0x28] sm:$0xff]
      %v5512 = vld [vmem:[#allocation2 + $0x30] sm:$0xff]
      %v5513 = vld [vmem:[#allocation2 + $0x38] sm:$0xff]
      %v5514 = vld [vmem:[#allocation2 + $0x40] sm:$0xff]
      %v5515 = vld [vmem:[#allocation2 + $0x48] sm:$0xff]
      %v5516 = vld [vmem:[#allocation2 + $0x50] sm:$0xff]
      %v5517 = vld [vmem:[#allocation2 + $0x58] sm:$0xff]
      %v5518 = vld [vmem:[#allocation2 + $0x60] sm:$0xff]
      %v5519 = vld [vmem:[#allocation2 + $0x68] sm:$0xff]
      %v5520 = vld [vmem:[#allocation2 + $0x70] sm:$0xff]
      %v5521 = vld [vmem:[#allocation2 + $0x78] sm:$0xff]
      %v5522 = vld [vmem:[#allocation2 + $0x80] sm:$0xff]
      %v5523 = vld [vmem:[#allocation2 + $0x88] sm:$0xff]
      %v5524 = vld [vmem:[#allocation2 + $0x90] sm:$0xff]
      %v5525 = vld [vmem:[#allocation2 + $0x98] sm:$0xff]
      %v5526 = vld [vmem:[#allocation2 + $0xa0] sm:$0xff]
      %v5527 = vld [vmem:[#allocation2 + $0xa8] sm:$0xff]
      %v5528 = vld [vmem:[#allocation2 + $0xb0] sm:$0xff]
      %v5529 = vld [vmem:[#allocation2 + $0xb8] sm:$0xff]
      %v5530 = vld [vmem:[#allocation2 + $0xc0] sm:$0xff]
      %v5531 = vld [vmem:[#allocation2 + $0xc8] sm:$0xff]
      %v5532 = vld [vmem:[#allocation2 + $0xd0] sm:$0xff]
      %v5533 = vld [vmem:[#allocation2 + $0xd8] sm:$0xff]
      %v5534 = vld [vmem:[#allocation2 + $0xe0] sm:$0xff]
      %v5535 = vld [vmem:[#allocation2 + $0xe8] sm:$0xff]
      %v5536 = vld [vmem:[#allocation2 + $0xf0] sm:$0xff]
      %v5537 = vld [vmem:[#allocation2 + $0xf8] sm:$0xff]
      %v5538 = vld [vmem:[#allocation2 + $0x100] sm:$0xff]
      %v5539 = vlaneseq
      %v5540 = vshrl.u32 %v5539, 7
      %v5541 = vsub.s32 1, %v5540
      %v5542 = vrot.slane %v5369, %v5541
      %v5543 = vmul.f32 %v5507, %v5542
      %v5544 = vmul.f32 %v5508, %v5542
      %v5545 = vmul.f32 %v5509, %v5542
      %v5546 = vmul.f32 %v5510, %v5542
      %v5547 = vmul.f32 %v5511, %v5542
      %v5548 = vmul.f32 %v5512, %v5542
      %v5549 = vmul.f32 %v5513, %v5542
      %v5550 = vmul.f32 %v5514, %v5542
      %v5551 = vmul.f32 %v5515, %v5542
      %v5552 = vmul.f32 %v5516, %v5542
      %v5553 = vmul.f32 %v5517, %v5542
      %v5554 = vmul.f32 %v5518, %v5542
      %v5555 = vmul.f32 %v5519, %v5542
      %v5556 = vmul.f32 %v5520, %v5542
      %v5557 = vmul.f32 %v5521, %v5542
      %v5558 = vmul.f32 %v5522, %v5542
      %v5559 = vmul.f32 %v5523, %v5542
      %v5560 = vmul.f32 %v5524, %v5542
      %v5561 = vmul.f32 %v5525, %v5542
      %v5562 = vmul.f32 %v5526, %v5542
      %v5563 = vmul.f32 %v5527, %v5542
      %v5564 = vmul.f32 %v5528, %v5542
      %v5565 = vmul.f32 %v5529, %v5542
      %v5566 = vmul.f32 %v5530, %v5542
      %v5567 = vmul.f32 %v5531, %v5542
      %v5568 = vmul.f32 %v5532, %v5542
      %v5569 = vmul.f32 %v5533, %v5542
      %v5570 = vmul.f32 %v5534, %v5542
      %v5571 = vmul.f32 %v5535, %v5542
      %v5572 = vmul.f32 %v5536, %v5542
      %v5573 = vmul.f32 %v5537, %v5542
      %v5574 = vmul.f32 %v5538, %v5542
      %v5575 = vadd.f32 %v5375, %v5543
      %v5576 = vadd.f32 %v5376, %v5544
      %v5577 = vadd.f32 %v5377, %v5545
      %v5578 = vadd.f32 %v5378, %v5546
      %v5579 = vadd.f32 %v5379, %v5547
      %v5580 = vadd.f32 %v5380, %v5548
      %v5581 = vadd.f32 %v5381, %v5549
      %v5582 = vadd.f32 %v5382, %v5550
      %v5583 = vadd.f32 %v5383, %v5551
      %v5584 = vadd.f32 %v5384, %v5552
      %v5585 = vadd.f32 %v5385, %v5553
      %v5586 = vadd.f32 %v5386, %v5554
      %v5587 = vadd.f32 %v5387, %v5555
      %v5588 = vadd.f32 %v5388, %v5556
      %v5589 = vadd.f32 %v5389, %v5557
      %v5590 = vadd.f32 %v5390, %v5558
      %v5591 = vadd.f32 %v5391, %v5559
      %v5592 = vadd.f32 %v5392, %v5560
      %v5593 = vadd.f32 %v5393, %v5561
      %v5594 = vadd.f32 %v5394, %v5562
      %v5595 = vadd.f32 %v5395, %v5563
      %v5596 = vadd.f32 %v5396, %v5564
      %v5597 = vadd.f32 %v5397, %v5565
      %v5598 = vadd.f32 %v5398, %v5566
      %v5599 = vadd.f32 %v5399, %v5567
      %v5600 = vadd.f32 %v5400, %v5568
      %v5601 = vadd.f32 %v5401, %v5569
      %v5602 = vadd.f32 %v5402, %v5570
      %v5603 = vadd.f32 %v5403, %v5571
      %v5604 = vadd.f32 %v5404, %v5572
      %v5605 = vadd.f32 %v5405, %v5573
      %v5606 = vadd.f32 %v5406, %v5574
      %v5607 = vld [vmem:[#allocation2 + $0x9] sm:$0xff]
      %v5608 = vld [vmem:[#allocation2 + $0x11] sm:$0xff]
      %v5609 = vld [vmem:[#allocation2 + $0x19] sm:$0xff]
      %v5610 = vld [vmem:[#allocation2 + $0x21] sm:$0xff]
      %v5611 = vld [vmem:[#allocation2 + $0x29] sm:$0xff]
      %v5612 = vld [vmem:[#allocation2 + $0x31] sm:$0xff]
      %v5613 = vld [vmem:[#allocation2 + $0x39] sm:$0xff]
      %v5614 = vld [vmem:[#allocation2 + $0x41] sm:$0xff]
      %v5615 = vld [vmem:[#allocation2 + $0x49] sm:$0xff]
      %v5616 = vld [vmem:[#allocation2 + $0x51] sm:$0xff]
      %v5617 = vld [vmem:[#allocation2 + $0x59] sm:$0xff]
      %v5618 = vld [vmem:[#allocation2 + $0x61] sm:$0xff]
      %v5619 = vld [vmem:[#allocation2 + $0x69] sm:$0xff]
      %v5620 = vld [vmem:[#allocation2 + $0x71] sm:$0xff]
      %v5621 = vld [vmem:[#allocation2 + $0x79] sm:$0xff]
      %v5622 = vld [vmem:[#allocation2 + $0x81] sm:$0xff]
      %v5623 = vld [vmem:[#allocation2 + $0x89] sm:$0xff]
      %v5624 = vld [vmem:[#allocation2 + $0x91] sm:$0xff]
      %v5625 = vld [vmem:[#allocation2 + $0x99] sm:$0xff]
      %v5626 = vld [vmem:[#allocation2 + $0xa1] sm:$0xff]
      %v5627 = vld [vmem:[#allocation2 + $0xa9] sm:$0xff]
      %v5628 = vld [vmem:[#allocation2 + $0xb1] sm:$0xff]
      %v5629 = vld [vmem:[#allocation2 + $0xb9] sm:$0xff]
      %v5630 = vld [vmem:[#allocation2 + $0xc1] sm:$0xff]
      %v5631 = vld [vmem:[#allocation2 + $0xc9] sm:$0xff]
      %v5632 = vld [vmem:[#allocation2 + $0xd1] sm:$0xff]
      %v5633 = vld [vmem:[#allocation2 + $0xd9] sm:$0xff]
      %v5634 = vld [vmem:[#allocation2 + $0xe1] sm:$0xff]
      %v5635 = vld [vmem:[#allocation2 + $0xe9] sm:$0xff]
      %v5636 = vld [vmem:[#allocation2 + $0xf1] sm:$0xff]
      %v5637 = vld [vmem:[#allocation2 + $0xf9] sm:$0xff]
      %v5638 = vld [vmem:[#allocation2 + $0x101] sm:$0xff]
      %v5639 = vmul.f32 %v5607, %v291
      %v5640 = vmul.f32 %v5608, %v292
      %v5641 = vmul.f32 %v5609, %v293
      %v5642 = vmul.f32 %v5610, %v294
      %v5643 = vmul.f32 %v5611, %v295
      %v5644 = vmul.f32 %v5612, %v296
      %v5645 = vmul.f32 %v5613, %v297
      %v5646 = vmul.f32 %v5614, %v298
      %v5647 = vmul.f32 %v5615, %v299
      %v5648 = vmul.f32 %v5616, %v300
      %v5649 = vmul.f32 %v5617, %v301
      %v5650 = vmul.f32 %v5618, %v302
      %v5651 = vmul.f32 %v5619, %v303
      %v5652 = vmul.f32 %v5620, %v304
      %v5653 = vmul.f32 %v5621, %v305
      %v5654 = vmul.f32 %v5622, %v306
      %v5655 = vmul.f32 %v5623, %v307
      %v5656 = vmul.f32 %v5624, %v308
      %v5657 = vmul.f32 %v5625, %v309
      %v5658 = vmul.f32 %v5626, %v310
      %v5659 = vmul.f32 %v5627, %v311
      %v5660 = vmul.f32 %v5628, %v312
      %v5661 = vmul.f32 %v5629, %v313
      %v5662 = vmul.f32 %v5630, %v314
      %v5663 = vmul.f32 %v5631, %v315
      %v5664 = vmul.f32 %v5632, %v316
      %v5665 = vmul.f32 %v5633, %v317
      %v5666 = vmul.f32 %v5634, %v318
      %v5667 = vmul.f32 %v5635, %v319
      %v5668 = vmul.f32 %v5636, %v320
      %v5669 = vmul.f32 %v5637, %v321
      %v5670 = vmul.f32 %v5638, %v322
      %v5671 = vlaneseq
      %v5672 = vshrl.u32 %v5671, 7
      %v5673 = vsub.s32 2, %v5672
      %v5674 = vrot.slane %v5369, %v5673
      %v5675 = vmul.f32 %v5639, %v5674
      %v5676 = vmul.f32 %v5640, %v5674
      %v5677 = vmul.f32 %v5641, %v5674
      %v5678 = vmul.f32 %v5642, %v5674
      %v5679 = vmul.f32 %v5643, %v5674
      %v5680 = vmul.f32 %v5644, %v5674
      %v5681 = vmul.f32 %v5645, %v5674
      %v5682 = vmul.f32 %v5646, %v5674
      %v5683 = vmul.f32 %v5647, %v5674
      %v5684 = vmul.f32 %v5648, %v5674
      %v5685 = vmul.f32 %v5649, %v5674
      %v5686 = vmul.f32 %v5650, %v5674
      %v5687 = vmul.f32 %v5651, %v5674
      %v5688 = vmul.f32 %v5652, %v5674
      %v5689 = vmul.f32 %v5653, %v5674
      %v5690 = vmul.f32 %v5654, %v5674
      %v5691 = vmul.f32 %v5655, %v5674
      %v5692 = vmul.f32 %v5656, %v5674
      %v5693 = vmul.f32 %v5657, %v5674
      %v5694 = vmul.f32 %v5658, %v5674
      %v5695 = vmul.f32 %v5659, %v5674
      %v5696 = vmul.f32 %v5660, %v5674
      %v5697 = vmul.f32 %v5661, %v5674
      %v5698 = vmul.f32 %v5662, %v5674
      %v5699 = vmul.f32 %v5663, %v5674
      %v5700 = vmul.f32 %v5664, %v5674
      %v5701 = vmul.f32 %v5665, %v5674
      %v5702 = vmul.f32 %v5666, %v5674
      %v5703 = vmul.f32 %v5667, %v5674
      %v5704 = vmul.f32 %v5668, %v5674
      %v5705 = vmul.f32 %v5669, %v5674
      %v5706 = vmul.f32 %v5670, %v5674
      %v5707 = vadd.f32 %v5475, %v5675
      %v5708 = vadd.f32 %v5476, %v5676
      %v5709 = vadd.f32 %v5477, %v5677
      %v5710 = vadd.f32 %v5478, %v5678
      %v5711 = vadd.f32 %v5479, %v5679
      %v5712 = vadd.f32 %v5480, %v5680
      %v5713 = vadd.f32 %v5481, %v5681
      %v5714 = vadd.f32 %v5482, %v5682
      %v5715 = vadd.f32 %v5483, %v5683
      %v5716 = vadd.f32 %v5484, %v5684
      %v5717 = vadd.f32 %v5485, %v5685
      %v5718 = vadd.f32 %v5486, %v5686
      %v5719 = vadd.f32 %v5487, %v5687
      %v5720 = vadd.f32 %v5488, %v5688
      %v5721 = vadd.f32 %v5489, %v5689
      %v5722 = vadd.f32 %v5490, %v5690
      %v5723 = vadd.f32 %v5491, %v5691
      %v5724 = vadd.f32 %v5492, %v5692
      %v5725 = vadd.f32 %v5493, %v5693
      %v5726 = vadd.f32 %v5494, %v5694
      %v5727 = vadd.f32 %v5495, %v5695
      %v5728 = vadd.f32 %v5496, %v5696
      %v5729 = vadd.f32 %v5497, %v5697
      %v5730 = vadd.f32 %v5498, %v5698
      %v5731 = vadd.f32 %v5499, %v5699
      %v5732 = vadd.f32 %v5500, %v5700
      %v5733 = vadd.f32 %v5501, %v5701
      %v5734 = vadd.f32 %v5502, %v5702
      %v5735 = vadd.f32 %v5503, %v5703
      %v5736 = vadd.f32 %v5504, %v5704
      %v5737 = vadd.f32 %v5505, %v5705
      %v5738 = vadd.f32 %v5506, %v5706
      %v5739 = vld [vmem:[#allocation2 + $0x107] sm:$0xff]
      %v5740 = vld [vmem:[#allocation2 + $0x10f] sm:$0xff]
      %v5741 = vmul.f32 %v5409, %v258
      %v5742 = vmul.f32 %v5410, %v259
      %v5743 = vmul.f32 %v5411, %v260
      %v5744 = vmul.f32 %v5412, %v261
      %v5745 = vmul.f32 %v5413, %v262
      %v5746 = vmul.f32 %v5414, %v263
      %v5747 = vmul.f32 %v5415, %v264
      %v5748 = vmul.f32 %v5416, %v265
      %v5749 = vmul.f32 %v5417, %v266
      %v5750 = vmul.f32 %v5418, %v267
      %v5751 = vmul.f32 %v5419, %v268
      %v5752 = vmul.f32 %v5420, %v269
      %v5753 = vmul.f32 %v5421, %v270
      %v5754 = vmul.f32 %v5422, %v271
      %v5755 = vmul.f32 %v5423, %v272
      %v5756 = vmul.f32 %v5424, %v273
      %v5757 = vmul.f32 %v5425, %v274
      %v5758 = vmul.f32 %v5426, %v275
      %v5759 = vmul.f32 %v5427, %v276
      %v5760 = vmul.f32 %v5428, %v277
      %v5761 = vmul.f32 %v5429, %v278
      %v5762 = vmul.f32 %v5430, %v279
      %v5763 = vmul.f32 %v5431, %v280
      %v5764 = vmul.f32 %v5432, %v281
      %v5765 = vmul.f32 %v5433, %v282
      %v5766 = vmul.f32 %v5434, %v283
      %v5767 = vmul.f32 %v5435, %v284
      %v5768 = vmul.f32 %v5436, %v285
      %v5769 = vmul.f32 %v5437, %v286
      %v5770 = vmul.f32 %v5438, %v287
      %v5771 = vmul.f32 %v5739, %v288
      %v5772 = vmul.f32 %v5740, %v289
      %v5773 = vlaneseq
      %v5774 = vshrl.u32 %v5773, 7
      %v5775 = vsub.s32 3, %v5774
      %v5776 = vrot.slane %v5369, %v5775
      %v5777 = vmul.f32 %v5741, %v5776
      %v5778 = vmul.f32 %v5742, %v5776
      %v5779 = vmul.f32 %v5743, %v5776
      %v5780 = vmul.f32 %v5744, %v5776
      %v5781 = vmul.f32 %v5745, %v5776
      %v5782 = vmul.f32 %v5746, %v5776
      %v5783 = vmul.f32 %v5747, %v5776
      %v5784 = vmul.f32 %v5748, %v5776
      %v5785 = vmul.f32 %v5749, %v5776
      %v5786 = vmul.f32 %v5750, %v5776
      %v5787 = vmul.f32 %v5751, %v5776
      %v5788 = vmul.f32 %v5752, %v5776
      %v5789 = vmul.f32 %v5753, %v5776
      %v5790 = vmul.f32 %v5754, %v5776
      %v5791 = vmul.f32 %v5755, %v5776
      %v5792 = vmul.f32 %v5756, %v5776
      %v5793 = vmul.f32 %v5757, %v5776
      %v5794 = vmul.f32 %v5758, %v5776
      %v5795 = vmul.f32 %v5759, %v5776
      %v5796 = vmul.f32 %v5760, %v5776
      %v5797 = vmul.f32 %v5761, %v5776
      %v5798 = vmul.f32 %v5762, %v5776
      %v5799 = vmul.f32 %v5763, %v5776
      %v5800 = vmul.f32 %v5764, %v5776
      %v5801 = vmul.f32 %v5765, %v5776
      %v5802 = vmul.f32 %v5766, %v5776
      %v5803 = vmul.f32 %v5767, %v5776
      %v5804 = vmul.f32 %v5768, %v5776
      %v5805 = vmul.f32 %v5769, %v5776
      %v5806 = vmul.f32 %v5770, %v5776
      %v5807 = vmul.f32 %v5771, %v5776
      %v5808 = vmul.f32 %v5772, %v5776
      %v5809 = vadd.f32 %v5575, %v5777
      %v5810 = vadd.f32 %v5576, %v5778
      %v5811 = vadd.f32 %v5577, %v5779
      %v5812 = vadd.f32 %v5578, %v5780
      %v5813 = vadd.f32 %v5579, %v5781
      %v5814 = vadd.f32 %v5580, %v5782
      %v5815 = vadd.f32 %v5581, %v5783
      %v5816 = vadd.f32 %v5582, %v5784
      %v5817 = vadd.f32 %v5583, %v5785
      %v5818 = vadd.f32 %v5584, %v5786
      %v5819 = vadd.f32 %v5585, %v5787
      %v5820 = vadd.f32 %v5586, %v5788
      %v5821 = vadd.f32 %v5587, %v5789
      %v5822 = vadd.f32 %v5588, %v5790
      %v5823 = vadd.f32 %v5589, %v5791
      %v5824 = vadd.f32 %v5590, %v5792
      %v5825 = vadd.f32 %v5591, %v5793
      %v5826 = vadd.f32 %v5592, %v5794
      %v5827 = vadd.f32 %v5593, %v5795
      %v5828 = vadd.f32 %v5594, %v5796
      %v5829 = vadd.f32 %v5595, %v5797
      %v5830 = vadd.f32 %v5596, %v5798
      %v5831 = vadd.f32 %v5597, %v5799
      %v5832 = vadd.f32 %v5598, %v5800
      %v5833 = vadd.f32 %v5599, %v5801
      %v5834 = vadd.f32 %v5600, %v5802
      %v5835 = vadd.f32 %v5601, %v5803
      %v5836 = vadd.f32 %v5602, %v5804
      %v5837 = vadd.f32 %v5603, %v5805
      %v5838 = vadd.f32 %v5604, %v5806
      %v5839 = vadd.f32 %v5605, %v5807
      %v5840 = vadd.f32 %v5606, %v5808
      %v5841 = vld [vmem:[#allocation2 + $0x109] sm:$0xff]
      %v5842 = vld [vmem:[#allocation2 + $0x111] sm:$0xff]
      %v5843 = vmul.f32 %v5609, %v291
      %v5844 = vmul.f32 %v5610, %v292
      %v5845 = vmul.f32 %v5611, %v293
      %v5846 = vmul.f32 %v5612, %v294
      %v5847 = vmul.f32 %v5613, %v295
      %v5848 = vmul.f32 %v5614, %v296
      %v5849 = vmul.f32 %v5615, %v297
      %v5850 = vmul.f32 %v5616, %v298
      %v5851 = vmul.f32 %v5617, %v299
      %v5852 = vmul.f32 %v5618, %v300
      %v5853 = vmul.f32 %v5619, %v301
      %v5854 = vmul.f32 %v5620, %v302
      %v5855 = vmul.f32 %v5621, %v303
      %v5856 = vmul.f32 %v5622, %v304
      %v5857 = vmul.f32 %v5623, %v305
      %v5858 = vmul.f32 %v5624, %v306
      %v5859 = vmul.f32 %v5625, %v307
      %v5860 = vmul.f32 %v5626, %v308
      %v5861 = vmul.f32 %v5627, %v309
      %v5862 = vmul.f32 %v5628, %v310
      %v5863 = vmul.f32 %v5629, %v311
      %v5864 = vmul.f32 %v5630, %v312
      %v5865 = vmul.f32 %v5631, %v313
      %v5866 = vmul.f32 %v5632, %v314
      %v5867 = vmul.f32 %v5633, %v315
      %v5868 = vmul.f32 %v5634, %v316
      %v5869 = vmul.f32 %v5635, %v317
      %v5870 = vmul.f32 %v5636, %v318
      %v5871 = vmul.f32 %v5637, %v319
      %v5872 = vmul.f32 %v5638, %v320
      %v5873 = vmul.f32 %v5841, %v321
      %v5874 = vmul.f32 %v5842, %v322
      %v5875 = vlaneseq
      %v5876 = vshrl.u32 %v5875, 7
      %v5877 = vsub.s32 5, %v5876
      %v5878 = vrot.slane %v5369, %v5877
      %v5879 = vmul.f32 %v5843, %v5878
      %v5880 = vmul.f32 %v5844, %v5878
      %v5881 = vmul.f32 %v5845, %v5878
      %v5882 = vmul.f32 %v5846, %v5878
      %v5883 = vmul.f32 %v5847, %v5878
      %v5884 = vmul.f32 %v5848, %v5878
      %v5885 = vmul.f32 %v5849, %v5878
      %v5886 = vmul.f32 %v5850, %v5878
      %v5887 = vmul.f32 %v5851, %v5878
      %v5888 = vmul.f32 %v5852, %v5878
      %v5889 = vmul.f32 %v5853, %v5878
      %v5890 = vmul.f32 %v5854, %v5878
      %v5891 = vmul.f32 %v5855, %v5878
      %v5892 = vmul.f32 %v5856, %v5878
      %v5893 = vmul.f32 %v5857, %v5878
      %v5894 = vmul.f32 %v5858, %v5878
      %v5895 = vmul.f32 %v5859, %v5878
      %v5896 = vmul.f32 %v5860, %v5878
      %v5897 = vmul.f32 %v5861, %v5878
      %v5898 = vmul.f32 %v5862, %v5878
      %v5899 = vmul.f32 %v5863, %v5878
      %v5900 = vmul.f32 %v5864, %v5878
      %v5901 = vmul.f32 %v5865, %v5878
      %v5902 = vmul.f32 %v5866, %v5878
      %v5903 = vmul.f32 %v5867, %v5878
      %v5904 = vmul.f32 %v5868, %v5878
      %v5905 = vmul.f32 %v5869, %v5878
      %v5906 = vmul.f32 %v5870, %v5878
      %v5907 = vmul.f32 %v5871, %v5878
      %v5908 = vmul.f32 %v5872, %v5878
      %v5909 = vmul.f32 %v5873, %v5878
      %v5910 = vmul.f32 %v5874, %v5878
      %v5911 = vadd.f32 %v5707, %v5879
      %v5912 = vadd.f32 %v5708, %v5880
      %v5913 = vadd.f32 %v5709, %v5881
      %v5914 = vadd.f32 %v5710, %v5882
      %v5915 = vadd.f32 %v5711, %v5883
      %v5916 = vadd.f32 %v5712, %v5884
      %v5917 = vadd.f32 %v5713, %v5885
      %v5918 = vadd.f32 %v5714, %v5886
      %v5919 = vadd.f32 %v5715, %v5887
      %v5920 = vadd.f32 %v5716, %v5888
      %v5921 = vadd.f32 %v5717, %v5889
      %v5922 = vadd.f32 %v5718, %v5890
      %v5923 = vadd.f32 %v5719, %v5891
      %v5924 = vadd.f32 %v5720, %v5892
      %v5925 = vadd.f32 %v5721, %v5893
      %v5926 = vadd.f32 %v5722, %v5894
      %v5927 = vadd.f32 %v5723, %v5895
      %v5928 = vadd.f32 %v5724, %v5896
      %v5929 = vadd.f32 %v5725, %v5897
      %v5930 = vadd.f32 %v5726, %v5898
      %v5931 = vadd.f32 %v5727, %v5899
      %v5932 = vadd.f32 %v5728, %v5900
      %v5933 = vadd.f32 %v5729, %v5901
      %v5934 = vadd.f32 %v5730, %v5902
      %v5935 = vadd.f32 %v5731, %v5903
      %v5936 = vadd.f32 %v5732, %v5904
      %v5937 = vadd.f32 %v5733, %v5905
      %v5938 = vadd.f32 %v5734, %v5906
      %v5939 = vadd.f32 %v5735, %v5907
      %v5940 = vadd.f32 %v5736, %v5908
      %v5941 = vadd.f32 %v5737, %v5909
      %v5942 = vadd.f32 %v5738, %v5910
      %v5943 = vld [vmem:[#allocation2 + $0x117] sm:$0xff]
      %v5944 = vld [vmem:[#allocation2 + $0x11f] sm:$0xff]
      %v5945 = vmul.f32 %v5411, %v258
      %v5946 = vmul.f32 %v5412, %v259
      %v5947 = vmul.f32 %v5413, %v260
      %v5948 = vmul.f32 %v5414, %v261
      %v5949 = vmul.f32 %v5415, %v262
      %v5950 = vmul.f32 %v5416, %v263
      %v5951 = vmul.f32 %v5417, %v264
      %v5952 = vmul.f32 %v5418, %v265
      %v5953 = vmul.f32 %v5419, %v266
      %v5954 = vmul.f32 %v5420, %v267
      %v5955 = vmul.f32 %v5421, %v268
      %v5956 = vmul.f32 %v5422, %v269
      %v5957 = vmul.f32 %v5423, %v270
      %v5958 = vmul.f32 %v5424, %v271
      %v5959 = vmul.f32 %v5425, %v272
      %v5960 = vmul.f32 %v5426, %v273
      %v5961 = vmul.f32 %v5427, %v274
      %v5962 = vmul.f32 %v5428, %v275
      %v5963 = vmul.f32 %v5429, %v276
      %v5964 = vmul.f32 %v5430, %v277
      %v5965 = vmul.f32 %v5431, %v278
      %v5966 = vmul.f32 %v5432, %v279
      %v5967 = vmul.f32 %v5433, %v280
      %v5968 = vmul.f32 %v5434, %v281
      %v5969 = vmul.f32 %v5435, %v282
      %v5970 = vmul.f32 %v5436, %v283
      %v5971 = vmul.f32 %v5437, %v284
      %v5972 = vmul.f32 %v5438, %v285
      %v5973 = vmul.f32 %v5739, %v286
      %v5974 = vmul.f32 %v5740, %v287
      %v5975 = vmul.f32 %v5943, %v288
      %v5976 = vmul.f32 %v5944, %v289
      %v5977 = vlaneseq
      %v5978 = vshrl.u32 %v5977, 7
      %v5979 = vsub.s32 6, %v5978
      %v5980 = vrot.slane %v5369, %v5979
      %v5981 = vmul.f32 %v5945, %v5980
      %v5982 = vmul.f32 %v5946, %v5980
      %v5983 = vmul.f32 %v5947, %v5980
      %v5984 = vmul.f32 %v5948, %v5980
      %v5985 = vmul.f32 %v5949, %v5980
      %v5986 = vmul.f32 %v5950, %v5980
      %v5987 = vmul.f32 %v5951, %v5980
      %v5988 = vmul.f32 %v5952, %v5980
      %v5989 = vmul.f32 %v5953, %v5980
      %v5990 = vmul.f32 %v5954, %v5980
      %v5991 = vmul.f32 %v5955, %v5980
      %v5992 = vmul.f32 %v5956, %v5980
      %v5993 = vmul.f32 %v5957, %v5980
      %v5994 = vmul.f32 %v5958, %v5980
      %v5995 = vmul.f32 %v5959, %v5980
      %v5996 = vmul.f32 %v5960, %v5980
      %v5997 = vmul.f32 %v5961, %v5980
      %v5998 = vmul.f32 %v5962, %v5980
      %v5999 = vmul.f32 %v5963, %v5980
      %v6000 = vmul.f32 %v5964, %v5980
      %v6001 = vmul.f32 %v5965, %v5980
      %v6002 = vmul.f32 %v5966, %v5980
      %v6003 = vmul.f32 %v5967, %v5980
      %v6004 = vmul.f32 %v5968, %v5980
      %v6005 = vmul.f32 %v5969, %v5980
      %v6006 = vmul.f32 %v5970, %v5980
      %v6007 = vmul.f32 %v5971, %v5980
      %v6008 = vmul.f32 %v5972, %v5980
      %v6009 = vmul.f32 %v5973, %v5980
      %v6010 = vmul.f32 %v5974, %v5980
      %v6011 = vmul.f32 %v5975, %v5980
      %v6012 = vmul.f32 %v5976, %v5980
      %v6013 = vadd.f32 %v5809, %v5981
      %v6014 = vadd.f32 %v5810, %v5982
      %v6015 = vadd.f32 %v5811, %v5983
      %v6016 = vadd.f32 %v5812, %v5984
      %v6017 = vadd.f32 %v5813, %v5985
      %v6018 = vadd.f32 %v5814, %v5986
      %v6019 = vadd.f32 %v5815, %v5987
      %v6020 = vadd.f32 %v5816, %v5988
      %v6021 = vadd.f32 %v5817, %v5989
      %v6022 = vadd.f32 %v5818, %v5990
      %v6023 = vadd.f32 %v5819, %v5991
      %v6024 = vadd.f32 %v5820, %v5992
      %v6025 = vadd.f32 %v5821, %v5993
      %v6026 = vadd.f32 %v5822, %v5994
      %v6027 = vadd.f32 %v5823, %v5995
      %v6028 = vadd.f32 %v5824, %v5996
      %v6029 = vadd.f32 %v5825, %v5997
      %v6030 = vadd.f32 %v5826, %v5998
      %v6031 = vadd.f32 %v5827, %v5999
      %v6032 = vadd.f32 %v5828, %v6000
      %v6033 = vadd.f32 %v5829, %v6001
      %v6034 = vadd.f32 %v5830, %v6002
      %v6035 = vadd.f32 %v5831, %v6003
      %v6036 = vadd.f32 %v5832, %v6004
      %v6037 = vadd.f32 %v5833, %v6005
      %v6038 = vadd.f32 %v5834, %v6006
      %v6039 = vadd.f32 %v5835, %v6007
      %v6040 = vadd.f32 %v5836, %v6008
      %v6041 = vadd.f32 %v5837, %v6009
      %v6042 = vadd.f32 %v5838, %v6010
      %v6043 = vadd.f32 %v5839, %v6011
      %v6044 = vadd.f32 %v5840, %v6012
      %v6045 = vld [vmem:[#allocation2 + $0x108] sm:$0xff]
      %v6046 = vld [vmem:[#allocation2 + $0x110] sm:$0xff]
      %v6047 = vld [vmem:[#allocation2 + $0x118] sm:$0xff]
      %v6048 = vld [vmem:[#allocation2 + $0x120] sm:$0xff]
      %v6049 = vlaneseq
      %v6050 = vshrl.u32 %v6049, 7
      %v6051 = vsub.s32 7, %v6050
      %v6052 = vrot.slane %v5369, %v6051
      %v6053 = vmul.f32 %v5511, %v6052
      %v6054 = vmul.f32 %v5512, %v6052
      %v6055 = vmul.f32 %v5513, %v6052
      %v6056 = vmul.f32 %v5514, %v6052
      %v6057 = vmul.f32 %v5515, %v6052
      %v6058 = vmul.f32 %v5516, %v6052
      %v6059 = vmul.f32 %v5517, %v6052
      %v6060 = vmul.f32 %v5518, %v6052
      %v6061 = vmul.f32 %v5519, %v6052
      %v6062 = vmul.f32 %v5520, %v6052
      %v6063 = vmul.f32 %v5521, %v6052
      %v6064 = vmul.f32 %v5522, %v6052
      %v6065 = vmul.f32 %v5523, %v6052
      %v6066 = vmul.f32 %v5524, %v6052
      %v6067 = vmul.f32 %v5525, %v6052
      %v6068 = vmul.f32 %v5526, %v6052
      %v6069 = vmul.f32 %v5527, %v6052
      %v6070 = vmul.f32 %v5528, %v6052
      %v6071 = vmul.f32 %v5529, %v6052
      %v6072 = vmul.f32 %v5530, %v6052
      %v6073 = vmul.f32 %v5531, %v6052
      %v6074 = vmul.f32 %v5532, %v6052
      %v6075 = vmul.f32 %v5533, %v6052
      %v6076 = vmul.f32 %v5534, %v6052
      %v6077 = vmul.f32 %v5535, %v6052
      %v6078 = vmul.f32 %v5536, %v6052
      %v6079 = vmul.f32 %v5537, %v6052
      %v6080 = vmul.f32 %v5538, %v6052
      %v6081 = vmul.f32 %v6045, %v6052
      %v6082 = vmul.f32 %v6046, %v6052
      %v6083 = vmul.f32 %v6047, %v6052
      %v6084 = vmul.f32 %v6048, %v6052
      %v6085 = vadd.f32 %v5911, %v6053
      %v6086 = vadd.f32 %v5912, %v6054
      %v6087 = vadd.f32 %v5913, %v6055
      %v6088 = vadd.f32 %v5914, %v6056
      %v6089 = vadd.f32 %v5915, %v6057
      %v6090 = vadd.f32 %v5916, %v6058
      %v6091 = vadd.f32 %v5917, %v6059
      %v6092 = vadd.f32 %v5918, %v6060
      %v6093 = vadd.f32 %v5919, %v6061
      %v6094 = vadd.f32 %v5920, %v6062
      %v6095 = vadd.f32 %v5921, %v6063
      %v6096 = vadd.f32 %v5922, %v6064
      %v6097 = vadd.f32 %v5923, %v6065
      %v6098 = vadd.f32 %v5924, %v6066
      %v6099 = vadd.f32 %v5925, %v6067
      %v6100 = vadd.f32 %v5926, %v6068
      %v6101 = vadd.f32 %v5927, %v6069
      %v6102 = vadd.f32 %v5928, %v6070
      %v6103 = vadd.f32 %v5929, %v6071
      %v6104 = vadd.f32 %v5930, %v6072
      %v6105 = vadd.f32 %v5931, %v6073
      %v6106 = vadd.f32 %v5932, %v6074
      %v6107 = vadd.f32 %v5933, %v6075
      %v6108 = vadd.f32 %v5934, %v6076
      %v6109 = vadd.f32 %v5935, %v6077
      %v6110 = vadd.f32 %v5936, %v6078
      %v6111 = vadd.f32 %v5937, %v6079
      %v6112 = vadd.f32 %v5938, %v6080
      %v6113 = vadd.f32 %v5939, %v6081
      %v6114 = vadd.f32 %v5940, %v6082
      %v6115 = vadd.f32 %v5941, %v6083
      %v6116 = vadd.f32 %v5942, %v6084
      %v6117 = vld [vmem:[#allocation2 + $0x119] sm:$0xff]
      %v6118 = vld [vmem:[#allocation2 + $0x121] sm:$0xff]
      %v6119 = vmul.f32 %v5611, %v291
      %v6120 = vmul.f32 %v5612, %v292
      %v6121 = vmul.f32 %v5613, %v293
      %v6122 = vmul.f32 %v5614, %v294
      %v6123 = vmul.f32 %v5615, %v295
      %v6124 = vmul.f32 %v5616, %v296
      %v6125 = vmul.f32 %v5617, %v297
      %v6126 = vmul.f32 %v5618, %v298
      %v6127 = vmul.f32 %v5619, %v299
      %v6128 = vmul.f32 %v5620, %v300
      %v6129 = vmul.f32 %v5621, %v301
      %v6130 = vmul.f32 %v5622, %v302
      %v6131 = vmul.f32 %v5623, %v303
      %v6132 = vmul.f32 %v5624, %v304
      %v6133 = vmul.f32 %v5625, %v305
      %v6134 = vmul.f32 %v5626, %v306
      %v6135 = vmul.f32 %v5627, %v307
      %v6136 = vmul.f32 %v5628, %v308
      %v6137 = vmul.f32 %v5629, %v309
      %v6138 = vmul.f32 %v5630, %v310
      %v6139 = vmul.f32 %v5631, %v311
      %v6140 = vmul.f32 %v5632, %v312
      %v6141 = vmul.f32 %v5633, %v313
      %v6142 = vmul.f32 %v5634, %v314
      %v6143 = vmul.f32 %v5635, %v315
      %v6144 = vmul.f32 %v5636, %v316
      %v6145 = vmul.f32 %v5637, %v317
      %v6146 = vmul.f32 %v5638, %v318
      %v6147 = vmul.f32 %v5841, %v319
      %v6148 = vmul.f32 %v5842, %v320
      %v6149 = vmul.f32 %v6117, %v321
      %v6150 = vmul.f32 %v6118, %v322
      %v6151 = vlaneseq
      %v6152 = vshrl.u32 %v6151, 7
      %v6153 = vsub.s32 0, %v6152
      %v6154 = vrot.slane %v5370, %v6153
      %v6155 = vmul.f32 %v6119, %v6154
      %v6156 = vmul.f32 %v6120, %v6154
      %v6157 = vmul.f32 %v6121, %v6154
      %v6158 = vmul.f32 %v6122, %v6154
      %v6159 = vmul.f32 %v6123, %v6154
      %v6160 = vmul.f32 %v6124, %v6154
      %v6161 = vmul.f32 %v6125, %v6154
      %v6162 = vmul.f32 %v6126, %v6154
      %v6163 = vmul.f32 %v6127, %v6154
      %v6164 = vmul.f32 %v6128, %v6154
      %v6165 = vmul.f32 %v6129, %v6154
      %v6166 = vmul.f32 %v6130, %v6154
      %v6167 = vmul.f32 %v6131, %v6154
      %v6168 = vmul.f32 %v6132, %v6154
      %v6169 = vmul.f32 %v6133, %v6154
      %v6170 = vmul.f32 %v6134, %v6154
      %v6171 = vmul.f32 %v6135, %v6154
      %v6172 = vmul.f32 %v6136, %v6154
      %v6173 = vmul.f32 %v6137, %v6154
      %v6174 = vmul.f32 %v6138, %v6154
      %v6175 = vmul.f32 %v6139, %v6154
      %v6176 = vmul.f32 %v6140, %v6154
      %v6177 = vmul.f32 %v6141, %v6154
      %v6178 = vmul.f32 %v6142, %v6154
      %v6179 = vmul.f32 %v6143, %v6154
      %v6180 = vmul.f32 %v6144, %v6154
      %v6181 = vmul.f32 %v6145, %v6154
      %v6182 = vmul.f32 %v6146, %v6154
      %v6183 = vmul.f32 %v6147, %v6154
      %v6184 = vmul.f32 %v6148, %v6154
      %v6185 = vmul.f32 %v6149, %v6154
      %v6186 = vmul.f32 %v6150, %v6154
      %v6187 = vadd.f32 %v6013, %v6155
      %v6188 = vadd.f32 %v6014, %v6156
      %v6189 = vadd.f32 %v6015, %v6157
      %v6190 = vadd.f32 %v6016, %v6158
      %v6191 = vadd.f32 %v6017, %v6159
      %v6192 = vadd.f32 %v6018, %v6160
      %v6193 = vadd.f32 %v6019, %v6161
      %v6194 = vadd.f32 %v6020, %v6162
      %v6195 = vadd.f32 %v6021, %v6163
      %v6196 = vadd.f32 %v6022, %v6164
      %v6197 = vadd.f32 %v6023, %v6165
      %v6198 = vadd.f32 %v6024, %v6166
      %v6199 = vadd.f32 %v6025, %v6167
      %v6200 = vadd.f32 %v6026, %v6168
      %v6201 = vadd.f32 %v6027, %v6169
      %v6202 = vadd.f32 %v6028, %v6170
      %v6203 = vadd.f32 %v6029, %v6171
      %v6204 = vadd.f32 %v6030, %v6172
      %v6205 = vadd.f32 %v6031, %v6173
      %v6206 = vadd.f32 %v6032, %v6174
      %v6207 = vadd.f32 %v6033, %v6175
      %v6208 = vadd.f32 %v6034, %v6176
      %v6209 = vadd.f32 %v6035, %v6177
      %v6210 = vadd.f32 %v6036, %v6178
      %v6211 = vadd.f32 %v6037, %v6179
      %v6212 = vadd.f32 %v6038, %v6180
      %v6213 = vadd.f32 %v6039, %v6181
      %v6214 = vadd.f32 %v6040, %v6182
      %v6215 = vadd.f32 %v6041, %v6183
      %v6216 = vadd.f32 %v6042, %v6184
      %v6217 = vadd.f32 %v6043, %v6185
      %v6218 = vadd.f32 %v6044, %v6186
      %v6219 = vadd.f32 %v6187, %v6085
      %v6220 = vadd.f32 %v6188, %v6086
      %v6221 = vadd.f32 %v6189, %v6087
      %v6222 = vadd.f32 %v6190, %v6088
      %v6223 = vadd.f32 %v6191, %v6089
      %v6224 = vadd.f32 %v6192, %v6090
      %v6225 = vadd.f32 %v6193, %v6091
      %v6226 = vadd.f32 %v6194, %v6092
      %v6227 = vadd.f32 %v6195, %v6093
      %v6228 = vadd.f32 %v6196, %v6094
      %v6229 = vadd.f32 %v6197, %v6095
      %v6230 = vadd.f32 %v6198, %v6096
      %v6231 = vadd.f32 %v6199, %v6097
      %v6232 = vadd.f32 %v6200, %v6098
      %v6233 = vadd.f32 %v6201, %v6099
      %v6234 = vadd.f32 %v6202, %v6100
      %v6235 = vadd.f32 %v6203, %v6101
      %v6236 = vadd.f32 %v6204, %v6102
      %v6237 = vadd.f32 %v6205, %v6103
      %v6238 = vadd.f32 %v6206, %v6104
      %v6239 = vadd.f32 %v6207, %v6105
      %v6240 = vadd.f32 %v6208, %v6106
      %v6241 = vadd.f32 %v6209, %v6107
      %v6242 = vadd.f32 %v6210, %v6108
      %v6243 = vadd.f32 %v6211, %v6109
      %v6244 = vadd.f32 %v6212, %v6110
      %v6245 = vadd.f32 %v6213, %v6111
      %v6246 = vadd.f32 %v6214, %v6112
      %v6247 = vadd.f32 %v6215, %v6113
      %v6248 = vadd.f32 %v6216, %v6114
      %v6249 = vadd.f32 %v6217, %v6115
      %v6250 = vadd.f32 %v6218, %v6116
      %s6251 = scalar_lea.vmem %s4, 1
      %v6252 = vld [vmem:[%s6251] sm:$0x1]
      %v6254 = vlaneseq
      %v6255 = vshrl.u32 %v6254, 7
      %v6256 = vsub.s32 0, %v6255
      %v6257 = vrot.slane %v6252, %v6256
      %v6259 = vadd.f32 %v6219, %v6257
      %v6260 = vadd.f32 %v6220, %v6257
      %v6261 = vadd.f32 %v6221, %v6257
      %v6262 = vadd.f32 %v6222, %v6257
      %v6263 = vadd.f32 %v6223, %v6257
      %v6264 = vadd.f32 %v6224, %v6257
      %v6265 = vadd.f32 %v6225, %v6257
      %v6266 = vadd.f32 %v6226, %v6257
      %v6267 = vadd.f32 %v6227, %v6257
      %v6268 = vadd.f32 %v6228, %v6257
      %v6269 = vadd.f32 %v6229, %v6257
      %v6270 = vadd.f32 %v6230, %v6257
      %v6271 = vadd.f32 %v6231, %v6257
      %v6272 = vadd.f32 %v6232, %v6257
      %v6273 = vadd.f32 %v6233, %v6257
      %v6274 = vadd.f32 %v6234, %v6257
      %v6275 = vadd.f32 %v6235, %v6257
      %v6276 = vadd.f32 %v6236, %v6257
      %v6277 = vadd.f32 %v6237, %v6257
      %v6278 = vadd.f32 %v6238, %v6257
      %v6279 = vadd.f32 %v6239, %v6257
      %v6280 = vadd.f32 %v6240, %v6257
      %v6281 = vadd.f32 %v6241, %v6257
      %v6282 = vadd.f32 %v6242, %v6257
      %v6283 = vadd.f32 %v6243, %v6257
      %v6284 = vadd.f32 %v6244, %v6257
      %v6285 = vadd.f32 %v6245, %v6257
      %v6286 = vadd.f32 %v6246, %v6257
      %v6287 = vadd.f32 %v6247, %v6257
      %v6288 = vadd.f32 %v6248, %v6257
      %v6289 = vadd.f32 %v6249, %v6257
      %v6290 = vadd.f32 %v6250, %v6257
      %v6291 = vmax.f32 %v6259, 0.0
      %v6292 = vmax.f32 %v6260, 0.0
      %v6293 = vmax.f32 %v6261, 0.0
      %v6294 = vmax.f32 %v6262, 0.0
      %v6295 = vmax.f32 %v6263, 0.0
      %v6296 = vmax.f32 %v6264, 0.0
      %v6297 = vmax.f32 %v6265, 0.0
      %v6298 = vmax.f32 %v6266, 0.0
      %v6299 = vmax.f32 %v6267, 0.0
      %v6300 = vmax.f32 %v6268, 0.0
      %v6301 = vmax.f32 %v6269, 0.0
      %v6302 = vmax.f32 %v6270, 0.0
      %v6303 = vmax.f32 %v6271, 0.0
      %v6304 = vmax.f32 %v6272, 0.0
      %v6305 = vmax.f32 %v6273, 0.0
      %v6306 = vmax.f32 %v6274, 0.0
      %v6307 = vmax.f32 %v6275, 0.0
      %v6308 = vmax.f32 %v6276, 0.0
      %v6309 = vmax.f32 %v6277, 0.0
      %v6310 = vmax.f32 %v6278, 0.0
      %v6311 = vmax.f32 %v6279, 0.0
      %v6312 = vmax.f32 %v6280, 0.0
      %v6313 = vmax.f32 %v6281, 0.0
      %v6314 = vmax.f32 %v6282, 0.0
      %v6315 = vmax.f32 %v6283, 0.0
      %v6316 = vmax.f32 %v6284, 0.0
      %v6317 = vmax.f32 %v6285, 0.0
      %v6318 = vmax.f32 %v6286, 0.0
      %v6319 = vmax.f32 %v6287, 0.0
      %v6320 = vmax.f32 %v6288, 0.0
      %v6321 = vmax.f32 %v6289, 0.0
      %v6322 = vmax.f32 %v6290, 0.0
      %s6323 = scalar_lea.vmem %s1, 256
      %v6324 = vld [vmem:[%s6323] sm:$0xff]
      %v6325 = vld [vmem:[%s6323 + $0x8] sm:$0xff]
      %v6326 = vld [vmem:[%s6323 + $0x10] sm:$0xff]
      %v6327 = vld [vmem:[%s6323 + $0x18] sm:$0xff]
      %v6328 = vld [vmem:[%s6323 + $0x20] sm:$0xff]
      %v6329 = vld [vmem:[%s6323 + $0x28] sm:$0xff]
      %v6330 = vld [vmem:[%s6323 + $0x30] sm:$0xff]
      %v6331 = vld [vmem:[%s6323 + $0x38] sm:$0xff]
      %v6332 = vld [vmem:[%s6323 + $0x40] sm:$0xff]
      %v6333 = vld [vmem:[%s6323 + $0x48] sm:$0xff]
      %v6334 = vld [vmem:[%s6323 + $0x50] sm:$0xff]
      %v6335 = vld [vmem:[%s6323 + $0x58] sm:$0xff]
      %v6336 = vld [vmem:[%s6323 + $0x60] sm:$0xff]
      %v6337 = vld [vmem:[%s6323 + $0x68] sm:$0xff]
      %v6338 = vld [vmem:[%s6323 + $0x70] sm:$0xff]
      %v6339 = vld [vmem:[%s6323 + $0x78] sm:$0xff]
      %s6340 = scalar_lea.vmem %s2, 2
      %v6341 = vld [vmem:[%s6340] sm:$0x1]
      %v6343 = vlaneseq
      %v6344 = vshrl.u32 %v6343, 7
      %v6345 = vsub.s32 0, %v6344
      %v6346 = vrot.slane %v6341, %v6345
      %6348 = vmatprep.subr.mxu0 0.0
      %v6349 = vand.u32 %v6324, 4294901760
      %6350 = vmatpush1.msra.mxu0 %v6349
      %6351 = vmatprep.subr.mxu0 0.0
      %v6352 = vand.u32 %v6325, 4294901760
      %6353 = vmatpush1.msra.mxu0 %v6352
      %6354 = vmatprep.subr.mxu0 0.0
      %v6355 = vand.u32 %v6326, 4294901760
      %6356 = vmatpush1.msra.mxu0 %v6355
      %6357 = vmatprep.subr.mxu0 0.0
      %v6358 = vand.u32 %v6327, 4294901760
      %6359 = vmatpush1.msra.mxu0 %v6358
      %6360 = vmatprep.subr.mxu0 0.0
      %v6361 = vand.u32 %v6328, 4294901760
      %6362 = vmatpush1.msra.mxu0 %v6361
      %6363 = vmatprep.subr.mxu0 0.0
      %v6364 = vand.u32 %v6329, 4294901760
      %6365 = vmatpush1.msra.mxu0 %v6364
      %6366 = vmatprep.subr.mxu0 0.0
      %v6367 = vand.u32 %v6330, 4294901760
      %6368 = vmatpush1.msra.mxu0 %v6367
      %6369 = vmatprep.subr.mxu0 0.0
      %v6370 = vand.u32 %v6331, 4294901760
      %6371 = vmatpush1.msra.mxu0 %v6370
      %6372 = vmatprep.subr.mxu0 0.0
      %v6373 = vand.u32 %v6332, 4294901760
      %6374 = vmatpush1.msra.mxu0 %v6373
      %6375 = vmatprep.subr.mxu0 0.0
      %v6376 = vand.u32 %v6333, 4294901760
      %6377 = vmatpush1.msra.mxu0 %v6376
      %6378 = vmatprep.subr.mxu0 0.0
      %v6379 = vand.u32 %v6334, 4294901760
      %6380 = vmatpush1.msra.mxu0 %v6379
      %6381 = vmatprep.subr.mxu0 0.0
      %v6382 = vand.u32 %v6335, 4294901760
      %6383 = vmatpush1.msra.mxu0 %v6382
      %6384 = vmatprep.subr.mxu0 0.0
      %v6385 = vand.u32 %v6336, 4294901760
      %6386 = vmatpush1.msra.mxu0 %v6385
      %6387 = vmatprep.subr.mxu0 0.0
      %v6388 = vand.u32 %v6337, 4294901760
      %6389 = vmatpush1.msra.mxu0 %v6388
      %6390 = vmatprep.subr.mxu0 0.0
      %v6391 = vand.u32 %v6338, 4294901760
      %6392 = vmatpush1.msra.mxu0 %v6391
      %6393 = vmatprep.subr.mxu0 0.0
      %v6394 = vand.u32 %v6339, 4294901760
      %6395 = vmatpush1.msra.mxu0 %v6394
      %6396 = vmatprep.subr.mxu0 0.0
      %6397 = vmatpush1.msra.mxu0 0.0
      %6398 = vmatprep.subr.mxu0 0.0
      %6399 = vmatpush1.msra.mxu0 0.0
      %6400 = vmatprep.subr.mxu0 0.0
      %6401 = vmatpush1.msra.mxu0 0.0
      %6402 = vmatprep.subr.mxu0 0.0
      %6403 = vmatpush1.msra.mxu0 0.0
      %6404 = vmatprep.subr.mxu0 0.0
      %6405 = vmatpush1.msra.mxu0 0.0
      %6406 = vmatprep.subr.mxu0 0.0
      %6407 = vmatpush1.msra.mxu0 0.0
      %6408 = vmatprep.subr.mxu0 0.0
      %6409 = vmatpush1.msra.mxu0 0.0
      %6410 = vmatprep.subr.mxu0 0.0
      %6411 = vmatpush1.msra.mxu0 0.0
      %6412 = vmatprep.subr.mxu0 0.0
      %6413 = vmatpush1.msra.mxu0 0.0
      %6414 = vmatprep.subr.mxu0 0.0
      %6415 = vmatpush1.msra.mxu0 0.0
      %6416 = vmatprep.subr.mxu0 0.0
      %6417 = vmatpush1.msra.mxu0 0.0
      %6418 = vmatprep.subr.mxu0 0.0
      %6419 = vmatpush1.msra.mxu0 0.0
      %6420 = vmatprep.subr.mxu0 0.0
      %6421 = vmatpush1.msra.mxu0 0.0
      %6422 = vmatprep.subr.mxu0 0.0
      %6423 = vmatpush1.msra.mxu0 0.0
      %6424 = vmatprep.subr.mxu0 0.0
      %6425 = vmatpush1.msra.mxu0 0.0
      %6426 = vmatprep.subr.mxu0 0.0
      %6427 = vmatpush1.msra.mxu0 0.0
      %6428 = vmatprep.mubr.f32.mxu0 0.0
      %v6429 = vand.u32 %v6291, 4294901760
      %v6430 = vsub.f32 %v6291, %v6429
      %v6431 = vand.u32 %v6430, 4294901760
      %v6432 = vsub.f32 %v6430, %v6431
      %v6433 = vand.u32 %v6432, 4294901760
      %6434 = vmatmul.mubr.f32.gmra.mrb[0].mxu0 %v6433
      %v6435 = vpop.f32.mrb[0].mxu0
      %v6436 = vadd.f32 %v6346, %v6435
      %v6437 = vpop.f32.mrb[0].mxu0
      %6438 = vmatprep.mubr.f32.mxu0 0.0
      %v6439 = vand.u32 %v6292, 4294901760
      %v6440 = vsub.f32 %v6292, %v6439
      %v6441 = vand.u32 %v6440, 4294901760
      %v6442 = vsub.f32 %v6440, %v6441
      %v6443 = vand.u32 %v6442, 4294901760
      %6444 = vmatmul.mubr.f32.gmra.mrb[0].mxu0 %v6443
      %v6445 = vpop.f32.mrb[0].mxu0
      %v6446 = vadd.f32 %v6346, %v6445
      %v6447 = vpop.f32.mrb[0].mxu0
      %6448 = vmatprep.mubr.f32.mxu0 0.0
      %v6449 = vand.u32 %v6293, 4294901760
      %v6450 = vsub.f32 %v6293, %v6449
      %v6451 = vand.u32 %v6450, 4294901760
      %v6452 = vsub.f32 %v6450, %v6451
      %v6453 = vand.u32 %v6452, 4294901760
      %6454 = vmatmul.mubr.f32.gmra.mrb[0].mxu0 %v6453
      %v6455 = vpop.f32.mrb[0].mxu0
      %v6456 = vadd.f32 %v6346, %v6455
      %v6457 = vpop.f32.mrb[0].mxu0
      %6458 = vmatprep.mubr.f32.mxu0 0.0
      %v6459 = vand.u32 %v6294, 4294901760
      %v6460 = vsub.f32 %v6294, %v6459
      %v6461 = vand.u32 %v6460, 4294901760
      %v6462 = vsub.f32 %v6460, %v6461
      %v6463 = vand.u32 %v6462, 4294901760
      %6464 = vmatmul.mubr.f32.gmra.mrb[0].mxu0 %v6463
      %v6465 = vpop.f32.mrb[0].mxu0
      %v6466 = vadd.f32 %v6346, %v6465
      %v6467 = vpop.f32.mrb[0].mxu0
      %6468 = vmatprep.mubr.f32.mxu0 0.0
      %v6469 = vand.u32 %v6295, 4294901760
      %v6470 = vsub.f32 %v6295, %v6469
      %v6471 = vand.u32 %v6470, 4294901760
      %v6472 = vsub.f32 %v6470, %v6471
      %v6473 = vand.u32 %v6472, 4294901760
      %6474 = vmatmul.mubr.f32.gmra.mrb[0].mxu0 %v6473
      %v6475 = vpop.f32.mrb[0].mxu0
      %v6476 = vadd.f32 %v6346, %v6475
      %v6477 = vpop.f32.mrb[0].mxu0
      %6478 = vmatprep.mubr.f32.mxu0 0.0
      %v6479 = vand.u32 %v6296, 4294901760
      %v6480 = vsub.f32 %v6296, %v6479
      %v6481 = vand.u32 %v6480, 4294901760
      %v6482 = vsub.f32 %v6480, %v6481
      %v6483 = vand.u32 %v6482, 4294901760
      %6484 = vmatmul.mubr.f32.gmra.mrb[0].mxu0 %v6483
      %v6485 = vpop.f32.mrb[0].mxu0
      %v6486 = vadd.f32 %v6346, %v6485
      %v6487 = vpop.f32.mrb[0].mxu0
      %6488 = vmatprep.mubr.f32.mxu0 0.0
      %v6489 = vand.u32 %v6297, 4294901760
      %v6490 = vsub.f32 %v6297, %v6489
      %v6491 = vand.u32 %v6490, 4294901760
      %v6492 = vsub.f32 %v6490, %v6491
      %v6493 = vand.u32 %v6492, 4294901760
      %6494 = vmatmul.mubr.f32.gmra.mrb[0].mxu0 %v6493
      %v6495 = vpop.f32.mrb[0].mxu0
      %v6496 = vadd.f32 %v6346, %v6495
      %v6497 = vpop.f32.mrb[0].mxu0
      %6498 = vmatprep.mubr.f32.mxu0 0.0
      %v6499 = vand.u32 %v6298, 4294901760
      %v6500 = vsub.f32 %v6298, %v6499
      %v6501 = vand.u32 %v6500, 4294901760
      %v6502 = vsub.f32 %v6500, %v6501
      %v6503 = vand.u32 %v6502, 4294901760
      %6504 = vmatmul.mubr.f32.gmra.mrb[0].mxu0 %v6503
      %v6505 = vpop.f32.mrb[0].mxu0
      %v6506 = vadd.f32 %v6346, %v6505
      %v6507 = vpop.f32.mrb[0].mxu0
      %6508 = vmatprep.mubr.f32.mxu0 0.0
      %v6509 = vand.u32 %v6299, 4294901760
      %v6510 = vsub.f32 %v6299, %v6509
      %v6511 = vand.u32 %v6510, 4294901760
      %v6512 = vsub.f32 %v6510, %v6511
      %v6513 = vand.u32 %v6512, 4294901760
      %6514 = vmatmul.mubr.f32.gmra.mrb[0].mxu0 %v6513
      %v6515 = vpop.f32.mrb[0].mxu0
      %v6516 = vadd.f32 %v6346, %v6515
      %v6517 = vpop.f32.mrb[0].mxu0
      %6518 = vmatprep.mubr.f32.mxu0 0.0
      %v6519 = vand.u32 %v6300, 4294901760
      %v6520 = vsub.f32 %v6300, %v6519
      %v6521 = vand.u32 %v6520, 4294901760
      %v6522 = vsub.f32 %v6520, %v6521
      %v6523 = vand.u32 %v6522, 4294901760
      %6524 = vmatmul.mubr.f32.gmra.mrb[0].mxu0 %v6523
      %v6525 = vpop.f32.mrb[0].mxu0
      %v6526 = vadd.f32 %v6346, %v6525
      %v6527 = vpop.f32.mrb[0].mxu0
      %6528 = vmatprep.mubr.f32.mxu0 0.0
      %v6529 = vand.u32 %v6301, 4294901760
      %v6530 = vsub.f32 %v6301, %v6529
      %v6531 = vand.u32 %v6530, 4294901760
      %v6532 = vsub.f32 %v6530, %v6531
      %v6533 = vand.u32 %v6532, 4294901760
      %6534 = vmatmul.mubr.f32.gmra.mrb[0].mxu0 %v6533
      %v6535 = vpop.f32.mrb[0].mxu0
      %v6536 = vadd.f32 %v6346, %v6535
      %v6537 = vpop.f32.mrb[0].mxu0
      %6538 = vmatprep.mubr.f32.mxu0 0.0
      %v6539 = vand.u32 %v6302, 4294901760
      %v6540 = vsub.f32 %v6302, %v6539
      %v6541 = vand.u32 %v6540, 4294901760
      %v6542 = vsub.f32 %v6540, %v6541
      %v6543 = vand.u32 %v6542, 4294901760
      %6544 = vmatmul.mubr.f32.gmra.mrb[0].mxu0 %v6543
      %v6545 = vpop.f32.mrb[0].mxu0
      %v6546 = vadd.f32 %v6346, %v6545
      %v6547 = vpop.f32.mrb[0].mxu0
      %6548 = vmatprep.mubr.f32.mxu0 0.0
      %v6549 = vand.u32 %v6303, 4294901760
      %v6550 = vsub.f32 %v6303, %v6549
      %v6551 = vand.u32 %v6550, 4294901760
      %v6552 = vsub.f32 %v6550, %v6551
      %v6553 = vand.u32 %v6552, 4294901760
      %6554 = vmatmul.mubr.f32.gmra.mrb[0].mxu0 %v6553
      %v6555 = vpop.f32.mrb[0].mxu0
      %v6556 = vadd.f32 %v6346, %v6555
      %v6557 = vpop.f32.mrb[0].mxu0
      %6558 = vmatprep.mubr.f32.mxu0 0.0
      %v6559 = vand.u32 %v6304, 4294901760
      %v6560 = vsub.f32 %v6304, %v6559
      %v6561 = vand.u32 %v6560, 4294901760
      %v6562 = vsub.f32 %v6560, %v6561
      %v6563 = vand.u32 %v6562, 4294901760
      %6564 = vmatmul.mubr.f32.gmra.mrb[0].mxu0 %v6563
      %v6565 = vpop.f32.mrb[0].mxu0
      %v6566 = vadd.f32 %v6346, %v6565
      %v6567 = vpop.f32.mrb[0].mxu0
      %6568 = vmatprep.mubr.f32.mxu0 0.0
      %v6569 = vand.u32 %v6305, 4294901760
      %v6570 = vsub.f32 %v6305, %v6569
      %v6571 = vand.u32 %v6570, 4294901760
      %v6572 = vsub.f32 %v6570, %v6571
      %v6573 = vand.u32 %v6572, 4294901760
      %6574 = vmatmul.mubr.f32.gmra.mrb[0].mxu0 %v6573
      %v6575 = vpop.f32.mrb[0].mxu0
      %v6576 = vadd.f32 %v6346, %v6575
      %v6577 = vpop.f32.mrb[0].mxu0
      %6578 = vmatprep.mubr.f32.mxu0 0.0
      %v6579 = vand.u32 %v6306, 4294901760
      %v6580 = vsub.f32 %v6306, %v6579
      %v6581 = vand.u32 %v6580, 4294901760
      %v6582 = vsub.f32 %v6580, %v6581
      %v6583 = vand.u32 %v6582, 4294901760
      %6584 = vmatmul.mubr.f32.gmra.mrb[0].mxu0 %v6583
      %v6585 = vpop.f32.mrb[0].mxu0
      %v6586 = vadd.f32 %v6346, %v6585
      %v6587 = vpop.f32.mrb[0].mxu0
      %6588 = vmatprep.mubr.f32.mxu0 0.0
      %v6589 = vand.u32 %v6307, 4294901760
      %v6590 = vsub.f32 %v6307, %v6589
      %v6591 = vand.u32 %v6590, 4294901760
      %v6592 = vsub.f32 %v6590, %v6591
      %v6593 = vand.u32 %v6592, 4294901760
      %6594 = vmatmul.mubr.f32.gmra.mrb[0].mxu0 %v6593
      %v6595 = vpop.f32.mrb[0].mxu0
      %v6596 = vadd.f32 %v6346, %v6595
      %v6597 = vpop.f32.mrb[0].mxu0
      %6598 = vmatprep.mubr.f32.mxu0 0.0
      %v6599 = vand.u32 %v6308, 4294901760
      %v6600 = vsub.f32 %v6308, %v6599
      %v6601 = vand.u32 %v6600, 4294901760
      %v6602 = vsub.f32 %v6600, %v6601
      %v6603 = vand.u32 %v6602, 4294901760
      %6604 = vmatmul.mubr.f32.gmra.mrb[0].mxu0 %v6603
      %v6605 = vpop.f32.mrb[0].mxu0
      %v6606 = vadd.f32 %v6346, %v6605
      %v6607 = vpop.f32.mrb[0].mxu0
      %6608 = vmatprep.mubr.f32.mxu0 0.0
      %v6609 = vand.u32 %v6309, 4294901760
      %v6610 = vsub.f32 %v6309, %v6609
      %v6611 = vand.u32 %v6610, 4294901760
      %v6612 = vsub.f32 %v6610, %v6611
      %v6613 = vand.u32 %v6612, 4294901760
      %6614 = vmatmul.mubr.f32.gmra.mrb[0].mxu0 %v6613
      %v6615 = vpop.f32.mrb[0].mxu0
      %v6616 = vadd.f32 %v6346, %v6615
      %v6617 = vpop.f32.mrb[0].mxu0
      %6618 = vmatprep.mubr.f32.mxu0 0.0
      %v6619 = vand.u32 %v6310, 4294901760
      %v6620 = vsub.f32 %v6310, %v6619
      %v6621 = vand.u32 %v6620, 4294901760
      %v6622 = vsub.f32 %v6620, %v6621
      %v6623 = vand.u32 %v6622, 4294901760
      %6624 = vmatmul.mubr.f32.gmra.mrb[0].mxu0 %v6623
      %v6625 = vpop.f32.mrb[0].mxu0
      %v6626 = vadd.f32 %v6346, %v6625
      %v6627 = vpop.f32.mrb[0].mxu0
      %6628 = vmatprep.mubr.f32.mxu0 0.0
      %v6629 = vand.u32 %v6311, 4294901760
      %v6630 = vsub.f32 %v6311, %v6629
      %v6631 = vand.u32 %v6630, 4294901760
      %v6632 = vsub.f32 %v6630, %v6631
      %v6633 = vand.u32 %v6632, 4294901760
      %6634 = vmatmul.mubr.f32.gmra.mrb[0].mxu0 %v6633
      %v6635 = vpop.f32.mrb[0].mxu0
      %v6636 = vadd.f32 %v6346, %v6635
      %v6637 = vpop.f32.mrb[0].mxu0
      %6638 = vmatprep.mubr.f32.mxu0 0.0
      %v6639 = vand.u32 %v6312, 4294901760
      %v6640 = vsub.f32 %v6312, %v6639
      %v6641 = vand.u32 %v6640, 4294901760
      %v6642 = vsub.f32 %v6640, %v6641
      %v6643 = vand.u32 %v6642, 4294901760
      %6644 = vmatmul.mubr.f32.gmra.mrb[0].mxu0 %v6643
      %v6645 = vpop.f32.mrb[0].mxu0
      %v6646 = vadd.f32 %v6346, %v6645
      %v6647 = vpop.f32.mrb[0].mxu0
      %6648 = vmatprep.mubr.f32.mxu0 0.0
      %v6649 = vand.u32 %v6313, 4294901760
      %v6650 = vsub.f32 %v6313, %v6649
      %v6651 = vand.u32 %v6650, 4294901760
      %v6652 = vsub.f32 %v6650, %v6651
      %v6653 = vand.u32 %v6652, 4294901760
      %6654 = vmatmul.mubr.f32.gmra.mrb[0].mxu0 %v6653
      %v6655 = vpop.f32.mrb[0].mxu0
      %v6656 = vadd.f32 %v6346, %v6655
      %v6657 = vpop.f32.mrb[0].mxu0
      %6658 = vmatprep.mubr.f32.mxu0 0.0
      %v6659 = vand.u32 %v6314, 4294901760
      %v6660 = vsub.f32 %v6314, %v6659
      %v6661 = vand.u32 %v6660, 4294901760
      %v6662 = vsub.f32 %v6660, %v6661
      %v6663 = vand.u32 %v6662, 4294901760
      %6664 = vmatmul.mubr.f32.gmra.mrb[0].mxu0 %v6663
      %v6665 = vpop.f32.mrb[0].mxu0
      %v6666 = vadd.f32 %v6346, %v6665
      %v6667 = vpop.f32.mrb[0].mxu0
      %6668 = vmatprep.mubr.f32.mxu0 0.0
      %v6669 = vand.u32 %v6315, 4294901760
      %v6670 = vsub.f32 %v6315, %v6669
      %v6671 = vand.u32 %v6670, 4294901760
      %v6672 = vsub.f32 %v6670, %v6671
      %v6673 = vand.u32 %v6672, 4294901760
      %6674 = vmatmul.mubr.f32.gmra.mrb[0].mxu0 %v6673
      %v6675 = vpop.f32.mrb[0].mxu0
      %v6676 = vadd.f32 %v6346, %v6675
      %v6677 = vpop.f32.mrb[0].mxu0
      %6678 = vmatprep.mubr.f32.mxu0 0.0
      %v6679 = vand.u32 %v6316, 4294901760
      %v6680 = vsub.f32 %v6316, %v6679
      %v6681 = vand.u32 %v6680, 4294901760
      %v6682 = vsub.f32 %v6680, %v6681
      %v6683 = vand.u32 %v6682, 4294901760
      %6684 = vmatmul.mubr.f32.gmra.mrb[0].mxu0 %v6683
      %v6685 = vpop.f32.mrb[0].mxu0
      %v6686 = vadd.f32 %v6346, %v6685
      %v6687 = vpop.f32.mrb[0].mxu0
      %6688 = vmatprep.mubr.f32.mxu0 0.0
      %v6689 = vand.u32 %v6317, 4294901760
      %v6690 = vsub.f32 %v6317, %v6689
      %v6691 = vand.u32 %v6690, 4294901760
      %v6692 = vsub.f32 %v6690, %v6691
      %v6693 = vand.u32 %v6692, 4294901760
      %6694 = vmatmul.mubr.f32.gmra.mrb[0].mxu0 %v6693
      %v6695 = vpop.f32.mrb[0].mxu0
      %v6696 = vadd.f32 %v6346, %v6695
      %v6697 = vpop.f32.mrb[0].mxu0
      %6698 = vmatprep.mubr.f32.mxu0 0.0
      %v6699 = vand.u32 %v6318, 4294901760
      %v6700 = vsub.f32 %v6318, %v6699
      %v6701 = vand.u32 %v6700, 4294901760
      %v6702 = vsub.f32 %v6700, %v6701
      %v6703 = vand.u32 %v6702, 4294901760
      %6704 = vmatmul.mubr.f32.gmra.mrb[0].mxu0 %v6703
      %v6705 = vpop.f32.mrb[0].mxu0
      %v6706 = vadd.f32 %v6346, %v6705
      %v6707 = vpop.f32.mrb[0].mxu0
      %6708 = vmatprep.mubr.f32.mxu0 0.0
      %v6709 = vand.u32 %v6319, 4294901760
      %v6710 = vsub.f32 %v6319, %v6709
      %v6711 = vand.u32 %v6710, 4294901760
      %v6712 = vsub.f32 %v6710, %v6711
      %v6713 = vand.u32 %v6712, 4294901760
      %6714 = vmatmul.mubr.f32.gmra.mrb[0].mxu0 %v6713
      %v6715 = vpop.f32.mrb[0].mxu0
      %v6716 = vadd.f32 %v6346, %v6715
      %v6717 = vpop.f32.mrb[0].mxu0
      %6718 = vmatprep.mubr.f32.mxu0 0.0
      %v6719 = vand.u32 %v6320, 4294901760
      %v6720 = vsub.f32 %v6320, %v6719
      %v6721 = vand.u32 %v6720, 4294901760
      %v6722 = vsub.f32 %v6720, %v6721
      %v6723 = vand.u32 %v6722, 4294901760
      %6724 = vmatmul.mubr.f32.gmra.mrb[0].mxu0 %v6723
      %v6725 = vpop.f32.mrb[0].mxu0
      %v6726 = vadd.f32 %v6346, %v6725
      %v6727 = vpop.f32.mrb[0].mxu0
      %6728 = vmatprep.mubr.f32.mxu0 0.0
      %v6729 = vand.u32 %v6321, 4294901760
      %v6730 = vsub.f32 %v6321, %v6729
      %v6731 = vand.u32 %v6730, 4294901760
      %v6732 = vsub.f32 %v6730, %v6731
      %v6733 = vand.u32 %v6732, 4294901760
      %6734 = vmatmul.mubr.f32.gmra.mrb[0].mxu0 %v6733
      %v6735 = vpop.f32.mrb[0].mxu0
      %v6736 = vadd.f32 %v6346, %v6735
      %v6737 = vpop.f32.mrb[0].mxu0
      %6738 = vmatprep.mubr.f32.mxu0 0.0
      %v6739 = vand.u32 %v6322, 4294901760
      %v6740 = vsub.f32 %v6322, %v6739
      %v6741 = vand.u32 %v6740, 4294901760
      %v6742 = vsub.f32 %v6740, %v6741
      %v6743 = vand.u32 %v6742, 4294901760
      %6744 = vmatmul.mubr.f32.gmra.mrb[0].mxu0 %v6743
      %v6745 = vpop.f32.mrb[0].mxu0
      %v6746 = vadd.f32 %v6346, %v6745
      %v6747 = vpop.f32.mrb[0].mxu0
      %6748 = vdwg.mxu0
      %6749 = vmatprep.subr.mxu0 0.0
      %v6750 = vand.u32 %v6324, 4294901760
      %v6751 = vsub.f32 %v6324, %v6750
      %v6752 = vand.u32 %v6751, 4294901760
      %v6753 = vsub.f32 %v6751, %v6752
      %v6754 = vand.u32 %v6753, 4294901760
      %6755 = vmatpush1.msra.mxu0 %v6754
      %6756 = vmatprep.subr.mxu0 0.0
      %v6757 = vand.u32 %v6325, 4294901760
      %v6758 = vsub.f32 %v6325, %v6757
      %v6759 = vand.u32 %v6758, 4294901760
      %v6760 = vsub.f32 %v6758, %v6759
      %v6761 = vand.u32 %v6760, 4294901760
      %6762 = vmatpush1.msra.mxu0 %v6761
      %6763 = vmatprep.subr.mxu0 0.0
      %v6764 = vand.u32 %v6326, 4294901760
      %v6765 = vsub.f32 %v6326, %v6764
      %v6766 = vand.u32 %v6765, 4294901760
      %v6767 = vsub.f32 %v6765, %v6766
      %v6768 = vand.u32 %v6767, 4294901760
      %6769 = vmatpush1.msra.mxu0 %v6768
      %6770 = vmatprep.subr.mxu0 0.0
      %v6771 = vand.u32 %v6327, 4294901760
      %v6772 = vsub.f32 %v6327, %v6771
      %v6773 = vand.u32 %v6772, 4294901760
      %v6774 = vsub.f32 %v6772, %v6773
      %v6775 = vand.u32 %v6774, 4294901760
      %6776 = vmatpush1.msra.mxu0 %v6775
      %6777 = vmatprep.subr.mxu0 0.0
      %v6778 = vand.u32 %v6328, 4294901760
      %v6779 = vsub.f32 %v6328, %v6778
      %v6780 = vand.u32 %v6779, 4294901760
      %v6781 = vsub.f32 %v6779, %v6780
      %v6782 = vand.u32 %v6781, 4294901760
      %6783 = vmatpush1.msra.mxu0 %v6782
      %6784 = vmatprep.subr.mxu0 0.0
      %v6785 = vand.u32 %v6329, 4294901760
      %v6786 = vsub.f32 %v6329, %v6785
      %v6787 = vand.u32 %v6786, 4294901760
      %v6788 = vsub.f32 %v6786, %v6787
      %v6789 = vand.u32 %v6788, 4294901760
      %6790 = vmatpush1.msra.mxu0 %v6789
      %6791 = vmatprep.subr.mxu0 0.0
      %v6792 = vand.u32 %v6330, 4294901760
      %v6793 = vsub.f32 %v6330, %v6792
      %v6794 = vand.u32 %v6793, 4294901760
      %v6795 = vsub.f32 %v6793, %v6794
      %v6796 = vand.u32 %v6795, 4294901760
      %6797 = vmatpush1.msra.mxu0 %v6796
      %6798 = vmatprep.subr.mxu0 0.0
      %v6799 = vand.u32 %v6331, 4294901760
      %v6800 = vsub.f32 %v6331, %v6799
      %v6801 = vand.u32 %v6800, 4294901760
      %v6802 = vsub.f32 %v6800, %v6801
      %v6803 = vand.u32 %v6802, 4294901760
      %6804 = vmatpush1.msra.mxu0 %v6803
      %6805 = vmatprep.subr.mxu0 0.0
      %v6806 = vand.u32 %v6332, 4294901760
      %v6807 = vsub.f32 %v6332, %v6806
      %v6808 = vand.u32 %v6807, 4294901760
      %v6809 = vsub.f32 %v6807, %v6808
      %v6810 = vand.u32 %v6809, 4294901760
      %6811 = vmatpush1.msra.mxu0 %v6810
      %6812 = vmatprep.subr.mxu0 0.0
      %v6813 = vand.u32 %v6333, 4294901760
      %v6814 = vsub.f32 %v6333, %v6813
      %v6815 = vand.u32 %v6814, 4294901760
      %v6816 = vsub.f32 %v6814, %v6815
      %v6817 = vand.u32 %v6816, 4294901760
      %6818 = vmatpush1.msra.mxu0 %v6817
      %6819 = vmatprep.subr.mxu0 0.0
      %v6820 = vand.u32 %v6334, 4294901760
      %v6821 = vsub.f32 %v6334, %v6820
      %v6822 = vand.u32 %v6821, 4294901760
      %v6823 = vsub.f32 %v6821, %v6822
      %v6824 = vand.u32 %v6823, 4294901760
      %6825 = vmatpush1.msra.mxu0 %v6824
      %6826 = vmatprep.subr.mxu0 0.0
      %v6827 = vand.u32 %v6335, 4294901760
      %v6828 = vsub.f32 %v6335, %v6827
      %v6829 = vand.u32 %v6828, 4294901760
      %v6830 = vsub.f32 %v6828, %v6829
      %v6831 = vand.u32 %v6830, 4294901760
      %6832 = vmatpush1.msra.mxu0 %v6831
      %6833 = vmatprep.subr.mxu0 0.0
      %v6834 = vand.u32 %v6336, 4294901760
      %v6835 = vsub.f32 %v6336, %v6834
      %v6836 = vand.u32 %v6835, 4294901760
      %v6837 = vsub.f32 %v6835, %v6836
      %v6838 = vand.u32 %v6837, 4294901760
      %6839 = vmatpush1.msra.mxu0 %v6838
      %6840 = vmatprep.subr.mxu0 0.0
      %v6841 = vand.u32 %v6337, 4294901760
      %v6842 = vsub.f32 %v6337, %v6841
      %v6843 = vand.u32 %v6842, 4294901760
      %v6844 = vsub.f32 %v6842, %v6843
      %v6845 = vand.u32 %v6844, 4294901760
      %6846 = vmatpush1.msra.mxu0 %v6845
      %6847 = vmatprep.subr.mxu0 0.0
      %v6848 = vand.u32 %v6338, 4294901760
      %v6849 = vsub.f32 %v6338, %v6848
      %v6850 = vand.u32 %v6849, 4294901760
      %v6851 = vsub.f32 %v6849, %v6850
      %v6852 = vand.u32 %v6851, 4294901760
      %6853 = vmatpush1.msra.mxu0 %v6852
      %6854 = vmatprep.subr.mxu0 0.0
      %v6855 = vand.u32 %v6339, 4294901760
      %v6856 = vsub.f32 %v6339, %v6855
      %v6857 = vand.u32 %v6856, 4294901760
      %v6858 = vsub.f32 %v6856, %v6857
      %v6859 = vand.u32 %v6858, 4294901760
      %6860 = vmatpush1.msra.mxu0 %v6859
      %6861 = vmatprep.subr.mxu0 0.0
      %6862 = vmatpush1.msra.mxu0 0.0
      %6863 = vmatprep.subr.mxu0 0.0
      %6864 = vmatpush1.msra.mxu0 0.0
      %6865 = vmatprep.subr.mxu0 0.0
      %6866 = vmatpush1.msra.mxu0 0.0
      %6867 = vmatprep.subr.mxu0 0.0
      %6868 = vmatpush1.msra.mxu0 0.0
      %6869 = vmatprep.subr.mxu0 0.0
      %6870 = vmatpush1.msra.mxu0 0.0
      %6871 = vmatprep.subr.mxu0 0.0
      %6872 = vmatpush1.msra.mxu0 0.0
      %6873 = vmatprep.subr.mxu0 0.0
      %6874 = vmatpush1.msra.mxu0 0.0
      %6875 = vmatprep.subr.mxu0 0.0
      %6876 = vmatpush1.msra.mxu0 0.0
      %6877 = vmatprep.subr.mxu0 0.0
      %6878 = vmatpush1.msra.mxu0 0.0
      %6879 = vmatprep.subr.mxu0 0.0
      %6880 = vmatpush1.msra.mxu0 0.0
      %6881 = vmatprep.subr.mxu0 0.0
      %6882 = vmatpush1.msra.mxu0 0.0
      %6883 = vmatprep.subr.mxu0 0.0
      %6884 = vmatpush1.msra.mxu0 0.0
      %6885 = vmatprep.subr.mxu0 0.0
      %6886 = vmatpush1.msra.mxu0 0.0
      %6887 = vmatprep.subr.mxu0 0.0
      %6888 = vmatpush1.msra.mxu0 0.0
      %6889 = vmatprep.subr.mxu0 0.0
      %6890 = vmatpush1.msra.mxu0 0.0
      %6891 = vmatprep.subr.mxu0 0.0
      %6892 = vmatpush1.msra.mxu0 0.0
      %6893 = vmatprep.mubr.f32.mxu0 0.0
      %v6894 = vand.u32 %v6291, 4294901760
      %6895 = vmatmul.mubr.f32.gmra.mrb[0].mxu0 %v6894
      %v6896 = vpop.f32.mrb[0].mxu0
      %v6897 = vadd.f32 %v6436, %v6896
      %v6898 = vpop.f32.mrb[0].mxu0
      %6899 = vmatprep.mubr.f32.mxu0 0.0
      %v6900 = vand.u32 %v6292, 4294901760
      %6901 = vmatmul.mubr.f32.gmra.mrb[0].mxu0 %v6900
      %v6902 = vpop.f32.mrb[0].mxu0
      %v6903 = vadd.f32 %v6446, %v6902
      %v6904 = vpop.f32.mrb[0].mxu0
      %6905 = vmatprep.mubr.f32.mxu0 0.0
      %v6906 = vand.u32 %v6293, 4294901760
      %6907 = vmatmul.mubr.f32.gmra.mrb[0].mxu0 %v6906
      %v6908 = vpop.f32.mrb[0].mxu0
      %v6909 = vadd.f32 %v6456, %v6908
      %v6910 = vpop.f32.mrb[0].mxu0
      %6911 = vmatprep.mubr.f32.mxu0 0.0
      %v6912 = vand.u32 %v6294, 4294901760
      %6913 = vmatmul.mubr.f32.gmra.mrb[0].mxu0 %v6912
      %v6914 = vpop.f32.mrb[0].mxu0
      %v6915 = vadd.f32 %v6466, %v6914
      %v6916 = vpop.f32.mrb[0].mxu0
      %6917 = vmatprep.mubr.f32.mxu0 0.0
      %v6918 = vand.u32 %v6295, 4294901760
      %6919 = vmatmul.mubr.f32.gmra.mrb[0].mxu0 %v6918
      %v6920 = vpop.f32.mrb[0].mxu0
      %v6921 = vadd.f32 %v6476, %v6920
      %v6922 = vpop.f32.mrb[0].mxu0
      %6923 = vmatprep.mubr.f32.mxu0 0.0
      %v6924 = vand.u32 %v6296, 4294901760
      %6925 = vmatmul.mubr.f32.gmra.mrb[0].mxu0 %v6924
      %v6926 = vpop.f32.mrb[0].mxu0
      %v6927 = vadd.f32 %v6486, %v6926
      %v6928 = vpop.f32.mrb[0].mxu0
      %6929 = vmatprep.mubr.f32.mxu0 0.0
      %v6930 = vand.u32 %v6297, 4294901760
      %6931 = vmatmul.mubr.f32.gmra.mrb[0].mxu0 %v6930
      %v6932 = vpop.f32.mrb[0].mxu0
      %v6933 = vadd.f32 %v6496, %v6932
      %v6934 = vpop.f32.mrb[0].mxu0
      %6935 = vmatprep.mubr.f32.mxu0 0.0
      %v6936 = vand.u32 %v6298, 4294901760
      %6937 = vmatmul.mubr.f32.gmra.mrb[0].mxu0 %v6936
      %v6938 = vpop.f32.mrb[0].mxu0
      %v6939 = vadd.f32 %v6506, %v6938
      %v6940 = vpop.f32.mrb[0].mxu0
      %6941 = vmatprep.mubr.f32.mxu0 0.0
      %v6942 = vand.u32 %v6299, 4294901760
      %6943 = vmatmul.mubr.f32.gmra.mrb[0].mxu0 %v6942
      %v6944 = vpop.f32.mrb[0].mxu0
      %v6945 = vadd.f32 %v6516, %v6944
      %v6946 = vpop.f32.mrb[0].mxu0
      %6947 = vmatprep.mubr.f32.mxu0 0.0
      %v6948 = vand.u32 %v6300, 4294901760
      %6949 = vmatmul.mubr.f32.gmra.mrb[0].mxu0 %v6948
      %v6950 = vpop.f32.mrb[0].mxu0
      %v6951 = vadd.f32 %v6526, %v6950
      %v6952 = vpop.f32.mrb[0].mxu0
      %6953 = vmatprep.mubr.f32.mxu0 0.0
      %v6954 = vand.u32 %v6301, 4294901760
      %6955 = vmatmul.mubr.f32.gmra.mrb[0].mxu0 %v6954
      %v6956 = vpop.f32.mrb[0].mxu0
      %v6957 = vadd.f32 %v6536, %v6956
      %v6958 = vpop.f32.mrb[0].mxu0
      %6959 = vmatprep.mubr.f32.mxu0 0.0
      %v6960 = vand.u32 %v6302, 4294901760
      %6961 = vmatmul.mubr.f32.gmra.mrb[0].mxu0 %v6960
      %v6962 = vpop.f32.mrb[0].mxu0
      %v6963 = vadd.f32 %v6546, %v6962
      %v6964 = vpop.f32.mrb[0].mxu0
      %6965 = vmatprep.mubr.f32.mxu0 0.0
      %v6966 = vand.u32 %v6303, 4294901760
      %6967 = vmatmul.mubr.f32.gmra.mrb[0].mxu0 %v6966
      %v6968 = vpop.f32.mrb[0].mxu0
      %v6969 = vadd.f32 %v6556, %v6968
      %v6970 = vpop.f32.mrb[0].mxu0
      %6971 = vmatprep.mubr.f32.mxu0 0.0
      %v6972 = vand.u32 %v6304, 4294901760
      %6973 = vmatmul.mubr.f32.gmra.mrb[0].mxu0 %v6972
      %v6974 = vpop.f32.mrb[0].mxu0
      %v6975 = vadd.f32 %v6566, %v6974
      %v6976 = vpop.f32.mrb[0].mxu0
      %6977 = vmatprep.mubr.f32.mxu0 0.0
      %v6978 = vand.u32 %v6305, 4294901760
      %6979 = vmatmul.mubr.f32.gmra.mrb[0].mxu0 %v6978
      %v6980 = vpop.f32.mrb[0].mxu0
      %v6981 = vadd.f32 %v6576, %v6980
      %v6982 = vpop.f32.mrb[0].mxu0
      %6983 = vmatprep.mubr.f32.mxu0 0.0
      %v6984 = vand.u32 %v6306, 4294901760
      %6985 = vmatmul.mubr.f32.gmra.mrb[0].mxu0 %v6984
      %v6986 = vpop.f32.mrb[0].mxu0
      %v6987 = vadd.f32 %v6586, %v6986
      %v6988 = vpop.f32.mrb[0].mxu0
      %6989 = vmatprep.mubr.f32.mxu0 0.0
      %v6990 = vand.u32 %v6307, 4294901760
      %6991 = vmatmul.mubr.f32.gmra.mrb[0].mxu0 %v6990
      %v6992 = vpop.f32.mrb[0].mxu0
      %v6993 = vadd.f32 %v6596, %v6992
      %v6994 = vpop.f32.mrb[0].mxu0
      %6995 = vmatprep.mubr.f32.mxu0 0.0
      %v6996 = vand.u32 %v6308, 4294901760
      %6997 = vmatmul.mubr.f32.gmra.mrb[0].mxu0 %v6996
      %v6998 = vpop.f32.mrb[0].mxu0
      %v6999 = vadd.f32 %v6606, %v6998
      %v7000 = vpop.f32.mrb[0].mxu0
      %7001 = vmatprep.mubr.f32.mxu0 0.0
      %v7002 = vand.u32 %v6309, 4294901760
      %7003 = vmatmul.mubr.f32.gmra.mrb[0].mxu0 %v7002
      %v7004 = vpop.f32.mrb[0].mxu0
      %v7005 = vadd.f32 %v6616, %v7004
      %v7006 = vpop.f32.mrb[0].mxu0
      %7007 = vmatprep.mubr.f32.mxu0 0.0
      %v7008 = vand.u32 %v6310, 4294901760
      %7009 = vmatmul.mubr.f32.gmra.mrb[0].mxu0 %v7008
      %v7010 = vpop.f32.mrb[0].mxu0
      %v7011 = vadd.f32 %v6626, %v7010
      %v7012 = vpop.f32.mrb[0].mxu0
      %7013 = vmatprep.mubr.f32.mxu0 0.0
      %v7014 = vand.u32 %v6311, 4294901760
      %7015 = vmatmul.mubr.f32.gmra.mrb[0].mxu0 %v7014
      %v7016 = vpop.f32.mrb[0].mxu0
      %v7017 = vadd.f32 %v6636, %v7016
      %v7018 = vpop.f32.mrb[0].mxu0
      %7019 = vmatprep.mubr.f32.mxu0 0.0
      %v7020 = vand.u32 %v6312, 4294901760
      %7021 = vmatmul.mubr.f32.gmra.mrb[0].mxu0 %v7020
      %v7022 = vpop.f32.mrb[0].mxu0
      %v7023 = vadd.f32 %v6646, %v7022
      %v7024 = vpop.f32.mrb[0].mxu0
      %7025 = vmatprep.mubr.f32.mxu0 0.0
      %v7026 = vand.u32 %v6313, 4294901760
      %7027 = vmatmul.mubr.f32.gmra.mrb[0].mxu0 %v7026
      %v7028 = vpop.f32.mrb[0].mxu0
      %v7029 = vadd.f32 %v6656, %v7028
      %v7030 = vpop.f32.mrb[0].mxu0
      %7031 = vmatprep.mubr.f32.mxu0 0.0
      %v7032 = vand.u32 %v6314, 4294901760
      %7033 = vmatmul.mubr.f32.gmra.mrb[0].mxu0 %v7032
      %v7034 = vpop.f32.mrb[0].mxu0
      %v7035 = vadd.f32 %v6666, %v7034
      %v7036 = vpop.f32.mrb[0].mxu0
      %7037 = vmatprep.mubr.f32.mxu0 0.0
      %v7038 = vand.u32 %v6315, 4294901760
      %7039 = vmatmul.mubr.f32.gmra.mrb[0].mxu0 %v7038
      %v7040 = vpop.f32.mrb[0].mxu0
      %v7041 = vadd.f32 %v6676, %v7040
      %v7042 = vpop.f32.mrb[0].mxu0
      %7043 = vmatprep.mubr.f32.mxu0 0.0
      %v7044 = vand.u32 %v6316, 4294901760
      %7045 = vmatmul.mubr.f32.gmra.mrb[0].mxu0 %v7044
      %v7046 = vpop.f32.mrb[0].mxu0
      %v7047 = vadd.f32 %v6686, %v7046
      %v7048 = vpop.f32.mrb[0].mxu0
      %7049 = vmatprep.mubr.f32.mxu0 0.0
      %v7050 = vand.u32 %v6317, 4294901760
      %7051 = vmatmul.mubr.f32.gmra.mrb[0].mxu0 %v7050
      %v7052 = vpop.f32.mrb[0].mxu0
      %v7053 = vadd.f32 %v6696, %v7052
      %v7054 = vpop.f32.mrb[0].mxu0
      %7055 = vmatprep.mubr.f32.mxu0 0.0
      %v7056 = vand.u32 %v6318, 4294901760
      %7057 = vmatmul.mubr.f32.gmra.mrb[0].mxu0 %v7056
      %v7058 = vpop.f32.mrb[0].mxu0
      %v7059 = vadd.f32 %v6706, %v7058
      %v7060 = vpop.f32.mrb[0].mxu0
      %7061 = vmatprep.mubr.f32.mxu0 0.0
      %v7062 = vand.u32 %v6319, 4294901760
      %7063 = vmatmul.mubr.f32.gmra.mrb[0].mxu0 %v7062
      %v7064 = vpop.f32.mrb[0].mxu0
      %v7065 = vadd.f32 %v6716, %v7064
      %v7066 = vpop.f32.mrb[0].mxu0
      %7067 = vmatprep.mubr.f32.mxu0 0.0
      %v7068 = vand.u32 %v6320, 4294901760
      %7069 = vmatmul.mubr.f32.gmra.mrb[0].mxu0 %v7068
      %v7070 = vpop.f32.mrb[0].mxu0
      %v7071 = vadd.f32 %v6726, %v7070
      %v7072 = vpop.f32.mrb[0].mxu0
      %7073 = vmatprep.mubr.f32.mxu0 0.0
      %v7074 = vand.u32 %v6321, 4294901760
      %7075 = vmatmul.mubr.f32.gmra.mrb[0].mxu0 %v7074
      %v7076 = vpop.f32.mrb[0].mxu0
      %v7077 = vadd.f32 %v6736, %v7076
      %v7078 = vpop.f32.mrb[0].mxu0
      %7079 = vmatprep.mubr.f32.mxu0 0.0
      %v7080 = vand.u32 %v6322, 4294901760
      %7081 = vmatmul.mubr.f32.gmra.mrb[0].mxu0 %v7080
      %v7082 = vpop.f32.mrb[0].mxu0
      %v7083 = vadd.f32 %v6746, %v7082
      %v7084 = vpop.f32.mrb[0].mxu0
      %7085 = vdwg.mxu0
      %7086 = vmatprep.subr.mxu0 0.0
      %v7087 = vand.u32 %v6324, 4294901760
      %v7088 = vsub.f32 %v6324, %v7087
      %7089 = vmatpush1.msra.mxu0 %v7088
      %7090 = vmatprep.subr.mxu0 0.0
      %v7091 = vand.u32 %v6325, 4294901760
      %v7092 = vsub.f32 %v6325, %v7091
      %7093 = vmatpush1.msra.mxu0 %v7092
      %7094 = vmatprep.subr.mxu0 0.0
      %v7095 = vand.u32 %v6326, 4294901760
      %v7096 = vsub.f32 %v6326, %v7095
      %7097 = vmatpush1.msra.mxu0 %v7096
      %7098 = vmatprep.subr.mxu0 0.0
      %v7099 = vand.u32 %v6327, 4294901760
      %v7100 = vsub.f32 %v6327, %v7099
      %7101 = vmatpush1.msra.mxu0 %v7100
      %7102 = vmatprep.subr.mxu0 0.0
      %v7103 = vand.u32 %v6328, 4294901760
      %v7104 = vsub.f32 %v6328, %v7103
      %7105 = vmatpush1.msra.mxu0 %v7104
      %7106 = vmatprep.subr.mxu0 0.0
      %v7107 = vand.u32 %v6329, 4294901760
      %v7108 = vsub.f32 %v6329, %v7107
      %7109 = vmatpush1.msra.mxu0 %v7108
      %7110 = vmatprep.subr.mxu0 0.0
      %v7111 = vand.u32 %v6330, 4294901760
      %v7112 = vsub.f32 %v6330, %v7111
      %7113 = vmatpush1.msra.mxu0 %v7112
      %7114 = vmatprep.subr.mxu0 0.0
      %v7115 = vand.u32 %v6331, 4294901760
      %v7116 = vsub.f32 %v6331, %v7115
      %7117 = vmatpush1.msra.mxu0 %v7116
      %7118 = vmatprep.subr.mxu0 0.0
      %v7119 = vand.u32 %v6332, 4294901760
      %v7120 = vsub.f32 %v6332, %v7119
      %7121 = vmatpush1.msra.mxu0 %v7120
      %7122 = vmatprep.subr.mxu0 0.0
      %v7123 = vand.u32 %v6333, 4294901760
      %v7124 = vsub.f32 %v6333, %v7123
      %7125 = vmatpush1.msra.mxu0 %v7124
      %7126 = vmatprep.subr.mxu0 0.0
      %v7127 = vand.u32 %v6334, 4294901760
      %v7128 = vsub.f32 %v6334, %v7127
      %7129 = vmatpush1.msra.mxu0 %v7128
      %7130 = vmatprep.subr.mxu0 0.0
      %v7131 = vand.u32 %v6335, 4294901760
      %v7132 = vsub.f32 %v6335, %v7131
      %7133 = vmatpush1.msra.mxu0 %v7132
      %7134 = vmatprep.subr.mxu0 0.0
      %v7135 = vand.u32 %v6336, 4294901760
      %v7136 = vsub.f32 %v6336, %v7135
      %7137 = vmatpush1.msra.mxu0 %v7136
      %7138 = vmatprep.subr.mxu0 0.0
      %v7139 = vand.u32 %v6337, 4294901760
      %v7140 = vsub.f32 %v6337, %v7139
      %7141 = vmatpush1.msra.mxu0 %v7140
      %7142 = vmatprep.subr.mxu0 0.0
      %v7143 = vand.u32 %v6338, 4294901760
      %v7144 = vsub.f32 %v6338, %v7143
      %7145 = vmatpush1.msra.mxu0 %v7144
      %7146 = vmatprep.subr.mxu0 0.0
      %v7147 = vand.u32 %v6339, 4294901760
      %v7148 = vsub.f32 %v6339, %v7147
      %7149 = vmatpush1.msra.mxu0 %v7148
      %7150 = vmatprep.subr.mxu0 0.0
      %7151 = vmatpush1.msra.mxu0 0.0
      %7152 = vmatprep.subr.mxu0 0.0
      %7153 = vmatpush1.msra.mxu0 0.0
      %7154 = vmatprep.subr.mxu0 0.0
      %7155 = vmatpush1.msra.mxu0 0.0
      %7156 = vmatprep.subr.mxu0 0.0
      %7157 = vmatpush1.msra.mxu0 0.0
      %7158 = vmatprep.subr.mxu0 0.0
      %7159 = vmatpush1.msra.mxu0 0.0
      %7160 = vmatprep.subr.mxu0 0.0
      %7161 = vmatpush1.msra.mxu0 0.0
      %7162 = vmatprep.subr.mxu0 0.0
      %7163 = vmatpush1.msra.mxu0 0.0
      %7164 = vmatprep.subr.mxu0 0.0
      %7165 = vmatpush1.msra.mxu0 0.0
      %7166 = vmatprep.subr.mxu0 0.0
      %7167 = vmatpush1.msra.mxu0 0.0
      %7168 = vmatprep.subr.mxu0 0.0
      %7169 = vmatpush1.msra.mxu0 0.0
      %7170 = vmatprep.subr.mxu0 0.0
      %7171 = vmatpush1.msra.mxu0 0.0
      %7172 = vmatprep.subr.mxu0 0.0
      %7173 = vmatpush1.msra.mxu0 0.0
      %7174 = vmatprep.subr.mxu0 0.0
      %7175 = vmatpush1.msra.mxu0 0.0
      %7176 = vmatprep.subr.mxu0 0.0
      %7177 = vmatpush1.msra.mxu0 0.0
      %7178 = vmatprep.subr.mxu0 0.0
      %7179 = vmatpush1.msra.mxu0 0.0
      %7180 = vmatprep.subr.mxu0 0.0
      %7181 = vmatpush1.msra.mxu0 0.0
      %7182 = vmatprep.mubr.f32.mxu0 0.0
      %v7183 = vand.u32 %v6291, 4294901760
      %v7184 = vsub.f32 %v6291, %v7183
      %7185 = vmatmul.mubr.f32.gmra.mrb[0].mxu0 %v7184
      %v7186 = vpop.f32.mrb[0].mxu0
      %v7187 = vadd.f32 %v6897, %v7186
      %v7188 = vpop.f32.mrb[0].mxu0
      %7189 = vmatprep.mubr.f32.mxu0 0.0
      %v7190 = vand.u32 %v6292, 4294901760
      %v7191 = vsub.f32 %v6292, %v7190
      %7192 = vmatmul.mubr.f32.gmra.mrb[0].mxu0 %v7191
      %v7193 = vpop.f32.mrb[0].mxu0
      %v7194 = vadd.f32 %v6903, %v7193
      %v7195 = vpop.f32.mrb[0].mxu0
      %7196 = vmatprep.mubr.f32.mxu0 0.0
      %v7197 = vand.u32 %v6293, 4294901760
      %v7198 = vsub.f32 %v6293, %v7197
      %7199 = vmatmul.mubr.f32.gmra.mrb[0].mxu0 %v7198
      %v7200 = vpop.f32.mrb[0].mxu0
      %v7201 = vadd.f32 %v6909, %v7200
      %v7202 = vpop.f32.mrb[0].mxu0
      %7203 = vmatprep.mubr.f32.mxu0 0.0
      %v7204 = vand.u32 %v6294, 4294901760
      %v7205 = vsub.f32 %v6294, %v7204
      %7206 = vmatmul.mubr.f32.gmra.mrb[0].mxu0 %v7205
      %v7207 = vpop.f32.mrb[0].mxu0
      %v7208 = vadd.f32 %v6915, %v7207
      %v7209 = vpop.f32.mrb[0].mxu0
      %7210 = vmatprep.mubr.f32.mxu0 0.0
      %v7211 = vand.u32 %v6295, 4294901760
      %v7212 = vsub.f32 %v6295, %v7211
      %7213 = vmatmul.mubr.f32.gmra.mrb[0].mxu0 %v7212
      %v7214 = vpop.f32.mrb[0].mxu0
      %v7215 = vadd.f32 %v6921, %v7214
      %v7216 = vpop.f32.mrb[0].mxu0
      %7217 = vmatprep.mubr.f32.mxu0 0.0
      %v7218 = vand.u32 %v6296, 4294901760
      %v7219 = vsub.f32 %v6296, %v7218
      %7220 = vmatmul.mubr.f32.gmra.mrb[0].mxu0 %v7219
      %v7221 = vpop.f32.mrb[0].mxu0
      %v7222 = vadd.f32 %v6927, %v7221
      %v7223 = vpop.f32.mrb[0].mxu0
      %7224 = vmatprep.mubr.f32.mxu0 0.0
      %v7225 = vand.u32 %v6297, 4294901760
      %v7226 = vsub.f32 %v6297, %v7225
      %7227 = vmatmul.mubr.f32.gmra.mrb[0].mxu0 %v7226
      %v7228 = vpop.f32.mrb[0].mxu0
      %v7229 = vadd.f32 %v6933, %v7228
      %v7230 = vpop.f32.mrb[0].mxu0
      %7231 = vmatprep.mubr.f32.mxu0 0.0
      %v7232 = vand.u32 %v6298, 4294901760
      %v7233 = vsub.f32 %v6298, %v7232
      %7234 = vmatmul.mubr.f32.gmra.mrb[0].mxu0 %v7233
      %v7235 = vpop.f32.mrb[0].mxu0
      %v7236 = vadd.f32 %v6939, %v7235
      %v7237 = vpop.f32.mrb[0].mxu0
      %7238 = vmatprep.mubr.f32.mxu0 0.0
      %v7239 = vand.u32 %v6299, 4294901760
      %v7240 = vsub.f32 %v6299, %v7239
      %7241 = vmatmul.mubr.f32.gmra.mrb[0].mxu0 %v7240
      %v7242 = vpop.f32.mrb[0].mxu0
      %v7243 = vadd.f32 %v6945, %v7242
      %v7244 = vpop.f32.mrb[0].mxu0
      %7245 = vmatprep.mubr.f32.mxu0 0.0
      %v7246 = vand.u32 %v6300, 4294901760
      %v7247 = vsub.f32 %v6300, %v7246
      %7248 = vmatmul.mubr.f32.gmra.mrb[0].mxu0 %v7247
      %v7249 = vpop.f32.mrb[0].mxu0
      %v7250 = vadd.f32 %v6951, %v7249
      %v7251 = vpop.f32.mrb[0].mxu0
      %7252 = vmatprep.mubr.f32.mxu0 0.0
      %v7253 = vand.u32 %v6301, 4294901760
      %v7254 = vsub.f32 %v6301, %v7253
      %7255 = vmatmul.mubr.f32.gmra.mrb[0].mxu0 %v7254
      %v7256 = vpop.f32.mrb[0].mxu0
      %v7257 = vadd.f32 %v6957, %v7256
      %v7258 = vpop.f32.mrb[0].mxu0
      %7259 = vmatprep.mubr.f32.mxu0 0.0
      %v7260 = vand.u32 %v6302, 4294901760
      %v7261 = vsub.f32 %v6302, %v7260
      %7262 = vmatmul.mubr.f32.gmra.mrb[0].mxu0 %v7261
      %v7263 = vpop.f32.mrb[0].mxu0
      %v7264 = vadd.f32 %v6963, %v7263
      %v7265 = vpop.f32.mrb[0].mxu0
      %7266 = vmatprep.mubr.f32.mxu0 0.0
      %v7267 = vand.u32 %v6303, 4294901760
      %v7268 = vsub.f32 %v6303, %v7267
      %7269 = vmatmul.mubr.f32.gmra.mrb[0].mxu0 %v7268
      %v7270 = vpop.f32.mrb[0].mxu0
      %v7271 = vadd.f32 %v6969, %v7270
      %v7272 = vpop.f32.mrb[0].mxu0
      %7273 = vmatprep.mubr.f32.mxu0 0.0
      %v7274 = vand.u32 %v6304, 4294901760
      %v7275 = vsub.f32 %v6304, %v7274
      %7276 = vmatmul.mubr.f32.gmra.mrb[0].mxu0 %v7275
      %v7277 = vpop.f32.mrb[0].mxu0
      %v7278 = vadd.f32 %v6975, %v7277
      %v7279 = vpop.f32.mrb[0].mxu0
      %7280 = vmatprep.mubr.f32.mxu0 0.0
      %v7281 = vand.u32 %v6305, 4294901760
      %v7282 = vsub.f32 %v6305, %v7281
      %7283 = vmatmul.mubr.f32.gmra.mrb[0].mxu0 %v7282
      %v7284 = vpop.f32.mrb[0].mxu0
      %v7285 = vadd.f32 %v6981, %v7284
      %v7286 = vpop.f32.mrb[0].mxu0
      %7287 = vmatprep.mubr.f32.mxu0 0.0
      %v7288 = vand.u32 %v6306, 4294901760
      %v7289 = vsub.f32 %v6306, %v7288
      %7290 = vmatmul.mubr.f32.gmra.mrb[0].mxu0 %v7289
      %v7291 = vpop.f32.mrb[0].mxu0
      %v7292 = vadd.f32 %v6987, %v7291
      %v7293 = vpop.f32.mrb[0].mxu0
      %7294 = vmatprep.mubr.f32.mxu0 0.0
      %v7295 = vand.u32 %v6307, 4294901760
      %v7296 = vsub.f32 %v6307, %v7295
      %7297 = vmatmul.mubr.f32.gmra.mrb[0].mxu0 %v7296
      %v7298 = vpop.f32.mrb[0].mxu0
      %v7299 = vadd.f32 %v6993, %v7298
      %v7300 = vpop.f32.mrb[0].mxu0
      %7301 = vmatprep.mubr.f32.mxu0 0.0
      %v7302 = vand.u32 %v6308, 4294901760
      %v7303 = vsub.f32 %v6308, %v7302
      %7304 = vmatmul.mubr.f32.gmra.mrb[0].mxu0 %v7303
      %v7305 = vpop.f32.mrb[0].mxu0
      %v7306 = vadd.f32 %v6999, %v7305
      %v7307 = vpop.f32.mrb[0].mxu0
      %7308 = vmatprep.mubr.f32.mxu0 0.0
      %v7309 = vand.u32 %v6309, 4294901760
      %v7310 = vsub.f32 %v6309, %v7309
      %7311 = vmatmul.mubr.f32.gmra.mrb[0].mxu0 %v7310
      %v7312 = vpop.f32.mrb[0].mxu0
      %v7313 = vadd.f32 %v7005, %v7312
      %v7314 = vpop.f32.mrb[0].mxu0
      %7315 = vmatprep.mubr.f32.mxu0 0.0
      %v7316 = vand.u32 %v6310, 4294901760
      %v7317 = vsub.f32 %v6310, %v7316
      %7318 = vmatmul.mubr.f32.gmra.mrb[0].mxu0 %v7317
      %v7319 = vpop.f32.mrb[0].mxu0
      %v7320 = vadd.f32 %v7011, %v7319
      %v7321 = vpop.f32.mrb[0].mxu0
      %7322 = vmatprep.mubr.f32.mxu0 0.0
      %v7323 = vand.u32 %v6311, 4294901760
      %v7324 = vsub.f32 %v6311, %v7323
      %7325 = vmatmul.mubr.f32.gmra.mrb[0].mxu0 %v7324
      %v7326 = vpop.f32.mrb[0].mxu0
      %v7327 = vadd.f32 %v7017, %v7326
      %v7328 = vpop.f32.mrb[0].mxu0
      %7329 = vmatprep.mubr.f32.mxu0 0.0
      %v7330 = vand.u32 %v6312, 4294901760
      %v7331 = vsub.f32 %v6312, %v7330
      %7332 = vmatmul.mubr.f32.gmra.mrb[0].mxu0 %v7331
      %v7333 = vpop.f32.mrb[0].mxu0
      %v7334 = vadd.f32 %v7023, %v7333
      %v7335 = vpop.f32.mrb[0].mxu0
      %7336 = vmatprep.mubr.f32.mxu0 0.0
      %v7337 = vand.u32 %v6313, 4294901760
      %v7338 = vsub.f32 %v6313, %v7337
      %7339 = vmatmul.mubr.f32.gmra.mrb[0].mxu0 %v7338
      %v7340 = vpop.f32.mrb[0].mxu0
      %v7341 = vadd.f32 %v7029, %v7340
      %v7342 = vpop.f32.mrb[0].mxu0
      %7343 = vmatprep.mubr.f32.mxu0 0.0
      %v7344 = vand.u32 %v6314, 4294901760
      %v7345 = vsub.f32 %v6314, %v7344
      %7346 = vmatmul.mubr.f32.gmra.mrb[0].mxu0 %v7345
      %v7347 = vpop.f32.mrb[0].mxu0
      %v7348 = vadd.f32 %v7035, %v7347
      %v7349 = vpop.f32.mrb[0].mxu0
      %7350 = vmatprep.mubr.f32.mxu0 0.0
      %v7351 = vand.u32 %v6315, 4294901760
      %v7352 = vsub.f32 %v6315, %v7351
      %7353 = vmatmul.mubr.f32.gmra.mrb[0].mxu0 %v7352
      %v7354 = vpop.f32.mrb[0].mxu0
      %v7355 = vadd.f32 %v7041, %v7354
      %v7356 = vpop.f32.mrb[0].mxu0
      %7357 = vmatprep.mubr.f32.mxu0 0.0
      %v7358 = vand.u32 %v6316, 4294901760
      %v7359 = vsub.f32 %v6316, %v7358
      %7360 = vmatmul.mubr.f32.gmra.mrb[0].mxu0 %v7359
      %v7361 = vpop.f32.mrb[0].mxu0
      %v7362 = vadd.f32 %v7047, %v7361
      %v7363 = vpop.f32.mrb[0].mxu0
      %7364 = vmatprep.mubr.f32.mxu0 0.0
      %v7365 = vand.u32 %v6317, 4294901760
      %v7366 = vsub.f32 %v6317, %v7365
      %7367 = vmatmul.mubr.f32.gmra.mrb[0].mxu0 %v7366
      %v7368 = vpop.f32.mrb[0].mxu0
      %v7369 = vadd.f32 %v7053, %v7368
      %v7370 = vpop.f32.mrb[0].mxu0
      %7371 = vmatprep.mubr.f32.mxu0 0.0
      %v7372 = vand.u32 %v6318, 4294901760
      %v7373 = vsub.f32 %v6318, %v7372
      %7374 = vmatmul.mubr.f32.gmra.mrb[0].mxu0 %v7373
      %v7375 = vpop.f32.mrb[0].mxu0
      %v7376 = vadd.f32 %v7059, %v7375
      %v7377 = vpop.f32.mrb[0].mxu0
      %7378 = vmatprep.mubr.f32.mxu0 0.0
      %v7379 = vand.u32 %v6319, 4294901760
      %v7380 = vsub.f32 %v6319, %v7379
      %7381 = vmatmul.mubr.f32.gmra.mrb[0].mxu0 %v7380
      %v7382 = vpop.f32.mrb[0].mxu0
      %v7383 = vadd.f32 %v7065, %v7382
      %v7384 = vpop.f32.mrb[0].mxu0
      %7385 = vmatprep.mubr.f32.mxu0 0.0
      %v7386 = vand.u32 %v6320, 4294901760
      %v7387 = vsub.f32 %v6320, %v7386
      %7388 = vmatmul.mubr.f32.gmra.mrb[0].mxu0 %v7387
      %v7389 = vpop.f32.mrb[0].mxu0
      %v7390 = vadd.f32 %v7071, %v7389
      %v7391 = vpop.f32.mrb[0].mxu0
      %7392 = vmatprep.mubr.f32.mxu0 0.0
      %v7393 = vand.u32 %v6321, 4294901760
      %v7394 = vsub.f32 %v6321, %v7393
      %7395 = vmatmul.mubr.f32.gmra.mrb[0].mxu0 %v7394
      %v7396 = vpop.f32.mrb[0].mxu0
      %v7397 = vadd.f32 %v7077, %v7396
      %v7398 = vpop.f32.mrb[0].mxu0
      %7399 = vmatprep.mubr.f32.mxu0 0.0
      %v7400 = vand.u32 %v6322, 4294901760
      %v7401 = vsub.f32 %v6322, %v7400
      %7402 = vmatmul.mubr.f32.gmra.mrb[0].mxu0 %v7401
      %v7403 = vpop.f32.mrb[0].mxu0
      %v7404 = vadd.f32 %v7083, %v7403
      %v7405 = vpop.f32.mrb[0].mxu0
      %7406 = vdwg.mxu0
      %7407 = vmatprep.subr.mxu0 0.0
      %v7408 = vand.u32 %v6324, 4294901760
      %7409 = vmatpush1.msra.mxu0 %v7408
      %7410 = vmatprep.subr.mxu0 0.0
      %v7411 = vand.u32 %v6325, 4294901760
      %7412 = vmatpush1.msra.mxu0 %v7411
      %7413 = vmatprep.subr.mxu0 0.0
      %v7414 = vand.u32 %v6326, 4294901760
      %7415 = vmatpush1.msra.mxu0 %v7414
      %7416 = vmatprep.subr.mxu0 0.0
      %v7417 = vand.u32 %v6327, 4294901760
      %7418 = vmatpush1.msra.mxu0 %v7417
      %7419 = vmatprep.subr.mxu0 0.0
      %v7420 = vand.u32 %v6328, 4294901760
      %7421 = vmatpush1.msra.mxu0 %v7420
      %7422 = vmatprep.subr.mxu0 0.0
      %v7423 = vand.u32 %v6329, 4294901760
      %7424 = vmatpush1.msra.mxu0 %v7423
      %7425 = vmatprep.subr.mxu0 0.0
      %v7426 = vand.u32 %v6330, 4294901760
      %7427 = vmatpush1.msra.mxu0 %v7426
      %7428 = vmatprep.subr.mxu0 0.0
      %v7429 = vand.u32 %v6331, 4294901760
      %7430 = vmatpush1.msra.mxu0 %v7429
      %7431 = vmatprep.subr.mxu0 0.0
      %v7432 = vand.u32 %v6332, 4294901760
      %7433 = vmatpush1.msra.mxu0 %v7432
      %7434 = vmatprep.subr.mxu0 0.0
      %v7435 = vand.u32 %v6333, 4294901760
      %7436 = vmatpush1.msra.mxu0 %v7435
      %7437 = vmatprep.subr.mxu0 0.0
      %v7438 = vand.u32 %v6334, 4294901760
      %7439 = vmatpush1.msra.mxu0 %v7438
      %7440 = vmatprep.subr.mxu0 0.0
      %v7441 = vand.u32 %v6335, 4294901760
      %7442 = vmatpush1.msra.mxu0 %v7441
      %7443 = vmatprep.subr.mxu0 0.0
      %v7444 = vand.u32 %v6336, 4294901760
      %7445 = vmatpush1.msra.mxu0 %v7444
      %7446 = vmatprep.subr.mxu0 0.0
      %v7447 = vand.u32 %v6337, 4294901760
      %7448 = vmatpush1.msra.mxu0 %v7447
      %7449 = vmatprep.subr.mxu0 0.0
      %v7450 = vand.u32 %v6338, 4294901760
      %7451 = vmatpush1.msra.mxu0 %v7450
      %7452 = vmatprep.subr.mxu0 0.0
      %v7453 = vand.u32 %v6339, 4294901760
      %7454 = vmatpush1.msra.mxu0 %v7453
      %7455 = vmatprep.subr.mxu0 0.0
      %7456 = vmatpush1.msra.mxu0 0.0
      %7457 = vmatprep.subr.mxu0 0.0
      %7458 = vmatpush1.msra.mxu0 0.0
      %7459 = vmatprep.subr.mxu0 0.0
      %7460 = vmatpush1.msra.mxu0 0.0
      %7461 = vmatprep.subr.mxu0 0.0
      %7462 = vmatpush1.msra.mxu0 0.0
      %7463 = vmatprep.subr.mxu0 0.0
      %7464 = vmatpush1.msra.mxu0 0.0
      %7465 = vmatprep.subr.mxu0 0.0
      %7466 = vmatpush1.msra.mxu0 0.0
      %7467 = vmatprep.subr.mxu0 0.0
      %7468 = vmatpush1.msra.mxu0 0.0
      %7469 = vmatprep.subr.mxu0 0.0
      %7470 = vmatpush1.msra.mxu0 0.0
      %7471 = vmatprep.subr.mxu0 0.0
      %7472 = vmatpush1.msra.mxu0 0.0
      %7473 = vmatprep.subr.mxu0 0.0
      %7474 = vmatpush1.msra.mxu0 0.0
      %7475 = vmatprep.subr.mxu0 0.0
      %7476 = vmatpush1.msra.mxu0 0.0
      %7477 = vmatprep.subr.mxu0 0.0
      %7478 = vmatpush1.msra.mxu0 0.0
      %7479 = vmatprep.subr.mxu0 0.0
      %7480 = vmatpush1.msra.mxu0 0.0
      %7481 = vmatprep.subr.mxu0 0.0
      %7482 = vmatpush1.msra.mxu0 0.0
      %7483 = vmatprep.subr.mxu0 0.0
      %7484 = vmatpush1.msra.mxu0 0.0
      %7485 = vmatprep.subr.mxu0 0.0
      %7486 = vmatpush1.msra.mxu0 0.0
      %7487 = vmatprep.mubr.f32.mxu0 0.0
      %v7488 = vand.u32 %v6291, 4294901760
      %v7489 = vsub.f32 %v6291, %v7488
      %v7490 = vand.u32 %v7489, 4294901760
      %7491 = vmatmul.mubr.f32.gmra.mrb[0].mxu0 %v7490
      %v7492 = vpop.f32.mrb[0].mxu0
      %v7493 = vadd.f32 %v7187, %v7492
      %v7494 = vpop.f32.mrb[0].mxu0
      %7495 = vmatprep.mubr.f32.mxu0 0.0
      %v7496 = vand.u32 %v6292, 4294901760
      %v7497 = vsub.f32 %v6292, %v7496
      %v7498 = vand.u32 %v7497, 4294901760
      %7499 = vmatmul.mubr.f32.gmra.mrb[0].mxu0 %v7498
      %v7500 = vpop.f32.mrb[0].mxu0
      %v7501 = vadd.f32 %v7194, %v7500
      %v7502 = vpop.f32.mrb[0].mxu0
      %7503 = vmatprep.mubr.f32.mxu0 0.0
      %v7504 = vand.u32 %v6293, 4294901760
      %v7505 = vsub.f32 %v6293, %v7504
      %v7506 = vand.u32 %v7505, 4294901760
      %7507 = vmatmul.mubr.f32.gmra.mrb[0].mxu0 %v7506
      %v7508 = vpop.f32.mrb[0].mxu0
      %v7509 = vadd.f32 %v7201, %v7508
      %v7510 = vpop.f32.mrb[0].mxu0
      %7511 = vmatprep.mubr.f32.mxu0 0.0
      %v7512 = vand.u32 %v6294, 4294901760
      %v7513 = vsub.f32 %v6294, %v7512
      %v7514 = vand.u32 %v7513, 4294901760
      %7515 = vmatmul.mubr.f32.gmra.mrb[0].mxu0 %v7514
      %v7516 = vpop.f32.mrb[0].mxu0
      %v7517 = vadd.f32 %v7208, %v7516
      %v7518 = vpop.f32.mrb[0].mxu0
      %7519 = vmatprep.mubr.f32.mxu0 0.0
      %v7520 = vand.u32 %v6295, 4294901760
      %v7521 = vsub.f32 %v6295, %v7520
      %v7522 = vand.u32 %v7521, 4294901760
      %7523 = vmatmul.mubr.f32.gmra.mrb[0].mxu0 %v7522
      %v7524 = vpop.f32.mrb[0].mxu0
      %v7525 = vadd.f32 %v7215, %v7524
      %v7526 = vpop.f32.mrb[0].mxu0
      %7527 = vmatprep.mubr.f32.mxu0 0.0
      %v7528 = vand.u32 %v6296, 4294901760
      %v7529 = vsub.f32 %v6296, %v7528
      %v7530 = vand.u32 %v7529, 4294901760
      %7531 = vmatmul.mubr.f32.gmra.mrb[0].mxu0 %v7530
      %v7532 = vpop.f32.mrb[0].mxu0
      %v7533 = vadd.f32 %v7222, %v7532
      %v7534 = vpop.f32.mrb[0].mxu0
      %7535 = vmatprep.mubr.f32.mxu0 0.0
      %v7536 = vand.u32 %v6297, 4294901760
      %v7537 = vsub.f32 %v6297, %v7536
      %v7538 = vand.u32 %v7537, 4294901760
      %7539 = vmatmul.mubr.f32.gmra.mrb[0].mxu0 %v7538
      %v7540 = vpop.f32.mrb[0].mxu0
      %v7541 = vadd.f32 %v7229, %v7540
      %v7542 = vpop.f32.mrb[0].mxu0
      %7543 = vmatprep.mubr.f32.mxu0 0.0
      %v7544 = vand.u32 %v6298, 4294901760
      %v7545 = vsub.f32 %v6298, %v7544
      %v7546 = vand.u32 %v7545, 4294901760
      %7547 = vmatmul.mubr.f32.gmra.mrb[0].mxu0 %v7546
      %v7548 = vpop.f32.mrb[0].mxu0
      %v7549 = vadd.f32 %v7236, %v7548
      %v7550 = vpop.f32.mrb[0].mxu0
      %7551 = vmatprep.mubr.f32.mxu0 0.0
      %v7552 = vand.u32 %v6299, 4294901760
      %v7553 = vsub.f32 %v6299, %v7552
      %v7554 = vand.u32 %v7553, 4294901760
      %7555 = vmatmul.mubr.f32.gmra.mrb[0].mxu0 %v7554
      %v7556 = vpop.f32.mrb[0].mxu0
      %v7557 = vadd.f32 %v7243, %v7556
      %v7558 = vpop.f32.mrb[0].mxu0
      %7559 = vmatprep.mubr.f32.mxu0 0.0
      %v7560 = vand.u32 %v6300, 4294901760
      %v7561 = vsub.f32 %v6300, %v7560
      %v7562 = vand.u32 %v7561, 4294901760
      %7563 = vmatmul.mubr.f32.gmra.mrb[0].mxu0 %v7562
      %v7564 = vpop.f32.mrb[0].mxu0
      %v7565 = vadd.f32 %v7250, %v7564
      %v7566 = vpop.f32.mrb[0].mxu0
      %7567 = vmatprep.mubr.f32.mxu0 0.0
      %v7568 = vand.u32 %v6301, 4294901760
      %v7569 = vsub.f32 %v6301, %v7568
      %v7570 = vand.u32 %v7569, 4294901760
      %7571 = vmatmul.mubr.f32.gmra.mrb[0].mxu0 %v7570
      %v7572 = vpop.f32.mrb[0].mxu0
      %v7573 = vadd.f32 %v7257, %v7572
      %v7574 = vpop.f32.mrb[0].mxu0
      %7575 = vmatprep.mubr.f32.mxu0 0.0
      %v7576 = vand.u32 %v6302, 4294901760
      %v7577 = vsub.f32 %v6302, %v7576
      %v7578 = vand.u32 %v7577, 4294901760
      %7579 = vmatmul.mubr.f32.gmra.mrb[0].mxu0 %v7578
      %v7580 = vpop.f32.mrb[0].mxu0
      %v7581 = vadd.f32 %v7264, %v7580
      %v7582 = vpop.f32.mrb[0].mxu0
      %7583 = vmatprep.mubr.f32.mxu0 0.0
      %v7584 = vand.u32 %v6303, 4294901760
      %v7585 = vsub.f32 %v6303, %v7584
      %v7586 = vand.u32 %v7585, 4294901760
      %7587 = vmatmul.mubr.f32.gmra.mrb[0].mxu0 %v7586
      %v7588 = vpop.f32.mrb[0].mxu0
      %v7589 = vadd.f32 %v7271, %v7588
      %v7590 = vpop.f32.mrb[0].mxu0
      %7591 = vmatprep.mubr.f32.mxu0 0.0
      %v7592 = vand.u32 %v6304, 4294901760
      %v7593 = vsub.f32 %v6304, %v7592
      %v7594 = vand.u32 %v7593, 4294901760
      %7595 = vmatmul.mubr.f32.gmra.mrb[0].mxu0 %v7594
      %v7596 = vpop.f32.mrb[0].mxu0
      %v7597 = vadd.f32 %v7278, %v7596
      %v7598 = vpop.f32.mrb[0].mxu0
      %7599 = vmatprep.mubr.f32.mxu0 0.0
      %v7600 = vand.u32 %v6305, 4294901760
      %v7601 = vsub.f32 %v6305, %v7600
      %v7602 = vand.u32 %v7601, 4294901760
      %7603 = vmatmul.mubr.f32.gmra.mrb[0].mxu0 %v7602
      %v7604 = vpop.f32.mrb[0].mxu0
      %v7605 = vadd.f32 %v7285, %v7604
      %v7606 = vpop.f32.mrb[0].mxu0
      %7607 = vmatprep.mubr.f32.mxu0 0.0
      %v7608 = vand.u32 %v6306, 4294901760
      %v7609 = vsub.f32 %v6306, %v7608
      %v7610 = vand.u32 %v7609, 4294901760
      %7611 = vmatmul.mubr.f32.gmra.mrb[0].mxu0 %v7610
      %v7612 = vpop.f32.mrb[0].mxu0
      %v7613 = vadd.f32 %v7292, %v7612
      %v7614 = vpop.f32.mrb[0].mxu0
      %7615 = vmatprep.mubr.f32.mxu0 0.0
      %v7616 = vand.u32 %v6307, 4294901760
      %v7617 = vsub.f32 %v6307, %v7616
      %v7618 = vand.u32 %v7617, 4294901760
      %7619 = vmatmul.mubr.f32.gmra.mrb[0].mxu0 %v7618
      %v7620 = vpop.f32.mrb[0].mxu0
      %v7621 = vadd.f32 %v7299, %v7620
      %v7622 = vpop.f32.mrb[0].mxu0
      %7623 = vmatprep.mubr.f32.mxu0 0.0
      %v7624 = vand.u32 %v6308, 4294901760
      %v7625 = vsub.f32 %v6308, %v7624
      %v7626 = vand.u32 %v7625, 4294901760
      %7627 = vmatmul.mubr.f32.gmra.mrb[0].mxu0 %v7626
      %v7628 = vpop.f32.mrb[0].mxu0
      %v7629 = vadd.f32 %v7306, %v7628
      %v7630 = vpop.f32.mrb[0].mxu0
      %7631 = vmatprep.mubr.f32.mxu0 0.0
      %v7632 = vand.u32 %v6309, 4294901760
      %v7633 = vsub.f32 %v6309, %v7632
      %v7634 = vand.u32 %v7633, 4294901760
      %7635 = vmatmul.mubr.f32.gmra.mrb[0].mxu0 %v7634
      %v7636 = vpop.f32.mrb[0].mxu0
      %v7637 = vadd.f32 %v7313, %v7636
      %v7638 = vpop.f32.mrb[0].mxu0
      %7639 = vmatprep.mubr.f32.mxu0 0.0
      %v7640 = vand.u32 %v6310, 4294901760
      %v7641 = vsub.f32 %v6310, %v7640
      %v7642 = vand.u32 %v7641, 4294901760
      %7643 = vmatmul.mubr.f32.gmra.mrb[0].mxu0 %v7642
      %v7644 = vpop.f32.mrb[0].mxu0
      %v7645 = vadd.f32 %v7320, %v7644
      %v7646 = vpop.f32.mrb[0].mxu0
      %7647 = vmatprep.mubr.f32.mxu0 0.0
      %v7648 = vand.u32 %v6311, 4294901760
      %v7649 = vsub.f32 %v6311, %v7648
      %v7650 = vand.u32 %v7649, 4294901760
      %7651 = vmatmul.mubr.f32.gmra.mrb[0].mxu0 %v7650
      %v7652 = vpop.f32.mrb[0].mxu0
      %v7653 = vadd.f32 %v7327, %v7652
      %v7654 = vpop.f32.mrb[0].mxu0
      %7655 = vmatprep.mubr.f32.mxu0 0.0
      %v7656 = vand.u32 %v6312, 4294901760
      %v7657 = vsub.f32 %v6312, %v7656
      %v7658 = vand.u32 %v7657, 4294901760
      %7659 = vmatmul.mubr.f32.gmra.mrb[0].mxu0 %v7658
      %v7660 = vpop.f32.mrb[0].mxu0
      %v7661 = vadd.f32 %v7334, %v7660
      %v7662 = vpop.f32.mrb[0].mxu0
      %7663 = vmatprep.mubr.f32.mxu0 0.0
      %v7664 = vand.u32 %v6313, 4294901760
      %v7665 = vsub.f32 %v6313, %v7664
      %v7666 = vand.u32 %v7665, 4294901760
      %7667 = vmatmul.mubr.f32.gmra.mrb[0].mxu0 %v7666
      %v7668 = vpop.f32.mrb[0].mxu0
      %v7669 = vadd.f32 %v7341, %v7668
      %v7670 = vpop.f32.mrb[0].mxu0
      %7671 = vmatprep.mubr.f32.mxu0 0.0
      %v7672 = vand.u32 %v6314, 4294901760
      %v7673 = vsub.f32 %v6314, %v7672
      %v7674 = vand.u32 %v7673, 4294901760
      %7675 = vmatmul.mubr.f32.gmra.mrb[0].mxu0 %v7674
      %v7676 = vpop.f32.mrb[0].mxu0
      %v7677 = vadd.f32 %v7348, %v7676
      %v7678 = vpop.f32.mrb[0].mxu0
      %7679 = vmatprep.mubr.f32.mxu0 0.0
      %v7680 = vand.u32 %v6315, 4294901760
      %v7681 = vsub.f32 %v6315, %v7680
      %v7682 = vand.u32 %v7681, 4294901760
      %7683 = vmatmul.mubr.f32.gmra.mrb[0].mxu0 %v7682
      %v7684 = vpop.f32.mrb[0].mxu0
      %v7685 = vadd.f32 %v7355, %v7684
      %v7686 = vpop.f32.mrb[0].mxu0
      %7687 = vmatprep.mubr.f32.mxu0 0.0
      %v7688 = vand.u32 %v6316, 4294901760
      %v7689 = vsub.f32 %v6316, %v7688
      %v7690 = vand.u32 %v7689, 4294901760
      %7691 = vmatmul.mubr.f32.gmra.mrb[0].mxu0 %v7690
      %v7692 = vpop.f32.mrb[0].mxu0
      %v7693 = vadd.f32 %v7362, %v7692
      %v7694 = vpop.f32.mrb[0].mxu0
      %7695 = vmatprep.mubr.f32.mxu0 0.0
      %v7696 = vand.u32 %v6317, 4294901760
      %v7697 = vsub.f32 %v6317, %v7696
      %v7698 = vand.u32 %v7697, 4294901760
      %7699 = vmatmul.mubr.f32.gmra.mrb[0].mxu0 %v7698
      %v7700 = vpop.f32.mrb[0].mxu0
      %v7701 = vadd.f32 %v7369, %v7700
      %v7702 = vpop.f32.mrb[0].mxu0
      %7703 = vmatprep.mubr.f32.mxu0 0.0
      %v7704 = vand.u32 %v6318, 4294901760
      %v7705 = vsub.f32 %v6318, %v7704
      %v7706 = vand.u32 %v7705, 4294901760
      %7707 = vmatmul.mubr.f32.gmra.mrb[0].mxu0 %v7706
      %v7708 = vpop.f32.mrb[0].mxu0
      %v7709 = vadd.f32 %v7376, %v7708
      %v7710 = vpop.f32.mrb[0].mxu0
      %7711 = vmatprep.mubr.f32.mxu0 0.0
      %v7712 = vand.u32 %v6319, 4294901760
      %v7713 = vsub.f32 %v6319, %v7712
      %v7714 = vand.u32 %v7713, 4294901760
      %7715 = vmatmul.mubr.f32.gmra.mrb[0].mxu0 %v7714
      %v7716 = vpop.f32.mrb[0].mxu0
      %v7717 = vadd.f32 %v7383, %v7716
      %v7718 = vpop.f32.mrb[0].mxu0
      %7719 = vmatprep.mubr.f32.mxu0 0.0
      %v7720 = vand.u32 %v6320, 4294901760
      %v7721 = vsub.f32 %v6320, %v7720
      %v7722 = vand.u32 %v7721, 4294901760
      %7723 = vmatmul.mubr.f32.gmra.mrb[0].mxu0 %v7722
      %v7724 = vpop.f32.mrb[0].mxu0
      %v7725 = vadd.f32 %v7390, %v7724
      %v7726 = vpop.f32.mrb[0].mxu0
      %7727 = vmatprep.mubr.f32.mxu0 0.0
      %v7728 = vand.u32 %v6321, 4294901760
      %v7729 = vsub.f32 %v6321, %v7728
      %v7730 = vand.u32 %v7729, 4294901760
      %7731 = vmatmul.mubr.f32.gmra.mrb[0].mxu0 %v7730
      %v7732 = vpop.f32.mrb[0].mxu0
      %v7733 = vadd.f32 %v7397, %v7732
      %v7734 = vpop.f32.mrb[0].mxu0
      %7735 = vmatprep.mubr.f32.mxu0 0.0
      %v7736 = vand.u32 %v6322, 4294901760
      %v7737 = vsub.f32 %v6322, %v7736
      %v7738 = vand.u32 %v7737, 4294901760
      %7739 = vmatmul.mubr.f32.gmra.mrb[0].mxu0 %v7738
      %v7740 = vpop.f32.mrb[0].mxu0
      %v7741 = vadd.f32 %v7404, %v7740
      %v7742 = vpop.f32.mrb[0].mxu0
      %7743 = vdwg.mxu0
      %7744 = vmatprep.subr.mxu0 0.0
      %v7745 = vand.u32 %v6324, 4294901760
      %v7746 = vsub.f32 %v6324, %v7745
      %v7747 = vand.u32 %v7746, 4294901760
      %7748 = vmatpush1.msra.mxu0 %v7747
      %7749 = vmatprep.subr.mxu0 0.0
      %v7750 = vand.u32 %v6325, 4294901760
      %v7751 = vsub.f32 %v6325, %v7750
      %v7752 = vand.u32 %v7751, 4294901760
      %7753 = vmatpush1.msra.mxu0 %v7752
      %7754 = vmatprep.subr.mxu0 0.0
      %v7755 = vand.u32 %v6326, 4294901760
      %v7756 = vsub.f32 %v6326, %v7755
      %v7757 = vand.u32 %v7756, 4294901760
      %7758 = vmatpush1.msra.mxu0 %v7757
      %7759 = vmatprep.subr.mxu0 0.0
      %v7760 = vand.u32 %v6327, 4294901760
      %v7761 = vsub.f32 %v6327, %v7760
      %v7762 = vand.u32 %v7761, 4294901760
      %7763 = vmatpush1.msra.mxu0 %v7762
      %7764 = vmatprep.subr.mxu0 0.0
      %v7765 = vand.u32 %v6328, 4294901760
      %v7766 = vsub.f32 %v6328, %v7765
      %v7767 = vand.u32 %v7766, 4294901760
      %7768 = vmatpush1.msra.mxu0 %v7767
      %7769 = vmatprep.subr.mxu0 0.0
      %v7770 = vand.u32 %v6329, 4294901760
      %v7771 = vsub.f32 %v6329, %v7770
      %v7772 = vand.u32 %v7771, 4294901760
      %7773 = vmatpush1.msra.mxu0 %v7772
      %7774 = vmatprep.subr.mxu0 0.0
      %v7775 = vand.u32 %v6330, 4294901760
      %v7776 = vsub.f32 %v6330, %v7775
      %v7777 = vand.u32 %v7776, 4294901760
      %7778 = vmatpush1.msra.mxu0 %v7777
      %7779 = vmatprep.subr.mxu0 0.0
      %v7780 = vand.u32 %v6331, 4294901760
      %v7781 = vsub.f32 %v6331, %v7780
      %v7782 = vand.u32 %v7781, 4294901760
      %7783 = vmatpush1.msra.mxu0 %v7782
      %7784 = vmatprep.subr.mxu0 0.0
      %v7785 = vand.u32 %v6332, 4294901760
      %v7786 = vsub.f32 %v6332, %v7785
      %v7787 = vand.u32 %v7786, 4294901760
      %7788 = vmatpush1.msra.mxu0 %v7787
      %7789 = vmatprep.subr.mxu0 0.0
      %v7790 = vand.u32 %v6333, 4294901760
      %v7791 = vsub.f32 %v6333, %v7790
      %v7792 = vand.u32 %v7791, 4294901760
      %7793 = vmatpush1.msra.mxu0 %v7792
      %7794 = vmatprep.subr.mxu0 0.0
      %v7795 = vand.u32 %v6334, 4294901760
      %v7796 = vsub.f32 %v6334, %v7795
      %v7797 = vand.u32 %v7796, 4294901760
      %7798 = vmatpush1.msra.mxu0 %v7797
      %7799 = vmatprep.subr.mxu0 0.0
      %v7800 = vand.u32 %v6335, 4294901760
      %v7801 = vsub.f32 %v6335, %v7800
      %v7802 = vand.u32 %v7801, 4294901760
      %7803 = vmatpush1.msra.mxu0 %v7802
      %7804 = vmatprep.subr.mxu0 0.0
      %v7805 = vand.u32 %v6336, 4294901760
      %v7806 = vsub.f32 %v6336, %v7805
      %v7807 = vand.u32 %v7806, 4294901760
      %7808 = vmatpush1.msra.mxu0 %v7807
      %7809 = vmatprep.subr.mxu0 0.0
      %v7810 = vand.u32 %v6337, 4294901760
      %v7811 = vsub.f32 %v6337, %v7810
      %v7812 = vand.u32 %v7811, 4294901760
      %7813 = vmatpush1.msra.mxu0 %v7812
      %7814 = vmatprep.subr.mxu0 0.0
      %v7815 = vand.u32 %v6338, 4294901760
      %v7816 = vsub.f32 %v6338, %v7815
      %v7817 = vand.u32 %v7816, 4294901760
      %7818 = vmatpush1.msra.mxu0 %v7817
      %7819 = vmatprep.subr.mxu0 0.0
      %v7820 = vand.u32 %v6339, 4294901760
      %v7821 = vsub.f32 %v6339, %v7820
      %v7822 = vand.u32 %v7821, 4294901760
      %7823 = vmatpush1.msra.mxu0 %v7822
      %7824 = vmatprep.subr.mxu0 0.0
      %7825 = vmatpush1.msra.mxu0 0.0
      %7826 = vmatprep.subr.mxu0 0.0
      %7827 = vmatpush1.msra.mxu0 0.0
      %7828 = vmatprep.subr.mxu0 0.0
      %7829 = vmatpush1.msra.mxu0 0.0
      %7830 = vmatprep.subr.mxu0 0.0
      %7831 = vmatpush1.msra.mxu0 0.0
      %7832 = vmatprep.subr.mxu0 0.0
      %7833 = vmatpush1.msra.mxu0 0.0
      %7834 = vmatprep.subr.mxu0 0.0
      %7835 = vmatpush1.msra.mxu0 0.0
      %7836 = vmatprep.subr.mxu0 0.0
      %7837 = vmatpush1.msra.mxu0 0.0
      %7838 = vmatprep.subr.mxu0 0.0
      %7839 = vmatpush1.msra.mxu0 0.0
      %7840 = vmatprep.subr.mxu0 0.0
      %7841 = vmatpush1.msra.mxu0 0.0
      %7842 = vmatprep.subr.mxu0 0.0
      %7843 = vmatpush1.msra.mxu0 0.0
      %7844 = vmatprep.subr.mxu0 0.0
      %7845 = vmatpush1.msra.mxu0 0.0
      %7846 = vmatprep.subr.mxu0 0.0
      %7847 = vmatpush1.msra.mxu0 0.0
      %7848 = vmatprep.subr.mxu0 0.0
      %7849 = vmatpush1.msra.mxu0 0.0
      %7850 = vmatprep.subr.mxu0 0.0
      %7851 = vmatpush1.msra.mxu0 0.0
      %7852 = vmatprep.subr.mxu0 0.0
      %7853 = vmatpush1.msra.mxu0 0.0
      %7854 = vmatprep.subr.mxu0 0.0
      %7855 = vmatpush1.msra.mxu0 0.0
      %7856 = vmatprep.mubr.f32.mxu0 0.0
      %v7857 = vand.u32 %v6291, 4294901760
      %7858 = vmatmul.mubr.f32.gmra.mrb[0].mxu0 %v7857
      %v7859 = vpop.f32.mrb[0].mxu0
      %v7860 = vadd.f32 %v7493, %v7859
      %v7861 = vpop.f32.mrb[0].mxu0
      %7862 = vmatprep.mubr.f32.mxu0 0.0
      %v7863 = vand.u32 %v6292, 4294901760
      %7864 = vmatmul.mubr.f32.gmra.mrb[0].mxu0 %v7863
      %v7865 = vpop.f32.mrb[0].mxu0
      %v7866 = vadd.f32 %v7501, %v7865
      %v7867 = vpop.f32.mrb[0].mxu0
      %7868 = vmatprep.mubr.f32.mxu0 0.0
      %v7869 = vand.u32 %v6293, 4294901760
      %7870 = vmatmul.mubr.f32.gmra.mrb[0].mxu0 %v7869
      %v7871 = vpop.f32.mrb[0].mxu0
      %v7872 = vadd.f32 %v7509, %v7871
      %v7873 = vpop.f32.mrb[0].mxu0
      %7874 = vmatprep.mubr.f32.mxu0 0.0
      %v7875 = vand.u32 %v6294, 4294901760
      %7876 = vmatmul.mubr.f32.gmra.mrb[0].mxu0 %v7875
      %v7877 = vpop.f32.mrb[0].mxu0
      %v7878 = vadd.f32 %v7517, %v7877
      %v7879 = vpop.f32.mrb[0].mxu0
      %7880 = vmatprep.mubr.f32.mxu0 0.0
      %v7881 = vand.u32 %v6295, 4294901760
      %7882 = vmatmul.mubr.f32.gmra.mrb[0].mxu0 %v7881
      %v7883 = vpop.f32.mrb[0].mxu0
      %v7884 = vadd.f32 %v7525, %v7883
      %v7885 = vpop.f32.mrb[0].mxu0
      %7886 = vmatprep.mubr.f32.mxu0 0.0
      %v7887 = vand.u32 %v6296, 4294901760
      %7888 = vmatmul.mubr.f32.gmra.mrb[0].mxu0 %v7887
      %v7889 = vpop.f32.mrb[0].mxu0
      %v7890 = vadd.f32 %v7533, %v7889
      %v7891 = vpop.f32.mrb[0].mxu0
      %7892 = vmatprep.mubr.f32.mxu0 0.0
      %v7893 = vand.u32 %v6297, 4294901760
      %7894 = vmatmul.mubr.f32.gmra.mrb[0].mxu0 %v7893
      %v7895 = vpop.f32.mrb[0].mxu0
      %v7896 = vadd.f32 %v7541, %v7895
      %v7897 = vpop.f32.mrb[0].mxu0
      %7898 = vmatprep.mubr.f32.mxu0 0.0
      %v7899 = vand.u32 %v6298, 4294901760
      %7900 = vmatmul.mubr.f32.gmra.mrb[0].mxu0 %v7899
      %v7901 = vpop.f32.mrb[0].mxu0
      %v7902 = vadd.f32 %v7549, %v7901
      %v7903 = vpop.f32.mrb[0].mxu0
      %7904 = vmatprep.mubr.f32.mxu0 0.0
      %v7905 = vand.u32 %v6299, 4294901760
      %7906 = vmatmul.mubr.f32.gmra.mrb[0].mxu0 %v7905
      %v7907 = vpop.f32.mrb[0].mxu0
      %v7908 = vadd.f32 %v7557, %v7907
      %v7909 = vpop.f32.mrb[0].mxu0
      %7910 = vmatprep.mubr.f32.mxu0 0.0
      %v7911 = vand.u32 %v6300, 4294901760
      %7912 = vmatmul.mubr.f32.gmra.mrb[0].mxu0 %v7911
      %v7913 = vpop.f32.mrb[0].mxu0
      %v7914 = vadd.f32 %v7565, %v7913
      %v7915 = vpop.f32.mrb[0].mxu0
      %7916 = vmatprep.mubr.f32.mxu0 0.0
      %v7917 = vand.u32 %v6301, 4294901760
      %7918 = vmatmul.mubr.f32.gmra.mrb[0].mxu0 %v7917
      %v7919 = vpop.f32.mrb[0].mxu0
      %v7920 = vadd.f32 %v7573, %v7919
      %v7921 = vpop.f32.mrb[0].mxu0
      %7922 = vmatprep.mubr.f32.mxu0 0.0
      %v7923 = vand.u32 %v6302, 4294901760
      %7924 = vmatmul.mubr.f32.gmra.mrb[0].mxu0 %v7923
      %v7925 = vpop.f32.mrb[0].mxu0
      %v7926 = vadd.f32 %v7581, %v7925
      %v7927 = vpop.f32.mrb[0].mxu0
      %7928 = vmatprep.mubr.f32.mxu0 0.0
      %v7929 = vand.u32 %v6303, 4294901760
      %7930 = vmatmul.mubr.f32.gmra.mrb[0].mxu0 %v7929
      %v7931 = vpop.f32.mrb[0].mxu0
      %v7932 = vadd.f32 %v7589, %v7931
      %v7933 = vpop.f32.mrb[0].mxu0
      %7934 = vmatprep.mubr.f32.mxu0 0.0
      %v7935 = vand.u32 %v6304, 4294901760
      %7936 = vmatmul.mubr.f32.gmra.mrb[0].mxu0 %v7935
      %v7937 = vpop.f32.mrb[0].mxu0
      %v7938 = vadd.f32 %v7597, %v7937
      %v7939 = vpop.f32.mrb[0].mxu0
      %7940 = vmatprep.mubr.f32.mxu0 0.0
      %v7941 = vand.u32 %v6305, 4294901760
      %7942 = vmatmul.mubr.f32.gmra.mrb[0].mxu0 %v7941
      %v7943 = vpop.f32.mrb[0].mxu0
      %v7944 = vadd.f32 %v7605, %v7943
      %v7945 = vpop.f32.mrb[0].mxu0
      %7946 = vmatprep.mubr.f32.mxu0 0.0
      %v7947 = vand.u32 %v6306, 4294901760
      %7948 = vmatmul.mubr.f32.gmra.mrb[0].mxu0 %v7947
      %v7949 = vpop.f32.mrb[0].mxu0
      %v7950 = vadd.f32 %v7613, %v7949
      %v7951 = vpop.f32.mrb[0].mxu0
      %7952 = vmatprep.mubr.f32.mxu0 0.0
      %v7953 = vand.u32 %v6307, 4294901760
      %7954 = vmatmul.mubr.f32.gmra.mrb[0].mxu0 %v7953
      %v7955 = vpop.f32.mrb[0].mxu0
      %v7956 = vadd.f32 %v7621, %v7955
      %v7957 = vpop.f32.mrb[0].mxu0
      %7958 = vmatprep.mubr.f32.mxu0 0.0
      %v7959 = vand.u32 %v6308, 4294901760
      %7960 = vmatmul.mubr.f32.gmra.mrb[0].mxu0 %v7959
      %v7961 = vpop.f32.mrb[0].mxu0
      %v7962 = vadd.f32 %v7629, %v7961
      %v7963 = vpop.f32.mrb[0].mxu0
      %7964 = vmatprep.mubr.f32.mxu0 0.0
      %v7965 = vand.u32 %v6309, 4294901760
      %7966 = vmatmul.mubr.f32.gmra.mrb[0].mxu0 %v7965
      %v7967 = vpop.f32.mrb[0].mxu0
      %v7968 = vadd.f32 %v7637, %v7967
      %v7969 = vpop.f32.mrb[0].mxu0
      %7970 = vmatprep.mubr.f32.mxu0 0.0
      %v7971 = vand.u32 %v6310, 4294901760
      %7972 = vmatmul.mubr.f32.gmra.mrb[0].mxu0 %v7971
      %v7973 = vpop.f32.mrb[0].mxu0
      %v7974 = vadd.f32 %v7645, %v7973
      %v7975 = vpop.f32.mrb[0].mxu0
      %7976 = vmatprep.mubr.f32.mxu0 0.0
      %v7977 = vand.u32 %v6311, 4294901760
      %7978 = vmatmul.mubr.f32.gmra.mrb[0].mxu0 %v7977
      %v7979 = vpop.f32.mrb[0].mxu0
      %v7980 = vadd.f32 %v7653, %v7979
      %v7981 = vpop.f32.mrb[0].mxu0
      %7982 = vmatprep.mubr.f32.mxu0 0.0
      %v7983 = vand.u32 %v6312, 4294901760
      %7984 = vmatmul.mubr.f32.gmra.mrb[0].mxu0 %v7983
      %v7985 = vpop.f32.mrb[0].mxu0
      %v7986 = vadd.f32 %v7661, %v7985
      %v7987 = vpop.f32.mrb[0].mxu0
      %7988 = vmatprep.mubr.f32.mxu0 0.0
      %v7989 = vand.u32 %v6313, 4294901760
      %7990 = vmatmul.mubr.f32.gmra.mrb[0].mxu0 %v7989
      %v7991 = vpop.f32.mrb[0].mxu0
      %v7992 = vadd.f32 %v7669, %v7991
      %v7993 = vpop.f32.mrb[0].mxu0
      %7994 = vmatprep.mubr.f32.mxu0 0.0
      %v7995 = vand.u32 %v6314, 4294901760
      %7996 = vmatmul.mubr.f32.gmra.mrb[0].mxu0 %v7995
      %v7997 = vpop.f32.mrb[0].mxu0
      %v7998 = vadd.f32 %v7677, %v7997
      %v7999 = vpop.f32.mrb[0].mxu0
      %8000 = vmatprep.mubr.f32.mxu0 0.0
      %v8001 = vand.u32 %v6315, 4294901760
      %8002 = vmatmul.mubr.f32.gmra.mrb[0].mxu0 %v8001
      %v8003 = vpop.f32.mrb[0].mxu0
      %v8004 = vadd.f32 %v7685, %v8003
      %v8005 = vpop.f32.mrb[0].mxu0
      %8006 = vmatprep.mubr.f32.mxu0 0.0
      %v8007 = vand.u32 %v6316, 4294901760
      %8008 = vmatmul.mubr.f32.gmra.mrb[0].mxu0 %v8007
      %v8009 = vpop.f32.mrb[0].mxu0
      %v8010 = vadd.f32 %v7693, %v8009
      %v8011 = vpop.f32.mrb[0].mxu0
      %8012 = vmatprep.mubr.f32.mxu0 0.0
      %v8013 = vand.u32 %v6317, 4294901760
      %8014 = vmatmul.mubr.f32.gmra.mrb[0].mxu0 %v8013
      %v8015 = vpop.f32.mrb[0].mxu0
      %v8016 = vadd.f32 %v7701, %v8015
      %v8017 = vpop.f32.mrb[0].mxu0
      %8018 = vmatprep.mubr.f32.mxu0 0.0
      %v8019 = vand.u32 %v6318, 4294901760
      %8020 = vmatmul.mubr.f32.gmra.mrb[0].mxu0 %v8019
      %v8021 = vpop.f32.mrb[0].mxu0
      %v8022 = vadd.f32 %v7709, %v8021
      %v8023 = vpop.f32.mrb[0].mxu0
      %8024 = vmatprep.mubr.f32.mxu0 0.0
      %v8025 = vand.u32 %v6319, 4294901760
      %8026 = vmatmul.mubr.f32.gmra.mrb[0].mxu0 %v8025
      %v8027 = vpop.f32.mrb[0].mxu0
      %v8028 = vadd.f32 %v7717, %v8027
      %v8029 = vpop.f32.mrb[0].mxu0
      %8030 = vmatprep.mubr.f32.mxu0 0.0
      %v8031 = vand.u32 %v6320, 4294901760
      %8032 = vmatmul.mubr.f32.gmra.mrb[0].mxu0 %v8031
      %v8033 = vpop.f32.mrb[0].mxu0
      %v8034 = vadd.f32 %v7725, %v8033
      %v8035 = vpop.f32.mrb[0].mxu0
      %8036 = vmatprep.mubr.f32.mxu0 0.0
      %v8037 = vand.u32 %v6321, 4294901760
      %8038 = vmatmul.mubr.f32.gmra.mrb[0].mxu0 %v8037
      %v8039 = vpop.f32.mrb[0].mxu0
      %v8040 = vadd.f32 %v7733, %v8039
      %v8041 = vpop.f32.mrb[0].mxu0
      %8042 = vmatprep.mubr.f32.mxu0 0.0
      %v8043 = vand.u32 %v6322, 4294901760
      %8044 = vmatmul.mubr.f32.gmra.mrb[0].mxu0 %v8043
      %v8045 = vpop.f32.mrb[0].mxu0
      %v8046 = vadd.f32 %v7741, %v8045
      %v8047 = vpop.f32.mrb[0].mxu0
      %8048 = vdwg.mxu0
      %8049 = vmatprep.subr.mxu0 0.0
      %v8050 = vand.u32 %v6324, 4294901760
      %8051 = vmatpush1.msra.mxu0 %v8050
      %8052 = vmatprep.subr.mxu0 0.0
      %v8053 = vand.u32 %v6325, 4294901760
      %8054 = vmatpush1.msra.mxu0 %v8053
      %8055 = vmatprep.subr.mxu0 0.0
      %v8056 = vand.u32 %v6326, 4294901760
      %8057 = vmatpush1.msra.mxu0 %v8056
      %8058 = vmatprep.subr.mxu0 0.0
      %v8059 = vand.u32 %v6327, 4294901760
      %8060 = vmatpush1.msra.mxu0 %v8059
      %8061 = vmatprep.subr.mxu0 0.0
      %v8062 = vand.u32 %v6328, 4294901760
      %8063 = vmatpush1.msra.mxu0 %v8062
      %8064 = vmatprep.subr.mxu0 0.0
      %v8065 = vand.u32 %v6329, 4294901760
      %8066 = vmatpush1.msra.mxu0 %v8065
      %8067 = vmatprep.subr.mxu0 0.0
      %v8068 = vand.u32 %v6330, 4294901760
      %8069 = vmatpush1.msra.mxu0 %v8068
      %8070 = vmatprep.subr.mxu0 0.0
      %v8071 = vand.u32 %v6331, 4294901760
      %8072 = vmatpush1.msra.mxu0 %v8071
      %8073 = vmatprep.subr.mxu0 0.0
      %v8074 = vand.u32 %v6332, 4294901760
      %8075 = vmatpush1.msra.mxu0 %v8074
      %8076 = vmatprep.subr.mxu0 0.0
      %v8077 = vand.u32 %v6333, 4294901760
      %8078 = vmatpush1.msra.mxu0 %v8077
      %8079 = vmatprep.subr.mxu0 0.0
      %v8080 = vand.u32 %v6334, 4294901760
      %8081 = vmatpush1.msra.mxu0 %v8080
      %8082 = vmatprep.subr.mxu0 0.0
      %v8083 = vand.u32 %v6335, 4294901760
      %8084 = vmatpush1.msra.mxu0 %v8083
      %8085 = vmatprep.subr.mxu0 0.0
      %v8086 = vand.u32 %v6336, 4294901760
      %8087 = vmatpush1.msra.mxu0 %v8086
      %8088 = vmatprep.subr.mxu0 0.0
      %v8089 = vand.u32 %v6337, 4294901760
      %8090 = vmatpush1.msra.mxu0 %v8089
      %8091 = vmatprep.subr.mxu0 0.0
      %v8092 = vand.u32 %v6338, 4294901760
      %8093 = vmatpush1.msra.mxu0 %v8092
      %8094 = vmatprep.subr.mxu0 0.0
      %v8095 = vand.u32 %v6339, 4294901760
      %8096 = vmatpush1.msra.mxu0 %v8095
      %8097 = vmatprep.subr.mxu0 0.0
      %8098 = vmatpush1.msra.mxu0 0.0
      %8099 = vmatprep.subr.mxu0 0.0
      %8100 = vmatpush1.msra.mxu0 0.0
      %8101 = vmatprep.subr.mxu0 0.0
      %8102 = vmatpush1.msra.mxu0 0.0
      %8103 = vmatprep.subr.mxu0 0.0
      %8104 = vmatpush1.msra.mxu0 0.0
      %8105 = vmatprep.subr.mxu0 0.0
      %8106 = vmatpush1.msra.mxu0 0.0
      %8107 = vmatprep.subr.mxu0 0.0
      %8108 = vmatpush1.msra.mxu0 0.0
      %8109 = vmatprep.subr.mxu0 0.0
      %8110 = vmatpush1.msra.mxu0 0.0
      %8111 = vmatprep.subr.mxu0 0.0
      %8112 = vmatpush1.msra.mxu0 0.0
      %8113 = vmatprep.subr.mxu0 0.0
      %8114 = vmatpush1.msra.mxu0 0.0
      %8115 = vmatprep.subr.mxu0 0.0
      %8116 = vmatpush1.msra.mxu0 0.0
      %8117 = vmatprep.subr.mxu0 0.0
      %8118 = vmatpush1.msra.mxu0 0.0
      %8119 = vmatprep.subr.mxu0 0.0
      %8120 = vmatpush1.msra.mxu0 0.0
      %8121 = vmatprep.subr.mxu0 0.0
      %8122 = vmatpush1.msra.mxu0 0.0
      %8123 = vmatprep.subr.mxu0 0.0
      %8124 = vmatpush1.msra.mxu0 0.0
      %8125 = vmatprep.subr.mxu0 0.0
      %8126 = vmatpush1.msra.mxu0 0.0
      %8127 = vmatprep.subr.mxu0 0.0
      %8128 = vmatpush1.msra.mxu0 0.0
      %8129 = vmatprep.mubr.f32.mxu0 0.0
      %v8130 = vand.u32 %v6291, 4294901760
      %8131 = vmatmul.mubr.f32.gmra.mrb[0].mxu0 %v8130
      %v8132 = vpop.f32.mrb[0].mxu0
      %v8133 = vadd.f32 %v7860, %v8132
      %v8134 = vpop.f32.mrb[0].mxu0
      %8135 = vmatprep.mubr.f32.mxu0 0.0
      %v8136 = vand.u32 %v6292, 4294901760
      %8137 = vmatmul.mubr.f32.gmra.mrb[0].mxu0 %v8136
      %v8138 = vpop.f32.mrb[0].mxu0
      %v8139 = vadd.f32 %v7866, %v8138
      %v8140 = vpop.f32.mrb[0].mxu0
      %8141 = vmatprep.mubr.f32.mxu0 0.0
      %v8142 = vand.u32 %v6293, 4294901760
      %8143 = vmatmul.mubr.f32.gmra.mrb[0].mxu0 %v8142
      %v8144 = vpop.f32.mrb[0].mxu0
      %v8145 = vadd.f32 %v7872, %v8144
      %v8146 = vpop.f32.mrb[0].mxu0
      %8147 = vmatprep.mubr.f32.mxu0 0.0
      %v8148 = vand.u32 %v6294, 4294901760
      %8149 = vmatmul.mubr.f32.gmra.mrb[0].mxu0 %v8148
      %v8150 = vpop.f32.mrb[0].mxu0
      %v8151 = vadd.f32 %v7878, %v8150
      %v8152 = vpop.f32.mrb[0].mxu0
      %8153 = vmatprep.mubr.f32.mxu0 0.0
      %v8154 = vand.u32 %v6295, 4294901760
      %8155 = vmatmul.mubr.f32.gmra.mrb[0].mxu0 %v8154
      %v8156 = vpop.f32.mrb[0].mxu0
      %v8157 = vadd.f32 %v7884, %v8156
      %v8158 = vpop.f32.mrb[0].mxu0
      %8159 = vmatprep.mubr.f32.mxu0 0.0
      %v8160 = vand.u32 %v6296, 4294901760
      %8161 = vmatmul.mubr.f32.gmra.mrb[0].mxu0 %v8160
      %v8162 = vpop.f32.mrb[0].mxu0
      %v8163 = vadd.f32 %v7890, %v8162
      %v8164 = vpop.f32.mrb[0].mxu0
      %8165 = vmatprep.mubr.f32.mxu0 0.0
      %v8166 = vand.u32 %v6297, 4294901760
      %8167 = vmatmul.mubr.f32.gmra.mrb[0].mxu0 %v8166
      %v8168 = vpop.f32.mrb[0].mxu0
      %v8169 = vadd.f32 %v7896, %v8168
      %v8170 = vpop.f32.mrb[0].mxu0
      %8171 = vmatprep.mubr.f32.mxu0 0.0
      %v8172 = vand.u32 %v6298, 4294901760
      %8173 = vmatmul.mubr.f32.gmra.mrb[0].mxu0 %v8172
      %v8174 = vpop.f32.mrb[0].mxu0
      %v8175 = vadd.f32 %v7902, %v8174
      %v8176 = vpop.f32.mrb[0].mxu0
      %8177 = vmatprep.mubr.f32.mxu0 0.0
      %v8178 = vand.u32 %v6299, 4294901760
      %8179 = vmatmul.mubr.f32.gmra.mrb[0].mxu0 %v8178
      %v8180 = vpop.f32.mrb[0].mxu0
      %v8181 = vadd.f32 %v7908, %v8180
      %v8182 = vpop.f32.mrb[0].mxu0
      %8183 = vmatprep.mubr.f32.mxu0 0.0
      %v8184 = vand.u32 %v6300, 4294901760
      %8185 = vmatmul.mubr.f32.gmra.mrb[0].mxu0 %v8184
      %v8186 = vpop.f32.mrb[0].mxu0
      %v8187 = vadd.f32 %v7914, %v8186
      %v8188 = vpop.f32.mrb[0].mxu0
      %8189 = vmatprep.mubr.f32.mxu0 0.0
      %v8190 = vand.u32 %v6301, 4294901760
      %8191 = vmatmul.mubr.f32.gmra.mrb[0].mxu0 %v8190
      %v8192 = vpop.f32.mrb[0].mxu0
      %v8193 = vadd.f32 %v7920, %v8192
      %v8194 = vpop.f32.mrb[0].mxu0
      %8195 = vmatprep.mubr.f32.mxu0 0.0
      %v8196 = vand.u32 %v6302, 4294901760
      %8197 = vmatmul.mubr.f32.gmra.mrb[0].mxu0 %v8196
      %v8198 = vpop.f32.mrb[0].mxu0
      %v8199 = vadd.f32 %v7926, %v8198
      %v8200 = vpop.f32.mrb[0].mxu0
      %8201 = vmatprep.mubr.f32.mxu0 0.0
      %v8202 = vand.u32 %v6303, 4294901760
      %8203 = vmatmul.mubr.f32.gmra.mrb[0].mxu0 %v8202
      %v8204 = vpop.f32.mrb[0].mxu0
      %v8205 = vadd.f32 %v7932, %v8204
      %v8206 = vpop.f32.mrb[0].mxu0
      %8207 = vmatprep.mubr.f32.mxu0 0.0
      %v8208 = vand.u32 %v6304, 4294901760
      %8209 = vmatmul.mubr.f32.gmra.mrb[0].mxu0 %v8208
      %v8210 = vpop.f32.mrb[0].mxu0
      %v8211 = vadd.f32 %v7938, %v8210
      %v8212 = vpop.f32.mrb[0].mxu0
      %8213 = vmatprep.mubr.f32.mxu0 0.0
      %v8214 = vand.u32 %v6305, 4294901760
      %8215 = vmatmul.mubr.f32.gmra.mrb[0].mxu0 %v8214
      %v8216 = vpop.f32.mrb[0].mxu0
      %v8217 = vadd.f32 %v7944, %v8216
      %v8218 = vpop.f32.mrb[0].mxu0
      %8219 = vmatprep.mubr.f32.mxu0 0.0
      %v8220 = vand.u32 %v6306, 4294901760
      %8221 = vmatmul.mubr.f32.gmra.mrb[0].mxu0 %v8220
      %v8222 = vpop.f32.mrb[0].mxu0
      %v8223 = vadd.f32 %v7950, %v8222
      %v8224 = vpop.f32.mrb[0].mxu0
      %8225 = vmatprep.mubr.f32.mxu0 0.0
      %v8226 = vand.u32 %v6307, 4294901760
      %8227 = vmatmul.mubr.f32.gmra.mrb[0].mxu0 %v8226
      %v8228 = vpop.f32.mrb[0].mxu0
      %v8229 = vadd.f32 %v7956, %v8228
      %v8230 = vpop.f32.mrb[0].mxu0
      %8231 = vmatprep.mubr.f32.mxu0 0.0
      %v8232 = vand.u32 %v6308, 4294901760
      %8233 = vmatmul.mubr.f32.gmra.mrb[0].mxu0 %v8232
      %v8234 = vpop.f32.mrb[0].mxu0
      %v8235 = vadd.f32 %v7962, %v8234
      %v8236 = vpop.f32.mrb[0].mxu0
      %8237 = vmatprep.mubr.f32.mxu0 0.0
      %v8238 = vand.u32 %v6309, 4294901760
      %8239 = vmatmul.mubr.f32.gmra.mrb[0].mxu0 %v8238
      %v8240 = vpop.f32.mrb[0].mxu0
      %v8241 = vadd.f32 %v7968, %v8240
      %v8242 = vpop.f32.mrb[0].mxu0
      %8243 = vmatprep.mubr.f32.mxu0 0.0
      %v8244 = vand.u32 %v6310, 4294901760
      %8245 = vmatmul.mubr.f32.gmra.mrb[0].mxu0 %v8244
      %v8246 = vpop.f32.mrb[0].mxu0
      %v8247 = vadd.f32 %v7974, %v8246
      %v8248 = vpop.f32.mrb[0].mxu0
      %8249 = vmatprep.mubr.f32.mxu0 0.0
      %v8250 = vand.u32 %v6311, 4294901760
      %8251 = vmatmul.mubr.f32.gmra.mrb[0].mxu0 %v8250
      %v8252 = vpop.f32.mrb[0].mxu0
      %v8253 = vadd.f32 %v7980, %v8252
      %v8254 = vpop.f32.mrb[0].mxu0
      %8255 = vmatprep.mubr.f32.mxu0 0.0
      %v8256 = vand.u32 %v6312, 4294901760
      %8257 = vmatmul.mubr.f32.gmra.mrb[0].mxu0 %v8256
      %v8258 = vpop.f32.mrb[0].mxu0
      %v8259 = vadd.f32 %v7986, %v8258
      %v8260 = vpop.f32.mrb[0].mxu0
      %8261 = vmatprep.mubr.f32.mxu0 0.0
      %v8262 = vand.u32 %v6313, 4294901760
      %8263 = vmatmul.mubr.f32.gmra.mrb[0].mxu0 %v8262
      %v8264 = vpop.f32.mrb[0].mxu0
      %v8265 = vadd.f32 %v7992, %v8264
      %v8266 = vpop.f32.mrb[0].mxu0
      %8267 = vmatprep.mubr.f32.mxu0 0.0
      %v8268 = vand.u32 %v6314, 4294901760
      %8269 = vmatmul.mubr.f32.gmra.mrb[0].mxu0 %v8268
      %v8270 = vpop.f32.mrb[0].mxu0
      %v8271 = vadd.f32 %v7998, %v8270
      %v8272 = vpop.f32.mrb[0].mxu0
      %8273 = vmatprep.mubr.f32.mxu0 0.0
      %v8274 = vand.u32 %v6315, 4294901760
      %8275 = vmatmul.mubr.f32.gmra.mrb[0].mxu0 %v8274
      %v8276 = vpop.f32.mrb[0].mxu0
      %v8277 = vadd.f32 %v8004, %v8276
      %v8278 = vpop.f32.mrb[0].mxu0
      %8279 = vmatprep.mubr.f32.mxu0 0.0
      %v8280 = vand.u32 %v6316, 4294901760
      %8281 = vmatmul.mubr.f32.gmra.mrb[0].mxu0 %v8280
      %v8282 = vpop.f32.mrb[0].mxu0
      %v8283 = vadd.f32 %v8010, %v8282
      %v8284 = vpop.f32.mrb[0].mxu0
      %8285 = vmatprep.mubr.f32.mxu0 0.0
      %v8286 = vand.u32 %v6317, 4294901760
      %8287 = vmatmul.mubr.f32.gmra.mrb[0].mxu0 %v8286
      %v8288 = vpop.f32.mrb[0].mxu0
      %v8289 = vadd.f32 %v8016, %v8288
      %v8290 = vpop.f32.mrb[0].mxu0
      %8291 = vmatprep.mubr.f32.mxu0 0.0
      %v8292 = vand.u32 %v6318, 4294901760
      %8293 = vmatmul.mubr.f32.gmra.mrb[0].mxu0 %v8292
      %v8294 = vpop.f32.mrb[0].mxu0
      %v8295 = vadd.f32 %v8022, %v8294
      %v8296 = vpop.f32.mrb[0].mxu0
      %8297 = vmatprep.mubr.f32.mxu0 0.0
      %v8298 = vand.u32 %v6319, 4294901760
      %8299 = vmatmul.mubr.f32.gmra.mrb[0].mxu0 %v8298
      %v8300 = vpop.f32.mrb[0].mxu0
      %v8301 = vadd.f32 %v8028, %v8300
      %v8302 = vpop.f32.mrb[0].mxu0
      %8303 = vmatprep.mubr.f32.mxu0 0.0
      %v8304 = vand.u32 %v6320, 4294901760
      %8305 = vmatmul.mubr.f32.gmra.mrb[0].mxu0 %v8304
      %v8306 = vpop.f32.mrb[0].mxu0
      %v8307 = vadd.f32 %v8034, %v8306
      %v8308 = vpop.f32.mrb[0].mxu0
      %8309 = vmatprep.mubr.f32.mxu0 0.0
      %v8310 = vand.u32 %v6321, 4294901760
      %8311 = vmatmul.mubr.f32.gmra.mrb[0].mxu0 %v8310
      %v8312 = vpop.f32.mrb[0].mxu0
      %v8313 = vadd.f32 %v8040, %v8312
      %v8314 = vpop.f32.mrb[0].mxu0
      %8315 = vmatprep.mubr.f32.mxu0 0.0
      %v8316 = vand.u32 %v6322, 4294901760
      %8317 = vmatmul.mubr.f32.gmra.mrb[0].mxu0 %v8316
      %v8318 = vpop.f32.mrb[0].mxu0
      %v8319 = vadd.f32 %v8046, %v8318
      %v8320 = vpop.f32.mrb[0].mxu0
      %8321 = vdwg.mxu0
      %8322 = vst [vmem:[#allocation2 + $0x18] sm:$0xff] %v8133
      %8323 = vst [vmem:[#allocation2 + $0x20] sm:$0xff] %v8139
      %8324 = vst [vmem:[#allocation2 + $0x28] sm:$0xff] %v8145
      %8325 = vst [vmem:[#allocation2 + $0x30] sm:$0xff] %v8151
      %8326 = vst [vmem:[#allocation2 + $0x38] sm:$0xff] %v8157
      %8327 = vst [vmem:[#allocation2 + $0x40] sm:$0xff] %v8163
      %8328 = vst [vmem:[#allocation2 + $0x48] sm:$0xff] %v8169
      %8329 = vst [vmem:[#allocation2 + $0x50] sm:$0xff] %v8175
      %8330 = vst [vmem:[#allocation2 + $0x58] sm:$0xff] %v8181
      %8331 = vst [vmem:[#allocation2 + $0x60] sm:$0xff] %v8187
      %8332 = vst [vmem:[#allocation2 + $0x68] sm:$0xff] %v8193
      %8333 = vst [vmem:[#allocation2 + $0x70] sm:$0xff] %v8199
      %8334 = vst [vmem:[#allocation2 + $0x78] sm:$0xff] %v8205
      %8335 = vst [vmem:[#allocation2 + $0x80] sm:$0xff] %v8211
      %8336 = vst [vmem:[#allocation2 + $0x88] sm:$0xff] %v8217
      %8337 = vst [vmem:[#allocation2 + $0x90] sm:$0xff] %v8223
      %8338 = vst [vmem:[#allocation2 + $0x98] sm:$0xff] %v8229
      %8339 = vst [vmem:[#allocation2 + $0xa0] sm:$0xff] %v8235
      %8340 = vst [vmem:[#allocation2 + $0xa8] sm:$0xff] %v8241
      %8341 = vst [vmem:[#allocation2 + $0xb0] sm:$0xff] %v8247
      %8342 = vst [vmem:[#allocation2 + $0xb8] sm:$0xff] %v8253
      %8343 = vst [vmem:[#allocation2 + $0xc0] sm:$0xff] %v8259
      %8344 = vst [vmem:[#allocation2 + $0xc8] sm:$0xff] %v8265
      %8345 = vst [vmem:[#allocation2 + $0xd0] sm:$0xff] %v8271
      %8346 = vst [vmem:[#allocation2 + $0xd8] sm:$0xff] %v8277
      %8347 = vst [vmem:[#allocation2 + $0xe0] sm:$0xff] %v8283
      %8348 = vst [vmem:[#allocation2 + $0xe8] sm:$0xff] %v8289
      %8349 = vst [vmem:[#allocation2 + $0xf0] sm:$0xff] %v8295
      %8350 = vst [vmem:[#allocation2 + $0xf8] sm:$0xff] %v8301
      %8351 = vst [vmem:[#allocation2 + $0x100] sm:$0xff] %v8307
      %8352 = vst [vmem:[#allocation2 + $0x108] sm:$0xff] %v8313
      %8353 = vst [vmem:[#allocation2 + $0x110] sm:$0xff] %v8319
      %s8354 = scalar_lea.vmem %s3, 32
      %v8355 = vld [vmem:[%s8354] sm:$0xff]
      %v8356 = vld [vmem:[%s8354 + $0x8] sm:$0x1]
      %v8357 = vlaneseq
      %v8358 = vshrl.u32 %v8357, 7
      %v8359 = vsub.s32 4, %v8358
      %v8360 = vrot.slane %v8355, %v8359
      %v8361 = vmul.f32 %v8133, %v8360
      %v8362 = vmul.f32 %v8139, %v8360
      %v8363 = vmul.f32 %v8145, %v8360
      %v8364 = vmul.f32 %v8151, %v8360
      %v8365 = vmul.f32 %v8157, %v8360
      %v8366 = vmul.f32 %v8163, %v8360
      %v8367 = vmul.f32 %v8169, %v8360
      %v8368 = vmul.f32 %v8175, %v8360
      %v8369 = vmul.f32 %v8181, %v8360
      %v8370 = vmul.f32 %v8187, %v8360
      %v8371 = vmul.f32 %v8193, %v8360
      %v8372 = vmul.f32 %v8199, %v8360
      %v8373 = vmul.f32 %v8205, %v8360
      %v8374 = vmul.f32 %v8211, %v8360
      %v8375 = vmul.f32 %v8217, %v8360
      %v8376 = vmul.f32 %v8223, %v8360
      %v8377 = vmul.f32 %v8229, %v8360
      %v8378 = vmul.f32 %v8235, %v8360
      %v8379 = vmul.f32 %v8241, %v8360
      %v8380 = vmul.f32 %v8247, %v8360
      %v8381 = vmul.f32 %v8253, %v8360
      %v8382 = vmul.f32 %v8259, %v8360
      %v8383 = vmul.f32 %v8265, %v8360
      %v8384 = vmul.f32 %v8271, %v8360
      %v8385 = vmul.f32 %v8277, %v8360
      %v8386 = vmul.f32 %v8283, %v8360
      %v8387 = vmul.f32 %v8289, %v8360
      %v8388 = vmul.f32 %v8295, %v8360
      %v8389 = vmul.f32 %v8301, %v8360
      %v8390 = vmul.f32 %v8307, %v8360
      %v8391 = vmul.f32 %v8313, %v8360
      %v8392 = vmul.f32 %v8319, %v8360
      %v8393 = vld [vmem:[#allocation2 + $0x7] sm:$0xff]
      %v8394 = vld [vmem:[#allocation2 + $0xf] sm:$0xff]
      %v8395 = vld [vmem:[#allocation2 + $0x17] sm:$0xff]
      %v8396 = vld [vmem:[#allocation2 + $0x1f] sm:$0xff]
      %v8397 = vld [vmem:[#allocation2 + $0x27] sm:$0xff]
      %v8398 = vld [vmem:[#allocation2 + $0x2f] sm:$0xff]
      %v8399 = vld [vmem:[#allocation2 + $0x37] sm:$0xff]
      %v8400 = vld [vmem:[#allocation2 + $0x3f] sm:$0xff]
      %v8401 = vld [vmem:[#allocation2 + $0x47] sm:$0xff]
      %v8402 = vld [vmem:[#allocation2 + $0x4f] sm:$0xff]
      %v8403 = vld [vmem:[#allocation2 + $0x57] sm:$0xff]
      %v8404 = vld [vmem:[#allocation2 + $0x5f] sm:$0xff]
      %v8405 = vld [vmem:[#allocation2 + $0x67] sm:$0xff]
      %v8406 = vld [vmem:[#allocation2 + $0x6f] sm:$0xff]
      %v8407 = vld [vmem:[#allocation2 + $0x77] sm:$0xff]
      %v8408 = vld [vmem:[#allocation2 + $0x7f] sm:$0xff]
      %v8409 = vld [vmem:[#allocation2 + $0x87] sm:$0xff]
      %v8410 = vld [vmem:[#allocation2 + $0x8f] sm:$0xff]
      %v8411 = vld [vmem:[#allocation2 + $0x97] sm:$0xff]
      %v8412 = vld [vmem:[#allocation2 + $0x9f] sm:$0xff]
      %v8413 = vld [vmem:[#allocation2 + $0xa7] sm:$0xff]
      %v8414 = vld [vmem:[#allocation2 + $0xaf] sm:$0xff]
      %v8415 = vld [vmem:[#allocation2 + $0xb7] sm:$0xff]
      %v8416 = vld [vmem:[#allocation2 + $0xbf] sm:$0xff]
      %v8417 = vld [vmem:[#allocation2 + $0xc7] sm:$0xff]
      %v8418 = vld [vmem:[#allocation2 + $0xcf] sm:$0xff]
      %v8419 = vld [vmem:[#allocation2 + $0xd7] sm:$0xff]
      %v8420 = vld [vmem:[#allocation2 + $0xdf] sm:$0xff]
      %v8421 = vld [vmem:[#allocation2 + $0xe7] sm:$0xff]
      %v8422 = vld [vmem:[#allocation2 + $0xef] sm:$0xff]
      %v8423 = vld [vmem:[#allocation2 + $0xf7] sm:$0xff]
      %v8424 = vld [vmem:[#allocation2 + $0xff] sm:$0xff]
      %v8425 = vmul.f32 %v8393, %v258
      %v8426 = vmul.f32 %v8394, %v259
      %v8427 = vmul.f32 %v8395, %v260
      %v8428 = vmul.f32 %v8396, %v261
      %v8429 = vmul.f32 %v8397, %v262
      %v8430 = vmul.f32 %v8398, %v263
      %v8431 = vmul.f32 %v8399, %v264
      %v8432 = vmul.f32 %v8400, %v265
      %v8433 = vmul.f32 %v8401, %v266
      %v8434 = vmul.f32 %v8402, %v267
      %v8435 = vmul.f32 %v8403, %v268
      %v8436 = vmul.f32 %v8404, %v269
      %v8437 = vmul.f32 %v8405, %v270
      %v8438 = vmul.f32 %v8406, %v271
      %v8439 = vmul.f32 %v8407, %v272
      %v8440 = vmul.f32 %v8408, %v273
      %v8441 = vmul.f32 %v8409, %v274
      %v8442 = vmul.f32 %v8410, %v275
      %v8443 = vmul.f32 %v8411, %v276
      %v8444 = vmul.f32 %v8412, %v277
      %v8445 = vmul.f32 %v8413, %v278
      %v8446 = vmul.f32 %v8414, %v279
      %v8447 = vmul.f32 %v8415, %v280
      %v8448 = vmul.f32 %v8416, %v281
      %v8449 = vmul.f32 %v8417, %v282
      %v8450 = vmul.f32 %v8418, %v283
      %v8451 = vmul.f32 %v8419, %v284
      %v8452 = vmul.f32 %v8420, %v285
      %v8453 = vmul.f32 %v8421, %v286
      %v8454 = vmul.f32 %v8422, %v287
      %v8455 = vmul.f32 %v8423, %v288
      %v8456 = vmul.f32 %v8424, %v289
      %v8457 = vlaneseq
      %v8458 = vshrl.u32 %v8457, 7
      %v8459 = vsub.s32 0, %v8458
      %v8460 = vrot.slane %v8355, %v8459
      %v8461 = vmul.f32 %v8425, %v8460
      %v8462 = vmul.f32 %v8426, %v8460
      %v8463 = vmul.f32 %v8427, %v8460
      %v8464 = vmul.f32 %v8428, %v8460
      %v8465 = vmul.f32 %v8429, %v8460
      %v8466 = vmul.f32 %v8430, %v8460
      %v8467 = vmul.f32 %v8431, %v8460
      %v8468 = vmul.f32 %v8432, %v8460
      %v8469 = vmul.f32 %v8433, %v8460
      %v8470 = vmul.f32 %v8434, %v8460
      %v8471 = vmul.f32 %v8435, %v8460
      %v8472 = vmul.f32 %v8436, %v8460
      %v8473 = vmul.f32 %v8437, %v8460
      %v8474 = vmul.f32 %v8438, %v8460
      %v8475 = vmul.f32 %v8439, %v8460
      %v8476 = vmul.f32 %v8440, %v8460
      %v8477 = vmul.f32 %v8441, %v8460
      %v8478 = vmul.f32 %v8442, %v8460
      %v8479 = vmul.f32 %v8443, %v8460
      %v8480 = vmul.f32 %v8444, %v8460
      %v8481 = vmul.f32 %v8445, %v8460
      %v8482 = vmul.f32 %v8446, %v8460
      %v8483 = vmul.f32 %v8447, %v8460
      %v8484 = vmul.f32 %v8448, %v8460
      %v8485 = vmul.f32 %v8449, %v8460
      %v8486 = vmul.f32 %v8450, %v8460
      %v8487 = vmul.f32 %v8451, %v8460
      %v8488 = vmul.f32 %v8452, %v8460
      %v8489 = vmul.f32 %v8453, %v8460
      %v8490 = vmul.f32 %v8454, %v8460
      %v8491 = vmul.f32 %v8455, %v8460
      %v8492 = vmul.f32 %v8456, %v8460
      %v8493 = vld [vmem:[#allocation2 + $0x8] sm:$0xff]
      %v8494 = vld [vmem:[#allocation2 + $0x10] sm:$0xff]
      %v8495 = vld [vmem:[#allocation2 + $0x18] sm:$0xff]
      %v8496 = vld [vmem:[#allocation2 + $0x20] sm:$0xff]
      %v8497 = vld [vmem:[#allocation2 + $0x28] sm:$0xff]
      %v8498 = vld [vmem:[#allocation2 + $0x30] sm:$0xff]
      %v8499 = vld [vmem:[#allocation2 + $0x38] sm:$0xff]
      %v8500 = vld [vmem:[#allocation2 + $0x40] sm:$0xff]
      %v8501 = vld [vmem:[#allocation2 + $0x48] sm:$0xff]
      %v8502 = vld [vmem:[#allocation2 + $0x50] sm:$0xff]
      %v8503 = vld [vmem:[#allocation2 + $0x58] sm:$0xff]
      %v8504 = vld [vmem:[#allocation2 + $0x60] sm:$0xff]
      %v8505 = vld [vmem:[#allocation2 + $0x68] sm:$0xff]
      %v8506 = vld [vmem:[#allocation2 + $0x70] sm:$0xff]
      %v8507 = vld [vmem:[#allocation2 + $0x78] sm:$0xff]
      %v8508 = vld [vmem:[#allocation2 + $0x80] sm:$0xff]
      %v8509 = vld [vmem:[#allocation2 + $0x88] sm:$0xff]
      %v8510 = vld [vmem:[#allocation2 + $0x90] sm:$0xff]
      %v8511 = vld [vmem:[#allocation2 + $0x98] sm:$0xff]
      %v8512 = vld [vmem:[#allocation2 + $0xa0] sm:$0xff]
      %v8513 = vld [vmem:[#allocation2 + $0xa8] sm:$0xff]
      %v8514 = vld [vmem:[#allocation2 + $0xb0] sm:$0xff]
      %v8515 = vld [vmem:[#allocation2 + $0xb8] sm:$0xff]
      %v8516 = vld [vmem:[#allocation2 + $0xc0] sm:$0xff]
      %v8517 = vld [vmem:[#allocation2 + $0xc8] sm:$0xff]
      %v8518 = vld [vmem:[#allocation2 + $0xd0] sm:$0xff]
      %v8519 = vld [vmem:[#allocation2 + $0xd8] sm:$0xff]
      %v8520 = vld [vmem:[#allocation2 + $0xe0] sm:$0xff]
      %v8521 = vld [vmem:[#allocation2 + $0xe8] sm:$0xff]
      %v8522 = vld [vmem:[#allocation2 + $0xf0] sm:$0xff]
      %v8523 = vld [vmem:[#allocation2 + $0xf8] sm:$0xff]
      %v8524 = vld [vmem:[#allocation2 + $0x100] sm:$0xff]
      %v8525 = vlaneseq
      %v8526 = vshrl.u32 %v8525, 7
      %v8527 = vsub.s32 1, %v8526
      %v8528 = vrot.slane %v8355, %v8527
      %v8529 = vmul.f32 %v8493, %v8528
      %v8530 = vmul.f32 %v8494, %v8528
      %v8531 = vmul.f32 %v8495, %v8528
      %v8532 = vmul.f32 %v8496, %v8528
      %v8533 = vmul.f32 %v8497, %v8528
      %v8534 = vmul.f32 %v8498, %v8528
      %v8535 = vmul.f32 %v8499, %v8528
      %v8536 = vmul.f32 %v8500, %v8528
      %v8537 = vmul.f32 %v8501, %v8528
      %v8538 = vmul.f32 %v8502, %v8528
      %v8539 = vmul.f32 %v8503, %v8528
      %v8540 = vmul.f32 %v8504, %v8528
      %v8541 = vmul.f32 %v8505, %v8528
      %v8542 = vmul.f32 %v8506, %v8528
      %v8543 = vmul.f32 %v8507, %v8528
      %v8544 = vmul.f32 %v8508, %v8528
      %v8545 = vmul.f32 %v8509, %v8528
      %v8546 = vmul.f32 %v8510, %v8528
      %v8547 = vmul.f32 %v8511, %v8528
      %v8548 = vmul.f32 %v8512, %v8528
      %v8549 = vmul.f32 %v8513, %v8528
      %v8550 = vmul.f32 %v8514, %v8528
      %v8551 = vmul.f32 %v8515, %v8528
      %v8552 = vmul.f32 %v8516, %v8528
      %v8553 = vmul.f32 %v8517, %v8528
      %v8554 = vmul.f32 %v8518, %v8528
      %v8555 = vmul.f32 %v8519, %v8528
      %v8556 = vmul.f32 %v8520, %v8528
      %v8557 = vmul.f32 %v8521, %v8528
      %v8558 = vmul.f32 %v8522, %v8528
      %v8559 = vmul.f32 %v8523, %v8528
      %v8560 = vmul.f32 %v8524, %v8528
      %v8561 = vadd.f32 %v8361, %v8529
      %v8562 = vadd.f32 %v8362, %v8530
      %v8563 = vadd.f32 %v8363, %v8531
      %v8564 = vadd.f32 %v8364, %v8532
      %v8565 = vadd.f32 %v8365, %v8533
      %v8566 = vadd.f32 %v8366, %v8534
      %v8567 = vadd.f32 %v8367, %v8535
      %v8568 = vadd.f32 %v8368, %v8536
      %v8569 = vadd.f32 %v8369, %v8537
      %v8570 = vadd.f32 %v8370, %v8538
      %v8571 = vadd.f32 %v8371, %v8539
      %v8572 = vadd.f32 %v8372, %v8540
      %v8573 = vadd.f32 %v8373, %v8541
      %v8574 = vadd.f32 %v8374, %v8542
      %v8575 = vadd.f32 %v8375, %v8543
      %v8576 = vadd.f32 %v8376, %v8544
      %v8577 = vadd.f32 %v8377, %v8545
      %v8578 = vadd.f32 %v8378, %v8546
      %v8579 = vadd.f32 %v8379, %v8547
      %v8580 = vadd.f32 %v8380, %v8548
      %v8581 = vadd.f32 %v8381, %v8549
      %v8582 = vadd.f32 %v8382, %v8550
      %v8583 = vadd.f32 %v8383, %v8551
      %v8584 = vadd.f32 %v8384, %v8552
      %v8585 = vadd.f32 %v8385, %v8553
      %v8586 = vadd.f32 %v8386, %v8554
      %v8587 = vadd.f32 %v8387, %v8555
      %v8588 = vadd.f32 %v8388, %v8556
      %v8589 = vadd.f32 %v8389, %v8557
      %v8590 = vadd.f32 %v8390, %v8558
      %v8591 = vadd.f32 %v8391, %v8559
      %v8592 = vadd.f32 %v8392, %v8560
      %v8593 = vld [vmem:[#allocation2 + $0x9] sm:$0xff]
      %v8594 = vld [vmem:[#allocation2 + $0x11] sm:$0xff]
      %v8595 = vld [vmem:[#allocation2 + $0x19] sm:$0xff]
      %v8596 = vld [vmem:[#allocation2 + $0x21] sm:$0xff]
      %v8597 = vld [vmem:[#allocation2 + $0x29] sm:$0xff]
      %v8598 = vld [vmem:[#allocation2 + $0x31] sm:$0xff]
      %v8599 = vld [vmem:[#allocation2 + $0x39] sm:$0xff]
      %v8600 = vld [vmem:[#allocation2 + $0x41] sm:$0xff]
      %v8601 = vld [vmem:[#allocation2 + $0x49] sm:$0xff]
      %v8602 = vld [vmem:[#allocation2 + $0x51] sm:$0xff]
      %v8603 = vld [vmem:[#allocation2 + $0x59] sm:$0xff]
      %v8604 = vld [vmem:[#allocation2 + $0x61] sm:$0xff]
      %v8605 = vld [vmem:[#allocation2 + $0x69] sm:$0xff]
      %v8606 = vld [vmem:[#allocation2 + $0x71] sm:$0xff]
      %v8607 = vld [vmem:[#allocation2 + $0x79] sm:$0xff]
      %v8608 = vld [vmem:[#allocation2 + $0x81] sm:$0xff]
      %v8609 = vld [vmem:[#allocation2 + $0x89] sm:$0xff]
      %v8610 = vld [vmem:[#allocation2 + $0x91] sm:$0xff]
      %v8611 = vld [vmem:[#allocation2 + $0x99] sm:$0xff]
      %v8612 = vld [vmem:[#allocation2 + $0xa1] sm:$0xff]
      %v8613 = vld [vmem:[#allocation2 + $0xa9] sm:$0xff]
      %v8614 = vld [vmem:[#allocation2 + $0xb1] sm:$0xff]
      %v8615 = vld [vmem:[#allocation2 + $0xb9] sm:$0xff]
      %v8616 = vld [vmem:[#allocation2 + $0xc1] sm:$0xff]
      %v8617 = vld [vmem:[#allocation2 + $0xc9] sm:$0xff]
      %v8618 = vld [vmem:[#allocation2 + $0xd1] sm:$0xff]
      %v8619 = vld [vmem:[#allocation2 + $0xd9] sm:$0xff]
      %v8620 = vld [vmem:[#allocation2 + $0xe1] sm:$0xff]
      %v8621 = vld [vmem:[#allocation2 + $0xe9] sm:$0xff]
      %v8622 = vld [vmem:[#allocation2 + $0xf1] sm:$0xff]
      %v8623 = vld [vmem:[#allocation2 + $0xf9] sm:$0xff]
      %v8624 = vld [vmem:[#allocation2 + $0x101] sm:$0xff]
      %v8625 = vmul.f32 %v8593, %v291
      %v8626 = vmul.f32 %v8594, %v292
      %v8627 = vmul.f32 %v8595, %v293
      %v8628 = vmul.f32 %v8596, %v294
      %v8629 = vmul.f32 %v8597, %v295
      %v8630 = vmul.f32 %v8598, %v296
      %v8631 = vmul.f32 %v8599, %v297
      %v8632 = vmul.f32 %v8600, %v298
      %v8633 = vmul.f32 %v8601, %v299
      %v8634 = vmul.f32 %v8602, %v300
      %v8635 = vmul.f32 %v8603, %v301
      %v8636 = vmul.f32 %v8604, %v302
      %v8637 = vmul.f32 %v8605, %v303
      %v8638 = vmul.f32 %v8606, %v304
      %v8639 = vmul.f32 %v8607, %v305
      %v8640 = vmul.f32 %v8608, %v306
      %v8641 = vmul.f32 %v8609, %v307
      %v8642 = vmul.f32 %v8610, %v308
      %v8643 = vmul.f32 %v8611, %v309
      %v8644 = vmul.f32 %v8612, %v310
      %v8645 = vmul.f32 %v8613, %v311
      %v8646 = vmul.f32 %v8614, %v312
      %v8647 = vmul.f32 %v8615, %v313
      %v8648 = vmul.f32 %v8616, %v314
      %v8649 = vmul.f32 %v8617, %v315
      %v8650 = vmul.f32 %v8618, %v316
      %v8651 = vmul.f32 %v8619, %v317
      %v8652 = vmul.f32 %v8620, %v318
      %v8653 = vmul.f32 %v8621, %v319
      %v8654 = vmul.f32 %v8622, %v320
      %v8655 = vmul.f32 %v8623, %v321
      %v8656 = vmul.f32 %v8624, %v322
      %v8657 = vlaneseq
      %v8658 = vshrl.u32 %v8657, 7
      %v8659 = vsub.s32 2, %v8658
      %v8660 = vrot.slane %v8355, %v8659
      %v8661 = vmul.f32 %v8625, %v8660
      %v8662 = vmul.f32 %v8626, %v8660
      %v8663 = vmul.f32 %v8627, %v8660
      %v8664 = vmul.f32 %v8628, %v8660
      %v8665 = vmul.f32 %v8629, %v8660
      %v8666 = vmul.f32 %v8630, %v8660
      %v8667 = vmul.f32 %v8631, %v8660
      %v8668 = vmul.f32 %v8632, %v8660
      %v8669 = vmul.f32 %v8633, %v8660
      %v8670 = vmul.f32 %v8634, %v8660
      %v8671 = vmul.f32 %v8635, %v8660
      %v8672 = vmul.f32 %v8636, %v8660
      %v8673 = vmul.f32 %v8637, %v8660
      %v8674 = vmul.f32 %v8638, %v8660
      %v8675 = vmul.f32 %v8639, %v8660
      %v8676 = vmul.f32 %v8640, %v8660
      %v8677 = vmul.f32 %v8641, %v8660
      %v8678 = vmul.f32 %v8642, %v8660
      %v8679 = vmul.f32 %v8643, %v8660
      %v8680 = vmul.f32 %v8644, %v8660
      %v8681 = vmul.f32 %v8645, %v8660
      %v8682 = vmul.f32 %v8646, %v8660
      %v8683 = vmul.f32 %v8647, %v8660
      %v8684 = vmul.f32 %v8648, %v8660
      %v8685 = vmul.f32 %v8649, %v8660
      %v8686 = vmul.f32 %v8650, %v8660
      %v8687 = vmul.f32 %v8651, %v8660
      %v8688 = vmul.f32 %v8652, %v8660
      %v8689 = vmul.f32 %v8653, %v8660
      %v8690 = vmul.f32 %v8654, %v8660
      %v8691 = vmul.f32 %v8655, %v8660
      %v8692 = vmul.f32 %v8656, %v8660
      %v8693 = vadd.f32 %v8461, %v8661
      %v8694 = vadd.f32 %v8462, %v8662
      %v8695 = vadd.f32 %v8463, %v8663
      %v8696 = vadd.f32 %v8464, %v8664
      %v8697 = vadd.f32 %v8465, %v8665
      %v8698 = vadd.f32 %v8466, %v8666
      %v8699 = vadd.f32 %v8467, %v8667
      %v8700 = vadd.f32 %v8468, %v8668
      %v8701 = vadd.f32 %v8469, %v8669
      %v8702 = vadd.f32 %v8470, %v8670
      %v8703 = vadd.f32 %v8471, %v8671
      %v8704 = vadd.f32 %v8472, %v8672
      %v8705 = vadd.f32 %v8473, %v8673
      %v8706 = vadd.f32 %v8474, %v8674
      %v8707 = vadd.f32 %v8475, %v8675
      %v8708 = vadd.f32 %v8476, %v8676
      %v8709 = vadd.f32 %v8477, %v8677
      %v8710 = vadd.f32 %v8478, %v8678
      %v8711 = vadd.f32 %v8479, %v8679
      %v8712 = vadd.f32 %v8480, %v8680
      %v8713 = vadd.f32 %v8481, %v8681
      %v8714 = vadd.f32 %v8482, %v8682
      %v8715 = vadd.f32 %v8483, %v8683
      %v8716 = vadd.f32 %v8484, %v8684
      %v8717 = vadd.f32 %v8485, %v8685
      %v8718 = vadd.f32 %v8486, %v8686
      %v8719 = vadd.f32 %v8487, %v8687
      %v8720 = vadd.f32 %v8488, %v8688
      %v8721 = vadd.f32 %v8489, %v8689
      %v8722 = vadd.f32 %v8490, %v8690
      %v8723 = vadd.f32 %v8491, %v8691
      %v8724 = vadd.f32 %v8492, %v8692
      %v8725 = vld [vmem:[#allocation2 + $0x107] sm:$0xff]
      %v8726 = vld [vmem:[#allocation2 + $0x10f] sm:$0xff]
      %v8727 = vmul.f32 %v8395, %v258
      %v8728 = vmul.f32 %v8396, %v259
      %v8729 = vmul.f32 %v8397, %v260
      %v8730 = vmul.f32 %v8398, %v261
      %v8731 = vmul.f32 %v8399, %v262
      %v8732 = vmul.f32 %v8400, %v263
      %v8733 = vmul.f32 %v8401, %v264
      %v8734 = vmul.f32 %v8402, %v265
      %v8735 = vmul.f32 %v8403, %v266
      %v8736 = vmul.f32 %v8404, %v267
      %v8737 = vmul.f32 %v8405, %v268
      %v8738 = vmul.f32 %v8406, %v269
      %v8739 = vmul.f32 %v8407, %v270
      %v8740 = vmul.f32 %v8408, %v271
      %v8741 = vmul.f32 %v8409, %v272
      %v8742 = vmul.f32 %v8410, %v273
      %v8743 = vmul.f32 %v8411, %v274
      %v8744 = vmul.f32 %v8412, %v275
      %v8745 = vmul.f32 %v8413, %v276
      %v8746 = vmul.f32 %v8414, %v277
      %v8747 = vmul.f32 %v8415, %v278
      %v8748 = vmul.f32 %v8416, %v279
      %v8749 = vmul.f32 %v8417, %v280
      %v8750 = vmul.f32 %v8418, %v281
      %v8751 = vmul.f32 %v8419, %v282
      %v8752 = vmul.f32 %v8420, %v283
      %v8753 = vmul.f32 %v8421, %v284
      %v8754 = vmul.f32 %v8422, %v285
      %v8755 = vmul.f32 %v8423, %v286
      %v8756 = vmul.f32 %v8424, %v287
      %v8757 = vmul.f32 %v8725, %v288
      %v8758 = vmul.f32 %v8726, %v289
      %v8759 = vlaneseq
      %v8760 = vshrl.u32 %v8759, 7
      %v8761 = vsub.s32 3, %v8760
      %v8762 = vrot.slane %v8355, %v8761
      %v8763 = vmul.f32 %v8727, %v8762
      %v8764 = vmul.f32 %v8728, %v8762
      %v8765 = vmul.f32 %v8729, %v8762
      %v8766 = vmul.f32 %v8730, %v8762
      %v8767 = vmul.f32 %v8731, %v8762
      %v8768 = vmul.f32 %v8732, %v8762
      %v8769 = vmul.f32 %v8733, %v8762
      %v8770 = vmul.f32 %v8734, %v8762
      %v8771 = vmul.f32 %v8735, %v8762
      %v8772 = vmul.f32 %v8736, %v8762
      %v8773 = vmul.f32 %v8737, %v8762
      %v8774 = vmul.f32 %v8738, %v8762
      %v8775 = vmul.f32 %v8739, %v8762
      %v8776 = vmul.f32 %v8740, %v8762
      %v8777 = vmul.f32 %v8741, %v8762
      %v8778 = vmul.f32 %v8742, %v8762
      %v8779 = vmul.f32 %v8743, %v8762
      %v8780 = vmul.f32 %v8744, %v8762
      %v8781 = vmul.f32 %v8745, %v8762
      %v8782 = vmul.f32 %v8746, %v8762
      %v8783 = vmul.f32 %v8747, %v8762
      %v8784 = vmul.f32 %v8748, %v8762
      %v8785 = vmul.f32 %v8749, %v8762
      %v8786 = vmul.f32 %v8750, %v8762
      %v8787 = vmul.f32 %v8751, %v8762
      %v8788 = vmul.f32 %v8752, %v8762
      %v8789 = vmul.f32 %v8753, %v8762
      %v8790 = vmul.f32 %v8754, %v8762
      %v8791 = vmul.f32 %v8755, %v8762
      %v8792 = vmul.f32 %v8756, %v8762
      %v8793 = vmul.f32 %v8757, %v8762
      %v8794 = vmul.f32 %v8758, %v8762
      %v8795 = vadd.f32 %v8561, %v8763
      %v8796 = vadd.f32 %v8562, %v8764
      %v8797 = vadd.f32 %v8563, %v8765
      %v8798 = vadd.f32 %v8564, %v8766
      %v8799 = vadd.f32 %v8565, %v8767
      %v8800 = vadd.f32 %v8566, %v8768
      %v8801 = vadd.f32 %v8567, %v8769
      %v8802 = vadd.f32 %v8568, %v8770
      %v8803 = vadd.f32 %v8569, %v8771
      %v8804 = vadd.f32 %v8570, %v8772
      %v8805 = vadd.f32 %v8571, %v8773
      %v8806 = vadd.f32 %v8572, %v8774
      %v8807 = vadd.f32 %v8573, %v8775
      %v8808 = vadd.f32 %v8574, %v8776
      %v8809 = vadd.f32 %v8575, %v8777
      %v8810 = vadd.f32 %v8576, %v8778
      %v8811 = vadd.f32 %v8577, %v8779
      %v8812 = vadd.f32 %v8578, %v8780
      %v8813 = vadd.f32 %v8579, %v8781
      %v8814 = vadd.f32 %v8580, %v8782
      %v8815 = vadd.f32 %v8581, %v8783
      %v8816 = vadd.f32 %v8582, %v8784
      %v8817 = vadd.f32 %v8583, %v8785
      %v8818 = vadd.f32 %v8584, %v8786
      %v8819 = vadd.f32 %v8585, %v8787
      %v8820 = vadd.f32 %v8586, %v8788
      %v8821 = vadd.f32 %v8587, %v8789
      %v8822 = vadd.f32 %v8588, %v8790
      %v8823 = vadd.f32 %v8589, %v8791
      %v8824 = vadd.f32 %v8590, %v8792
      %v8825 = vadd.f32 %v8591, %v8793
      %v8826 = vadd.f32 %v8592, %v8794
      %v8827 = vld [vmem:[#allocation2 + $0x109] sm:$0xff]
      %v8828 = vld [vmem:[#allocation2 + $0x111] sm:$0xff]
      %v8829 = vmul.f32 %v8595, %v291
      %v8830 = vmul.f32 %v8596, %v292
      %v8831 = vmul.f32 %v8597, %v293
      %v8832 = vmul.f32 %v8598, %v294
      %v8833 = vmul.f32 %v8599, %v295
      %v8834 = vmul.f32 %v8600, %v296
      %v8835 = vmul.f32 %v8601, %v297
      %v8836 = vmul.f32 %v8602, %v298
      %v8837 = vmul.f32 %v8603, %v299
      %v8838 = vmul.f32 %v8604, %v300
      %v8839 = vmul.f32 %v8605, %v301
      %v8840 = vmul.f32 %v8606, %v302
      %v8841 = vmul.f32 %v8607, %v303
      %v8842 = vmul.f32 %v8608, %v304
      %v8843 = vmul.f32 %v8609, %v305
      %v8844 = vmul.f32 %v8610, %v306
      %v8845 = vmul.f32 %v8611, %v307
      %v8846 = vmul.f32 %v8612, %v308
      %v8847 = vmul.f32 %v8613, %v309
      %v8848 = vmul.f32 %v8614, %v310
      %v8849 = vmul.f32 %v8615, %v311
      %v8850 = vmul.f32 %v8616, %v312
      %v8851 = vmul.f32 %v8617, %v313
      %v8852 = vmul.f32 %v8618, %v314
      %v8853 = vmul.f32 %v8619, %v315
      %v8854 = vmul.f32 %v8620, %v316
      %v8855 = vmul.f32 %v8621, %v317
      %v8856 = vmul.f32 %v8622, %v318
      %v8857 = vmul.f32 %v8623, %v319
      %v8858 = vmul.f32 %v8624, %v320
      %v8859 = vmul.f32 %v8827, %v321
      %v8860 = vmul.f32 %v8828, %v322
      %v8861 = vlaneseq
      %v8862 = vshrl.u32 %v8861, 7
      %v8863 = vsub.s32 5, %v8862
      %v8864 = vrot.slane %v8355, %v8863
      %v8865 = vmul.f32 %v8829, %v8864
      %v8866 = vmul.f32 %v8830, %v8864
      %v8867 = vmul.f32 %v8831, %v8864
      %v8868 = vmul.f32 %v8832, %v8864
      %v8869 = vmul.f32 %v8833, %v8864
      %v8870 = vmul.f32 %v8834, %v8864
      %v8871 = vmul.f32 %v8835, %v8864
      %v8872 = vmul.f32 %v8836, %v8864
      %v8873 = vmul.f32 %v8837, %v8864
      %v8874 = vmul.f32 %v8838, %v8864
      %v8875 = vmul.f32 %v8839, %v8864
      %v8876 = vmul.f32 %v8840, %v8864
      %v8877 = vmul.f32 %v8841, %v8864
      %v8878 = vmul.f32 %v8842, %v8864
      %v8879 = vmul.f32 %v8843, %v8864
      %v8880 = vmul.f32 %v8844, %v8864
      %v8881 = vmul.f32 %v8845, %v8864
      %v8882 = vmul.f32 %v8846, %v8864
      %v8883 = vmul.f32 %v8847, %v8864
      %v8884 = vmul.f32 %v8848, %v8864
      %v8885 = vmul.f32 %v8849, %v8864
      %v8886 = vmul.f32 %v8850, %v8864
      %v8887 = vmul.f32 %v8851, %v8864
      %v8888 = vmul.f32 %v8852, %v8864
      %v8889 = vmul.f32 %v8853, %v8864
      %v8890 = vmul.f32 %v8854, %v8864
      %v8891 = vmul.f32 %v8855, %v8864
      %v8892 = vmul.f32 %v8856, %v8864
      %v8893 = vmul.f32 %v8857, %v8864
      %v8894 = vmul.f32 %v8858, %v8864
      %v8895 = vmul.f32 %v8859, %v8864
      %v8896 = vmul.f32 %v8860, %v8864
      %v8897 = vadd.f32 %v8693, %v8865
      %v8898 = vadd.f32 %v8694, %v8866
      %v8899 = vadd.f32 %v8695, %v8867
      %v8900 = vadd.f32 %v8696, %v8868
      %v8901 = vadd.f32 %v8697, %v8869
      %v8902 = vadd.f32 %v8698, %v8870
      %v8903 = vadd.f32 %v8699, %v8871
      %v8904 = vadd.f32 %v8700, %v8872
      %v8905 = vadd.f32 %v8701, %v8873
      %v8906 = vadd.f32 %v8702, %v8874
      %v8907 = vadd.f32 %v8703, %v8875
      %v8908 = vadd.f32 %v8704, %v8876
      %v8909 = vadd.f32 %v8705, %v8877
      %v8910 = vadd.f32 %v8706, %v8878
      %v8911 = vadd.f32 %v8707, %v8879
      %v8912 = vadd.f32 %v8708, %v8880
      %v8913 = vadd.f32 %v8709, %v8881
      %v8914 = vadd.f32 %v8710, %v8882
      %v8915 = vadd.f32 %v8711, %v8883
      %v8916 = vadd.f32 %v8712, %v8884
      %v8917 = vadd.f32 %v8713, %v8885
      %v8918 = vadd.f32 %v8714, %v8886
      %v8919 = vadd.f32 %v8715, %v8887
      %v8920 = vadd.f32 %v8716, %v8888
      %v8921 = vadd.f32 %v8717, %v8889
      %v8922 = vadd.f32 %v8718, %v8890
      %v8923 = vadd.f32 %v8719, %v8891
      %v8924 = vadd.f32 %v8720, %v8892
      %v8925 = vadd.f32 %v8721, %v8893
      %v8926 = vadd.f32 %v8722, %v8894
      %v8927 = vadd.f32 %v8723, %v8895
      %v8928 = vadd.f32 %v8724, %v8896
      %v8929 = vld [vmem:[#allocation2 + $0x117] sm:$0xff]
      %v8930 = vld [vmem:[#allocation2 + $0x11f] sm:$0xff]
      %v8931 = vmul.f32 %v8397, %v258
      %v8932 = vmul.f32 %v8398, %v259
      %v8933 = vmul.f32 %v8399, %v260
      %v8934 = vmul.f32 %v8400, %v261
      %v8935 = vmul.f32 %v8401, %v262
      %v8936 = vmul.f32 %v8402, %v263
      %v8937 = vmul.f32 %v8403, %v264
      %v8938 = vmul.f32 %v8404, %v265
      %v8939 = vmul.f32 %v8405, %v266
      %v8940 = vmul.f32 %v8406, %v267
      %v8941 = vmul.f32 %v8407, %v268
      %v8942 = vmul.f32 %v8408, %v269
      %v8943 = vmul.f32 %v8409, %v270
      %v8944 = vmul.f32 %v8410, %v271
      %v8945 = vmul.f32 %v8411, %v272
      %v8946 = vmul.f32 %v8412, %v273
      %v8947 = vmul.f32 %v8413, %v274
      %v8948 = vmul.f32 %v8414, %v275
      %v8949 = vmul.f32 %v8415, %v276
      %v8950 = vmul.f32 %v8416, %v277
      %v8951 = vmul.f32 %v8417, %v278
      %v8952 = vmul.f32 %v8418, %v279
      %v8953 = vmul.f32 %v8419, %v280
      %v8954 = vmul.f32 %v8420, %v281
      %v8955 = vmul.f32 %v8421, %v282
      %v8956 = vmul.f32 %v8422, %v283
      %v8957 = vmul.f32 %v8423, %v284
      %v8958 = vmul.f32 %v8424, %v285
      %v8959 = vmul.f32 %v8725, %v286
      %v8960 = vmul.f32 %v8726, %v287
      %v8961 = vmul.f32 %v8929, %v288
      %v8962 = vmul.f32 %v8930, %v289
      %v8963 = vlaneseq
      %v8964 = vshrl.u32 %v8963, 7
      %v8965 = vsub.s32 6, %v8964
      %v8966 = vrot.slane %v8355, %v8965
      %v8967 = vmul.f32 %v8931, %v8966
      %v8968 = vmul.f32 %v8932, %v8966
      %v8969 = vmul.f32 %v8933, %v8966
      %v8970 = vmul.f32 %v8934, %v8966
      %v8971 = vmul.f32 %v8935, %v8966
      %v8972 = vmul.f32 %v8936, %v8966
      %v8973 = vmul.f32 %v8937, %v8966
      %v8974 = vmul.f32 %v8938, %v8966
      %v8975 = vmul.f32 %v8939, %v8966
      %v8976 = vmul.f32 %v8940, %v8966
      %v8977 = vmul.f32 %v8941, %v8966
      %v8978 = vmul.f32 %v8942, %v8966
      %v8979 = vmul.f32 %v8943, %v8966
      %v8980 = vmul.f32 %v8944, %v8966
      %v8981 = vmul.f32 %v8945, %v8966
      %v8982 = vmul.f32 %v8946, %v8966
      %v8983 = vmul.f32 %v8947, %v8966
      %v8984 = vmul.f32 %v8948, %v8966
      %v8985 = vmul.f32 %v8949, %v8966
      %v8986 = vmul.f32 %v8950, %v8966
      %v8987 = vmul.f32 %v8951, %v8966
      %v8988 = vmul.f32 %v8952, %v8966
      %v8989 = vmul.f32 %v8953, %v8966
      %v8990 = vmul.f32 %v8954, %v8966
      %v8991 = vmul.f32 %v8955, %v8966
      %v8992 = vmul.f32 %v8956, %v8966
      %v8993 = vmul.f32 %v8957, %v8966
      %v8994 = vmul.f32 %v8958, %v8966
      %v8995 = vmul.f32 %v8959, %v8966
      %v8996 = vmul.f32 %v8960, %v8966
      %v8997 = vmul.f32 %v8961, %v8966
      %v8998 = vmul.f32 %v8962, %v8966
      %v8999 = vadd.f32 %v8795, %v8967
      %v9000 = vadd.f32 %v8796, %v8968
      %v9001 = vadd.f32 %v8797, %v8969
      %v9002 = vadd.f32 %v8798, %v8970
      %v9003 = vadd.f32 %v8799, %v8971
      %v9004 = vadd.f32 %v8800, %v8972
      %v9005 = vadd.f32 %v8801, %v8973
      %v9006 = vadd.f32 %v8802, %v8974
      %v9007 = vadd.f32 %v8803, %v8975
      %v9008 = vadd.f32 %v8804, %v8976
      %v9009 = vadd.f32 %v8805, %v8977
      %v9010 = vadd.f32 %v8806, %v8978
      %v9011 = vadd.f32 %v8807, %v8979
      %v9012 = vadd.f32 %v8808, %v8980
      %v9013 = vadd.f32 %v8809, %v8981
      %v9014 = vadd.f32 %v8810, %v8982
      %v9015 = vadd.f32 %v8811, %v8983
      %v9016 = vadd.f32 %v8812, %v8984
      %v9017 = vadd.f32 %v8813, %v8985
      %v9018 = vadd.f32 %v8814, %v8986
      %v9019 = vadd.f32 %v8815, %v8987
      %v9020 = vadd.f32 %v8816, %v8988
      %v9021 = vadd.f32 %v8817, %v8989
      %v9022 = vadd.f32 %v8818, %v8990
      %v9023 = vadd.f32 %v8819, %v8991
      %v9024 = vadd.f32 %v8820, %v8992
      %v9025 = vadd.f32 %v8821, %v8993
      %v9026 = vadd.f32 %v8822, %v8994
      %v9027 = vadd.f32 %v8823, %v8995
      %v9028 = vadd.f32 %v8824, %v8996
      %v9029 = vadd.f32 %v8825, %v8997
      %v9030 = vadd.f32 %v8826, %v8998
      %v9031 = vld [vmem:[#allocation2 + $0x108] sm:$0xff]
      %v9032 = vld [vmem:[#allocation2 + $0x110] sm:$0xff]
      %v9033 = vld [vmem:[#allocation2 + $0x118] sm:$0xff]
      %v9034 = vld [vmem:[#allocation2 + $0x120] sm:$0xff]
      %v9035 = vlaneseq
      %v9036 = vshrl.u32 %v9035, 7
      %v9037 = vsub.s32 7, %v9036
      %v9038 = vrot.slane %v8355, %v9037
      %v9039 = vmul.f32 %v8497, %v9038
      %v9040 = vmul.f32 %v8498, %v9038
      %v9041 = vmul.f32 %v8499, %v9038
      %v9042 = vmul.f32 %v8500, %v9038
      %v9043 = vmul.f32 %v8501, %v9038
      %v9044 = vmul.f32 %v8502, %v9038
      %v9045 = vmul.f32 %v8503, %v9038
      %v9046 = vmul.f32 %v8504, %v9038
      %v9047 = vmul.f32 %v8505, %v9038
      %v9048 = vmul.f32 %v8506, %v9038
      %v9049 = vmul.f32 %v8507, %v9038
      %v9050 = vmul.f32 %v8508, %v9038
      %v9051 = vmul.f32 %v8509, %v9038
      %v9052 = vmul.f32 %v8510, %v9038
      %v9053 = vmul.f32 %v8511, %v9038
      %v9054 = vmul.f32 %v8512, %v9038
      %v9055 = vmul.f32 %v8513, %v9038
      %v9056 = vmul.f32 %v8514, %v9038
      %v9057 = vmul.f32 %v8515, %v9038
      %v9058 = vmul.f32 %v8516, %v9038
      %v9059 = vmul.f32 %v8517, %v9038
      %v9060 = vmul.f32 %v8518, %v9038
      %v9061 = vmul.f32 %v8519, %v9038
      %v9062 = vmul.f32 %v8520, %v9038
      %v9063 = vmul.f32 %v8521, %v9038
      %v9064 = vmul.f32 %v8522, %v9038
      %v9065 = vmul.f32 %v8523, %v9038
      %v9066 = vmul.f32 %v8524, %v9038
      %v9067 = vmul.f32 %v9031, %v9038
      %v9068 = vmul.f32 %v9032, %v9038
      %v9069 = vmul.f32 %v9033, %v9038
      %v9070 = vmul.f32 %v9034, %v9038
      %v9071 = vadd.f32 %v8897, %v9039
      %v9072 = vadd.f32 %v8898, %v9040
      %v9073 = vadd.f32 %v8899, %v9041
      %v9074 = vadd.f32 %v8900, %v9042
      %v9075 = vadd.f32 %v8901, %v9043
      %v9076 = vadd.f32 %v8902, %v9044
      %v9077 = vadd.f32 %v8903, %v9045
      %v9078 = vadd.f32 %v8904, %v9046
      %v9079 = vadd.f32 %v8905, %v9047
      %v9080 = vadd.f32 %v8906, %v9048
      %v9081 = vadd.f32 %v8907, %v9049
      %v9082 = vadd.f32 %v8908, %v9050
      %v9083 = vadd.f32 %v8909, %v9051
      %v9084 = vadd.f32 %v8910, %v9052
      %v9085 = vadd.f32 %v8911, %v9053
      %v9086 = vadd.f32 %v8912, %v9054
      %v9087 = vadd.f32 %v8913, %v9055
      %v9088 = vadd.f32 %v8914, %v9056
      %v9089 = vadd.f32 %v8915, %v9057
      %v9090 = vadd.f32 %v8916, %v9058
      %v9091 = vadd.f32 %v8917, %v9059
      %v9092 = vadd.f32 %v8918, %v9060
      %v9093 = vadd.f32 %v8919, %v9061
      %v9094 = vadd.f32 %v8920, %v9062
      %v9095 = vadd.f32 %v8921, %v9063
      %v9096 = vadd.f32 %v8922, %v9064
      %v9097 = vadd.f32 %v8923, %v9065
      %v9098 = vadd.f32 %v8924, %v9066
      %v9099 = vadd.f32 %v8925, %v9067
      %v9100 = vadd.f32 %v8926, %v9068
      %v9101 = vadd.f32 %v8927, %v9069
      %v9102 = vadd.f32 %v8928, %v9070
      %v9103 = vld [vmem:[#allocation2 + $0x119] sm:$0xff]
      %v9104 = vld [vmem:[#allocation2 + $0x121] sm:$0xff]
      %v9105 = vmul.f32 %v8597, %v291
      %v9106 = vmul.f32 %v8598, %v292
      %v9107 = vmul.f32 %v8599, %v293
      %v9108 = vmul.f32 %v8600, %v294
      %v9109 = vmul.f32 %v8601, %v295
      %v9110 = vmul.f32 %v8602, %v296
      %v9111 = vmul.f32 %v8603, %v297
      %v9112 = vmul.f32 %v8604, %v298
      %v9113 = vmul.f32 %v8605, %v299
      %v9114 = vmul.f32 %v8606, %v300
      %v9115 = vmul.f32 %v8607, %v301
      %v9116 = vmul.f32 %v8608, %v302
      %v9117 = vmul.f32 %v8609, %v303
      %v9118 = vmul.f32 %v8610, %v304
      %v9119 = vmul.f32 %v8611, %v305
      %v9120 = vmul.f32 %v8612, %v306
      %v9121 = vmul.f32 %v8613, %v307
      %v9122 = vmul.f32 %v8614, %v308
      %v9123 = vmul.f32 %v8615, %v309
      %v9124 = vmul.f32 %v8616, %v310
      %v9125 = vmul.f32 %v8617, %v311
      %v9126 = vmul.f32 %v8618, %v312
      %v9127 = vmul.f32 %v8619, %v313
      %v9128 = vmul.f32 %v8620, %v314
      %v9129 = vmul.f32 %v8621, %v315
      %v9130 = vmul.f32 %v8622, %v316
      %v9131 = vmul.f32 %v8623, %v317
      %v9132 = vmul.f32 %v8624, %v318
      %v9133 = vmul.f32 %v8827, %v319
      %v9134 = vmul.f32 %v8828, %v320
      %v9135 = vmul.f32 %v9103, %v321
      %v9136 = vmul.f32 %v9104, %v322
      %v9137 = vlaneseq
      %v9138 = vshrl.u32 %v9137, 7
      %v9139 = vsub.s32 0, %v9138
      %v9140 = vrot.slane %v8356, %v9139
      %v9141 = vmul.f32 %v9105, %v9140
      %v9142 = vmul.f32 %v9106, %v9140
      %v9143 = vmul.f32 %v9107, %v9140
      %v9144 = vmul.f32 %v9108, %v9140
      %v9145 = vmul.f32 %v9109, %v9140
      %v9146 = vmul.f32 %v9110, %v9140
      %v9147 = vmul.f32 %v9111, %v9140
      %v9148 = vmul.f32 %v9112, %v9140
      %v9149 = vmul.f32 %v9113, %v9140
      %v9150 = vmul.f32 %v9114, %v9140
      %v9151 = vmul.f32 %v9115, %v9140
      %v9152 = vmul.f32 %v9116, %v9140
      %v9153 = vmul.f32 %v9117, %v9140
      %v9154 = vmul.f32 %v9118, %v9140
      %v9155 = vmul.f32 %v9119, %v9140
      %v9156 = vmul.f32 %v9120, %v9140
      %v9157 = vmul.f32 %v9121, %v9140
      %v9158 = vmul.f32 %v9122, %v9140
      %v9159 = vmul.f32 %v9123, %v9140
      %v9160 = vmul.f32 %v9124, %v9140
      %v9161 = vmul.f32 %v9125, %v9140
      %v9162 = vmul.f32 %v9126, %v9140
      %v9163 = vmul.f32 %v9127, %v9140
      %v9164 = vmul.f32 %v9128, %v9140
      %v9165 = vmul.f32 %v9129, %v9140
      %v9166 = vmul.f32 %v9130, %v9140
      %v9167 = vmul.f32 %v9131, %v9140
      %v9168 = vmul.f32 %v9132, %v9140
      %v9169 = vmul.f32 %v9133, %v9140
      %v9170 = vmul.f32 %v9134, %v9140
      %v9171 = vmul.f32 %v9135, %v9140
      %v9172 = vmul.f32 %v9136, %v9140
      %v9173 = vadd.f32 %v8999, %v9141
      %v9174 = vadd.f32 %v9000, %v9142
      %v9175 = vadd.f32 %v9001, %v9143
      %v9176 = vadd.f32 %v9002, %v9144
      %v9177 = vadd.f32 %v9003, %v9145
      %v9178 = vadd.f32 %v9004, %v9146
      %v9179 = vadd.f32 %v9005, %v9147
      %v9180 = vadd.f32 %v9006, %v9148
      %v9181 = vadd.f32 %v9007, %v9149
      %v9182 = vadd.f32 %v9008, %v9150
      %v9183 = vadd.f32 %v9009, %v9151
      %v9184 = vadd.f32 %v9010, %v9152
      %v9185 = vadd.f32 %v9011, %v9153
      %v9186 = vadd.f32 %v9012, %v9154
      %v9187 = vadd.f32 %v9013, %v9155
      %v9188 = vadd.f32 %v9014, %v9156
      %v9189 = vadd.f32 %v9015, %v9157
      %v9190 = vadd.f32 %v9016, %v9158
      %v9191 = vadd.f32 %v9017, %v9159
      %v9192 = vadd.f32 %v9018, %v9160
      %v9193 = vadd.f32 %v9019, %v9161
      %v9194 = vadd.f32 %v9020, %v9162
      %v9195 = vadd.f32 %v9021, %v9163
      %v9196 = vadd.f32 %v9022, %v9164
      %v9197 = vadd.f32 %v9023, %v9165
      %v9198 = vadd.f32 %v9024, %v9166
      %v9199 = vadd.f32 %v9025, %v9167
      %v9200 = vadd.f32 %v9026, %v9168
      %v9201 = vadd.f32 %v9027, %v9169
      %v9202 = vadd.f32 %v9028, %v9170
      %v9203 = vadd.f32 %v9029, %v9171
      %v9204 = vadd.f32 %v9030, %v9172
      %v9205 = vadd.f32 %v9173, %v9071
      %v9206 = vadd.f32 %v9174, %v9072
      %v9207 = vadd.f32 %v9175, %v9073
      %v9208 = vadd.f32 %v9176, %v9074
      %v9209 = vadd.f32 %v9177, %v9075
      %v9210 = vadd.f32 %v9178, %v9076
      %v9211 = vadd.f32 %v9179, %v9077
      %v9212 = vadd.f32 %v9180, %v9078
      %v9213 = vadd.f32 %v9181, %v9079
      %v9214 = vadd.f32 %v9182, %v9080
      %v9215 = vadd.f32 %v9183, %v9081
      %v9216 = vadd.f32 %v9184, %v9082
      %v9217 = vadd.f32 %v9185, %v9083
      %v9218 = vadd.f32 %v9186, %v9084
      %v9219 = vadd.f32 %v9187, %v9085
      %v9220 = vadd.f32 %v9188, %v9086
      %v9221 = vadd.f32 %v9189, %v9087
      %v9222 = vadd.f32 %v9190, %v9088
      %v9223 = vadd.f32 %v9191, %v9089
      %v9224 = vadd.f32 %v9192, %v9090
      %v9225 = vadd.f32 %v9193, %v9091
      %v9226 = vadd.f32 %v9194, %v9092
      %v9227 = vadd.f32 %v9195, %v9093
      %v9228 = vadd.f32 %v9196, %v9094
      %v9229 = vadd.f32 %v9197, %v9095
      %v9230 = vadd.f32 %v9198, %v9096
      %v9231 = vadd.f32 %v9199, %v9097
      %v9232 = vadd.f32 %v9200, %v9098
      %v9233 = vadd.f32 %v9201, %v9099
      %v9234 = vadd.f32 %v9202, %v9100
      %v9235 = vadd.f32 %v9203, %v9101
      %v9236 = vadd.f32 %v9204, %v9102
      %s9237 = scalar_lea.vmem %s4, 2
      %v9238 = vld [vmem:[%s9237] sm:$0x1]
      %v9240 = vlaneseq
      %v9241 = vshrl.u32 %v9240, 7
      %v9242 = vsub.s32 0, %v9241
      %v9243 = vrot.slane %v9238, %v9242
      %v9245 = vadd.f32 %v9205, %v9243
      %v9246 = vadd.f32 %v9206, %v9243
      %v9247 = vadd.f32 %v9207, %v9243
      %v9248 = vadd.f32 %v9208, %v9243
      %v9249 = vadd.f32 %v9209, %v9243
      %v9250 = vadd.f32 %v9210, %v9243
      %v9251 = vadd.f32 %v9211, %v9243
      %v9252 = vadd.f32 %v9212, %v9243
      %v9253 = vadd.f32 %v9213, %v9243
      %v9254 = vadd.f32 %v9214, %v9243
      %v9255 = vadd.f32 %v9215, %v9243
      %v9256 = vadd.f32 %v9216, %v9243
      %v9257 = vadd.f32 %v9217, %v9243
      %v9258 = vadd.f32 %v9218, %v9243
      %v9259 = vadd.f32 %v9219, %v9243
      %v9260 = vadd.f32 %v9220, %v9243
      %v9261 = vadd.f32 %v9221, %v9243
      %v9262 = vadd.f32 %v9222, %v9243
      %v9263 = vadd.f32 %v9223, %v9243
      %v9264 = vadd.f32 %v9224, %v9243
      %v9265 = vadd.f32 %v9225, %v9243
      %v9266 = vadd.f32 %v9226, %v9243
      %v9267 = vadd.f32 %v9227, %v9243
      %v9268 = vadd.f32 %v9228, %v9243
      %v9269 = vadd.f32 %v9229, %v9243
      %v9270 = vadd.f32 %v9230, %v9243
      %v9271 = vadd.f32 %v9231, %v9243
      %v9272 = vadd.f32 %v9232, %v9243
      %v9273 = vadd.f32 %v9233, %v9243
      %v9274 = vadd.f32 %v9234, %v9243
      %v9275 = vadd.f32 %v9235, %v9243
      %v9276 = vadd.f32 %v9236, %v9243
      %v9277 = vmax.f32 %v9245, 0.0
      %v9278 = vmax.f32 %v9246, 0.0
      %v9279 = vmax.f32 %v9247, 0.0
      %v9280 = vmax.f32 %v9248, 0.0
      %v9281 = vmax.f32 %v9249, 0.0
      %v9282 = vmax.f32 %v9250, 0.0
      %v9283 = vmax.f32 %v9251, 0.0
      %v9284 = vmax.f32 %v9252, 0.0
      %v9285 = vmax.f32 %v9253, 0.0
      %v9286 = vmax.f32 %v9254, 0.0
      %v9287 = vmax.f32 %v9255, 0.0
      %v9288 = vmax.f32 %v9256, 0.0
      %v9289 = vmax.f32 %v9257, 0.0
      %v9290 = vmax.f32 %v9258, 0.0
      %v9291 = vmax.f32 %v9259, 0.0
      %v9292 = vmax.f32 %v9260, 0.0
      %v9293 = vmax.f32 %v9261, 0.0
      %v9294 = vmax.f32 %v9262, 0.0
      %v9295 = vmax.f32 %v9263, 0.0
      %v9296 = vmax.f32 %v9264, 0.0
      %v9297 = vmax.f32 %v9265, 0.0
      %v9298 = vmax.f32 %v9266, 0.0
      %v9299 = vmax.f32 %v9267, 0.0
      %v9300 = vmax.f32 %v9268, 0.0
      %v9301 = vmax.f32 %v9269, 0.0
      %v9302 = vmax.f32 %v9270, 0.0
      %v9303 = vmax.f32 %v9271, 0.0
      %v9304 = vmax.f32 %v9272, 0.0
      %v9305 = vmax.f32 %v9273, 0.0
      %v9306 = vmax.f32 %v9274, 0.0
      %v9307 = vmax.f32 %v9275, 0.0
      %v9308 = vmax.f32 %v9276, 0.0
      %9309 = vst [vmem:[%s251] sm:$0xff] %v9277
      %9310 = vst [vmem:[%s251 + $0x8] sm:$0xff] %v9278
      %9311 = vst [vmem:[%s251 + $0x10] sm:$0xff] %v9279
      %9312 = vst [vmem:[%s251 + $0x18] sm:$0xff] %v9280
      %9313 = vst [vmem:[%s251 + $0x20] sm:$0xff] %v9281
      %9314 = vst [vmem:[%s251 + $0x28] sm:$0xff] %v9282
      %9315 = vst [vmem:[%s251 + $0x30] sm:$0xff] %v9283
      %9316 = vst [vmem:[%s251 + $0x38] sm:$0xff] %v9284
      %9317 = vst [vmem:[%s251 + $0x40] sm:$0xff] %v9285
      %9318 = vst [vmem:[%s251 + $0x48] sm:$0xff] %v9286
      %9319 = vst [vmem:[%s251 + $0x50] sm:$0xff] %v9287
      %9320 = vst [vmem:[%s251 + $0x58] sm:$0xff] %v9288
      %9321 = vst [vmem:[%s251 + $0x60] sm:$0xff] %v9289
      %9322 = vst [vmem:[%s251 + $0x68] sm:$0xff] %v9290
      %9323 = vst [vmem:[%s251 + $0x70] sm:$0xff] %v9291
      %9324 = vst [vmem:[%s251 + $0x78] sm:$0xff] %v9292
      %9325 = vst [vmem:[%s251 + $0x80] sm:$0xff] %v9293
      %9326 = vst [vmem:[%s251 + $0x88] sm:$0xff] %v9294
      %9327 = vst [vmem:[%s251 + $0x90] sm:$0xff] %v9295
      %9328 = vst [vmem:[%s251 + $0x98] sm:$0xff] %v9296
      %9329 = vst [vmem:[%s251 + $0xa0] sm:$0xff] %v9297
      %9330 = vst [vmem:[%s251 + $0xa8] sm:$0xff] %v9298
      %9331 = vst [vmem:[%s251 + $0xb0] sm:$0xff] %v9299
      %9332 = vst [vmem:[%s251 + $0xb8] sm:$0xff] %v9300
      %9333 = vst [vmem:[%s251 + $0xc0] sm:$0xff] %v9301
      %9334 = vst [vmem:[%s251 + $0xc8] sm:$0xff] %v9302
      %9335 = vst [vmem:[%s251 + $0xd0] sm:$0xff] %v9303
      %9336 = vst [vmem:[%s251 + $0xd8] sm:$0xff] %v9304
      %9337 = vst [vmem:[%s251 + $0xe0] sm:$0xff] %v9305
      %9338 = vst [vmem:[%s251 + $0xe8] sm:$0xff] %v9306
      %9339 = vst [vmem:[%s251 + $0xf0] sm:$0xff] %v9307
      %9340 = vst [vmem:[%s251 + $0xf8] sm:$0xff] %v9308
      %p9341 = scmp.lt.s32.totalorder %s17, 1
      %s9342 = scalar_select %p9341, %s17, 1
      %s9343 = smul.addr %s9342, 32
      %s9344 = smul.addr %s9343, 8
      %s9345 = scalar_lea.vmem %s6, %s9344
      // Predicated region
      $region45: #{mlp_layer_forward.1} parent=43 // pred_check
        %p9346 = pneg %p166
      $region46: #{mlp_layer_forward.1} parent=43 // pred_check_branch
        %9348 = sbr.rel (%p9346) target = $region48
      $region47: #{mlp_layer_forward.1} parent=43 // pred_region
        _
      $region48: #{mlp_layer_forward.1} parent=43 // pred_fallthru
        _
    $region44: #{mlp_layer_forward.1} parent=5 // pred_fallthru
      _
    %p9349 = scmp.le.s32.totalorder 2, %s12
    // Predicated region
    $region49: #{mlp_layer_forward.1} parent=5 // pred_check
      %p9350 = pneg %p9349
    $region50: #{mlp_layer_forward.1} parent=5 // pred_check_branch
      %9352 = sbr.rel (%p9350) target = $region52
    $region51: #{mlp_layer_forward.1} parent=5 // pred_region
      %s9353 = ssub.s32 %s12, 2
      // Predicated region
      $region53: #{mlp_layer_forward.1} parent=51 // pred_check
        %p9354 = pneg %p172
      $region54: #{mlp_layer_forward.1} parent=51 // pred_check_branch
        %9356 = sbr.rel (%p9354) target = $region56
      $region55: #{mlp_layer_forward.1} parent=51 // pred_region
        %p9357 = scmp.lt.s32.totalorder %s18, 1
        %s9358 = scalar_select %p9357, %s18, 1
        %s9359 = smul.addr %s9358, 32
        %s9360 = smul.addr %s9359, 8
        %s9361 = scalar_lea.vmem %s6, %s9360
      $region56: #{mlp_layer_forward.1} parent=51 // pred_fallthru
        _
    $region52: #{mlp_layer_forward.1} parent=5 // pred_fallthru
      _
  $region6: #{mlp_layer_forward.1} parent=0 // loop_footer
    %s16 = sadd.s32 1, %s12
  $region7: #{mlp_layer_forward.1} parent=0 // loop_footer_branch
    %11 = sbr.rel target = $region3
  $region8: #{mlp_layer_forward.1} parent=0 // loop_exit
    _

</llo_original>
